<compile_context>
chip_gen: v7x
topology: tpu7x:2x2x1
jax: 0.10.0
libtpu: 0.0.40
codegen_flags: <defaults>
</compile_context>

<pallas_src>
import functools

import jax
import jax.numpy as jnp
from jax import lax
from jax.experimental import pallas as pl
from jax.experimental.pallas import tpu as pltpu

EPS = 1e-5


def _resnet_block_kernel(x_pad_ref, x_flat_ref, w1_ref, w2_ref, o_ref,
                         slab_ref, pad_ref, *, H, W):
    """One batch image per grid step.

    x_pad_ref  : (1, C, H+2, W+2) f32   reflect-padded input (padded host-side)
    x_flat_ref : (1, C, H*W) f32        lane-dense residual input
    w1_ref     : (C, 9*C) bf16          conv1 weights, taps stacked along K
    w2_ref     : (C, 9*C) bf16          conv2 weights, taps stacked along K
    o_ref      : (1, C, H*W)            lane-dense flat output
    slab_ref   : (9*C, H*W) bf16        im2col scratch, reused by both convs
    pad_ref    : (C, H+2, W+2) bf16     reflect-pad scratch for the hidden act
    """
    C = o_ref.shape[1]
    HW = H * W
    inv_hw = 1.0 / float(HW)

    def fill_slab(get_tap):
        # Write each 3x3 tap directly into the scratch slab (no concat copy).
        t = 0
        for dy in range(3):
            for dx in range(3):
                slab_ref[t * C:(t + 1) * C, :] = get_tap(dy, dx)
                t += 1

    def conv3x3(w_bf16):
        # Single long-K matmul; accumulation stays inside the MXU in f32.
        return jnp.dot(w_bf16, slab_ref[...], preferred_element_type=jnp.float32)

    def instance_norm(a):
        # Single traversal: sum + sum of squares; biased var (PyTorch IN).
        s = jnp.sum(a, axis=1, keepdims=True)
        ss = jnp.sum(a * a, axis=1, keepdims=True)
        m = s * inv_hw
        v = jnp.maximum(ss * inv_hw - m * m, 0.0)
        return (a - m) * lax.rsqrt(v + EPS)

    # ---- conv1 -> IN -> ReLU  (conv bias cancels under affine-free IN).
    x_pad = x_pad_ref[0].astype(jnp.bfloat16)                 # (C, H+2, W+2)
    fill_slab(lambda dy, dx: x_pad[:, dy:dy + H, dx:dx + W].reshape(C, HW))
    h = conv3x3(w1_ref[...])                                   # (C, HW) f32
    h = jnp.maximum(instance_norm(h), 0.0)
    # TODO(synk): Dropout(0.5) omitted (use_dropout=False configuration).

    # ---- reflect-pad the hidden activation into the bf16 scratch.
    h3 = h.astype(jnp.bfloat16).reshape(C, H, W)
    mid = jnp.concatenate(
        [h3[:, 1:2, :], h3, h3[:, H - 2:H - 1, :]], axis=1)    # (C, H+2, W)
    pad_ref[:, :, 1:W + 1] = mid
    pad_ref[:, :, 0:1] = mid[:, :, 1:2]
    pad_ref[:, :, W + 1:W + 2] = mid[:, :, W - 2:W - 1]

    # ---- conv2 -> IN (taps read directly from the bf16 pad scratch).
    fill_slab(lambda dy, dx: pad_ref[:, dy:dy + H, dx:dx + W].reshape(C, HW))
    h2 = instance_norm(conv3x3(w2_ref[...]))

    # ---- residual add from the lane-dense flat input.
    o_ref[0] = (x_flat_ref[0] + h2).astype(o_ref.dtype)


def _vmem_limit_bytes(C, H, W):
    HW = H * W
    pad_hw = (H + 2) * (W + 2)
    in_b = C * pad_hw * 4            # padded-input block (f32)
    res_b = C * HW * 4               # flat residual block (f32)
    out_b = C * HW * 4               # output block (f32)
    w_b = 2 * C * 9 * C * 2          # two bf16 weight slabs (single-buffered)
    slab_b = 9 * C * HW * 2          # im2col scratch (bf16)
    padscr_b = C * pad_hw * 2        # bf16 pad scratch
    # f32 conv/IN temporaries + bf16 cast of x_pad + the (C, H+2, W) mid block.
    tmp_b = 3 * C * HW * 4 + C * pad_hw * 2 + C * (H + 2) * W * 2
    est = 2 * (in_b + res_b + out_b) + w_b + slab_b + padscr_b + tmp_b
    try:
        phys = int(pltpu.get_tpu_info().vmem_capacity_bytes)
    except Exception:
        phys = 128 * 2**20
    # Leave headroom for compiler-internal scratch; never cap below 16 MiB.
    cap = max(16 * 2**20, min(phys - 8 * 2**20, 100 * 2**20))
    return int(min(cap, max(16 * 2**20, int(1.5 * est))))


def resnet_block(x, w1, b1, w2, b2):
    """x: (N, C, H, W) f32; w*: (C, C, 3, 3) OIHW; b*: (C,).

    b1/b2 are accepted for API parity but are mathematically cancelled by the
    mean subtraction of the affine-free InstanceNorm that follows each conv.
    """
    del b1, b2
    N, C, H, W = x.shape
    HW = H * W

    # Host-side reflect pad so the first conv needs no in-kernel padding, plus
    # a lane-dense flat view for the residual add.
    x_pad = jnp.pad(x, ((0, 0), (0, 0), (1, 1), (1, 1)), mode="reflect")
    x_flat = x.reshape(N, C, HW)

    # (Cout, Cin, 3, 3) -> (Cout, 3, 3, Cin) -> (Cout, 9*Cin): tap-major /
    # channel-minor K ordering matching the im2col slab; bf16 for the MXU.
    w1_s = jnp.transpose(w1, (0, 2, 3, 1)).reshape(C, 9 * C).astype(jnp.bfloat16)
    w2_s = jnp.transpose(w2, (0, 2, 3, 1)).reshape(C, 9 * C).astype(jnp.bfloat16)

    vmem_limit = _vmem_limit_bytes(C, H, W)
    cost = pl.CostEstimate(
        flops=int(N * 2 * 2 * 9 * C * C * HW),
        transcendentals=int(N * 2 * C),
        bytes_accessed=int(x_pad.size * 4 + x_flat.size * 4
                           + (w1_s.size + w2_s.size) * 2 + N * C * HW * 4),
    )

    kernel = functools.partial(_resnet_block_kernel, H=H, W=W)

    def build(single_buffer_weights):
        w_kwargs = {}
        if single_buffer_weights:
            # Constant index_map across the grid -> one buffer is enough.
            w_kwargs["pipeline_mode"] = pl.Buffered(1)
        return pl.pallas_call(
            kernel,
            out_shape=jax.ShapeDtypeStruct((N, C, HW), x.dtype),
            grid_spec=pltpu.PrefetchScalarGridSpec(
                num_scalar_prefetch=0,
                grid=(N,),
                in_specs=[
                    pl.BlockSpec((1, C, H + 2, W + 2), lambda b: (b, 0, 0, 0)),
                    pl.BlockSpec((1, C, HW), lambda b: (b, 0, 0)),
                    pl.BlockSpec((C, 9 * C), lambda b: (0, 0), **w_kwargs),
                    pl.BlockSpec((C, 9 * C), lambda b: (0, 0), **w_kwargs),
                ],
                out_specs=pl.BlockSpec((1, C, HW), lambda b: (b, 0, 0)),
                scratch_shapes=[
                    pltpu.VMEM((9 * C, HW), jnp.bfloat16),        # im2col slab
                    pltpu.VMEM((C, H + 2, W + 2), jnp.bfloat16),  # pad scratch
                ],
            ),
            compiler_params=pltpu.CompilerParams(
                dimension_semantics=("parallel",),
                vmem_limit_bytes=vmem_limit),
            cost_estimate=cost,
        )

    try:
        out_flat = jax.block_until_ready(build(True)(x_pad, x_flat, w1_s, w2_s))
    except Exception:
        # Fallback if this jax build rejects pipeline_mode=pl.Buffered(1);
        # identical numerics, weights just stay double-buffered.
        out_flat = build(False)(x_pad, x_flat, w1_s, w2_s)

    return out_flat.reshape(N, C, H, W)


def _ref_forward(x, w1, b1, w2, b2):
    """Pure-JAX reference matching the PyTorch forward (biases included)."""
    def conv(a, w, b):
        p = jnp.pad(a, ((0, 0), (0, 0), (1, 1), (1, 1)), mode="reflect")
        y = lax.conv_general_dilated(
            p, w, window_strides=(1, 1), padding="VALID",
            dimension_numbers=("NCHW", "OIHW", "NCHW"))
        return y + b[None, :, None, None]

    def inorm(a):
        m = a.mean(axis=(2, 3), keepdims=True)
        v = ((a - m) ** 2).mean(axis=(2, 3), keepdims=True)
        return (a - m) * lax.rsqrt(v + EPS)

    h = jnp.maximum(inorm(conv(x, w1, b1)), 0.0)
    h = inorm(conv(h, w2, b2))
    return x + h


if __name__ == "__main__":
    key = jax.random.PRNGKey(0)
    k_x, k_w1, k_b1, k_w2, k_b2 = jax.random.split(key, 5)

    N, C, H, W = 2, 4, 16, 16
    x = jax.random.normal(k_x, (N, C, H, W), jnp.float32)

    fan_in = C * 3 * 3
    scale = 1.0 / jnp.sqrt(jnp.float32(fan_in))
    w1 = jax.random.normal(k_w1, (C, C, 3, 3), jnp.float32) * scale
    b1 = jax.random.normal(k_b1, (C,), jnp.float32) * scale
    w2 = jax.random.normal(k_w2, (C, C, 3, 3), jnp.float32) * scale
    b2 = jax.random.normal(k_b2, (C,), jnp.float32) * scale

    out = jax.block_until_ready(resnet_block(x, w1, b1, w2, b2))
    ref = jax.block_until_ready(_ref_forward(x, w1, b1, w2, b2))

    assert out.shape == (N, C, H, W)
    err = jnp.max(jnp.abs(out - ref))
    # Tolerance accounts for bf16 MXU operands (f32 accumulation) in the kernel.
    assert jnp.allclose(out, ref, rtol=2e-2, atol=2e-2), f"max abs err {err}"
    print("KERNEL_OK")
</pallas_src>

<mosaic_0001>
module attributes {stable_mosaic.version = 11 : i64} {
  func.func @_resnet_block_kernel(%arg0: i32, %arg1: memref<1x4x18x18xf32, #tpu.memory_space<vmem>>, %arg2: memref<1x4x256xf32, #tpu.memory_space<vmem>>, %arg3: memref<4x36xbf16, #tpu.memory_space<vmem>>, %arg4: memref<4x36xbf16, #tpu.memory_space<vmem>>, %arg5: memref<1x4x256xf32, #tpu.memory_space<vmem>>, %arg6: memref<36x256xbf16, #tpu.memory_space<vmem>>, %arg7: memref<4x18x18xbf16, #tpu.memory_space<vmem>>) attributes {dimension_semantics = [#tpu.dimension_semantics<parallel>], iteration_bounds = array<i64: 2>, scalar_prefetch = 0 : i64, scratch_operands = 2 : i64, tpu.core_type = #tpu.core_type<tc>, window_params = [{transform_indices = @transform_0, window_bounds = array<i64: 1, 4, 18, 18>}, {transform_indices = @transform_1, window_bounds = array<i64: 1, 4, 256>}, {pipeline_mode = #tpu.pipeline_mode<synchronous>, transform_indices = @transform_2, window_bounds = array<i64: 4, 36>}, {pipeline_mode = #tpu.pipeline_mode<synchronous>, transform_indices = @transform_3, window_bounds = array<i64: 4, 36>}, {transform_indices = @transform_4, window_bounds = array<i64: 1, 4, 256>}]} {
    %c0 = arith.constant 0 : index
    %c0_0 = arith.constant 0 : index
    %c0_1 = arith.constant 0 : index
    %c0_2 = arith.constant 0 : index
    %0 = vector.load %arg1[%c0, %c0_0, %c0_1, %c0_2] : memref<1x4x18x18xf32, #tpu.memory_space<vmem>>, vector<1x4x18x18xf32>
    %1 = vector.shape_cast %0 : vector<1x4x18x18xf32> to vector<4x18x18xf32>
    %2 = arith.truncf %1 : vector<4x18x18xf32> to vector<4x18x18xbf16>
    %3 = vector.extract_strided_slice %2 {offsets = [0, 0, 0], sizes = [4, 16, 16], strides = [1, 1, 1]} : vector<4x18x18xbf16> to vector<4x16x16xbf16>
    %4 = vector.shape_cast %3 : vector<4x16x16xbf16> to vector<4x256xbf16>
    %c0_3 = arith.constant 0 : index
    %c0_4 = arith.constant 0 : index
    %5 = vector.load %arg6[%c0_3, %c0_4] : memref<36x256xbf16, #tpu.memory_space<vmem>>, vector<4x256xbf16>
    tpu.vector_store %arg6[%c0_3, %c0_4], %4 {strides = array<i32>} : memref<36x256xbf16, #tpu.memory_space<vmem>>, vector<4x256xbf16>,
    %6 = vector.extract_strided_slice %2 {offsets = [0, 0, 1], sizes = [4, 16, 16], strides = [1, 1, 1]} : vector<4x18x18xbf16> to vector<4x16x16xbf16>
    %7 = vector.shape_cast %6 : vector<4x16x16xbf16> to vector<4x256xbf16>
    %c4 = arith.constant 4 : index
    %c0_5 = arith.constant 0 : index
    %8 = vector.load %arg6[%c4, %c0_5] : memref<36x256xbf16, #tpu.memory_space<vmem>>, vector<4x256xbf16>
    tpu.vector_store %arg6[%c4, %c0_5], %7 {strides = array<i32>} : memref<36x256xbf16, #tpu.memory_space<vmem>>, vector<4x256xbf16>,
    %9 = vector.extract_strided_slice %2 {offsets = [0, 0, 2], sizes = [4, 16, 16], strides = [1, 1, 1]} : vector<4x18x18xbf16> to vector<4x16x16xbf16>
    %10 = vector.shape_cast %9 : vector<4x16x16xbf16> to vector<4x256xbf16>
    %c8 = arith.constant 8 : index
    %c0_6 = arith.constant 0 : index
    %11 = vector.load %arg6[%c8, %c0_6] : memref<36x256xbf16, #tpu.memory_space<vmem>>, vector<4x256xbf16>
    tpu.vector_store %arg6[%c8, %c0_6], %10 {strides = array<i32>} : memref<36x256xbf16, #tpu.memory_space<vmem>>, vector<4x256xbf16>,
    %12 = vector.extract_strided_slice %2 {offsets = [0, 1, 0], sizes = [4, 16, 16], strides = [1, 1, 1]} : vector<4x18x18xbf16> to vector<4x16x16xbf16>
    %13 = vector.shape_cast %12 : vector<4x16x16xbf16> to vector<4x256xbf16>
    %c12 = arith.constant 12 : index
    %c0_7 = arith.constant 0 : index
    %14 = vector.load %arg6[%c12, %c0_7] : memref<36x256xbf16, #tpu.memory_space<vmem>>, vector<4x256xbf16>
    tpu.vector_store %arg6[%c12, %c0_7], %13 {strides = array<i32>} : memref<36x256xbf16, #tpu.memory_space<vmem>>, vector<4x256xbf16>,
    %15 = vector.extract_strided_slice %2 {offsets = [0, 1, 1], sizes = [4, 16, 16], strides = [1, 1, 1]} : vector<4x18x18xbf16> to vector<4x16x16xbf16>
    %16 = vector.shape_cast %15 : vector<4x16x16xbf16> to vector<4x256xbf16>
    %c16 = arith.constant 16 : index
    %c0_8 = arith.constant 0 : index
    %17 = vector.load %arg6[%c16, %c0_8] : memref<36x256xbf16, #tpu.memory_space<vmem>>, vector<4x256xbf16>
    tpu.vector_store %arg6[%c16, %c0_8], %16 {strides = array<i32>} : memref<36x256xbf16, #tpu.memory_space<vmem>>, vector<4x256xbf16>,
    %18 = vector.extract_strided_slice %2 {offsets = [0, 1, 2], sizes = [4, 16, 16], strides = [1, 1, 1]} : vector<4x18x18xbf16> to vector<4x16x16xbf16>
    %19 = vector.shape_cast %18 : vector<4x16x16xbf16> to vector<4x256xbf16>
    %c20 = arith.constant 20 : index
    %c0_9 = arith.constant 0 : index
    %20 = vector.load %arg6[%c20, %c0_9] : memref<36x256xbf16, #tpu.memory_space<vmem>>, vector<4x256xbf16>
    tpu.vector_store %arg6[%c20, %c0_9], %19 {strides = array<i32>} : memref<36x256xbf16, #tpu.memory_space<vmem>>, vector<4x256xbf16>,
    %21 = vector.extract_strided_slice %2 {offsets = [0, 2, 0], sizes = [4, 16, 16], strides = [1, 1, 1]} : vector<4x18x18xbf16> to vector<4x16x16xbf16>
    %22 = vector.shape_cast %21 : vector<4x16x16xbf16> to vector<4x256xbf16>
    %c24 = arith.constant 24 : index
    %c0_10 = arith.constant 0 : index
    %23 = vector.load %arg6[%c24, %c0_10] : memref<36x256xbf16, #tpu.memory_space<vmem>>, vector<4x256xbf16>
    tpu.vector_store %arg6[%c24, %c0_10], %22 {strides = array<i32>} : memref<36x256xbf16, #tpu.memory_space<vmem>>, vector<4x256xbf16>,
    %24 = vector.extract_strided_slice %2 {offsets = [0, 2, 1], sizes = [4, 16, 16], strides = [1, 1, 1]} : vector<4x18x18xbf16> to vector<4x16x16xbf16>
    %25 = vector.shape_cast %24 : vector<4x16x16xbf16> to vector<4x256xbf16>
    %c28 = arith.constant 28 : index
    %c0_11 = arith.constant 0 : index
    %26 = vector.load %arg6[%c28, %c0_11] : memref<36x256xbf16, #tpu.memory_space<vmem>>, vector<4x256xbf16>
    tpu.vector_store %arg6[%c28, %c0_11], %25 {strides = array<i32>} : memref<36x256xbf16, #tpu.memory_space<vmem>>, vector<4x256xbf16>,
    %27 = vector.extract_strided_slice %2 {offsets = [0, 2, 2], sizes = [4, 16, 16], strides = [1, 1, 1]} : vector<4x18x18xbf16> to vector<4x16x16xbf16>
    %28 = vector.shape_cast %27 : vector<4x16x16xbf16> to vector<4x256xbf16>
    %c32 = arith.constant 32 : index
    %c0_12 = arith.constant 0 : index
    %29 = vector.load %arg6[%c32, %c0_12] : memref<36x256xbf16, #tpu.memory_space<vmem>>, vector<4x256xbf16>
    tpu.vector_store %arg6[%c32, %c0_12], %28 {strides = array<i32>} : memref<36x256xbf16, #tpu.memory_space<vmem>>, vector<4x256xbf16>,
    %c0_13 = arith.constant 0 : index
    %c0_14 = arith.constant 0 : index
    %30 = vector.load %arg3[%c0_13, %c0_14] : memref<4x36xbf16, #tpu.memory_space<vmem>>, vector<4x36xbf16>
    %c0_15 = arith.constant 0 : index
    %c0_16 = arith.constant 0 : index
    %31 = vector.load %arg6[%c0_15, %c0_16] : memref<36x256xbf16, #tpu.memory_space<vmem>>, vector<36x256xbf16>
    %cst = arith.constant dense<0.000000e+00> : vector<4x256xf32>
    %32 = tpu.matmul %30, %31, %cst {dimension_numbers = #tpu.dot_dimension_numbers<[1], [0], [0], [1], [0, 0, 1, 1], [], []>} : vector<4x36xbf16>, vector<36x256xbf16>, vector<4x256xf32> -> vector<4x256xf32>
    %cst_17 = arith.constant dense<0.000000e+00> : vector<4xf32>
    %33 = vector.multi_reduction <add>, %32, %cst_17 [1] : vector<4x256xf32> to vector<4xf32>
    %34 = vector.shape_cast %33 : vector<4xf32> to vector<4x1xf32>
    %35 = arith.mulf %32, %32 : vector<4x256xf32>
    %cst_18 = arith.constant dense<0.000000e+00> : vector<4xf32>
    %36 = vector.multi_reduction <add>, %35, %cst_18 [1] : vector<4x256xf32> to vector<4xf32>
    %37 = vector.shape_cast %36 : vector<4xf32> to vector<4x1xf32>
    %cst_19 = arith.constant 3.906250e-03 : f32
    %38 = vector.broadcast %cst_19 : f32 to vector<4x1xf32>
    %39 = arith.mulf %34, %38 : vector<4x1xf32>
    %cst_20 = arith.constant 3.906250e-03 : f32
    %40 = vector.broadcast %cst_20 : f32 to vector<4x1xf32>
    %41 = arith.mulf %37, %40 : vector<4x1xf32>
    %42 = arith.mulf %39, %39 : vector<4x1xf32>
    %43 = arith.subf %41, %42 : vector<4x1xf32>
    %cst_21 = arith.constant 0.000000e+00 : f32
    %44 = vector.broadcast %cst_21 : f32 to vector<4x1xf32>
    %45 = arith.maximumf %43, %44 : vector<4x1xf32>
    %46 = vector.broadcast %39 : vector<4x1xf32> to vector<4x256xf32>
    %47 = arith.subf %32, %46 : vector<4x256xf32>
    %cst_22 = arith.constant 9.99999974E-6 : f32
    %48 = vector.broadcast %cst_22 : f32 to vector<4x1xf32>
    %49 = arith.addf %45, %48 : vector<4x1xf32>
    %50 = math.rsqrt %49 : vector<4x1xf32>
    %51 = vector.broadcast %50 : vector<4x1xf32> to vector<4x256xf32>
    %52 = arith.mulf %47, %51 : vector<4x256xf32>
    %cst_23 = arith.constant 0.000000e+00 : f32
    %53 = vector.broadcast %cst_23 : f32 to vector<4x256xf32>
    %54 = arith.maximumf %52, %53 : vector<4x256xf32>
    %55 = arith.truncf %54 : vector<4x256xf32> to vector<4x256xbf16>
    %56 = vector.shape_cast %55 : vector<4x256xbf16> to vector<4x16x16xbf16>
    %57 = vector.extract_strided_slice %56 {offsets = [0, 1, 0], sizes = [4, 1, 16], strides = [1, 1, 1]} : vector<4x16x16xbf16> to vector<4x1x16xbf16>
    %58 = vector.extract_strided_slice %56 {offsets = [0, 14, 0], sizes = [4, 1, 16], strides = [1, 1, 1]} : vector<4x16x16xbf16> to vector<4x1x16xbf16>
    %59 = tpu.concatenate %57, %56, %58 in 1 : vector<4x1x16xbf16>, vector<4x16x16xbf16>, vector<4x1x16xbf16> -> vector<4x18x16xbf16>
    %c0_24 = arith.constant 0 : index
    %c0_25 = arith.constant 0 : index
    %c1 = arith.constant 1 : index
    %60 = vector.load %arg7[%c0_24, %c0_25, %c1] : memref<4x18x18xbf16, #tpu.memory_space<vmem>>, vector<4x18x16xbf16>
    tpu.vector_store %arg7[%c0_24, %c0_25, %c1], %59 {strides = array<i32>} : memref<4x18x18xbf16, #tpu.memory_space<vmem>>, vector<4x18x16xbf16>,
    %61 = vector.extract_strided_slice %59 {offsets = [0, 0, 1], sizes = [4, 18, 1], strides = [1, 1, 1]} : vector<4x18x16xbf16> to vector<4x18x1xbf16>
    %c0_26 = arith.constant 0 : index
    %c0_27 = arith.constant 0 : index
    %c0_28 = arith.constant 0 : index
    %62 = vector.load %arg7[%c0_26, %c0_27, %c0_28] : memref<4x18x18xbf16, #tpu.memory_space<vmem>>, vector<4x18x1xbf16>
    tpu.vector_store %arg7[%c0_26, %c0_27, %c0_28], %61 {strides = array<i32>} : memref<4x18x18xbf16, #tpu.memory_space<vmem>>, vector<4x18x1xbf16>,
    %63 = vector.extract_strided_slice %59 {offsets = [0, 0, 14], sizes = [4, 18, 1], strides = [1, 1, 1]} : vector<4x18x16xbf16> to vector<4x18x1xbf16>
    %c0_29 = arith.constant 0 : index
    %c0_30 = arith.constant 0 : index
    %c17 = arith.constant 17 : index
    %64 = vector.load %arg7[%c0_29, %c0_30, %c17] : memref<4x18x18xbf16, #tpu.memory_space<vmem>>, vector<4x18x1xbf16>
    tpu.vector_store %arg7[%c0_29, %c0_30, %c17], %63 {strides = array<i32>} : memref<4x18x18xbf16, #tpu.memory_space<vmem>>, vector<4x18x1xbf16>,
    %c0_31 = arith.constant 0 : index
    %c0_32 = arith.constant 0 : index
    %c0_33 = arith.constant 0 : index
    %65 = vector.load %arg7[%c0_31, %c0_32, %c0_33] : memref<4x18x18xbf16, #tpu.memory_space<vmem>>, vector<4x16x16xbf16>
    %66 = vector.shape_cast %65 : vector<4x16x16xbf16> to vector<4x256xbf16>
    %c0_34 = arith.constant 0 : index
    %c0_35 = arith.constant 0 : index
    %67 = vector.load %arg6[%c0_34, %c0_35] : memref<36x256xbf16, #tpu.memory_space<vmem>>, vector<4x256xbf16>
    tpu.vector_store %arg6[%c0_34, %c0_35], %66 {strides = array<i32>} : memref<36x256xbf16, #tpu.memory_space<vmem>>, vector<4x256xbf16>,
    %c0_36 = arith.constant 0 : index
    %c0_37 = arith.constant 0 : index
    %c1_38 = arith.constant 1 : index
    %68 = vector.load %arg7[%c0_36, %c0_37, %c1_38] : memref<4x18x18xbf16, #tpu.memory_space<vmem>>, vector<4x16x16xbf16>
    %69 = vector.shape_cast %68 : vector<4x16x16xbf16> to vector<4x256xbf16>
    %c4_39 = arith.constant 4 : index
    %c0_40 = arith.constant 0 : index
    %70 = vector.load %arg6[%c4_39, %c0_40] : memref<36x256xbf16, #tpu.memory_space<vmem>>, vector<4x256xbf16>
    tpu.vector_store %arg6[%c4_39, %c0_40], %69 {strides = array<i32>} : memref<36x256xbf16, #tpu.memory_space<vmem>>, vector<4x256xbf16>,
    %c0_41 = arith.constant 0 : index
    %c0_42 = arith.constant 0 : index
    %c2 = arith.constant 2 : index
    %71 = vector.load %arg7[%c0_41, %c0_42, %c2] : memref<4x18x18xbf16, #tpu.memory_space<vmem>>, vector<4x16x16xbf16>
    %72 = vector.shape_cast %71 : vector<4x16x16xbf16> to vector<4x256xbf16>
    %c8_43 = arith.constant 8 : index
    %c0_44 = arith.constant 0 : index
    %73 = vector.load %arg6[%c8_43, %c0_44] : memref<36x256xbf16, #tpu.memory_space<vmem>>, vector<4x256xbf16>
    tpu.vector_store %arg6[%c8_43, %c0_44], %72 {strides = array<i32>} : memref<36x256xbf16, #tpu.memory_space<vmem>>, vector<4x256xbf16>,
    %c0_45 = arith.constant 0 : index
    %c1_46 = arith.constant 1 : index
    %c0_47 = arith.constant 0 : index
    %74 = vector.load %arg7[%c0_45, %c1_46, %c0_47] : memref<4x18x18xbf16, #tpu.memory_space<vmem>>, vector<4x16x16xbf16>
    %75 = vector.shape_cast %74 : vector<4x16x16xbf16> to vector<4x256xbf16>
    %c12_48 = arith.constant 12 : index
    %c0_49 = arith.constant 0 : index
    %76 = vector.load %arg6[%c12_48, %c0_49] : memref<36x256xbf16, #tpu.memory_space<vmem>>, vector<4x256xbf16>
    tpu.vector_store %arg6[%c12_48, %c0_49], %75 {strides = array<i32>} : memref<36x256xbf16, #tpu.memory_space<vmem>>, vector<4x256xbf16>,
    %c0_50 = arith.constant 0 : index
    %c1_51 = arith.constant 1 : index
    %c1_52 = arith.constant 1 : index
    %77 = vector.load %arg7[%c0_50, %c1_51, %c1_52] : memref<4x18x18xbf16, #tpu.memory_space<vmem>>, vector<4x16x16xbf16>
    %78 = vector.shape_cast %77 : vector<4x16x16xbf16> to vector<4x256xbf16>
    %c16_53 = arith.constant 16 : index
    %c0_54 = arith.constant 0 : index
    %79 = vector.load %arg6[%c16_53, %c0_54] : memref<36x256xbf16, #tpu.memory_space<vmem>>, vector<4x256xbf16>
    tpu.vector_store %arg6[%c16_53, %c0_54], %78 {strides = array<i32>} : memref<36x256xbf16, #tpu.memory_space<vmem>>, vector<4x256xbf16>,
    %c0_55 = arith.constant 0 : index
    %c1_56 = arith.constant 1 : index
    %c2_57 = arith.constant 2 : index
    %80 = vector.load %arg7[%c0_55, %c1_56, %c2_57] : memref<4x18x18xbf16, #tpu.memory_space<vmem>>, vector<4x16x16xbf16>
    %81 = vector.shape_cast %80 : vector<4x16x16xbf16> to vector<4x256xbf16>
    %c20_58 = arith.constant 20 : index
    %c0_59 = arith.constant 0 : index
    %82 = vector.load %arg6[%c20_58, %c0_59] : memref<36x256xbf16, #tpu.memory_space<vmem>>, vector<4x256xbf16>
    tpu.vector_store %arg6[%c20_58, %c0_59], %81 {strides = array<i32>} : memref<36x256xbf16, #tpu.memory_space<vmem>>, vector<4x256xbf16>,
    %c0_60 = arith.constant 0 : index
    %c2_61 = arith.constant 2 : index
    %c0_62 = arith.constant 0 : index
    %83 = vector.load %arg7[%c0_60, %c2_61, %c0_62] : memref<4x18x18xbf16, #tpu.memory_space<vmem>>, vector<4x16x16xbf16>
    %84 = vector.shape_cast %83 : vector<4x16x16xbf16> to vector<4x256xbf16>
    %c24_63 = arith.constant 24 : index
    %c0_64 = arith.constant 0 : index
    %85 = vector.load %arg6[%c24_63, %c0_64] : memref<36x256xbf16, #tpu.memory_space<vmem>>, vector<4x256xbf16>
    tpu.vector_store %arg6[%c24_63, %c0_64], %84 {strides = array<i32>} : memref<36x256xbf16, #tpu.memory_space<vmem>>, vector<4x256xbf16>,
    %c0_65 = arith.constant 0 : index
    %c2_66 = arith.constant 2 : index
    %c1_67 = arith.constant 1 : index
    %86 = vector.load %arg7[%c0_65, %c2_66, %c1_67] : memref<4x18x18xbf16, #tpu.memory_space<vmem>>, vector<4x16x16xbf16>
    %87 = vector.shape_cast %86 : vector<4x16x16xbf16> to vector<4x256xbf16>
    %c28_68 = arith.constant 28 : index
    %c0_69 = arith.constant 0 : index
    %88 = vector.load %arg6[%c28_68, %c0_69] : memref<36x256xbf16, #tpu.memory_space<vmem>>, vector<4x256xbf16>
    tpu.vector_store %arg6[%c28_68, %c0_69], %87 {strides = array<i32>} : memref<36x256xbf16, #tpu.memory_space<vmem>>, vector<4x256xbf16>,
    %c0_70 = arith.constant 0 : index
    %c2_71 = arith.constant 2 : index
    %c2_72 = arith.constant 2 : index
    %89 = vector.load %arg7[%c0_70, %c2_71, %c2_72] : memref<4x18x18xbf16, #tpu.memory_space<vmem>>, vector<4x16x16xbf16>
    %90 = vector.shape_cast %89 : vector<4x16x16xbf16> to vector<4x256xbf16>
    %c32_73 = arith.constant 32 : index
    %c0_74 = arith.constant 0 : index
    %91 = vector.load %arg6[%c32_73, %c0_74] : memref<36x256xbf16, #tpu.memory_space<vmem>>, vector<4x256xbf16>
    tpu.vector_store %arg6[%c32_73, %c0_74], %90 {strides = array<i32>} : memref<36x256xbf16, #tpu.memory_space<vmem>>, vector<4x256xbf16>,
    %c0_75 = arith.constant 0 : index
    %c0_76 = arith.constant 0 : index
    %92 = vector.load %arg4[%c0_75, %c0_76] : memref<4x36xbf16, #tpu.memory_space<vmem>>, vector<4x36xbf16>
    %c0_77 = arith.constant 0 : index
    %c0_78 = arith.constant 0 : index
    %93 = vector.load %arg6[%c0_77, %c0_78] : memref<36x256xbf16, #tpu.memory_space<vmem>>, vector<36x256xbf16>
    %cst_79 = arith.constant dense<0.000000e+00> : vector<4x256xf32>
    %94 = tpu.matmul %92, %93, %cst_79 {dimension_numbers = #tpu.dot_dimension_numbers<[1], [0], [0], [1], [0, 0, 1, 1], [], []>} : vector<4x36xbf16>, vector<36x256xbf16>, vector<4x256xf32> -> vector<4x256xf32>
    %cst_80 = arith.constant dense<0.000000e+00> : vector<4xf32>
    %95 = vector.multi_reduction <add>, %94, %cst_80 [1] : vector<4x256xf32> to vector<4xf32>
    %96 = vector.shape_cast %95 : vector<4xf32> to vector<4x1xf32>
    %97 = arith.mulf %94, %94 : vector<4x256xf32>
    %cst_81 = arith.constant dense<0.000000e+00> : vector<4xf32>
    %98 = vector.multi_reduction <add>, %97, %cst_81 [1] : vector<4x256xf32> to vector<4xf32>
    %99 = vector.shape_cast %98 : vector<4xf32> to vector<4x1xf32>
    %cst_82 = arith.constant 3.906250e-03 : f32
    %100 = vector.broadcast %cst_82 : f32 to vector<4x1xf32>
    %101 = arith.mulf %96, %100 : vector<4x1xf32>
    %cst_83 = arith.constant 3.906250e-03 : f32
    %102 = vector.broadcast %cst_83 : f32 to vector<4x1xf32>
    %103 = arith.mulf %99, %102 : vector<4x1xf32>
    %104 = arith.mulf %101, %101 : vector<4x1xf32>
    %105 = arith.subf %103, %104 : vector<4x1xf32>
    %cst_84 = arith.constant 0.000000e+00 : f32
    %106 = vector.broadcast %cst_84 : f32 to vector<4x1xf32>
    %107 = arith.maximumf %105, %106 : vector<4x1xf32>
    %108 = vector.broadcast %101 : vector<4x1xf32> to vector<4x256xf32>
    %109 = arith.subf %94, %108 : vector<4x256xf32>
    %cst_85 = arith.constant 9.99999974E-6 : f32
    %110 = vector.broadcast %cst_85 : f32 to vector<4x1xf32>
    %111 = arith.addf %107, %110 : vector<4x1xf32>
    %112 = math.rsqrt %111 : vector<4x1xf32>
    %113 = vector.broadcast %112 : vector<4x1xf32> to vector<4x256xf32>
    %114 = arith.mulf %109, %113 : vector<4x256xf32>
    %c0_86 = arith.constant 0 : index
    %c0_87 = arith.constant 0 : index
    %c0_88 = arith.constant 0 : index
    %115 = vector.load %arg2[%c0_86, %c0_87, %c0_88] : memref<1x4x256xf32, #tpu.memory_space<vmem>>, vector<1x4x256xf32>
    %116 = vector.shape_cast %115 : vector<1x4x256xf32> to vector<4x256xf32>
    %117 = arith.addf %116, %114 : vector<4x256xf32>
    %c0_89 = arith.constant 0 : index
    %c0_90 = arith.constant 0 : index
    %c0_91 = arith.constant 0 : index
    %118 = vector.load %arg5[%c0_89, %c0_90, %c0_91] : memref<1x4x256xf32, #tpu.memory_space<vmem>>, vector<1x4x256xf32>
    %119 = vector.shape_cast %118 : vector<1x4x256xf32> to vector<4x256xf32>
    %120 = vector.shape_cast %117 : vector<4x256xf32> to vector<1x4x256xf32>
    tpu.vector_store %arg5[%c0_89, %c0_90, %c0_91], %120 {strides = array<i32>} : memref<1x4x256xf32, #tpu.memory_space<vmem>>, vector<1x4x256xf32>,
    return
  }
  func.func @transform_0(%arg0: i32) -> (i32, i32, i32, i32) {
    %c0_i32 = arith.constant 0 : i32
    %c0_i32_0 = arith.constant 0 : i32
    %c0_i32_1 = arith.constant 0 : i32
    %c0_i32_2 = arith.constant 0 : i32
    return %arg0, %c0_i32, %c0_i32_0, %c0_i32_1 : i32, i32, i32, i32
  }
  func.func @transform_1(%arg0: i32) -> (i32, i32, i32) {
    %c0_i32 = arith.constant 0 : i32
    %c0_i32_0 = arith.constant 0 : i32
    %c0_i32_1 = arith.constant 0 : i32
    return %arg0, %c0_i32, %c0_i32_0 : i32, i32, i32
  }
  func.func @transform_2(%arg0: i32) -> (i32, i32) {
    %c0_i32 = arith.constant 0 : i32
    %c0_i32_0 = arith.constant 0 : i32
    %c0_i32_1 = arith.constant 0 : i32
    return %c0_i32, %c0_i32_0 : i32, i32
  }
  func.func @transform_3(%arg0: i32) -> (i32, i32) {
    %c0_i32 = arith.constant 0 : i32
    %c0_i32_0 = arith.constant 0 : i32
    %c0_i32_1 = arith.constant 0 : i32
    return %c0_i32, %c0_i32_0 : i32, i32
  }
  func.func @transform_4(%arg0: i32) -> (i32, i32, i32) {
    %c0_i32 = arith.constant 0 : i32
    %c0_i32_0 = arith.constant 0 : i32
    %c0_i32_1 = arith.constant 0 : i32
    return %arg0, %c0_i32, %c0_i32_0 : i32, i32, i32
  }
}

module attributes {stable_mosaic.version = 11 : i64} {
  func.func @_resnet_block_kernel(%arg0: i32, %arg1: memref<1x4x18x18xf32, #tpu.memory_space<vmem>>, %arg2: memref<1x4x256xf32, #tpu.memory_space<vmem>>, %arg3: memref<4x36xbf16, #tpu.memory_space<vmem>>, %arg4: memref<4x36xbf16, #tpu.memory_space<vmem>>, %arg5: memref<1x4x256xf32, #tpu.memory_space<vmem>>, %arg6: memref<36x256xbf16, #tpu.memory_space<vmem>>, %arg7: memref<4x18x18xbf16, #tpu.memory_space<vmem>>) attributes {dimension_semantics = [#tpu.dimension_semantics<parallel>], iteration_bounds = array<i64: 2>, scalar_prefetch = 0 : i64, scratch_operands = 2 : i64, tpu.core_type = #tpu.core_type<tc>, window_params = [{transform_indices = @transform_0, window_bounds = array<i64: 1, 4, 18, 18>}, {transform_indices = @transform_1, window_bounds = array<i64: 1, 4, 256>}, {pipeline_mode = #tpu.pipeline_mode<synchronous>, transform_indices = @transform_2, window_bounds = array<i64: 4, 36>}, {pipeline_mode = #tpu.pipeline_mode<synchronous>, transform_indices = @transform_3, window_bounds = array<i64: 4, 36>}, {transform_indices = @transform_4, window_bounds = array<i64: 1, 4, 256>}]} {
    %c0 = arith.constant 0 : index
    %c0_0 = arith.constant 0 : index
    %c0_1 = arith.constant 0 : index
    %c0_2 = arith.constant 0 : index
    %0 = vector.load %arg1[%c0, %c0_0, %c0_1, %c0_2] : memref<1x4x18x18xf32, #tpu.memory_space<vmem>>, vector<1x4x18x18xf32>
    %1 = vector.shape_cast %0 : vector<1x4x18x18xf32> to vector<4x18x18xf32>
    %2 = arith.truncf %1 : vector<4x18x18xf32> to vector<4x18x18xbf16>
    %3 = vector.extract_strided_slice %2 {offsets = [0, 0, 0], sizes = [4, 16, 16], strides = [1, 1, 1]} : vector<4x18x18xbf16> to vector<4x16x16xbf16>
    %4 = vector.shape_cast %3 : vector<4x16x16xbf16> to vector<4x256xbf16>
    %c0_3 = arith.constant 0 : index
    %c0_4 = arith.constant 0 : index
    %5 = vector.load %arg6[%c0_3, %c0_4] : memref<36x256xbf16, #tpu.memory_space<vmem>>, vector<4x256xbf16>
    tpu.vector_store %arg6[%c0_3, %c0_4], %4 {strides = array<i32>} : memref<36x256xbf16, #tpu.memory_space<vmem>>, vector<4x256xbf16>,
    %6 = vector.extract_strided_slice %2 {offsets = [0, 0, 1], sizes = [4, 16, 16], strides = [1, 1, 1]} : vector<4x18x18xbf16> to vector<4x16x16xbf16>
    %7 = vector.shape_cast %6 : vector<4x16x16xbf16> to vector<4x256xbf16>
    %c4 = arith.constant 4 : index
    %c0_5 = arith.constant 0 : index
    %8 = vector.load %arg6[%c4, %c0_5] : memref<36x256xbf16, #tpu.memory_space<vmem>>, vector<4x256xbf16>
    tpu.vector_store %arg6[%c4, %c0_5], %7 {strides = array<i32>} : memref<36x256xbf16, #tpu.memory_space<vmem>>, vector<4x256xbf16>,
    %9 = vector.extract_strided_slice %2 {offsets = [0, 0, 2], sizes = [4, 16, 16], strides = [1, 1, 1]} : vector<4x18x18xbf16> to vector<4x16x16xbf16>
    %10 = vector.shape_cast %9 : vector<4x16x16xbf16> to vector<4x256xbf16>
    %c8 = arith.constant 8 : index
    %c0_6 = arith.constant 0 : index
    %11 = vector.load %arg6[%c8, %c0_6] : memref<36x256xbf16, #tpu.memory_space<vmem>>, vector<4x256xbf16>
    tpu.vector_store %arg6[%c8, %c0_6], %10 {strides = array<i32>} : memref<36x256xbf16, #tpu.memory_space<vmem>>, vector<4x256xbf16>,
    %12 = vector.extract_strided_slice %2 {offsets = [0, 1, 0], sizes = [4, 16, 16], strides = [1, 1, 1]} : vector<4x18x18xbf16> to vector<4x16x16xbf16>
    %13 = vector.shape_cast %12 : vector<4x16x16xbf16> to vector<4x256xbf16>
    %c12 = arith.constant 12 : index
    %c0_7 = arith.constant 0 : index
    %14 = vector.load %arg6[%c12, %c0_7] : memref<36x256xbf16, #tpu.memory_space<vmem>>, vector<4x256xbf16>
    tpu.vector_store %arg6[%c12, %c0_7], %13 {strides = array<i32>} : memref<36x256xbf16, #tpu.memory_space<vmem>>, vector<4x256xbf16>,
    %15 = vector.extract_strided_slice %2 {offsets = [0, 1, 1], sizes = [4, 16, 16], strides = [1, 1, 1]} : vector<4x18x18xbf16> to vector<4x16x16xbf16>
    %16 = vector.shape_cast %15 : vector<4x16x16xbf16> to vector<4x256xbf16>
    %c16 = arith.constant 16 : index
    %c0_8 = arith.constant 0 : index
    %17 = vector.load %arg6[%c16, %c0_8] : memref<36x256xbf16, #tpu.memory_space<vmem>>, vector<4x256xbf16>
    tpu.vector_store %arg6[%c16, %c0_8], %16 {strides = array<i32>} : memref<36x256xbf16, #tpu.memory_space<vmem>>, vector<4x256xbf16>,
    %18 = vector.extract_strided_slice %2 {offsets = [0, 1, 2], sizes = [4, 16, 16], strides = [1, 1, 1]} : vector<4x18x18xbf16> to vector<4x16x16xbf16>
    %19 = vector.shape_cast %18 : vector<4x16x16xbf16> to vector<4x256xbf16>
    %c20 = arith.constant 20 : index
    %c0_9 = arith.constant 0 : index
    %20 = vector.load %arg6[%c20, %c0_9] : memref<36x256xbf16, #tpu.memory_space<vmem>>, vector<4x256xbf16>
    tpu.vector_store %arg6[%c20, %c0_9], %19 {strides = array<i32>} : memref<36x256xbf16, #tpu.memory_space<vmem>>, vector<4x256xbf16>,
    %21 = vector.extract_strided_slice %2 {offsets = [0, 2, 0], sizes = [4, 16, 16], strides = [1, 1, 1]} : vector<4x18x18xbf16> to vector<4x16x16xbf16>
    %22 = vector.shape_cast %21 : vector<4x16x16xbf16> to vector<4x256xbf16>
    %c24 = arith.constant 24 : index
    %c0_10 = arith.constant 0 : index
    %23 = vector.load %arg6[%c24, %c0_10] : memref<36x256xbf16, #tpu.memory_space<vmem>>, vector<4x256xbf16>
    tpu.vector_store %arg6[%c24, %c0_10], %22 {strides = array<i32>} : memref<36x256xbf16, #tpu.memory_space<vmem>>, vector<4x256xbf16>,
    %24 = vector.extract_strided_slice %2 {offsets = [0, 2, 1], sizes = [4, 16, 16], strides = [1, 1, 1]} : vector<4x18x18xbf16> to vector<4x16x16xbf16>
    %25 = vector.shape_cast %24 : vector<4x16x16xbf16> to vector<4x256xbf16>
    %c28 = arith.constant 28 : index
    %c0_11 = arith.constant 0 : index
    %26 = vector.load %arg6[%c28, %c0_11] : memref<36x256xbf16, #tpu.memory_space<vmem>>, vector<4x256xbf16>
    tpu.vector_store %arg6[%c28, %c0_11], %25 {strides = array<i32>} : memref<36x256xbf16, #tpu.memory_space<vmem>>, vector<4x256xbf16>,
    %27 = vector.extract_strided_slice %2 {offsets = [0, 2, 2], sizes = [4, 16, 16], strides = [1, 1, 1]} : vector<4x18x18xbf16> to vector<4x16x16xbf16>
    %28 = vector.shape_cast %27 : vector<4x16x16xbf16> to vector<4x256xbf16>
    %c32 = arith.constant 32 : index
    %c0_12 = arith.constant 0 : index
    %29 = vector.load %arg6[%c32, %c0_12] : memref<36x256xbf16, #tpu.memory_space<vmem>>, vector<4x256xbf16>
    tpu.vector_store %arg6[%c32, %c0_12], %28 {strides = array<i32>} : memref<36x256xbf16, #tpu.memory_space<vmem>>, vector<4x256xbf16>,
    %c0_13 = arith.constant 0 : index
    %c0_14 = arith.constant 0 : index
    %30 = vector.load %arg3[%c0_13, %c0_14] : memref<4x36xbf16, #tpu.memory_space<vmem>>, vector<4x36xbf16>
    %c0_15 = arith.constant 0 : index
    %c0_16 = arith.constant 0 : index
    %31 = vector.load %arg6[%c0_15, %c0_16] : memref<36x256xbf16, #tpu.memory_space<vmem>>, vector<36x256xbf16>
    %cst = arith.constant dense<0.000000e+00> : vector<4x256xf32>
    %32 = tpu.matmul %30, %31, %cst {dimension_numbers = #tpu.dot_dimension_numbers<[1], [0], [0], [1], [0, 0, 1, 1], [], []>} : vector<4x36xbf16>, vector<36x256xbf16>, vector<4x256xf32> -> vector<4x256xf32>
    %cst_17 = arith.constant dense<0.000000e+00> : vector<4xf32>
    %33 = vector.multi_reduction <add>, %32, %cst_17 [1] : vector<4x256xf32> to vector<4xf32>
    %34 = vector.shape_cast %33 : vector<4xf32> to vector<4x1xf32>
    %35 = arith.mulf %32, %32 : vector<4x256xf32>
    %cst_18 = arith.constant dense<0.000000e+00> : vector<4xf32>
    %36 = vector.multi_reduction <add>, %35, %cst_18 [1] : vector<4x256xf32> to vector<4xf32>
    %37 = vector.shape_cast %36 : vector<4xf32> to vector<4x1xf32>
    %cst_19 = arith.constant 3.906250e-03 : f32
    %38 = vector.broadcast %cst_19 : f32 to vector<4x1xf32>
    %39 = arith.mulf %34, %38 : vector<4x1xf32>
    %cst_20 = arith.constant 3.906250e-03 : f32
    %40 = vector.broadcast %cst_20 : f32 to vector<4x1xf32>
    %41 = arith.mulf %37, %40 : vector<4x1xf32>
    %42 = arith.mulf %39, %39 : vector<4x1xf32>
    %43 = arith.subf %41, %42 : vector<4x1xf32>
    %cst_21 = arith.constant 0.000000e+00 : f32
    %44 = vector.broadcast %cst_21 : f32 to vector<4x1xf32>
    %45 = arith.maximumf %43, %44 : vector<4x1xf32>
    %46 = vector.broadcast %39 : vector<4x1xf32> to vector<4x256xf32>
    %47 = arith.subf %32, %46 : vector<4x256xf32>
    %cst_22 = arith.constant 9.99999974E-6 : f32
    %48 = vector.broadcast %cst_22 : f32 to vector<4x1xf32>
    %49 = arith.addf %45, %48 : vector<4x1xf32>
    %50 = math.rsqrt %49 : vector<4x1xf32>
    %51 = vector.broadcast %50 : vector<4x1xf32> to vector<4x256xf32>
    %52 = arith.mulf %47, %51 : vector<4x256xf32>
    %cst_23 = arith.constant 0.000000e+00 : f32
    %53 = vector.broadcast %cst_23 : f32 to vector<4x256xf32>
    %54 = arith.maximumf %52, %53 : vector<4x256xf32>
    %55 = arith.truncf %54 : vector<4x256xf32> to vector<4x256xbf16>
    %56 = vector.shape_cast %55 : vector<4x256xbf16> to vector<4x16x16xbf16>
    %57 = vector.extract_strided_slice %56 {offsets = [0, 1, 0], sizes = [4, 1, 16], strides = [1, 1, 1]} : vector<4x16x16xbf16> to vector<4x1x16xbf16>
    %58 = vector.extract_strided_slice %56 {offsets = [0, 14, 0], sizes = [4, 1, 16], strides = [1, 1, 1]} : vector<4x16x16xbf16> to vector<4x1x16xbf16>
    %59 = tpu.concatenate %57, %56, %58 in 1 : vector<4x1x16xbf16>, vector<4x16x16xbf16>, vector<4x1x16xbf16> -> vector<4x18x16xbf16>
    %c0_24 = arith.constant 0 : index
    %c0_25 = arith.constant 0 : index
    %c1 = arith.constant 1 : index
    %60 = vector.load %arg7[%c0_24, %c0_25, %c1] : memref<4x18x18xbf16, #tpu.memory_space<vmem>>, vector<4x18x16xbf16>
    tpu.vector_store %arg7[%c0_24, %c0_25, %c1], %59 {strides = array<i32>} : memref<4x18x18xbf16, #tpu.memory_space<vmem>>, vector<4x18x16xbf16>,
    %61 = vector.extract_strided_slice %59 {offsets = [0, 0, 1], sizes = [4, 18, 1], strides = [1, 1, 1]} : vector<4x18x16xbf16> to vector<4x18x1xbf16>
    %c0_26 = arith.constant 0 : index
    %c0_27 = arith.constant 0 : index
    %c0_28 = arith.constant 0 : index
    %62 = vector.load %arg7[%c0_26, %c0_27, %c0_28] : memref<4x18x18xbf16, #tpu.memory_space<vmem>>, vector<4x18x1xbf16>
    tpu.vector_store %arg7[%c0_26, %c0_27, %c0_28], %61 {strides = array<i32>} : memref<4x18x18xbf16, #tpu.memory_space<vmem>>, vector<4x18x1xbf16>,
    %63 = vector.extract_strided_slice %59 {offsets = [0, 0, 14], sizes = [4, 18, 1], strides = [1, 1, 1]} : vector<4x18x16xbf16> to vector<4x18x1xbf16>
    %c0_29 = arith.constant 0 : index
    %c0_30 = arith.constant 0 : index
    %c17 = arith.constant 17 : index
    %64 = vector.load %arg7[%c0_29, %c0_30, %c17] : memref<4x18x18xbf16, #tpu.memory_space<vmem>>, vector<4x18x1xbf16>
    tpu.vector_store %arg7[%c0_29, %c0_30, %c17], %63 {strides = array<i32>} : memref<4x18x18xbf16, #tpu.memory_space<vmem>>, vector<4x18x1xbf16>,
    %c0_31 = arith.constant 0 : index
    %c0_32 = arith.constant 0 : index
    %c0_33 = arith.constant 0 : index
    %65 = vector.load %arg7[%c0_31, %c0_32, %c0_33] : memref<4x18x18xbf16, #tpu.memory_space<vmem>>, vector<4x16x16xbf16>
    %66 = vector.shape_cast %65 : vector<4x16x16xbf16> to vector<4x256xbf16>
    %c0_34 = arith.constant 0 : index
    %c0_35 = arith.constant 0 : index
    %67 = vector.load %arg6[%c0_34, %c0_35] : memref<36x256xbf16, #tpu.memory_space<vmem>>, vector<4x256xbf16>
    tpu.vector_store %arg6[%c0_34, %c0_35], %66 {strides = array<i32>} : memref<36x256xbf16, #tpu.memory_space<vmem>>, vector<4x256xbf16>,
    %c0_36 = arith.constant 0 : index
    %c0_37 = arith.constant 0 : index
    %c1_38 = arith.constant 1 : index
    %68 = vector.load %arg7[%c0_36, %c0_37, %c1_38] : memref<4x18x18xbf16, #tpu.memory_space<vmem>>, vector<4x16x16xbf16>
    %69 = vector.shape_cast %68 : vector<4x16x16xbf16> to vector<4x256xbf16>
    %c4_39 = arith.constant 4 : index
    %c0_40 = arith.constant 0 : index
    %70 = vector.load %arg6[%c4_39, %c0_40] : memref<36x256xbf16, #tpu.memory_space<vmem>>, vector<4x256xbf16>
    tpu.vector_store %arg6[%c4_39, %c0_40], %69 {strides = array<i32>} : memref<36x256xbf16, #tpu.memory_space<vmem>>, vector<4x256xbf16>,
    %c0_41 = arith.constant 0 : index
    %c0_42 = arith.constant 0 : index
    %c2 = arith.constant 2 : index
    %71 = vector.load %arg7[%c0_41, %c0_42, %c2] : memref<4x18x18xbf16, #tpu.memory_space<vmem>>, vector<4x16x16xbf16>
    %72 = vector.shape_cast %71 : vector<4x16x16xbf16> to vector<4x256xbf16>
    %c8_43 = arith.constant 8 : index
    %c0_44 = arith.constant 0 : index
    %73 = vector.load %arg6[%c8_43, %c0_44] : memref<36x256xbf16, #tpu.memory_space<vmem>>, vector<4x256xbf16>
    tpu.vector_store %arg6[%c8_43, %c0_44], %72 {strides = array<i32>} : memref<36x256xbf16, #tpu.memory_space<vmem>>, vector<4x256xbf16>,
    %c0_45 = arith.constant 0 : index
    %c1_46 = arith.constant 1 : index
    %c0_47 = arith.constant 0 : index
    %74 = vector.load %arg7[%c0_45, %c1_46, %c0_47] : memref<4x18x18xbf16, #tpu.memory_space<vmem>>, vector<4x16x16xbf16>
    %75 = vector.shape_cast %74 : vector<4x16x16xbf16> to vector<4x256xbf16>
    %c12_48 = arith.constant 12 : index
    %c0_49 = arith.constant 0 : index
    %76 = vector.load %arg6[%c12_48, %c0_49] : memref<36x256xbf16, #tpu.memory_space<vmem>>, vector<4x256xbf16>
    tpu.vector_store %arg6[%c12_48, %c0_49], %75 {strides = array<i32>} : memref<36x256xbf16, #tpu.memory_space<vmem>>, vector<4x256xbf16>,
    %c0_50 = arith.constant 0 : index
    %c1_51 = arith.constant 1 : index
    %c1_52 = arith.constant 1 : index
    %77 = vector.load %arg7[%c0_50, %c1_51, %c1_52] : memref<4x18x18xbf16, #tpu.memory_space<vmem>>, vector<4x16x16xbf16>
    %78 = vector.shape_cast %77 : vector<4x16x16xbf16> to vector<4x256xbf16>
    %c16_53 = arith.constant 16 : index
    %c0_54 = arith.constant 0 : index
    %79 = vector.load %arg6[%c16_53, %c0_54] : memref<36x256xbf16, #tpu.memory_space<vmem>>, vector<4x256xbf16>
    tpu.vector_store %arg6[%c16_53, %c0_54], %78 {strides = array<i32>} : memref<36x256xbf16, #tpu.memory_space<vmem>>, vector<4x256xbf16>,
    %c0_55 = arith.constant 0 : index
    %c1_56 = arith.constant 1 : index
    %c2_57 = arith.constant 2 : index
    %80 = vector.load %arg7[%c0_55, %c1_56, %c2_57] : memref<4x18x18xbf16, #tpu.memory_space<vmem>>, vector<4x16x16xbf16>
    %81 = vector.shape_cast %80 : vector<4x16x16xbf16> to vector<4x256xbf16>
    %c20_58 = arith.constant 20 : index
    %c0_59 = arith.constant 0 : index
    %82 = vector.load %arg6[%c20_58, %c0_59] : memref<36x256xbf16, #tpu.memory_space<vmem>>, vector<4x256xbf16>
    tpu.vector_store %arg6[%c20_58, %c0_59], %81 {strides = array<i32>} : memref<36x256xbf16, #tpu.memory_space<vmem>>, vector<4x256xbf16>,
    %c0_60 = arith.constant 0 : index
    %c2_61 = arith.constant 2 : index
    %c0_62 = arith.constant 0 : index
    %83 = vector.load %arg7[%c0_60, %c2_61, %c0_62] : memref<4x18x18xbf16, #tpu.memory_space<vmem>>, vector<4x16x16xbf16>
    %84 = vector.shape_cast %83 : vector<4x16x16xbf16> to vector<4x256xbf16>
    %c24_63 = arith.constant 24 : index
    %c0_64 = arith.constant 0 : index
    %85 = vector.load %arg6[%c24_63, %c0_64] : memref<36x256xbf16, #tpu.memory_space<vmem>>, vector<4x256xbf16>
    tpu.vector_store %arg6[%c24_63, %c0_64], %84 {strides = array<i32>} : memref<36x256xbf16, #tpu.memory_space<vmem>>, vector<4x256xbf16>,
    %c0_65 = arith.constant 0 : index
    %c2_66 = arith.constant 2 : index
    %c1_67 = arith.constant 1 : index
    %86 = vector.load %arg7[%c0_65, %c2_66, %c1_67] : memref<4x18x18xbf16, #tpu.memory_space<vmem>>, vector<4x16x16xbf16>
    %87 = vector.shape_cast %86 : vector<4x16x16xbf16> to vector<4x256xbf16>
    %c28_68 = arith.constant 28 : index
    %c0_69 = arith.constant 0 : index
    %88 = vector.load %arg6[%c28_68, %c0_69] : memref<36x256xbf16, #tpu.memory_space<vmem>>, vector<4x256xbf16>
    tpu.vector_store %arg6[%c28_68, %c0_69], %87 {strides = array<i32>} : memref<36x256xbf16, #tpu.memory_space<vmem>>, vector<4x256xbf16>,
    %c0_70 = arith.constant 0 : index
    %c2_71 = arith.constant 2 : index
    %c2_72 = arith.constant 2 : index
    %89 = vector.load %arg7[%c0_70, %c2_71, %c2_72] : memref<4x18x18xbf16, #tpu.memory_space<vmem>>, vector<4x16x16xbf16>
    %90 = vector.shape_cast %89 : vector<4x16x16xbf16> to vector<4x256xbf16>
    %c32_73 = arith.constant 32 : index
    %c0_74 = arith.constant 0 : index
    %91 = vector.load %arg6[%c32_73, %c0_74] : memref<36x256xbf16, #tpu.memory_space<vmem>>, vector<4x256xbf16>
    tpu.vector_store %arg6[%c32_73, %c0_74], %90 {strides = array<i32>} : memref<36x256xbf16, #tpu.memory_space<vmem>>, vector<4x256xbf16>,
    %c0_75 = arith.constant 0 : index
    %c0_76 = arith.constant 0 : index
    %92 = vector.load %arg4[%c0_75, %c0_76] : memref<4x36xbf16, #tpu.memory_space<vmem>>, vector<4x36xbf16>
    %c0_77 = arith.constant 0 : index
    %c0_78 = arith.constant 0 : index
    %93 = vector.load %arg6[%c0_77, %c0_78] : memref<36x256xbf16, #tpu.memory_space<vmem>>, vector<36x256xbf16>
    %cst_79 = arith.constant dense<0.000000e+00> : vector<4x256xf32>
    %94 = tpu.matmul %92, %93, %cst_79 {dimension_numbers = #tpu.dot_dimension_numbers<[1], [0], [0], [1], [0, 0, 1, 1], [], []>} : vector<4x36xbf16>, vector<36x256xbf16>, vector<4x256xf32> -> vector<4x256xf32>
    %cst_80 = arith.constant dense<0.000000e+00> : vector<4xf32>
    %95 = vector.multi_reduction <add>, %94, %cst_80 [1] : vector<4x256xf32> to vector<4xf32>
    %96 = vector.shape_cast %95 : vector<4xf32> to vector<4x1xf32>
    %97 = arith.mulf %94, %94 : vector<4x256xf32>
    %cst_81 = arith.constant dense<0.000000e+00> : vector<4xf32>
    %98 = vector.multi_reduction <add>, %97, %cst_81 [1] : vector<4x256xf32> to vector<4xf32>
    %99 = vector.shape_cast %98 : vector<4xf32> to vector<4x1xf32>
    %cst_82 = arith.constant 3.906250e-03 : f32
    %100 = vector.broadcast %cst_82 : f32 to vector<4x1xf32>
    %101 = arith.mulf %96, %100 : vector<4x1xf32>
    %cst_83 = arith.constant 3.906250e-03 : f32
    %102 = vector.broadcast %cst_83 : f32 to vector<4x1xf32>
    %103 = arith.mulf %99, %102 : vector<4x1xf32>
    %104 = arith.mulf %101, %101 : vector<4x1xf32>
    %105 = arith.subf %103, %104 : vector<4x1xf32>
    %cst_84 = arith.constant 0.000000e+00 : f32
    %106 = vector.broadcast %cst_84 : f32 to vector<4x1xf32>
    %107 = arith.maximumf %105, %106 : vector<4x1xf32>
    %108 = vector.broadcast %101 : vector<4x1xf32> to vector<4x256xf32>
    %109 = arith.subf %94, %108 : vector<4x256xf32>
    %cst_85 = arith.constant 9.99999974E-6 : f32
    %110 = vector.broadcast %cst_85 : f32 to vector<4x1xf32>
    %111 = arith.addf %107, %110 : vector<4x1xf32>
    %112 = math.rsqrt %111 : vector<4x1xf32>
    %113 = vector.broadcast %112 : vector<4x1xf32> to vector<4x256xf32>
    %114 = arith.mulf %109, %113 : vector<4x256xf32>
    %c0_86 = arith.constant 0 : index
    %c0_87 = arith.constant 0 : index
    %c0_88 = arith.constant 0 : index
    %115 = vector.load %arg2[%c0_86, %c0_87, %c0_88] : memref<1x4x256xf32, #tpu.memory_space<vmem>>, vector<1x4x256xf32>
    %116 = vector.shape_cast %115 : vector<1x4x256xf32> to vector<4x256xf32>
    %117 = arith.addf %116, %114 : vector<4x256xf32>
    %c0_89 = arith.constant 0 : index
    %c0_90 = arith.constant 0 : index
    %c0_91 = arith.constant 0 : index
    %118 = vector.load %arg5[%c0_89, %c0_90, %c0_91] : memref<1x4x256xf32, #tpu.memory_space<vmem>>, vector<1x4x256xf32>
    %119 = vector.shape_cast %118 : vector<1x4x256xf32> to vector<4x256xf32>
    %120 = vector.shape_cast %117 : vector<4x256xf32> to vector<1x4x256xf32>
    tpu.vector_store %arg5[%c0_89, %c0_90, %c0_91], %120 {strides = array<i32>} : memref<1x4x256xf32, #tpu.memory_space<vmem>>, vector<1x4x256xf32>,
    return
  }
  func.func @transform_0(%arg0: i32) -> (i32, i32, i32, i32) {
    %c0_i32 = arith.constant 0 : i32
    %c0_i32_0 = arith.constant 0 : i32
    %c0_i32_1 = arith.constant 0 : i32
    %c0_i32_2 = arith.constant 0 : i32
    return %arg0, %c0_i32, %c0_i32_0, %c0_i32_1 : i32, i32, i32, i32
  }
  func.func @transform_1(%arg0: i32) -> (i32, i32, i32) {
    %c0_i32 = arith.constant 0 : i32
    %c0_i32_0 = arith.constant 0 : i32
    %c0_i32_1 = arith.constant 0 : i32
    return %arg0, %c0_i32, %c0_i32_0 : i32, i32, i32
  }
  func.func @transform_2(%arg0: i32) -> (i32, i32) {
    %c0_i32 = arith.constant 0 : i32
    %c0_i32_0 = arith.constant 0 : i32
    %c0_i32_1 = arith.constant 0 : i32
    return %c0_i32, %c0_i32_0 : i32, i32
  }
  func.func @transform_3(%arg0: i32) -> (i32, i32) {
    %c0_i32 = arith.constant 0 : i32
    %c0_i32_0 = arith.constant 0 : i32
    %c0_i32_1 = arith.constant 0 : i32
    return %c0_i32, %c0_i32_0 : i32, i32
  }
  func.func @transform_4(%arg0: i32) -> (i32, i32, i32) {
    %c0_i32 = arith.constant 0 : i32
    %c0_i32_0 = arith.constant 0 : i32
    %c0_i32_1 = arith.constant 0 : i32
    return %arg0, %c0_i32, %c0_i32_0 : i32, i32, i32
  }
}

</mosaic_0001>

<llo_original>
// kernel: tpu_custom_call.1
$region0: #{tpu_custom_call.1}
  #allocation0 [shape = 'u32[]', space=smem, size = 0x4, offset = 0x4, fixed_abs, tag = 'smem constant byte address 0x4 - core index']
  #allocation1 [shape = 'u32[144,128]{1,0:T(1,128)}', space=vmem, size = 0x12000, scoped, tag = 'internal scratch']
  #allocation2 [shape = 'bf16[36,256]{1,0:T(8,128)(2,1)}', space=vmem, size = 0x5000, scoped, tag = 'scratch operand']
  #allocation3 [shape = 'bf16[4,18,18]{2,1,0:T(8,128)(2,1)}', space=vmem, size = 0x6000, scoped, tag = 'scratch operand']
  %s0 = inlined_call_operand.vmem [shape: f32[2,4,18,18], index: 0, kind: input, shape index: {}]
  %s1 = inlined_call_operand.vmem [shape: f32[2,4,256], index: 1, kind: input, shape index: {}]
  %s2 = inlined_call_operand.vmem [shape: bf16[4,36], index: 2, kind: input, shape index: {}]
  %s3 = inlined_call_operand.vmem [shape: bf16[4,36], index: 3, kind: input, shape index: {}]
  %s4 = inlined_call_operand.hbm [shape: f32[2,4,256], index: 4, kind: output, shape index: {}]
  %s5 = sld [smem:[#allocation0]]
  $region49: #{tpu_custom_call.1} parent=0
    _
  %s7 = ssub.s32 1, %s5
  %s8 = scalar_select 0, %s7, %s5
  $region1: #{tpu_custom_call.1} parent=0
    #allocation4 [shape = 'u8[8192]{0}', space=vmem, size = 0x2000, scoped, tag = 'output window, operand 0']
    #allocation5 [shape = 's32[2]{0}', space=sflag, size = 0x8, scoped, tag = 'scoped memory for tpu_custom_call.1']
    %9 = vsyncpa [#allocation5], 0
    %s10 = scalar_lea.sflag [#allocation5], 1
    %11 = vsyncpa %s10, 0
    loop: start=0, step=1, limit=4
    $region2: #{tpu_custom_call.1} parent=1 // loop_pre_header
      _
    $region3: #{tpu_custom_call.1} parent=1 // loop_header
      %s13 = sphi 0, %s17
      %p14 = scmp.ge.s32.totalorder %s13, 4
      %s23 = sphi 0, %s25
      %s26 = sphi 0, %s23
      %s27 = sphi 0, %s26
      %s43 = sphi 0, %s27
      %s49 = sphi 0, %s51
      %s52 = sphi 0, %s49
      %s53 = sphi 0, %s52
      %s69 = sphi 0, %s53
      %s73 = sphi 0, %s73
      %s75 = sphi 0, %s73
      %s76 = sphi 0, %s75
      %s90 = sphi 0, %s76
      %s94 = sphi 0, %s94
      %s96 = sphi 0, %s94
      %s97 = sphi 0, %s96
      %s111 = sphi 0, %s97
      %s117 = sphi 0, %s119
      %s120 = sphi 0, %s117
      %s121 = sphi 0, %s120
      %s137 = sphi 0, %s121
    $region4: #{tpu_custom_call.1} parent=1 // loop_header_branch
      %16 = sbr.rel (%p14) target = $region8
    $region5: #{tpu_custom_call.1} parent=1 // loop_body
      %s18 = ssub.s32 %s13, 1
      %s19 = ssub.s32 %s13, 2
      %s20 = sadd.s32 %s13, 1
      %s21 = ssub.s32 %s13, %s20
      %p22 = scmp.eq.s32.totalorder %s21, 0
      %s24 = sadd.s32 %s23, 1
      %s25 = scalar_select %p22, %s23, %s24
      %p28 = pneg %p22
      %p29 = scmp.eq.s32.totalorder %s13, 1
      %p30 = por %p28, %p29
      %p31 = scmp.ne.s32.totalorder %s23, %s26
      %p32 = scmp.eq.s32.totalorder %s13, 0
      %p33 = por %p31, %p32
      %p34 = scmp.ne.s32.totalorder %s23, %s26
      %p35 = scmp.eq.s32.totalorder %s18, 1
      %p36 = por %p34, %p35
      %p37 = scmp.ne.s32.totalorder %s26, %s27
      %p38 = scmp.eq.s32.totalorder %s18, 0
      %p39 = por %p37, %p38
      %p40 = scmp.ne.s32.totalorder %s26, %s27
      %p41 = scmp.eq.s32.totalorder %s19, 1
      %p42 = por %p40, %p41
      %p44 = scmp.ne.s32.totalorder %s27, %s43
      %p45 = scmp.eq.s32.totalorder %s19, 0
      %p46 = por %p44, %p45
      %s47 = ssub.s32 %s13, %s20
      %p48 = scmp.eq.s32.totalorder %s47, 0
      %s50 = sadd.s32 %s49, 1
      %s51 = scalar_select %p48, %s49, %s50
      %p54 = pneg %p48
      %p55 = scmp.eq.s32.totalorder %s13, 1
      %p56 = por %p54, %p55
      %p57 = scmp.ne.s32.totalorder %s49, %s52
      %p58 = scmp.eq.s32.totalorder %s13, 0
      %p59 = por %p57, %p58
      %p60 = scmp.ne.s32.totalorder %s49, %s52
      %p61 = scmp.eq.s32.totalorder %s18, 1
      %p62 = por %p60, %p61
      %p63 = scmp.ne.s32.totalorder %s52, %s53
      %p64 = scmp.eq.s32.totalorder %s18, 0
      %p65 = por %p63, %p64
      %p66 = scmp.ne.s32.totalorder %s52, %s53
      %p67 = scmp.eq.s32.totalorder %s19, 1
      %p68 = por %p66, %p67
      %p70 = scmp.ne.s32.totalorder %s53, %s69
      %p71 = scmp.eq.s32.totalorder %s19, 0
      %p72 = por %p70, %p71
      %s74 = sadd.s32 %s73, 1
      %p77 = scmp.eq.s32.totalorder %s13, 1
      %p78 = scmp.ne.s32.totalorder %s73, %s75
      %p79 = scmp.eq.s32.totalorder %s13, 0
      %p80 = por %p78, %p79
      %p81 = scmp.ne.s32.totalorder %s73, %s75
      %p82 = scmp.eq.s32.totalorder %s18, 1
      %p83 = por %p81, %p82
      %p84 = scmp.ne.s32.totalorder %s75, %s76
      %p85 = scmp.eq.s32.totalorder %s18, 0
      %p86 = por %p84, %p85
      %p87 = scmp.ne.s32.totalorder %s75, %s76
      %p88 = scmp.eq.s32.totalorder %s19, 1
      %p89 = por %p87, %p88
      %p91 = scmp.ne.s32.totalorder %s76, %s90
      %p92 = scmp.eq.s32.totalorder %s19, 0
      %p93 = por %p91, %p92
      %s95 = sadd.s32 %s94, 1
      %p98 = scmp.eq.s32.totalorder %s13, 1
      %p99 = scmp.ne.s32.totalorder %s94, %s96
      %p100 = scmp.eq.s32.totalorder %s13, 0
      %p101 = por %p99, %p100
      %p102 = scmp.ne.s32.totalorder %s94, %s96
      %p103 = scmp.eq.s32.totalorder %s18, 1
      %p104 = por %p102, %p103
      %p105 = scmp.ne.s32.totalorder %s96, %s97
      %p106 = scmp.eq.s32.totalorder %s18, 0
      %p107 = por %p105, %p106
      %p108 = scmp.ne.s32.totalorder %s96, %s97
      %p109 = scmp.eq.s32.totalorder %s19, 1
      %p110 = por %p108, %p109
      %p112 = scmp.ne.s32.totalorder %s97, %s111
      %p113 = scmp.eq.s32.totalorder %s19, 0
      %p114 = por %p112, %p113
      %s115 = ssub.s32 %s13, %s20
      %p116 = scmp.eq.s32.totalorder %s115, 0
      %s118 = sadd.s32 %s117, 1
      %s119 = scalar_select %p116, %s117, %s118
      %p122 = pneg %p116
      %p123 = scmp.eq.s32.totalorder %s13, 1
      %p124 = por %p122, %p123
      %p125 = scmp.ne.s32.totalorder %s117, %s120
      %p126 = scmp.eq.s32.totalorder %s13, 0
      %p127 = por %p125, %p126
      %p128 = scmp.ne.s32.totalorder %s117, %s120
      %p129 = scmp.eq.s32.totalorder %s18, 1
      %p130 = por %p128, %p129
      %p131 = scmp.ne.s32.totalorder %s120, %s121
      %p132 = scmp.eq.s32.totalorder %s18, 0
      %p133 = por %p131, %p132
      %p134 = scmp.ne.s32.totalorder %s120, %s121
      %p135 = scmp.eq.s32.totalorder %s19, 1
      %p136 = por %p134, %p135
      %p138 = scmp.ne.s32.totalorder %s121, %s137
      %p139 = scmp.eq.s32.totalorder %s19, 0
      %p140 = por %p138, %p139
      %p141 = scmp.le.s32.totalorder 1, %s13
      %p142 = scmp.lt.s32.totalorder %s13, 3
      %p143 = pnand %p141, %p142
      %p144 = pneg %p143
      // Predicated region
      $region9: #{tpu_custom_call.1} parent=5 // pred_check
        _
      $region10: #{tpu_custom_call.1} parent=5 // pred_check_branch
        %146 = sbr.rel (%p143) target = $region12
      $region11: #{tpu_custom_call.1} parent=5 // pred_region
        %s147 = ssub.s32 %s13, 1
        // Predicated region
        $region13: #{tpu_custom_call.1} parent=11 // pred_check
          %p148 = pneg %p86
        $region14: #{tpu_custom_call.1} parent=11 // pred_check_branch
          %150 = sbr.rel (%p148) target = $region16
        $region15: #{tpu_custom_call.1} parent=11 // pred_region
          _
        $region16: #{tpu_custom_call.1} parent=11 // pred_fallthru
          _
        // Predicated region
        $region17: #{tpu_custom_call.1} parent=11 // pred_check
          %p151 = pneg %p107
        $region18: #{tpu_custom_call.1} parent=11 // pred_check_branch
          %153 = sbr.rel (%p151) target = $region20
        $region19: #{tpu_custom_call.1} parent=11 // pred_region
          _
        $region20: #{tpu_custom_call.1} parent=11 // pred_fallthru
          _
      $region12: #{tpu_custom_call.1} parent=5 // pred_fallthru
        _
      %p154 = scmp.lt.s32.totalorder %s13, 2
      // Predicated region
      $region21: #{tpu_custom_call.1} parent=5 // pred_check
        %p155 = pneg %p154
      $region22: #{tpu_custom_call.1} parent=5 // pred_check_branch
        %157 = sbr.rel (%p155) target = $region24
      $region23: #{tpu_custom_call.1} parent=5 // pred_region
        // Predicated region
        $region25: #{tpu_custom_call.1} parent=23 // pred_check
          %p158 = pneg %p33
        $region26: #{tpu_custom_call.1} parent=23 // pred_check_branch
          %160 = sbr.rel (%p158) target = $region28
        $region27: #{tpu_custom_call.1} parent=23 // pred_region
          %p161 = scmp.lt.s32.totalorder %s13, 1
          %s162 = scalar_select %p161, %s13, 1
          %s163 = smul.addr %s162, 12
          %s164 = smul.addr %s163, 8
          %s165 = scalar_lea.vmem %s0, %s164
        $region28: #{tpu_custom_call.1} parent=23 // pred_fallthru
          _
        // Predicated region
        $region29: #{tpu_custom_call.1} parent=23 // pred_check
          %p166 = pneg %p59
        $region30: #{tpu_custom_call.1} parent=23 // pred_check_branch
          %168 = sbr.rel (%p166) target = $region32
        $region31: #{tpu_custom_call.1} parent=23 // pred_region
          %p169 = scmp.lt.s32.totalorder %s13, 1
          %s170 = scalar_select %p169, %s13, 1
          %s171 = smul.addr %s170, 2
          %s172 = smul.addr %s171, 4
          %s173 = scalar_lea.vmem %s1, %s172
        $region32: #{tpu_custom_call.1} parent=23 // pred_fallthru
          _
      $region24: #{tpu_custom_call.1} parent=5 // pred_fallthru
        _
      %p174 = scmp.le.s32.totalorder 1, %s13
      %p175 = scmp.lt.s32.totalorder %s13, 3
      %p176 = pnand %p174, %p175
      %p177 = pneg %p176
      // Predicated region
      $region33: #{tpu_custom_call.1} parent=5 // pred_check
        _
      $region34: #{tpu_custom_call.1} parent=5 // pred_check_branch
        %179 = sbr.rel (%p176) target = $region36
      $region35: #{tpu_custom_call.1} parent=5 // pred_region
        %s180 = ssub.s32 %s13, 1
        %p181 = scmp.lt.s32.totalorder %s18, 1
        %s182 = scalar_select %p181, %s18, 1
        %s183 = smul.addr %s182, 12
        %s184 = smul.addr %s183, 8
        %s185 = scalar_lea.vmem %s0, %s184
        %p186 = pneg %p39
        %p187 = pneg %p36
        %p188 = scmp.lt.s32.totalorder %s18, 1
        %s189 = scalar_select %p188, %s18, 1
        %s190 = smul.addr %s189, 2
        %s191 = smul.addr %s190, 4
        %s192 = scalar_lea.vmem %s1, %s191
        %p193 = pneg %p65
        %p194 = pneg %p62
        %p195 = pneg %p86
        %p196 = pneg %p83
        %p197 = pneg %p107
        %p198 = pneg %p104
        %p199 = pneg %p133
        %p200 = pneg %p130
        %s201 = sand.u32 %s120, 1
        %s202 = scalar_lea.sflag [#allocation5], %s201
        %s203 = sand.u32 %s120, 1
        %s204 = smul.addr %s203, 8
        %s205 = scalar_lea.vmem [#allocation4], %s204
        %p206 = scmp.lt.s32.totalorder %s18, 1
        %s207 = scalar_select %p206, %s18, 1
        %s208 = smul.addr %s207, 12
        %s209 = smul.addr %s208, 8
        %s210 = scalar_lea.vmem %s0, %s209
        %p211 = scmp.lt.s32.totalorder %s18, 1
        %s212 = scalar_select %p211, %s18, 1
        %s213 = smul.addr %s212, 2
        %s214 = smul.addr %s213, 4
        %s215 = scalar_lea.vmem %s1, %s214
        %v217 = vld [vmem:[%s210] sm:$0xff]
        %v218 = vld [vmem:[%s210 + $0x8] sm:$0xff]
        %v219 = vld [vmem:[%s210 + $0x10] sm:$0x3]
        %v220 = vld [vmem:[%s210 + $0x18] sm:$0xff]
        %v221 = vld [vmem:[%s210 + $0x20] sm:$0xff]
        %v222 = vld [vmem:[%s210 + $0x28] sm:$0x3]
        %v223 = vld [vmem:[%s210 + $0x30] sm:$0xff]
        %v224 = vld [vmem:[%s210 + $0x38] sm:$0xff]
        %v225 = vld [vmem:[%s210 + $0x40] sm:$0x3]
        %v226 = vld [vmem:[%s210 + $0x48] sm:$0xff]
        %v227 = vld [vmem:[%s210 + $0x50] sm:$0xff]
        %v228 = vld [vmem:[%s210 + $0x58] sm:$0x3]
        %v229 = vpack.c.bf16 %v218, %v217
        %v230 = vpack.c.bf16 %v219, %v219
        %v231 = vpack.c.bf16 %v221, %v220
        %v232 = vpack.c.bf16 %v222, %v222
        %v233 = vpack.c.bf16 %v224, %v223
        %v234 = vpack.c.bf16 %v225, %v225
        %v235 = vpack.c.bf16 %v227, %v226
        %v236 = vpack.c.bf16 %v228, %v228
        %v239 = vpack.i.b16 %v231, %v229
        %v241 = vshrl.u32 %v229, 16
        %v242 = vshrl.u32 %v231, 16
        %v243 = vpack.i.b16 %v242, %v241
        %v247 = vpack.i.b16 %v235, %v233
        %v249 = vshrl.u32 %v233, 16
        %v250 = vshrl.u32 %v235, 16
        %v251 = vpack.i.b16 %v250, %v249
        %v254 = vpack.i.b16 0, 0
        %v256 = vshrl.u32 0, 16
        %v257 = vpack.i.b16 %v256, %v256
        %v259 = vcombine.high %v239, %v254
        %v261 = vunpack.c.l.s4 1983009808
        %v262 = vunpack.c.0.s8 %v261
        %v263 = vlaneseq
        %v264 = vshrl.u32 %v263, 7
        %v265 = vsub.s32 %v262, %v264
        %v266 = vrot.slane %v239, %v265
        %v268 = vunpack.c.l.s4 1983009808
        %v269 = vunpack.c.0.s8 %v268
        %v270 = vlaneseq
        %v271 = vshrl.u32 %v270, 7
        %v272 = vsub.s32 %v269, %v271
        %v273 = vrot.slane %v259, %v272
        %v274 = vcombine.high %v247, %v254
        %v276 = vunpack.c.l.s4 1983009808
        %v277 = vunpack.c.0.s8 %v276
        %v278 = vlaneseq
        %v279 = vshrl.u32 %v278, 7
        %v280 = vsub.s32 %v277, %v279
        %v281 = vrot.slane %v247, %v280
        %v283 = vunpack.c.l.s4 1983009808
        %v284 = vunpack.c.0.s8 %v283
        %v285 = vlaneseq
        %v286 = vshrl.u32 %v285, 7
        %v287 = vsub.s32 %v284, %v286
        %v288 = vrot.slane %v274, %v287
        %v289 = vcombine.low %v266, %v281
        %v290 = vcombine.high %v266, %v281
        %v292 = vunpack.c.l.s4 1934713408
        %v293 = vunpack.c.0.s8 %v292
        %v294 = vlaneseq
        %v295 = vshrl.u32 %v294, 7
        %v296 = vsub.s32 %v293, %v295
        %v297 = vrot.slane %v289, %v296
        %v299 = vunpack.c.l.s4 1934713408
        %v300 = vunpack.c.0.s8 %v299
        %v301 = vlaneseq
        %v302 = vshrl.u32 %v301, 7
        %v303 = vsub.s32 %v300, %v302
        %v304 = vrot.slane %v290, %v303
        %v305 = vcombine.low %v273, %v288
        %v306 = vcombine.high %v273, %v288
        %v308 = vunpack.c.l.s4 1934713408
        %v309 = vunpack.c.0.s8 %v308
        %v310 = vlaneseq
        %v311 = vshrl.u32 %v310, 7
        %v312 = vsub.s32 %v309, %v311
        %v313 = vrot.slane %v305, %v312
        %v315 = vunpack.c.l.s4 1934713408
        %v316 = vunpack.c.0.s8 %v315
        %v317 = vlaneseq
        %v318 = vshrl.u32 %v317, 7
        %v319 = vsub.s32 %v316, %v318
        %v320 = vrot.slane %v306, %v319
        %v321 = vcombine.high %v297, 0
        %v322 = vcombine.high %v304, 0
        %v323 = vcombine.high %v313, 0
        %v324 = vcombine.high %v320, 0
        %v325 = vcombine.high %v243, %v257
        %v327 = vunpack.c.l.s4 1983009808
        %v328 = vunpack.c.0.s8 %v327
        %v329 = vlaneseq
        %v330 = vshrl.u32 %v329, 7
        %v331 = vsub.s32 %v328, %v330
        %v332 = vrot.slane %v243, %v331
        %v334 = vunpack.c.l.s4 1983009808
        %v335 = vunpack.c.0.s8 %v334
        %v336 = vlaneseq
        %v337 = vshrl.u32 %v336, 7
        %v338 = vsub.s32 %v335, %v337
        %v339 = vrot.slane %v325, %v338
        %v340 = vcombine.high %v251, %v257
        %v342 = vunpack.c.l.s4 1983009808
        %v343 = vunpack.c.0.s8 %v342
        %v344 = vlaneseq
        %v345 = vshrl.u32 %v344, 7
        %v346 = vsub.s32 %v343, %v345
        %v347 = vrot.slane %v251, %v346
        %v349 = vunpack.c.l.s4 1983009808
        %v350 = vunpack.c.0.s8 %v349
        %v351 = vlaneseq
        %v352 = vshrl.u32 %v351, 7
        %v353 = vsub.s32 %v350, %v352
        %v354 = vrot.slane %v340, %v353
        %v355 = vcombine.low %v332, %v347
        %v356 = vcombine.high %v332, %v347
        %v358 = vunpack.c.l.s4 1934713408
        %v359 = vunpack.c.0.s8 %v358
        %v360 = vlaneseq
        %v361 = vshrl.u32 %v360, 7
        %v362 = vsub.s32 %v359, %v361
        %v363 = vrot.slane %v355, %v362
        %v365 = vunpack.c.l.s4 1934713408
        %v366 = vunpack.c.0.s8 %v365
        %v367 = vlaneseq
        %v368 = vshrl.u32 %v367, 7
        %v369 = vsub.s32 %v366, %v368
        %v370 = vrot.slane %v356, %v369
        %v371 = vcombine.low %v339, %v354
        %v372 = vcombine.high %v339, %v354
        %v374 = vunpack.c.l.s4 1934713408
        %v375 = vunpack.c.0.s8 %v374
        %v376 = vlaneseq
        %v377 = vshrl.u32 %v376, 7
        %v378 = vsub.s32 %v375, %v377
        %v379 = vrot.slane %v371, %v378
        %v381 = vunpack.c.l.s4 1934713408
        %v382 = vunpack.c.0.s8 %v381
        %v383 = vlaneseq
        %v384 = vshrl.u32 %v383, 7
        %v385 = vsub.s32 %v382, %v384
        %v386 = vrot.slane %v372, %v385
        %v387 = vcombine.high %v363, 0
        %v388 = vcombine.high %v370, 0
        %v389 = vcombine.high %v379, 0
        %v390 = vcombine.high %v386, 0
        %392 = vrot.lane.b32.xlu0 %v363, 16
        %v393 = vpop.permute.xlu0 %392
        %395 = vrot.lane.b32.xlu0 %v321, 32
        %v396 = vpop.permute.xlu0 %395
        %398 = vrot.lane.b32.xlu0 %v387, 48
        %v399 = vpop.permute.xlu0 %398
        %401 = vrot.lane.b32.xlu0 %v304, 64
        %v402 = vpop.permute.xlu0 %401
        %404 = vrot.lane.b32.xlu0 %v370, 80
        %v405 = vpop.permute.xlu0 %404
        %407 = vrot.lane.b32.xlu0 %v322, 96
        %v408 = vpop.permute.xlu0 %407
        %410 = vrot.lane.b32.xlu0 %v388, 112
        %v411 = vpop.permute.xlu0 %410
        %413 = vrot.lane.b32.xlu0 %v379, 16
        %v414 = vpop.permute.xlu0 %413
        %416 = vrot.lane.b32.xlu0 %v323, 32
        %v417 = vpop.permute.xlu0 %416
        %419 = vrot.lane.b32.xlu0 %v389, 48
        %v420 = vpop.permute.xlu0 %419
        %422 = vrot.lane.b32.xlu0 %v320, 64
        %v423 = vpop.permute.xlu0 %422
        %425 = vrot.lane.b32.xlu0 %v386, 80
        %v426 = vpop.permute.xlu0 %425
        %428 = vrot.lane.b32.xlu0 %v324, 96
        %v429 = vpop.permute.xlu0 %428
        %431 = vrot.lane.b32.xlu0 %v390, 112
        %v432 = vpop.permute.xlu0 %431
        %vm433 = vcmask 130048
        %v436 = vsel %vm433, %v297, %v393
        %vm437 = vcmask 261120
        %v439 = vsel %vm437, %v436, %v396
        %vm440 = vcmask 392192
        %v442 = vsel %vm440, %v439, %v399
        %vm443 = vcmask 523264
        %v445 = vsel %vm443, %v442, %v402
        %vm446 = vcmask 654336
        %v448 = vsel %vm446, %v445, %v405
        %vm449 = vcmask 785408
        %v451 = vsel %vm449, %v448, %v408
        %vm452 = vcmask 916480
        %v454 = vsel %vm452, %v451, %v411
        %v457 = vsel %vm433, %v313, %v414
        %v459 = vsel %vm437, %v457, %v417
        %v461 = vsel %vm440, %v459, %v420
        %v463 = vsel %vm443, %v461, %v423
        %v465 = vsel %vm446, %v463, %v426
        %v467 = vsel %vm449, %v465, %v429
        %v469 = vsel %vm452, %v467, %v432
        %v472 = vunpack.c.l.b16 %v454
        %v473 = vunpack.c.l.b16 %v469
        %v474 = vpack.c.b16 %v473, %v472
        %476 = vst [vmem:[#allocation2] sm:$0x33] %v474
        %481 = vrot.lane.b32.xlu0 %v229, 127
        %v482 = vpop.permute.xlu0 %481
        %483 = vrot.lane.b32.xlu0 %v231, 127
        %v484 = vpop.permute.xlu0 %483
        %485 = vrot.lane.b32.xlu0 %v233, 127
        %v486 = vpop.permute.xlu0 %485
        %487 = vrot.lane.b32.xlu0 %v235, 127
        %v488 = vpop.permute.xlu0 %487
        %v491 = vpack.i.b16 %v484, %v482
        %v493 = vshrl.u32 %v482, 16
        %v494 = vshrl.u32 %v484, 16
        %v495 = vpack.i.b16 %v494, %v493
        %v499 = vpack.i.b16 %v488, %v486
        %v501 = vshrl.u32 %v486, 16
        %v502 = vshrl.u32 %v488, 16
        %v503 = vpack.i.b16 %v502, %v501
        %v505 = vcombine.high %v491, %v254
        %v507 = vunpack.c.l.s4 1983009808
        %v508 = vunpack.c.0.s8 %v507
        %v509 = vlaneseq
        %v510 = vshrl.u32 %v509, 7
        %v511 = vsub.s32 %v508, %v510
        %v512 = vrot.slane %v491, %v511
        %v514 = vunpack.c.l.s4 1983009808
        %v515 = vunpack.c.0.s8 %v514
        %v516 = vlaneseq
        %v517 = vshrl.u32 %v516, 7
        %v518 = vsub.s32 %v515, %v517
        %v519 = vrot.slane %v505, %v518
        %v520 = vcombine.high %v499, %v254
        %v522 = vunpack.c.l.s4 1983009808
        %v523 = vunpack.c.0.s8 %v522
        %v524 = vlaneseq
        %v525 = vshrl.u32 %v524, 7
        %v526 = vsub.s32 %v523, %v525
        %v527 = vrot.slane %v499, %v526
        %v529 = vunpack.c.l.s4 1983009808
        %v530 = vunpack.c.0.s8 %v529
        %v531 = vlaneseq
        %v532 = vshrl.u32 %v531, 7
        %v533 = vsub.s32 %v530, %v532
        %v534 = vrot.slane %v520, %v533
        %v535 = vcombine.low %v512, %v527
        %v536 = vcombine.high %v512, %v527
        %v538 = vunpack.c.l.s4 1934713408
        %v539 = vunpack.c.0.s8 %v538
        %v540 = vlaneseq
        %v541 = vshrl.u32 %v540, 7
        %v542 = vsub.s32 %v539, %v541
        %v543 = vrot.slane %v535, %v542
        %v545 = vunpack.c.l.s4 1934713408
        %v546 = vunpack.c.0.s8 %v545
        %v547 = vlaneseq
        %v548 = vshrl.u32 %v547, 7
        %v549 = vsub.s32 %v546, %v548
        %v550 = vrot.slane %v536, %v549
        %v551 = vcombine.low %v519, %v534
        %v552 = vcombine.high %v519, %v534
        %v554 = vunpack.c.l.s4 1934713408
        %v555 = vunpack.c.0.s8 %v554
        %v556 = vlaneseq
        %v557 = vshrl.u32 %v556, 7
        %v558 = vsub.s32 %v555, %v557
        %v559 = vrot.slane %v551, %v558
        %v561 = vunpack.c.l.s4 1934713408
        %v562 = vunpack.c.0.s8 %v561
        %v563 = vlaneseq
        %v564 = vshrl.u32 %v563, 7
        %v565 = vsub.s32 %v562, %v564
        %v566 = vrot.slane %v552, %v565
        %v567 = vcombine.high %v543, 0
        %v568 = vcombine.high %v550, 0
        %v569 = vcombine.high %v559, 0
        %v570 = vcombine.high %v566, 0
        %v571 = vcombine.high %v495, %v257
        %v573 = vunpack.c.l.s4 1983009808
        %v574 = vunpack.c.0.s8 %v573
        %v575 = vlaneseq
        %v576 = vshrl.u32 %v575, 7
        %v577 = vsub.s32 %v574, %v576
        %v578 = vrot.slane %v495, %v577
        %v580 = vunpack.c.l.s4 1983009808
        %v581 = vunpack.c.0.s8 %v580
        %v582 = vlaneseq
        %v583 = vshrl.u32 %v582, 7
        %v584 = vsub.s32 %v581, %v583
        %v585 = vrot.slane %v571, %v584
        %v586 = vcombine.high %v503, %v257
        %v588 = vunpack.c.l.s4 1983009808
        %v589 = vunpack.c.0.s8 %v588
        %v590 = vlaneseq
        %v591 = vshrl.u32 %v590, 7
        %v592 = vsub.s32 %v589, %v591
        %v593 = vrot.slane %v503, %v592
        %v595 = vunpack.c.l.s4 1983009808
        %v596 = vunpack.c.0.s8 %v595
        %v597 = vlaneseq
        %v598 = vshrl.u32 %v597, 7
        %v599 = vsub.s32 %v596, %v598
        %v600 = vrot.slane %v586, %v599
        %v601 = vcombine.low %v578, %v593
        %v602 = vcombine.high %v578, %v593
        %v604 = vunpack.c.l.s4 1934713408
        %v605 = vunpack.c.0.s8 %v604
        %v606 = vlaneseq
        %v607 = vshrl.u32 %v606, 7
        %v608 = vsub.s32 %v605, %v607
        %v609 = vrot.slane %v601, %v608
        %v611 = vunpack.c.l.s4 1934713408
        %v612 = vunpack.c.0.s8 %v611
        %v613 = vlaneseq
        %v614 = vshrl.u32 %v613, 7
        %v615 = vsub.s32 %v612, %v614
        %v616 = vrot.slane %v602, %v615
        %v617 = vcombine.low %v585, %v600
        %v618 = vcombine.high %v585, %v600
        %v620 = vunpack.c.l.s4 1934713408
        %v621 = vunpack.c.0.s8 %v620
        %v622 = vlaneseq
        %v623 = vshrl.u32 %v622, 7
        %v624 = vsub.s32 %v621, %v623
        %v625 = vrot.slane %v617, %v624
        %v627 = vunpack.c.l.s4 1934713408
        %v628 = vunpack.c.0.s8 %v627
        %v629 = vlaneseq
        %v630 = vshrl.u32 %v629, 7
        %v631 = vsub.s32 %v628, %v630
        %v632 = vrot.slane %v618, %v631
        %v633 = vcombine.high %v609, 0
        %v634 = vcombine.high %v616, 0
        %v635 = vcombine.high %v625, 0
        %v636 = vcombine.high %v632, 0
        %638 = vrot.lane.b32.xlu0 %v609, 16
        %v639 = vpop.permute.xlu0 %638
        %641 = vrot.lane.b32.xlu0 %v567, 32
        %v642 = vpop.permute.xlu0 %641
        %644 = vrot.lane.b32.xlu0 %v633, 48
        %v645 = vpop.permute.xlu0 %644
        %647 = vrot.lane.b32.xlu0 %v550, 64
        %v648 = vpop.permute.xlu0 %647
        %650 = vrot.lane.b32.xlu0 %v616, 80
        %v651 = vpop.permute.xlu0 %650
        %653 = vrot.lane.b32.xlu0 %v568, 96
        %v654 = vpop.permute.xlu0 %653
        %656 = vrot.lane.b32.xlu0 %v634, 112
        %v657 = vpop.permute.xlu0 %656
        %659 = vrot.lane.b32.xlu0 %v625, 16
        %v660 = vpop.permute.xlu0 %659
        %662 = vrot.lane.b32.xlu0 %v569, 32
        %v663 = vpop.permute.xlu0 %662
        %665 = vrot.lane.b32.xlu0 %v635, 48
        %v666 = vpop.permute.xlu0 %665
        %668 = vrot.lane.b32.xlu0 %v566, 64
        %v669 = vpop.permute.xlu0 %668
        %671 = vrot.lane.b32.xlu0 %v632, 80
        %v672 = vpop.permute.xlu0 %671
        %674 = vrot.lane.b32.xlu0 %v570, 96
        %v675 = vpop.permute.xlu0 %674
        %677 = vrot.lane.b32.xlu0 %v636, 112
        %v678 = vpop.permute.xlu0 %677
        %v681 = vsel %vm433, %v543, %v639
        %v683 = vsel %vm437, %v681, %v642
        %v685 = vsel %vm440, %v683, %v645
        %v687 = vsel %vm443, %v685, %v648
        %v689 = vsel %vm446, %v687, %v651
        %v691 = vsel %vm449, %v689, %v654
        %v693 = vsel %vm452, %v691, %v657
        %v696 = vsel %vm433, %v559, %v660
        %v698 = vsel %vm437, %v696, %v663
        %v700 = vsel %vm440, %v698, %v666
        %v702 = vsel %vm443, %v700, %v669
        %v704 = vsel %vm446, %v702, %v672
        %v706 = vsel %vm449, %v704, %v675
        %v708 = vsel %vm452, %v706, %v678
        %v711 = vunpack.c.l.b16 %v693
        %v712 = vunpack.c.l.b16 %v708
        %v713 = vpack.c.b16 %v712, %v711
        %v714 = vrot.slane %v713, 6
        %716 = vst [vmem:[#allocation2] sm:$0xcc] %v714
        %717 = vrot.lane.b32.xlu0 %v229, 126
        %v718 = vpop.permute.xlu0 %717
        %719 = vrot.lane.b32.xlu0 %v231, 126
        %v720 = vpop.permute.xlu0 %719
        %721 = vrot.lane.b32.xlu0 %v233, 126
        %v722 = vpop.permute.xlu0 %721
        %723 = vrot.lane.b32.xlu0 %v235, 126
        %v724 = vpop.permute.xlu0 %723
        %v727 = vpack.i.b16 %v720, %v718
        %v729 = vshrl.u32 %v718, 16
        %v730 = vshrl.u32 %v720, 16
        %v731 = vpack.i.b16 %v730, %v729
        %v735 = vpack.i.b16 %v724, %v722
        %v737 = vshrl.u32 %v722, 16
        %v738 = vshrl.u32 %v724, 16
        %v739 = vpack.i.b16 %v738, %v737
        %v741 = vcombine.high %v727, %v254
        %v743 = vunpack.c.l.s4 1983009808
        %v744 = vunpack.c.0.s8 %v743
        %v745 = vlaneseq
        %v746 = vshrl.u32 %v745, 7
        %v747 = vsub.s32 %v744, %v746
        %v748 = vrot.slane %v727, %v747
        %v750 = vunpack.c.l.s4 1983009808
        %v751 = vunpack.c.0.s8 %v750
        %v752 = vlaneseq
        %v753 = vshrl.u32 %v752, 7
        %v754 = vsub.s32 %v751, %v753
        %v755 = vrot.slane %v741, %v754
        %v756 = vcombine.high %v735, %v254
        %v758 = vunpack.c.l.s4 1983009808
        %v759 = vunpack.c.0.s8 %v758
        %v760 = vlaneseq
        %v761 = vshrl.u32 %v760, 7
        %v762 = vsub.s32 %v759, %v761
        %v763 = vrot.slane %v735, %v762
        %v765 = vunpack.c.l.s4 1983009808
        %v766 = vunpack.c.0.s8 %v765
        %v767 = vlaneseq
        %v768 = vshrl.u32 %v767, 7
        %v769 = vsub.s32 %v766, %v768
        %v770 = vrot.slane %v756, %v769
        %v771 = vcombine.low %v748, %v763
        %v772 = vcombine.high %v748, %v763
        %v774 = vunpack.c.l.s4 1934713408
        %v775 = vunpack.c.0.s8 %v774
        %v776 = vlaneseq
        %v777 = vshrl.u32 %v776, 7
        %v778 = vsub.s32 %v775, %v777
        %v779 = vrot.slane %v771, %v778
        %v781 = vunpack.c.l.s4 1934713408
        %v782 = vunpack.c.0.s8 %v781
        %v783 = vlaneseq
        %v784 = vshrl.u32 %v783, 7
        %v785 = vsub.s32 %v782, %v784
        %v786 = vrot.slane %v772, %v785
        %v787 = vcombine.low %v755, %v770
        %v788 = vcombine.high %v755, %v770
        %v790 = vunpack.c.l.s4 1934713408
        %v791 = vunpack.c.0.s8 %v790
        %v792 = vlaneseq
        %v793 = vshrl.u32 %v792, 7
        %v794 = vsub.s32 %v791, %v793
        %v795 = vrot.slane %v787, %v794
        %v797 = vunpack.c.l.s4 1934713408
        %v798 = vunpack.c.0.s8 %v797
        %v799 = vlaneseq
        %v800 = vshrl.u32 %v799, 7
        %v801 = vsub.s32 %v798, %v800
        %v802 = vrot.slane %v788, %v801
        %v803 = vcombine.high %v779, 0
        %v804 = vcombine.high %v786, 0
        %v805 = vcombine.high %v795, 0
        %v806 = vcombine.high %v802, 0
        %v807 = vcombine.high %v731, %v257
        %v809 = vunpack.c.l.s4 1983009808
        %v810 = vunpack.c.0.s8 %v809
        %v811 = vlaneseq
        %v812 = vshrl.u32 %v811, 7
        %v813 = vsub.s32 %v810, %v812
        %v814 = vrot.slane %v731, %v813
        %v816 = vunpack.c.l.s4 1983009808
        %v817 = vunpack.c.0.s8 %v816
        %v818 = vlaneseq
        %v819 = vshrl.u32 %v818, 7
        %v820 = vsub.s32 %v817, %v819
        %v821 = vrot.slane %v807, %v820
        %v822 = vcombine.high %v739, %v257
        %v824 = vunpack.c.l.s4 1983009808
        %v825 = vunpack.c.0.s8 %v824
        %v826 = vlaneseq
        %v827 = vshrl.u32 %v826, 7
        %v828 = vsub.s32 %v825, %v827
        %v829 = vrot.slane %v739, %v828
        %v831 = vunpack.c.l.s4 1983009808
        %v832 = vunpack.c.0.s8 %v831
        %v833 = vlaneseq
        %v834 = vshrl.u32 %v833, 7
        %v835 = vsub.s32 %v832, %v834
        %v836 = vrot.slane %v822, %v835
        %v837 = vcombine.low %v814, %v829
        %v838 = vcombine.high %v814, %v829
        %v840 = vunpack.c.l.s4 1934713408
        %v841 = vunpack.c.0.s8 %v840
        %v842 = vlaneseq
        %v843 = vshrl.u32 %v842, 7
        %v844 = vsub.s32 %v841, %v843
        %v845 = vrot.slane %v837, %v844
        %v847 = vunpack.c.l.s4 1934713408
        %v848 = vunpack.c.0.s8 %v847
        %v849 = vlaneseq
        %v850 = vshrl.u32 %v849, 7
        %v851 = vsub.s32 %v848, %v850
        %v852 = vrot.slane %v838, %v851
        %v853 = vcombine.low %v821, %v836
        %v854 = vcombine.high %v821, %v836
        %v856 = vunpack.c.l.s4 1934713408
        %v857 = vunpack.c.0.s8 %v856
        %v858 = vlaneseq
        %v859 = vshrl.u32 %v858, 7
        %v860 = vsub.s32 %v857, %v859
        %v861 = vrot.slane %v853, %v860
        %v863 = vunpack.c.l.s4 1934713408
        %v864 = vunpack.c.0.s8 %v863
        %v865 = vlaneseq
        %v866 = vshrl.u32 %v865, 7
        %v867 = vsub.s32 %v864, %v866
        %v868 = vrot.slane %v854, %v867
        %v869 = vcombine.high %v845, 0
        %v870 = vcombine.high %v852, 0
        %v871 = vcombine.high %v861, 0
        %v872 = vcombine.high %v868, 0
        %874 = vrot.lane.b32.xlu0 %v845, 16
        %v875 = vpop.permute.xlu0 %874
        %877 = vrot.lane.b32.xlu0 %v803, 32
        %v878 = vpop.permute.xlu0 %877
        %880 = vrot.lane.b32.xlu0 %v869, 48
        %v881 = vpop.permute.xlu0 %880
        %883 = vrot.lane.b32.xlu0 %v786, 64
        %v884 = vpop.permute.xlu0 %883
        %886 = vrot.lane.b32.xlu0 %v852, 80
        %v887 = vpop.permute.xlu0 %886
        %889 = vrot.lane.b32.xlu0 %v804, 96
        %v890 = vpop.permute.xlu0 %889
        %892 = vrot.lane.b32.xlu0 %v870, 112
        %v893 = vpop.permute.xlu0 %892
        %895 = vrot.lane.b32.xlu0 %v861, 16
        %v896 = vpop.permute.xlu0 %895
        %898 = vrot.lane.b32.xlu0 %v805, 32
        %v899 = vpop.permute.xlu0 %898
        %901 = vrot.lane.b32.xlu0 %v871, 48
        %v902 = vpop.permute.xlu0 %901
        %904 = vrot.lane.b32.xlu0 %v802, 64
        %v905 = vpop.permute.xlu0 %904
        %907 = vrot.lane.b32.xlu0 %v868, 80
        %v908 = vpop.permute.xlu0 %907
        %910 = vrot.lane.b32.xlu0 %v806, 96
        %v911 = vpop.permute.xlu0 %910
        %913 = vrot.lane.b32.xlu0 %v872, 112
        %v914 = vpop.permute.xlu0 %913
        %v917 = vsel %vm433, %v779, %v875
        %v919 = vsel %vm437, %v917, %v878
        %v921 = vsel %vm440, %v919, %v881
        %v923 = vsel %vm443, %v921, %v884
        %v925 = vsel %vm446, %v923, %v887
        %v927 = vsel %vm449, %v925, %v890
        %v929 = vsel %vm452, %v927, %v893
        %v932 = vsel %vm433, %v795, %v896
        %v934 = vsel %vm437, %v932, %v899
        %v936 = vsel %vm440, %v934, %v902
        %v938 = vsel %vm443, %v936, %v905
        %v940 = vsel %vm446, %v938, %v908
        %v942 = vsel %vm449, %v940, %v911
        %v944 = vsel %vm452, %v942, %v914
        %v947 = vunpack.c.l.b16 %v929
        %v948 = vunpack.c.l.b16 %v944
        %v949 = vpack.c.b16 %v948, %v947
        %951 = vst [vmem:[#allocation2 + $0x8] sm:$0x33] %v949
        %vm952 = vsmask.f32 7424
        %v954 = vshll.u32 %v229, 16
        %v956 = vrot.slane %v954, 1
        %v957 = vor.u32 %v241, %v956
        %v959 = vshll.u32 %v230, 16
        %v961 = vrot.slane %v959, 1
        %v962 = vsel %vm952, %v957, %v961
        %v964 = vshll.u32 %v231, 16
        %v966 = vrot.slane %v964, 1
        %v967 = vor.u32 %v242, %v966
        %v969 = vshll.u32 %v232, 16
        %v971 = vrot.slane %v969, 1
        %v972 = vsel %vm952, %v967, %v971
        %v974 = vshll.u32 %v233, 16
        %v976 = vrot.slane %v974, 1
        %v977 = vor.u32 %v249, %v976
        %v979 = vshll.u32 %v234, 16
        %v981 = vrot.slane %v979, 1
        %v982 = vsel %vm952, %v977, %v981
        %v984 = vshll.u32 %v235, 16
        %v986 = vrot.slane %v984, 1
        %v987 = vor.u32 %v250, %v986
        %v989 = vshll.u32 %v236, 16
        %v991 = vrot.slane %v989, 1
        %v992 = vsel %vm952, %v987, %v991
        %v995 = vpack.i.b16 %v972, %v962
        %v997 = vshrl.u32 %v962, 16
        %v998 = vshrl.u32 %v972, 16
        %v999 = vpack.i.b16 %v998, %v997
        %v1003 = vpack.i.b16 %v992, %v982
        %v1005 = vshrl.u32 %v982, 16
        %v1006 = vshrl.u32 %v992, 16
        %v1007 = vpack.i.b16 %v1006, %v1005
        %v1009 = vcombine.high %v995, %v254
        %v1011 = vunpack.c.l.s4 1983009808
        %v1012 = vunpack.c.0.s8 %v1011
        %v1013 = vlaneseq
        %v1014 = vshrl.u32 %v1013, 7
        %v1015 = vsub.s32 %v1012, %v1014
        %v1016 = vrot.slane %v995, %v1015
        %v1018 = vunpack.c.l.s4 1983009808
        %v1019 = vunpack.c.0.s8 %v1018
        %v1020 = vlaneseq
        %v1021 = vshrl.u32 %v1020, 7
        %v1022 = vsub.s32 %v1019, %v1021
        %v1023 = vrot.slane %v1009, %v1022
        %v1024 = vcombine.high %v1003, %v254
        %v1026 = vunpack.c.l.s4 1983009808
        %v1027 = vunpack.c.0.s8 %v1026
        %v1028 = vlaneseq
        %v1029 = vshrl.u32 %v1028, 7
        %v1030 = vsub.s32 %v1027, %v1029
        %v1031 = vrot.slane %v1003, %v1030
        %v1033 = vunpack.c.l.s4 1983009808
        %v1034 = vunpack.c.0.s8 %v1033
        %v1035 = vlaneseq
        %v1036 = vshrl.u32 %v1035, 7
        %v1037 = vsub.s32 %v1034, %v1036
        %v1038 = vrot.slane %v1024, %v1037
        %v1039 = vcombine.low %v1016, %v1031
        %v1040 = vcombine.high %v1016, %v1031
        %v1042 = vunpack.c.l.s4 1934713408
        %v1043 = vunpack.c.0.s8 %v1042
        %v1044 = vlaneseq
        %v1045 = vshrl.u32 %v1044, 7
        %v1046 = vsub.s32 %v1043, %v1045
        %v1047 = vrot.slane %v1039, %v1046
        %v1049 = vunpack.c.l.s4 1934713408
        %v1050 = vunpack.c.0.s8 %v1049
        %v1051 = vlaneseq
        %v1052 = vshrl.u32 %v1051, 7
        %v1053 = vsub.s32 %v1050, %v1052
        %v1054 = vrot.slane %v1040, %v1053
        %v1055 = vcombine.low %v1023, %v1038
        %v1056 = vcombine.high %v1023, %v1038
        %v1058 = vunpack.c.l.s4 1934713408
        %v1059 = vunpack.c.0.s8 %v1058
        %v1060 = vlaneseq
        %v1061 = vshrl.u32 %v1060, 7
        %v1062 = vsub.s32 %v1059, %v1061
        %v1063 = vrot.slane %v1055, %v1062
        %v1065 = vunpack.c.l.s4 1934713408
        %v1066 = vunpack.c.0.s8 %v1065
        %v1067 = vlaneseq
        %v1068 = vshrl.u32 %v1067, 7
        %v1069 = vsub.s32 %v1066, %v1068
        %v1070 = vrot.slane %v1056, %v1069
        %v1071 = vcombine.high %v1047, 0
        %v1072 = vcombine.high %v1054, 0
        %v1073 = vcombine.high %v1063, 0
        %v1074 = vcombine.high %v1070, 0
        %v1075 = vcombine.high %v999, %v257
        %v1077 = vunpack.c.l.s4 1983009808
        %v1078 = vunpack.c.0.s8 %v1077
        %v1079 = vlaneseq
        %v1080 = vshrl.u32 %v1079, 7
        %v1081 = vsub.s32 %v1078, %v1080
        %v1082 = vrot.slane %v999, %v1081
        %v1084 = vunpack.c.l.s4 1983009808
        %v1085 = vunpack.c.0.s8 %v1084
        %v1086 = vlaneseq
        %v1087 = vshrl.u32 %v1086, 7
        %v1088 = vsub.s32 %v1085, %v1087
        %v1089 = vrot.slane %v1075, %v1088
        %v1090 = vcombine.high %v1007, %v257
        %v1092 = vunpack.c.l.s4 1983009808
        %v1093 = vunpack.c.0.s8 %v1092
        %v1094 = vlaneseq
        %v1095 = vshrl.u32 %v1094, 7
        %v1096 = vsub.s32 %v1093, %v1095
        %v1097 = vrot.slane %v1007, %v1096
        %v1099 = vunpack.c.l.s4 1983009808
        %v1100 = vunpack.c.0.s8 %v1099
        %v1101 = vlaneseq
        %v1102 = vshrl.u32 %v1101, 7
        %v1103 = vsub.s32 %v1100, %v1102
        %v1104 = vrot.slane %v1090, %v1103
        %v1105 = vcombine.low %v1082, %v1097
        %v1106 = vcombine.high %v1082, %v1097
        %v1108 = vunpack.c.l.s4 1934713408
        %v1109 = vunpack.c.0.s8 %v1108
        %v1110 = vlaneseq
        %v1111 = vshrl.u32 %v1110, 7
        %v1112 = vsub.s32 %v1109, %v1111
        %v1113 = vrot.slane %v1105, %v1112
        %v1115 = vunpack.c.l.s4 1934713408
        %v1116 = vunpack.c.0.s8 %v1115
        %v1117 = vlaneseq
        %v1118 = vshrl.u32 %v1117, 7
        %v1119 = vsub.s32 %v1116, %v1118
        %v1120 = vrot.slane %v1106, %v1119
        %v1121 = vcombine.low %v1089, %v1104
        %v1122 = vcombine.high %v1089, %v1104
        %v1124 = vunpack.c.l.s4 1934713408
        %v1125 = vunpack.c.0.s8 %v1124
        %v1126 = vlaneseq
        %v1127 = vshrl.u32 %v1126, 7
        %v1128 = vsub.s32 %v1125, %v1127
        %v1129 = vrot.slane %v1121, %v1128
        %v1131 = vunpack.c.l.s4 1934713408
        %v1132 = vunpack.c.0.s8 %v1131
        %v1133 = vlaneseq
        %v1134 = vshrl.u32 %v1133, 7
        %v1135 = vsub.s32 %v1132, %v1134
        %v1136 = vrot.slane %v1122, %v1135
        %v1137 = vcombine.high %v1113, 0
        %v1138 = vcombine.high %v1120, 0
        %v1139 = vcombine.high %v1129, 0
        %v1140 = vcombine.high %v1136, 0
        %1142 = vrot.lane.b32.xlu0 %v1113, 16
        %v1143 = vpop.permute.xlu0 %1142
        %1145 = vrot.lane.b32.xlu0 %v1071, 32
        %v1146 = vpop.permute.xlu0 %1145
        %1148 = vrot.lane.b32.xlu0 %v1137, 48
        %v1149 = vpop.permute.xlu0 %1148
        %1151 = vrot.lane.b32.xlu0 %v1054, 64
        %v1152 = vpop.permute.xlu0 %1151
        %1154 = vrot.lane.b32.xlu0 %v1120, 80
        %v1155 = vpop.permute.xlu0 %1154
        %1157 = vrot.lane.b32.xlu0 %v1072, 96
        %v1158 = vpop.permute.xlu0 %1157
        %1160 = vrot.lane.b32.xlu0 %v1138, 112
        %v1161 = vpop.permute.xlu0 %1160
        %1163 = vrot.lane.b32.xlu0 %v1129, 16
        %v1164 = vpop.permute.xlu0 %1163
        %1166 = vrot.lane.b32.xlu0 %v1073, 32
        %v1167 = vpop.permute.xlu0 %1166
        %1169 = vrot.lane.b32.xlu0 %v1139, 48
        %v1170 = vpop.permute.xlu0 %1169
        %1172 = vrot.lane.b32.xlu0 %v1070, 64
        %v1173 = vpop.permute.xlu0 %1172
        %1175 = vrot.lane.b32.xlu0 %v1136, 80
        %v1176 = vpop.permute.xlu0 %1175
        %1178 = vrot.lane.b32.xlu0 %v1074, 96
        %v1179 = vpop.permute.xlu0 %1178
        %1181 = vrot.lane.b32.xlu0 %v1140, 112
        %v1182 = vpop.permute.xlu0 %1181
        %v1185 = vsel %vm433, %v1047, %v1143
        %v1187 = vsel %vm437, %v1185, %v1146
        %v1189 = vsel %vm440, %v1187, %v1149
        %v1191 = vsel %vm443, %v1189, %v1152
        %v1193 = vsel %vm446, %v1191, %v1155
        %v1195 = vsel %vm449, %v1193, %v1158
        %v1197 = vsel %vm452, %v1195, %v1161
        %v1200 = vsel %vm433, %v1063, %v1164
        %v1202 = vsel %vm437, %v1200, %v1167
        %v1204 = vsel %vm440, %v1202, %v1170
        %v1206 = vsel %vm443, %v1204, %v1173
        %v1208 = vsel %vm446, %v1206, %v1176
        %v1210 = vsel %vm449, %v1208, %v1179
        %v1212 = vsel %vm452, %v1210, %v1182
        %v1215 = vunpack.c.l.b16 %v1197
        %v1216 = vunpack.c.l.b16 %v1212
        %v1217 = vpack.c.b16 %v1216, %v1215
        %v1218 = vrot.slane %v1217, 6
        %1220 = vst [vmem:[#allocation2 + $0x8] sm:$0xcc] %v1218
        %1221 = vrot.lane.b32.xlu0 %v962, 127
        %v1222 = vpop.permute.xlu0 %1221
        %1223 = vrot.lane.b32.xlu0 %v972, 127
        %v1224 = vpop.permute.xlu0 %1223
        %1225 = vrot.lane.b32.xlu0 %v982, 127
        %v1226 = vpop.permute.xlu0 %1225
        %1227 = vrot.lane.b32.xlu0 %v992, 127
        %v1228 = vpop.permute.xlu0 %1227
        %v1231 = vpack.i.b16 %v1224, %v1222
        %v1233 = vshrl.u32 %v1222, 16
        %v1234 = vshrl.u32 %v1224, 16
        %v1235 = vpack.i.b16 %v1234, %v1233
        %v1239 = vpack.i.b16 %v1228, %v1226
        %v1241 = vshrl.u32 %v1226, 16
        %v1242 = vshrl.u32 %v1228, 16
        %v1243 = vpack.i.b16 %v1242, %v1241
        %v1245 = vcombine.high %v1231, %v254
        %v1247 = vunpack.c.l.s4 1983009808
        %v1248 = vunpack.c.0.s8 %v1247
        %v1249 = vlaneseq
        %v1250 = vshrl.u32 %v1249, 7
        %v1251 = vsub.s32 %v1248, %v1250
        %v1252 = vrot.slane %v1231, %v1251
        %v1254 = vunpack.c.l.s4 1983009808
        %v1255 = vunpack.c.0.s8 %v1254
        %v1256 = vlaneseq
        %v1257 = vshrl.u32 %v1256, 7
        %v1258 = vsub.s32 %v1255, %v1257
        %v1259 = vrot.slane %v1245, %v1258
        %v1260 = vcombine.high %v1239, %v254
        %v1262 = vunpack.c.l.s4 1983009808
        %v1263 = vunpack.c.0.s8 %v1262
        %v1264 = vlaneseq
        %v1265 = vshrl.u32 %v1264, 7
        %v1266 = vsub.s32 %v1263, %v1265
        %v1267 = vrot.slane %v1239, %v1266
        %v1269 = vunpack.c.l.s4 1983009808
        %v1270 = vunpack.c.0.s8 %v1269
        %v1271 = vlaneseq
        %v1272 = vshrl.u32 %v1271, 7
        %v1273 = vsub.s32 %v1270, %v1272
        %v1274 = vrot.slane %v1260, %v1273
        %v1275 = vcombine.low %v1252, %v1267
        %v1276 = vcombine.high %v1252, %v1267
        %v1278 = vunpack.c.l.s4 1934713408
        %v1279 = vunpack.c.0.s8 %v1278
        %v1280 = vlaneseq
        %v1281 = vshrl.u32 %v1280, 7
        %v1282 = vsub.s32 %v1279, %v1281
        %v1283 = vrot.slane %v1275, %v1282
        %v1285 = vunpack.c.l.s4 1934713408
        %v1286 = vunpack.c.0.s8 %v1285
        %v1287 = vlaneseq
        %v1288 = vshrl.u32 %v1287, 7
        %v1289 = vsub.s32 %v1286, %v1288
        %v1290 = vrot.slane %v1276, %v1289
        %v1291 = vcombine.low %v1259, %v1274
        %v1292 = vcombine.high %v1259, %v1274
        %v1294 = vunpack.c.l.s4 1934713408
        %v1295 = vunpack.c.0.s8 %v1294
        %v1296 = vlaneseq
        %v1297 = vshrl.u32 %v1296, 7
        %v1298 = vsub.s32 %v1295, %v1297
        %v1299 = vrot.slane %v1291, %v1298
        %v1301 = vunpack.c.l.s4 1934713408
        %v1302 = vunpack.c.0.s8 %v1301
        %v1303 = vlaneseq
        %v1304 = vshrl.u32 %v1303, 7
        %v1305 = vsub.s32 %v1302, %v1304
        %v1306 = vrot.slane %v1292, %v1305
        %v1307 = vcombine.high %v1283, 0
        %v1308 = vcombine.high %v1290, 0
        %v1309 = vcombine.high %v1299, 0
        %v1310 = vcombine.high %v1306, 0
        %v1311 = vcombine.high %v1235, %v257
        %v1313 = vunpack.c.l.s4 1983009808
        %v1314 = vunpack.c.0.s8 %v1313
        %v1315 = vlaneseq
        %v1316 = vshrl.u32 %v1315, 7
        %v1317 = vsub.s32 %v1314, %v1316
        %v1318 = vrot.slane %v1235, %v1317
        %v1320 = vunpack.c.l.s4 1983009808
        %v1321 = vunpack.c.0.s8 %v1320
        %v1322 = vlaneseq
        %v1323 = vshrl.u32 %v1322, 7
        %v1324 = vsub.s32 %v1321, %v1323
        %v1325 = vrot.slane %v1311, %v1324
        %v1326 = vcombine.high %v1243, %v257
        %v1328 = vunpack.c.l.s4 1983009808
        %v1329 = vunpack.c.0.s8 %v1328
        %v1330 = vlaneseq
        %v1331 = vshrl.u32 %v1330, 7
        %v1332 = vsub.s32 %v1329, %v1331
        %v1333 = vrot.slane %v1243, %v1332
        %v1335 = vunpack.c.l.s4 1983009808
        %v1336 = vunpack.c.0.s8 %v1335
        %v1337 = vlaneseq
        %v1338 = vshrl.u32 %v1337, 7
        %v1339 = vsub.s32 %v1336, %v1338
        %v1340 = vrot.slane %v1326, %v1339
        %v1341 = vcombine.low %v1318, %v1333
        %v1342 = vcombine.high %v1318, %v1333
        %v1344 = vunpack.c.l.s4 1934713408
        %v1345 = vunpack.c.0.s8 %v1344
        %v1346 = vlaneseq
        %v1347 = vshrl.u32 %v1346, 7
        %v1348 = vsub.s32 %v1345, %v1347
        %v1349 = vrot.slane %v1341, %v1348
        %v1351 = vunpack.c.l.s4 1934713408
        %v1352 = vunpack.c.0.s8 %v1351
        %v1353 = vlaneseq
        %v1354 = vshrl.u32 %v1353, 7
        %v1355 = vsub.s32 %v1352, %v1354
        %v1356 = vrot.slane %v1342, %v1355
        %v1357 = vcombine.low %v1325, %v1340
        %v1358 = vcombine.high %v1325, %v1340
        %v1360 = vunpack.c.l.s4 1934713408
        %v1361 = vunpack.c.0.s8 %v1360
        %v1362 = vlaneseq
        %v1363 = vshrl.u32 %v1362, 7
        %v1364 = vsub.s32 %v1361, %v1363
        %v1365 = vrot.slane %v1357, %v1364
        %v1367 = vunpack.c.l.s4 1934713408
        %v1368 = vunpack.c.0.s8 %v1367
        %v1369 = vlaneseq
        %v1370 = vshrl.u32 %v1369, 7
        %v1371 = vsub.s32 %v1368, %v1370
        %v1372 = vrot.slane %v1358, %v1371
        %v1373 = vcombine.high %v1349, 0
        %v1374 = vcombine.high %v1356, 0
        %v1375 = vcombine.high %v1365, 0
        %v1376 = vcombine.high %v1372, 0
        %1378 = vrot.lane.b32.xlu0 %v1349, 16
        %v1379 = vpop.permute.xlu0 %1378
        %1381 = vrot.lane.b32.xlu0 %v1307, 32
        %v1382 = vpop.permute.xlu0 %1381
        %1384 = vrot.lane.b32.xlu0 %v1373, 48
        %v1385 = vpop.permute.xlu0 %1384
        %1387 = vrot.lane.b32.xlu0 %v1290, 64
        %v1388 = vpop.permute.xlu0 %1387
        %1390 = vrot.lane.b32.xlu0 %v1356, 80
        %v1391 = vpop.permute.xlu0 %1390
        %1393 = vrot.lane.b32.xlu0 %v1308, 96
        %v1394 = vpop.permute.xlu0 %1393
        %1396 = vrot.lane.b32.xlu0 %v1374, 112
        %v1397 = vpop.permute.xlu0 %1396
        %1399 = vrot.lane.b32.xlu0 %v1365, 16
        %v1400 = vpop.permute.xlu0 %1399
        %1402 = vrot.lane.b32.xlu0 %v1309, 32
        %v1403 = vpop.permute.xlu0 %1402
        %1405 = vrot.lane.b32.xlu0 %v1375, 48
        %v1406 = vpop.permute.xlu0 %1405
        %1408 = vrot.lane.b32.xlu0 %v1306, 64
        %v1409 = vpop.permute.xlu0 %1408
        %1411 = vrot.lane.b32.xlu0 %v1372, 80
        %v1412 = vpop.permute.xlu0 %1411
        %1414 = vrot.lane.b32.xlu0 %v1310, 96
        %v1415 = vpop.permute.xlu0 %1414
        %1417 = vrot.lane.b32.xlu0 %v1376, 112
        %v1418 = vpop.permute.xlu0 %1417
        %v1421 = vsel %vm433, %v1283, %v1379
        %v1423 = vsel %vm437, %v1421, %v1382
        %v1425 = vsel %vm440, %v1423, %v1385
        %v1427 = vsel %vm443, %v1425, %v1388
        %v1429 = vsel %vm446, %v1427, %v1391
        %v1431 = vsel %vm449, %v1429, %v1394
        %v1433 = vsel %vm452, %v1431, %v1397
        %v1436 = vsel %vm433, %v1299, %v1400
        %v1438 = vsel %vm437, %v1436, %v1403
        %v1440 = vsel %vm440, %v1438, %v1406
        %v1442 = vsel %vm443, %v1440, %v1409
        %v1444 = vsel %vm446, %v1442, %v1412
        %v1446 = vsel %vm449, %v1444, %v1415
        %v1448 = vsel %vm452, %v1446, %v1418
        %v1451 = vunpack.c.l.b16 %v1433
        %v1452 = vunpack.c.l.b16 %v1448
        %v1453 = vpack.c.b16 %v1452, %v1451
        %1455 = vst [vmem:[#allocation2 + $0x10] sm:$0x33] %v1453
        %1456 = vrot.lane.b32.xlu0 %v962, 126
        %v1457 = vpop.permute.xlu0 %1456
        %1458 = vrot.lane.b32.xlu0 %v972, 126
        %v1459 = vpop.permute.xlu0 %1458
        %1460 = vrot.lane.b32.xlu0 %v982, 126
        %v1461 = vpop.permute.xlu0 %1460
        %1462 = vrot.lane.b32.xlu0 %v992, 126
        %v1463 = vpop.permute.xlu0 %1462
        %v1466 = vpack.i.b16 %v1459, %v1457
        %v1468 = vshrl.u32 %v1457, 16
        %v1469 = vshrl.u32 %v1459, 16
        %v1470 = vpack.i.b16 %v1469, %v1468
        %v1474 = vpack.i.b16 %v1463, %v1461
        %v1476 = vshrl.u32 %v1461, 16
        %v1477 = vshrl.u32 %v1463, 16
        %v1478 = vpack.i.b16 %v1477, %v1476
        %v1480 = vcombine.high %v1466, %v254
        %v1482 = vunpack.c.l.s4 1983009808
        %v1483 = vunpack.c.0.s8 %v1482
        %v1484 = vlaneseq
        %v1485 = vshrl.u32 %v1484, 7
        %v1486 = vsub.s32 %v1483, %v1485
        %v1487 = vrot.slane %v1466, %v1486
        %v1489 = vunpack.c.l.s4 1983009808
        %v1490 = vunpack.c.0.s8 %v1489
        %v1491 = vlaneseq
        %v1492 = vshrl.u32 %v1491, 7
        %v1493 = vsub.s32 %v1490, %v1492
        %v1494 = vrot.slane %v1480, %v1493
        %v1495 = vcombine.high %v1474, %v254
        %v1497 = vunpack.c.l.s4 1983009808
        %v1498 = vunpack.c.0.s8 %v1497
        %v1499 = vlaneseq
        %v1500 = vshrl.u32 %v1499, 7
        %v1501 = vsub.s32 %v1498, %v1500
        %v1502 = vrot.slane %v1474, %v1501
        %v1504 = vunpack.c.l.s4 1983009808
        %v1505 = vunpack.c.0.s8 %v1504
        %v1506 = vlaneseq
        %v1507 = vshrl.u32 %v1506, 7
        %v1508 = vsub.s32 %v1505, %v1507
        %v1509 = vrot.slane %v1495, %v1508
        %v1510 = vcombine.low %v1487, %v1502
        %v1511 = vcombine.high %v1487, %v1502
        %v1513 = vunpack.c.l.s4 1934713408
        %v1514 = vunpack.c.0.s8 %v1513
        %v1515 = vlaneseq
        %v1516 = vshrl.u32 %v1515, 7
        %v1517 = vsub.s32 %v1514, %v1516
        %v1518 = vrot.slane %v1510, %v1517
        %v1520 = vunpack.c.l.s4 1934713408
        %v1521 = vunpack.c.0.s8 %v1520
        %v1522 = vlaneseq
        %v1523 = vshrl.u32 %v1522, 7
        %v1524 = vsub.s32 %v1521, %v1523
        %v1525 = vrot.slane %v1511, %v1524
        %v1526 = vcombine.low %v1494, %v1509
        %v1527 = vcombine.high %v1494, %v1509
        %v1529 = vunpack.c.l.s4 1934713408
        %v1530 = vunpack.c.0.s8 %v1529
        %v1531 = vlaneseq
        %v1532 = vshrl.u32 %v1531, 7
        %v1533 = vsub.s32 %v1530, %v1532
        %v1534 = vrot.slane %v1526, %v1533
        %v1536 = vunpack.c.l.s4 1934713408
        %v1537 = vunpack.c.0.s8 %v1536
        %v1538 = vlaneseq
        %v1539 = vshrl.u32 %v1538, 7
        %v1540 = vsub.s32 %v1537, %v1539
        %v1541 = vrot.slane %v1527, %v1540
        %v1542 = vcombine.high %v1518, 0
        %v1543 = vcombine.high %v1525, 0
        %v1544 = vcombine.high %v1534, 0
        %v1545 = vcombine.high %v1541, 0
        %v1546 = vcombine.high %v1470, %v257
        %v1548 = vunpack.c.l.s4 1983009808
        %v1549 = vunpack.c.0.s8 %v1548
        %v1550 = vlaneseq
        %v1551 = vshrl.u32 %v1550, 7
        %v1552 = vsub.s32 %v1549, %v1551
        %v1553 = vrot.slane %v1470, %v1552
        %v1555 = vunpack.c.l.s4 1983009808
        %v1556 = vunpack.c.0.s8 %v1555
        %v1557 = vlaneseq
        %v1558 = vshrl.u32 %v1557, 7
        %v1559 = vsub.s32 %v1556, %v1558
        %v1560 = vrot.slane %v1546, %v1559
        %v1561 = vcombine.high %v1478, %v257
        %v1563 = vunpack.c.l.s4 1983009808
        %v1564 = vunpack.c.0.s8 %v1563
        %v1565 = vlaneseq
        %v1566 = vshrl.u32 %v1565, 7
        %v1567 = vsub.s32 %v1564, %v1566
        %v1568 = vrot.slane %v1478, %v1567
        %v1570 = vunpack.c.l.s4 1983009808
        %v1571 = vunpack.c.0.s8 %v1570
        %v1572 = vlaneseq
        %v1573 = vshrl.u32 %v1572, 7
        %v1574 = vsub.s32 %v1571, %v1573
        %v1575 = vrot.slane %v1561, %v1574
        %v1576 = vcombine.low %v1553, %v1568
        %v1577 = vcombine.high %v1553, %v1568
        %v1579 = vunpack.c.l.s4 1934713408
        %v1580 = vunpack.c.0.s8 %v1579
        %v1581 = vlaneseq
        %v1582 = vshrl.u32 %v1581, 7
        %v1583 = vsub.s32 %v1580, %v1582
        %v1584 = vrot.slane %v1576, %v1583
        %v1586 = vunpack.c.l.s4 1934713408
        %v1587 = vunpack.c.0.s8 %v1586
        %v1588 = vlaneseq
        %v1589 = vshrl.u32 %v1588, 7
        %v1590 = vsub.s32 %v1587, %v1589
        %v1591 = vrot.slane %v1577, %v1590
        %v1592 = vcombine.low %v1560, %v1575
        %v1593 = vcombine.high %v1560, %v1575
        %v1595 = vunpack.c.l.s4 1934713408
        %v1596 = vunpack.c.0.s8 %v1595
        %v1597 = vlaneseq
        %v1598 = vshrl.u32 %v1597, 7
        %v1599 = vsub.s32 %v1596, %v1598
        %v1600 = vrot.slane %v1592, %v1599
        %v1602 = vunpack.c.l.s4 1934713408
        %v1603 = vunpack.c.0.s8 %v1602
        %v1604 = vlaneseq
        %v1605 = vshrl.u32 %v1604, 7
        %v1606 = vsub.s32 %v1603, %v1605
        %v1607 = vrot.slane %v1593, %v1606
        %v1608 = vcombine.high %v1584, 0
        %v1609 = vcombine.high %v1591, 0
        %v1610 = vcombine.high %v1600, 0
        %v1611 = vcombine.high %v1607, 0
        %1613 = vrot.lane.b32.xlu0 %v1584, 16
        %v1614 = vpop.permute.xlu0 %1613
        %1616 = vrot.lane.b32.xlu0 %v1542, 32
        %v1617 = vpop.permute.xlu0 %1616
        %1619 = vrot.lane.b32.xlu0 %v1608, 48
        %v1620 = vpop.permute.xlu0 %1619
        %1622 = vrot.lane.b32.xlu0 %v1525, 64
        %v1623 = vpop.permute.xlu0 %1622
        %1625 = vrot.lane.b32.xlu0 %v1591, 80
        %v1626 = vpop.permute.xlu0 %1625
        %1628 = vrot.lane.b32.xlu0 %v1543, 96
        %v1629 = vpop.permute.xlu0 %1628
        %1631 = vrot.lane.b32.xlu0 %v1609, 112
        %v1632 = vpop.permute.xlu0 %1631
        %1634 = vrot.lane.b32.xlu0 %v1600, 16
        %v1635 = vpop.permute.xlu0 %1634
        %1637 = vrot.lane.b32.xlu0 %v1544, 32
        %v1638 = vpop.permute.xlu0 %1637
        %1640 = vrot.lane.b32.xlu0 %v1610, 48
        %v1641 = vpop.permute.xlu0 %1640
        %1643 = vrot.lane.b32.xlu0 %v1541, 64
        %v1644 = vpop.permute.xlu0 %1643
        %1646 = vrot.lane.b32.xlu0 %v1607, 80
        %v1647 = vpop.permute.xlu0 %1646
        %1649 = vrot.lane.b32.xlu0 %v1545, 96
        %v1650 = vpop.permute.xlu0 %1649
        %1652 = vrot.lane.b32.xlu0 %v1611, 112
        %v1653 = vpop.permute.xlu0 %1652
        %v1656 = vsel %vm433, %v1518, %v1614
        %v1658 = vsel %vm437, %v1656, %v1617
        %v1660 = vsel %vm440, %v1658, %v1620
        %v1662 = vsel %vm443, %v1660, %v1623
        %v1664 = vsel %vm446, %v1662, %v1626
        %v1666 = vsel %vm449, %v1664, %v1629
        %v1668 = vsel %vm452, %v1666, %v1632
        %v1671 = vsel %vm433, %v1534, %v1635
        %v1673 = vsel %vm437, %v1671, %v1638
        %v1675 = vsel %vm440, %v1673, %v1641
        %v1677 = vsel %vm443, %v1675, %v1644
        %v1679 = vsel %vm446, %v1677, %v1647
        %v1681 = vsel %vm449, %v1679, %v1650
        %v1683 = vsel %vm452, %v1681, %v1653
        %v1686 = vunpack.c.l.b16 %v1668
        %v1687 = vunpack.c.l.b16 %v1683
        %v1688 = vpack.c.b16 %v1687, %v1686
        %v1689 = vrot.slane %v1688, 6
        %1691 = vst [vmem:[#allocation2 + $0x10] sm:$0xcc] %v1689
        %vm1696 = vcmask 1046528
        %v1697 = vrot.slane %v229, 1
        %v1698 = vrot.slane %v230, 1
        %v1699 = vsel %vm1696, %v1697, %v1698
        %v1700 = vrot.slane %v231, 1
        %v1701 = vrot.slane %v232, 1
        %v1702 = vsel %vm1696, %v1700, %v1701
        %v1703 = vrot.slane %v233, 1
        %v1704 = vrot.slane %v234, 1
        %v1705 = vsel %vm1696, %v1703, %v1704
        %v1706 = vrot.slane %v235, 1
        %v1707 = vrot.slane %v236, 1
        %v1708 = vsel %vm1696, %v1706, %v1707
        %v1711 = vpack.i.b16 %v1702, %v1699
        %v1713 = vshrl.u32 %v1699, 16
        %v1714 = vshrl.u32 %v1702, 16
        %v1715 = vpack.i.b16 %v1714, %v1713
        %v1719 = vpack.i.b16 %v1708, %v1705
        %v1721 = vshrl.u32 %v1705, 16
        %v1722 = vshrl.u32 %v1708, 16
        %v1723 = vpack.i.b16 %v1722, %v1721
        %v1725 = vcombine.high %v1711, %v254
        %v1727 = vunpack.c.l.s4 1983009808
        %v1728 = vunpack.c.0.s8 %v1727
        %v1729 = vlaneseq
        %v1730 = vshrl.u32 %v1729, 7
        %v1731 = vsub.s32 %v1728, %v1730
        %v1732 = vrot.slane %v1711, %v1731
        %v1734 = vunpack.c.l.s4 1983009808
        %v1735 = vunpack.c.0.s8 %v1734
        %v1736 = vlaneseq
        %v1737 = vshrl.u32 %v1736, 7
        %v1738 = vsub.s32 %v1735, %v1737
        %v1739 = vrot.slane %v1725, %v1738
        %v1740 = vcombine.high %v1719, %v254
        %v1742 = vunpack.c.l.s4 1983009808
        %v1743 = vunpack.c.0.s8 %v1742
        %v1744 = vlaneseq
        %v1745 = vshrl.u32 %v1744, 7
        %v1746 = vsub.s32 %v1743, %v1745
        %v1747 = vrot.slane %v1719, %v1746
        %v1749 = vunpack.c.l.s4 1983009808
        %v1750 = vunpack.c.0.s8 %v1749
        %v1751 = vlaneseq
        %v1752 = vshrl.u32 %v1751, 7
        %v1753 = vsub.s32 %v1750, %v1752
        %v1754 = vrot.slane %v1740, %v1753
        %v1755 = vcombine.low %v1732, %v1747
        %v1756 = vcombine.high %v1732, %v1747
        %v1758 = vunpack.c.l.s4 1934713408
        %v1759 = vunpack.c.0.s8 %v1758
        %v1760 = vlaneseq
        %v1761 = vshrl.u32 %v1760, 7
        %v1762 = vsub.s32 %v1759, %v1761
        %v1763 = vrot.slane %v1755, %v1762
        %v1765 = vunpack.c.l.s4 1934713408
        %v1766 = vunpack.c.0.s8 %v1765
        %v1767 = vlaneseq
        %v1768 = vshrl.u32 %v1767, 7
        %v1769 = vsub.s32 %v1766, %v1768
        %v1770 = vrot.slane %v1756, %v1769
        %v1771 = vcombine.low %v1739, %v1754
        %v1772 = vcombine.high %v1739, %v1754
        %v1774 = vunpack.c.l.s4 1934713408
        %v1775 = vunpack.c.0.s8 %v1774
        %v1776 = vlaneseq
        %v1777 = vshrl.u32 %v1776, 7
        %v1778 = vsub.s32 %v1775, %v1777
        %v1779 = vrot.slane %v1771, %v1778
        %v1781 = vunpack.c.l.s4 1934713408
        %v1782 = vunpack.c.0.s8 %v1781
        %v1783 = vlaneseq
        %v1784 = vshrl.u32 %v1783, 7
        %v1785 = vsub.s32 %v1782, %v1784
        %v1786 = vrot.slane %v1772, %v1785
        %v1787 = vcombine.high %v1763, 0
        %v1788 = vcombine.high %v1770, 0
        %v1789 = vcombine.high %v1779, 0
        %v1790 = vcombine.high %v1786, 0
        %v1791 = vcombine.high %v1715, %v257
        %v1793 = vunpack.c.l.s4 1983009808
        %v1794 = vunpack.c.0.s8 %v1793
        %v1795 = vlaneseq
        %v1796 = vshrl.u32 %v1795, 7
        %v1797 = vsub.s32 %v1794, %v1796
        %v1798 = vrot.slane %v1715, %v1797
        %v1800 = vunpack.c.l.s4 1983009808
        %v1801 = vunpack.c.0.s8 %v1800
        %v1802 = vlaneseq
        %v1803 = vshrl.u32 %v1802, 7
        %v1804 = vsub.s32 %v1801, %v1803
        %v1805 = vrot.slane %v1791, %v1804
        %v1806 = vcombine.high %v1723, %v257
        %v1808 = vunpack.c.l.s4 1983009808
        %v1809 = vunpack.c.0.s8 %v1808
        %v1810 = vlaneseq
        %v1811 = vshrl.u32 %v1810, 7
        %v1812 = vsub.s32 %v1809, %v1811
        %v1813 = vrot.slane %v1723, %v1812
        %v1815 = vunpack.c.l.s4 1983009808
        %v1816 = vunpack.c.0.s8 %v1815
        %v1817 = vlaneseq
        %v1818 = vshrl.u32 %v1817, 7
        %v1819 = vsub.s32 %v1816, %v1818
        %v1820 = vrot.slane %v1806, %v1819
        %v1821 = vcombine.low %v1798, %v1813
        %v1822 = vcombine.high %v1798, %v1813
        %v1824 = vunpack.c.l.s4 1934713408
        %v1825 = vunpack.c.0.s8 %v1824
        %v1826 = vlaneseq
        %v1827 = vshrl.u32 %v1826, 7
        %v1828 = vsub.s32 %v1825, %v1827
        %v1829 = vrot.slane %v1821, %v1828
        %v1831 = vunpack.c.l.s4 1934713408
        %v1832 = vunpack.c.0.s8 %v1831
        %v1833 = vlaneseq
        %v1834 = vshrl.u32 %v1833, 7
        %v1835 = vsub.s32 %v1832, %v1834
        %v1836 = vrot.slane %v1822, %v1835
        %v1837 = vcombine.low %v1805, %v1820
        %v1838 = vcombine.high %v1805, %v1820
        %v1840 = vunpack.c.l.s4 1934713408
        %v1841 = vunpack.c.0.s8 %v1840
        %v1842 = vlaneseq
        %v1843 = vshrl.u32 %v1842, 7
        %v1844 = vsub.s32 %v1841, %v1843
        %v1845 = vrot.slane %v1837, %v1844
        %v1847 = vunpack.c.l.s4 1934713408
        %v1848 = vunpack.c.0.s8 %v1847
        %v1849 = vlaneseq
        %v1850 = vshrl.u32 %v1849, 7
        %v1851 = vsub.s32 %v1848, %v1850
        %v1852 = vrot.slane %v1838, %v1851
        %v1853 = vcombine.high %v1829, 0
        %v1854 = vcombine.high %v1836, 0
        %v1855 = vcombine.high %v1845, 0
        %v1856 = vcombine.high %v1852, 0
        %1858 = vrot.lane.b32.xlu0 %v1829, 16
        %v1859 = vpop.permute.xlu0 %1858
        %1861 = vrot.lane.b32.xlu0 %v1787, 32
        %v1862 = vpop.permute.xlu0 %1861
        %1864 = vrot.lane.b32.xlu0 %v1853, 48
        %v1865 = vpop.permute.xlu0 %1864
        %1867 = vrot.lane.b32.xlu0 %v1770, 64
        %v1868 = vpop.permute.xlu0 %1867
        %1870 = vrot.lane.b32.xlu0 %v1836, 80
        %v1871 = vpop.permute.xlu0 %1870
        %1873 = vrot.lane.b32.xlu0 %v1788, 96
        %v1874 = vpop.permute.xlu0 %1873
        %1876 = vrot.lane.b32.xlu0 %v1854, 112
        %v1877 = vpop.permute.xlu0 %1876
        %1879 = vrot.lane.b32.xlu0 %v1845, 16
        %v1880 = vpop.permute.xlu0 %1879
        %1882 = vrot.lane.b32.xlu0 %v1789, 32
        %v1883 = vpop.permute.xlu0 %1882
        %1885 = vrot.lane.b32.xlu0 %v1855, 48
        %v1886 = vpop.permute.xlu0 %1885
        %1888 = vrot.lane.b32.xlu0 %v1786, 64
        %v1889 = vpop.permute.xlu0 %1888
        %1891 = vrot.lane.b32.xlu0 %v1852, 80
        %v1892 = vpop.permute.xlu0 %1891
        %1894 = vrot.lane.b32.xlu0 %v1790, 96
        %v1895 = vpop.permute.xlu0 %1894
        %1897 = vrot.lane.b32.xlu0 %v1856, 112
        %v1898 = vpop.permute.xlu0 %1897
        %v1901 = vsel %vm433, %v1763, %v1859
        %v1903 = vsel %vm437, %v1901, %v1862
        %v1905 = vsel %vm440, %v1903, %v1865
        %v1907 = vsel %vm443, %v1905, %v1868
        %v1909 = vsel %vm446, %v1907, %v1871
        %v1911 = vsel %vm449, %v1909, %v1874
        %v1913 = vsel %vm452, %v1911, %v1877
        %v1916 = vsel %vm433, %v1779, %v1880
        %v1918 = vsel %vm437, %v1916, %v1883
        %v1920 = vsel %vm440, %v1918, %v1886
        %v1922 = vsel %vm443, %v1920, %v1889
        %v1924 = vsel %vm446, %v1922, %v1892
        %v1926 = vsel %vm449, %v1924, %v1895
        %v1928 = vsel %vm452, %v1926, %v1898
        %v1931 = vunpack.c.l.b16 %v1913
        %v1932 = vunpack.c.l.b16 %v1928
        %v1933 = vpack.c.b16 %v1932, %v1931
        %1935 = vst [vmem:[#allocation2 + $0x18] sm:$0x33] %v1933
        %1936 = vrot.lane.b32.xlu0 %v1699, 127
        %v1937 = vpop.permute.xlu0 %1936
        %1938 = vrot.lane.b32.xlu0 %v1702, 127
        %v1939 = vpop.permute.xlu0 %1938
        %1940 = vrot.lane.b32.xlu0 %v1705, 127
        %v1941 = vpop.permute.xlu0 %1940
        %1942 = vrot.lane.b32.xlu0 %v1708, 127
        %v1943 = vpop.permute.xlu0 %1942
        %v1946 = vpack.i.b16 %v1939, %v1937
        %v1948 = vshrl.u32 %v1937, 16
        %v1949 = vshrl.u32 %v1939, 16
        %v1950 = vpack.i.b16 %v1949, %v1948
        %v1954 = vpack.i.b16 %v1943, %v1941
        %v1956 = vshrl.u32 %v1941, 16
        %v1957 = vshrl.u32 %v1943, 16
        %v1958 = vpack.i.b16 %v1957, %v1956
        %v1960 = vcombine.high %v1946, %v254
        %v1962 = vunpack.c.l.s4 1983009808
        %v1963 = vunpack.c.0.s8 %v1962
        %v1964 = vlaneseq
        %v1965 = vshrl.u32 %v1964, 7
        %v1966 = vsub.s32 %v1963, %v1965
        %v1967 = vrot.slane %v1946, %v1966
        %v1969 = vunpack.c.l.s4 1983009808
        %v1970 = vunpack.c.0.s8 %v1969
        %v1971 = vlaneseq
        %v1972 = vshrl.u32 %v1971, 7
        %v1973 = vsub.s32 %v1970, %v1972
        %v1974 = vrot.slane %v1960, %v1973
        %v1975 = vcombine.high %v1954, %v254
        %v1977 = vunpack.c.l.s4 1983009808
        %v1978 = vunpack.c.0.s8 %v1977
        %v1979 = vlaneseq
        %v1980 = vshrl.u32 %v1979, 7
        %v1981 = vsub.s32 %v1978, %v1980
        %v1982 = vrot.slane %v1954, %v1981
        %v1984 = vunpack.c.l.s4 1983009808
        %v1985 = vunpack.c.0.s8 %v1984
        %v1986 = vlaneseq
        %v1987 = vshrl.u32 %v1986, 7
        %v1988 = vsub.s32 %v1985, %v1987
        %v1989 = vrot.slane %v1975, %v1988
        %v1990 = vcombine.low %v1967, %v1982
        %v1991 = vcombine.high %v1967, %v1982
        %v1993 = vunpack.c.l.s4 1934713408
        %v1994 = vunpack.c.0.s8 %v1993
        %v1995 = vlaneseq
        %v1996 = vshrl.u32 %v1995, 7
        %v1997 = vsub.s32 %v1994, %v1996
        %v1998 = vrot.slane %v1990, %v1997
        %v2000 = vunpack.c.l.s4 1934713408
        %v2001 = vunpack.c.0.s8 %v2000
        %v2002 = vlaneseq
        %v2003 = vshrl.u32 %v2002, 7
        %v2004 = vsub.s32 %v2001, %v2003
        %v2005 = vrot.slane %v1991, %v2004
        %v2006 = vcombine.low %v1974, %v1989
        %v2007 = vcombine.high %v1974, %v1989
        %v2009 = vunpack.c.l.s4 1934713408
        %v2010 = vunpack.c.0.s8 %v2009
        %v2011 = vlaneseq
        %v2012 = vshrl.u32 %v2011, 7
        %v2013 = vsub.s32 %v2010, %v2012
        %v2014 = vrot.slane %v2006, %v2013
        %v2016 = vunpack.c.l.s4 1934713408
        %v2017 = vunpack.c.0.s8 %v2016
        %v2018 = vlaneseq
        %v2019 = vshrl.u32 %v2018, 7
        %v2020 = vsub.s32 %v2017, %v2019
        %v2021 = vrot.slane %v2007, %v2020
        %v2022 = vcombine.high %v1998, 0
        %v2023 = vcombine.high %v2005, 0
        %v2024 = vcombine.high %v2014, 0
        %v2025 = vcombine.high %v2021, 0
        %v2026 = vcombine.high %v1950, %v257
        %v2028 = vunpack.c.l.s4 1983009808
        %v2029 = vunpack.c.0.s8 %v2028
        %v2030 = vlaneseq
        %v2031 = vshrl.u32 %v2030, 7
        %v2032 = vsub.s32 %v2029, %v2031
        %v2033 = vrot.slane %v1950, %v2032
        %v2035 = vunpack.c.l.s4 1983009808
        %v2036 = vunpack.c.0.s8 %v2035
        %v2037 = vlaneseq
        %v2038 = vshrl.u32 %v2037, 7
        %v2039 = vsub.s32 %v2036, %v2038
        %v2040 = vrot.slane %v2026, %v2039
        %v2041 = vcombine.high %v1958, %v257
        %v2043 = vunpack.c.l.s4 1983009808
        %v2044 = vunpack.c.0.s8 %v2043
        %v2045 = vlaneseq
        %v2046 = vshrl.u32 %v2045, 7
        %v2047 = vsub.s32 %v2044, %v2046
        %v2048 = vrot.slane %v1958, %v2047
        %v2050 = vunpack.c.l.s4 1983009808
        %v2051 = vunpack.c.0.s8 %v2050
        %v2052 = vlaneseq
        %v2053 = vshrl.u32 %v2052, 7
        %v2054 = vsub.s32 %v2051, %v2053
        %v2055 = vrot.slane %v2041, %v2054
        %v2056 = vcombine.low %v2033, %v2048
        %v2057 = vcombine.high %v2033, %v2048
        %v2059 = vunpack.c.l.s4 1934713408
        %v2060 = vunpack.c.0.s8 %v2059
        %v2061 = vlaneseq
        %v2062 = vshrl.u32 %v2061, 7
        %v2063 = vsub.s32 %v2060, %v2062
        %v2064 = vrot.slane %v2056, %v2063
        %v2066 = vunpack.c.l.s4 1934713408
        %v2067 = vunpack.c.0.s8 %v2066
        %v2068 = vlaneseq
        %v2069 = vshrl.u32 %v2068, 7
        %v2070 = vsub.s32 %v2067, %v2069
        %v2071 = vrot.slane %v2057, %v2070
        %v2072 = vcombine.low %v2040, %v2055
        %v2073 = vcombine.high %v2040, %v2055
        %v2075 = vunpack.c.l.s4 1934713408
        %v2076 = vunpack.c.0.s8 %v2075
        %v2077 = vlaneseq
        %v2078 = vshrl.u32 %v2077, 7
        %v2079 = vsub.s32 %v2076, %v2078
        %v2080 = vrot.slane %v2072, %v2079
        %v2082 = vunpack.c.l.s4 1934713408
        %v2083 = vunpack.c.0.s8 %v2082
        %v2084 = vlaneseq
        %v2085 = vshrl.u32 %v2084, 7
        %v2086 = vsub.s32 %v2083, %v2085
        %v2087 = vrot.slane %v2073, %v2086
        %v2088 = vcombine.high %v2064, 0
        %v2089 = vcombine.high %v2071, 0
        %v2090 = vcombine.high %v2080, 0
        %v2091 = vcombine.high %v2087, 0
        %2093 = vrot.lane.b32.xlu0 %v2064, 16
        %v2094 = vpop.permute.xlu0 %2093
        %2096 = vrot.lane.b32.xlu0 %v2022, 32
        %v2097 = vpop.permute.xlu0 %2096
        %2099 = vrot.lane.b32.xlu0 %v2088, 48
        %v2100 = vpop.permute.xlu0 %2099
        %2102 = vrot.lane.b32.xlu0 %v2005, 64
        %v2103 = vpop.permute.xlu0 %2102
        %2105 = vrot.lane.b32.xlu0 %v2071, 80
        %v2106 = vpop.permute.xlu0 %2105
        %2108 = vrot.lane.b32.xlu0 %v2023, 96
        %v2109 = vpop.permute.xlu0 %2108
        %2111 = vrot.lane.b32.xlu0 %v2089, 112
        %v2112 = vpop.permute.xlu0 %2111
        %2114 = vrot.lane.b32.xlu0 %v2080, 16
        %v2115 = vpop.permute.xlu0 %2114
        %2117 = vrot.lane.b32.xlu0 %v2024, 32
        %v2118 = vpop.permute.xlu0 %2117
        %2120 = vrot.lane.b32.xlu0 %v2090, 48
        %v2121 = vpop.permute.xlu0 %2120
        %2123 = vrot.lane.b32.xlu0 %v2021, 64
        %v2124 = vpop.permute.xlu0 %2123
        %2126 = vrot.lane.b32.xlu0 %v2087, 80
        %v2127 = vpop.permute.xlu0 %2126
        %2129 = vrot.lane.b32.xlu0 %v2025, 96
        %v2130 = vpop.permute.xlu0 %2129
        %2132 = vrot.lane.b32.xlu0 %v2091, 112
        %v2133 = vpop.permute.xlu0 %2132
        %v2136 = vsel %vm433, %v1998, %v2094
        %v2138 = vsel %vm437, %v2136, %v2097
        %v2140 = vsel %vm440, %v2138, %v2100
        %v2142 = vsel %vm443, %v2140, %v2103
        %v2144 = vsel %vm446, %v2142, %v2106
        %v2146 = vsel %vm449, %v2144, %v2109
        %v2148 = vsel %vm452, %v2146, %v2112
        %v2151 = vsel %vm433, %v2014, %v2115
        %v2153 = vsel %vm437, %v2151, %v2118
        %v2155 = vsel %vm440, %v2153, %v2121
        %v2157 = vsel %vm443, %v2155, %v2124
        %v2159 = vsel %vm446, %v2157, %v2127
        %v2161 = vsel %vm449, %v2159, %v2130
        %v2163 = vsel %vm452, %v2161, %v2133
        %v2166 = vunpack.c.l.b16 %v2148
        %v2167 = vunpack.c.l.b16 %v2163
        %v2168 = vpack.c.b16 %v2167, %v2166
        %v2169 = vrot.slane %v2168, 6
        %2171 = vst [vmem:[#allocation2 + $0x18] sm:$0xcc] %v2169
        %2172 = vrot.lane.b32.xlu0 %v1699, 126
        %v2173 = vpop.permute.xlu0 %2172
        %2174 = vrot.lane.b32.xlu0 %v1702, 126
        %v2175 = vpop.permute.xlu0 %2174
        %2176 = vrot.lane.b32.xlu0 %v1705, 126
        %v2177 = vpop.permute.xlu0 %2176
        %2178 = vrot.lane.b32.xlu0 %v1708, 126
        %v2179 = vpop.permute.xlu0 %2178
        %v2182 = vpack.i.b16 %v2175, %v2173
        %v2184 = vshrl.u32 %v2173, 16
        %v2185 = vshrl.u32 %v2175, 16
        %v2186 = vpack.i.b16 %v2185, %v2184
        %v2190 = vpack.i.b16 %v2179, %v2177
        %v2192 = vshrl.u32 %v2177, 16
        %v2193 = vshrl.u32 %v2179, 16
        %v2194 = vpack.i.b16 %v2193, %v2192
        %v2196 = vcombine.high %v2182, %v254
        %v2198 = vunpack.c.l.s4 1983009808
        %v2199 = vunpack.c.0.s8 %v2198
        %v2200 = vlaneseq
        %v2201 = vshrl.u32 %v2200, 7
        %v2202 = vsub.s32 %v2199, %v2201
        %v2203 = vrot.slane %v2182, %v2202
        %v2205 = vunpack.c.l.s4 1983009808
        %v2206 = vunpack.c.0.s8 %v2205
        %v2207 = vlaneseq
        %v2208 = vshrl.u32 %v2207, 7
        %v2209 = vsub.s32 %v2206, %v2208
        %v2210 = vrot.slane %v2196, %v2209
        %v2211 = vcombine.high %v2190, %v254
        %v2213 = vunpack.c.l.s4 1983009808
        %v2214 = vunpack.c.0.s8 %v2213
        %v2215 = vlaneseq
        %v2216 = vshrl.u32 %v2215, 7
        %v2217 = vsub.s32 %v2214, %v2216
        %v2218 = vrot.slane %v2190, %v2217
        %v2220 = vunpack.c.l.s4 1983009808
        %v2221 = vunpack.c.0.s8 %v2220
        %v2222 = vlaneseq
        %v2223 = vshrl.u32 %v2222, 7
        %v2224 = vsub.s32 %v2221, %v2223
        %v2225 = vrot.slane %v2211, %v2224
        %v2226 = vcombine.low %v2203, %v2218
        %v2227 = vcombine.high %v2203, %v2218
        %v2229 = vunpack.c.l.s4 1934713408
        %v2230 = vunpack.c.0.s8 %v2229
        %v2231 = vlaneseq
        %v2232 = vshrl.u32 %v2231, 7
        %v2233 = vsub.s32 %v2230, %v2232
        %v2234 = vrot.slane %v2226, %v2233
        %v2236 = vunpack.c.l.s4 1934713408
        %v2237 = vunpack.c.0.s8 %v2236
        %v2238 = vlaneseq
        %v2239 = vshrl.u32 %v2238, 7
        %v2240 = vsub.s32 %v2237, %v2239
        %v2241 = vrot.slane %v2227, %v2240
        %v2242 = vcombine.low %v2210, %v2225
        %v2243 = vcombine.high %v2210, %v2225
        %v2245 = vunpack.c.l.s4 1934713408
        %v2246 = vunpack.c.0.s8 %v2245
        %v2247 = vlaneseq
        %v2248 = vshrl.u32 %v2247, 7
        %v2249 = vsub.s32 %v2246, %v2248
        %v2250 = vrot.slane %v2242, %v2249
        %v2252 = vunpack.c.l.s4 1934713408
        %v2253 = vunpack.c.0.s8 %v2252
        %v2254 = vlaneseq
        %v2255 = vshrl.u32 %v2254, 7
        %v2256 = vsub.s32 %v2253, %v2255
        %v2257 = vrot.slane %v2243, %v2256
        %v2258 = vcombine.high %v2234, 0
        %v2259 = vcombine.high %v2241, 0
        %v2260 = vcombine.high %v2250, 0
        %v2261 = vcombine.high %v2257, 0
        %v2262 = vcombine.high %v2186, %v257
        %v2264 = vunpack.c.l.s4 1983009808
        %v2265 = vunpack.c.0.s8 %v2264
        %v2266 = vlaneseq
        %v2267 = vshrl.u32 %v2266, 7
        %v2268 = vsub.s32 %v2265, %v2267
        %v2269 = vrot.slane %v2186, %v2268
        %v2271 = vunpack.c.l.s4 1983009808
        %v2272 = vunpack.c.0.s8 %v2271
        %v2273 = vlaneseq
        %v2274 = vshrl.u32 %v2273, 7
        %v2275 = vsub.s32 %v2272, %v2274
        %v2276 = vrot.slane %v2262, %v2275
        %v2277 = vcombine.high %v2194, %v257
        %v2279 = vunpack.c.l.s4 1983009808
        %v2280 = vunpack.c.0.s8 %v2279
        %v2281 = vlaneseq
        %v2282 = vshrl.u32 %v2281, 7
        %v2283 = vsub.s32 %v2280, %v2282
        %v2284 = vrot.slane %v2194, %v2283
        %v2286 = vunpack.c.l.s4 1983009808
        %v2287 = vunpack.c.0.s8 %v2286
        %v2288 = vlaneseq
        %v2289 = vshrl.u32 %v2288, 7
        %v2290 = vsub.s32 %v2287, %v2289
        %v2291 = vrot.slane %v2277, %v2290
        %v2292 = vcombine.low %v2269, %v2284
        %v2293 = vcombine.high %v2269, %v2284
        %v2295 = vunpack.c.l.s4 1934713408
        %v2296 = vunpack.c.0.s8 %v2295
        %v2297 = vlaneseq
        %v2298 = vshrl.u32 %v2297, 7
        %v2299 = vsub.s32 %v2296, %v2298
        %v2300 = vrot.slane %v2292, %v2299
        %v2302 = vunpack.c.l.s4 1934713408
        %v2303 = vunpack.c.0.s8 %v2302
        %v2304 = vlaneseq
        %v2305 = vshrl.u32 %v2304, 7
        %v2306 = vsub.s32 %v2303, %v2305
        %v2307 = vrot.slane %v2293, %v2306
        %v2308 = vcombine.low %v2276, %v2291
        %v2309 = vcombine.high %v2276, %v2291
        %v2311 = vunpack.c.l.s4 1934713408
        %v2312 = vunpack.c.0.s8 %v2311
        %v2313 = vlaneseq
        %v2314 = vshrl.u32 %v2313, 7
        %v2315 = vsub.s32 %v2312, %v2314
        %v2316 = vrot.slane %v2308, %v2315
        %v2318 = vunpack.c.l.s4 1934713408
        %v2319 = vunpack.c.0.s8 %v2318
        %v2320 = vlaneseq
        %v2321 = vshrl.u32 %v2320, 7
        %v2322 = vsub.s32 %v2319, %v2321
        %v2323 = vrot.slane %v2309, %v2322
        %v2324 = vcombine.high %v2300, 0
        %v2325 = vcombine.high %v2307, 0
        %v2326 = vcombine.high %v2316, 0
        %v2327 = vcombine.high %v2323, 0
        %2329 = vrot.lane.b32.xlu0 %v2300, 16
        %v2330 = vpop.permute.xlu0 %2329
        %2332 = vrot.lane.b32.xlu0 %v2258, 32
        %v2333 = vpop.permute.xlu0 %2332
        %2335 = vrot.lane.b32.xlu0 %v2324, 48
        %v2336 = vpop.permute.xlu0 %2335
        %2338 = vrot.lane.b32.xlu0 %v2241, 64
        %v2339 = vpop.permute.xlu0 %2338
        %2341 = vrot.lane.b32.xlu0 %v2307, 80
        %v2342 = vpop.permute.xlu0 %2341
        %2344 = vrot.lane.b32.xlu0 %v2259, 96
        %v2345 = vpop.permute.xlu0 %2344
        %2347 = vrot.lane.b32.xlu0 %v2325, 112
        %v2348 = vpop.permute.xlu0 %2347
        %2350 = vrot.lane.b32.xlu0 %v2316, 16
        %v2351 = vpop.permute.xlu0 %2350
        %2353 = vrot.lane.b32.xlu0 %v2260, 32
        %v2354 = vpop.permute.xlu0 %2353
        %2356 = vrot.lane.b32.xlu0 %v2326, 48
        %v2357 = vpop.permute.xlu0 %2356
        %2359 = vrot.lane.b32.xlu0 %v2257, 64
        %v2360 = vpop.permute.xlu0 %2359
        %2362 = vrot.lane.b32.xlu0 %v2323, 80
        %v2363 = vpop.permute.xlu0 %2362
        %2365 = vrot.lane.b32.xlu0 %v2261, 96
        %v2366 = vpop.permute.xlu0 %2365
        %2368 = vrot.lane.b32.xlu0 %v2327, 112
        %v2369 = vpop.permute.xlu0 %2368
        %v2372 = vsel %vm433, %v2234, %v2330
        %v2374 = vsel %vm437, %v2372, %v2333
        %v2376 = vsel %vm440, %v2374, %v2336
        %v2378 = vsel %vm443, %v2376, %v2339
        %v2380 = vsel %vm446, %v2378, %v2342
        %v2382 = vsel %vm449, %v2380, %v2345
        %v2384 = vsel %vm452, %v2382, %v2348
        %v2387 = vsel %vm433, %v2250, %v2351
        %v2389 = vsel %vm437, %v2387, %v2354
        %v2391 = vsel %vm440, %v2389, %v2357
        %v2393 = vsel %vm443, %v2391, %v2360
        %v2395 = vsel %vm446, %v2393, %v2363
        %v2397 = vsel %vm449, %v2395, %v2366
        %v2399 = vsel %vm452, %v2397, %v2369
        %v2402 = vunpack.c.l.b16 %v2384
        %v2403 = vunpack.c.l.b16 %v2399
        %v2404 = vpack.c.b16 %v2403, %v2402
        %2406 = vst [vmem:[#allocation2 + $0x20] sm:$0x33] %v2404
        %v2407 = vld [vmem:[%s2] sm:$0x3]
        %v2408 = vld [vmem:[#allocation2] sm:$0xff]
        %v2409 = vld [vmem:[#allocation2 + $0x8] sm:$0xff]
        %v2410 = vld [vmem:[#allocation2 + $0x10] sm:$0xff]
        %v2411 = vld [vmem:[#allocation2 + $0x18] sm:$0xff]
        %v2412 = vld [vmem:[#allocation2 + $0x20] sm:$0x33]
        %v2418 = vunpack.c.l.b16 %v2408
        %v2419 = vunpack.c.h.b16 %v2408
        %v2420 = vunpack.c.l.b16 %v2409
        %v2421 = vunpack.c.h.b16 %v2409
        %v2422 = vunpack.c.l.b16 %v2410
        %v2423 = vunpack.c.h.b16 %v2410
        %v2424 = vunpack.c.l.b16 %v2411
        %v2425 = vunpack.c.h.b16 %v2411
        %v2426 = vunpack.c.l.b16 %v2412
        %v2427 = vunpack.c.h.b16 %v2412
        %v2428 = vpack.c.b16 %v2420, %v2418
        %v2429 = vpack.c.b16 %v2421, %v2419
        %v2430 = vpack.c.b16 %v2424, %v2422
        %v2431 = vpack.c.b16 %v2425, %v2423
        %v2432 = vpack.c.b16 %v2426, %v2426
        %v2433 = vpack.c.b16 %v2427, %v2427
        %vm2438 = vcmask 293888
        %v2440 = vsel %vm2438, %v2407, 0
        %vm2442 = vcmask 1041408
        %v2444 = vsel %vm2442, %v2432, 0
        %v2447 = vsel %vm2442, %v2433, 0
        %2449 = vmatprep.subr.bf16.mxu0 %v2429
        %2450 = vmatpush1.bf16.msra.mxu0 %v2428
        %2451 = vmatprep.subr.bf16.mxu0 %v2431
        %2452 = vmatpush1.bf16.msra.mxu0 %v2430
        %2453 = vmatprep.subr.bf16.mxu0 %v2447
        %2454 = vmatpush1.bf16.msra.mxu0 %v2444
        %2455 = vmatprep.subr.bf16.mxu0 0
        %2456 = vmatpush1.bf16.msra.mxu0 0
        %2457 = vmatprep.subr.bf16.mxu0 0
        %2458 = vmatpush1.bf16.msra.mxu0 0
        %2459 = vmatprep.subr.bf16.mxu0 0
        %2460 = vmatpush1.bf16.msra.mxu0 0
        %2461 = vmatprep.subr.bf16.mxu0 0
        %2462 = vmatpush1.bf16.msra.mxu0 0
        %2463 = vmatprep.subr.bf16.mxu0 0
        %2464 = vmatpush1.bf16.msra.mxu0 0
        %2465 = vmatprep.subr.bf16.mxu0 0
        %2466 = vmatpush1.bf16.msra.mxu0 0
        %2467 = vmatprep.subr.bf16.mxu0 0
        %2468 = vmatpush1.bf16.msra.mxu0 0
        %2469 = vmatprep.subr.bf16.mxu0 0
        %2470 = vmatpush1.bf16.msra.mxu0 0
        %2471 = vmatprep.subr.bf16.mxu0 0
        %2472 = vmatpush1.bf16.msra.mxu0 0
        %2473 = vmatprep.subr.bf16.mxu0 0
        %2474 = vmatpush1.bf16.msra.mxu0 0
        %2475 = vmatprep.subr.bf16.mxu0 0
        %2476 = vmatpush1.bf16.msra.mxu0 0
        %2477 = vmatprep.subr.bf16.mxu0 0
        %2478 = vmatpush1.bf16.msra.mxu0 0
        %2479 = vmatprep.subr.bf16.mxu0 0
        %2480 = vmatpush1.bf16.msra.mxu0 0
        %2481 = vmatprep.mubr.bf16.mxu0 0
        %2482 = vmatmul.mubr.bf16.gmra.mrb[0].mxu0 %v2440
        %v2483 = vpop.f32.mrb[0].mxu0
        %v2484 = vadd.f32 0.0, %v2483
        %v2485 = vpop.f32.mrb[0].mxu0
        %v2486 = vadd.f32 0.0, %v2485
        %v2487 = vpop.f32.mrb[0].mxu0
        %v2488 = vpop.f32.mrb[0].mxu0
        %2489 = vdwg.mxu0
        %vm2490 = vcmask 1043456
        %v2491 = vsel %vm2490, %v2484, 0.0
        %v2492 = vsel %vm2490, %v2486, 0.0
        %v2493 = vadd.f32 %v2491, %v2492
        %2494 = vadd.xlane.f32.xlu0 %v2493
        %v2495 = vpop.xlane.xlu0 %2494
        %v2496 = vmul.f32 %v2484, %v2484
        %v2497 = vmul.f32 %v2486, %v2486
        %v2498 = vsel %vm2490, %v2496, 0.0
        %v2499 = vsel %vm2490, %v2497, 0.0
        %v2500 = vadd.f32 %v2498, %v2499
        %2501 = vadd.xlane.f32.xlu0 %v2500
        %v2502 = vpop.xlane.xlu0 %2501
        %v2503 = vmul.f32 %v2495, 0.00390625
        %v2504 = vmul.f32 %v2502, 0.00390625
        %v2505 = vmul.f32 %v2503, %v2503
        %v2506 = vsub.f32 %v2504, %v2505
        %v2507 = vmax.f32 %v2506, 0.0
        %v2508 = vsub.f32 %v2484, %v2503
        %v2509 = vsub.f32 %v2486, %v2503
        %v2510 = vadd.f32 %v2507, 1e-05
        %v2511 = vrsqrt.pop %v2510
        %v2512 = vmul.f32 %v2508, %v2511
        %v2513 = vmul.f32 %v2509, %v2511
        %v2514 = vmax.f32 %v2512, 0.0
        %v2515 = vmax.f32 %v2513, 0.0
        %v2516 = vpack.c.bf16 %v2514, %v2514
        %v2517 = vpack.c.bf16 %v2515, %v2515
        %2519 = vrot.lane.b32.xlu0 %v2516, 112
        %v2520 = vpop.permute.xlu0 %2519
        %2522 = vrot.lane.b32.xlu0 %v2516, 96
        %v2523 = vpop.permute.xlu0 %2522
        %2525 = vrot.lane.b32.xlu0 %v2516, 80
        %v2526 = vpop.permute.xlu0 %2525
        %2528 = vrot.lane.b32.xlu0 %v2516, 64
        %v2529 = vpop.permute.xlu0 %2528
        %2531 = vrot.lane.b32.xlu0 %v2516, 48
        %v2532 = vpop.permute.xlu0 %2531
        %2534 = vrot.lane.b32.xlu0 %v2516, 32
        %v2535 = vpop.permute.xlu0 %2534
        %2537 = vrot.lane.b32.xlu0 %v2516, 16
        %v2538 = vpop.permute.xlu0 %2537
        %2541 = vrot.lane.b32.xlu0 %v2517, 112
        %v2542 = vpop.permute.xlu0 %2541
        %2544 = vrot.lane.b32.xlu0 %v2517, 96
        %v2545 = vpop.permute.xlu0 %2544
        %2547 = vrot.lane.b32.xlu0 %v2517, 80
        %v2548 = vpop.permute.xlu0 %2547
        %2550 = vrot.lane.b32.xlu0 %v2517, 64
        %v2551 = vpop.permute.xlu0 %2550
        %2553 = vrot.lane.b32.xlu0 %v2517, 48
        %v2554 = vpop.permute.xlu0 %2553
        %2556 = vrot.lane.b32.xlu0 %v2517, 32
        %v2557 = vpop.permute.xlu0 %2556
        %2559 = vrot.lane.b32.xlu0 %v2517, 16
        %v2560 = vpop.permute.xlu0 %2559
        %v2562 = vcombine.low %v2516, %v2529
        %v2564 = vunpack.c.l.s4 1983009808
        %v2565 = vunpack.c.0.s8 %v2564
        %v2566 = vlaneseq
        %v2567 = vshrl.u32 %v2566, 7
        %v2568 = vsub.s32 %v2565, %v2567
        %v2569 = vrot.slane %v2562, %v2568
        %v2570 = vcombine.low %v2523, %v2535
        %v2572 = vunpack.c.l.s4 1983009808
        %v2573 = vunpack.c.0.s8 %v2572
        %v2574 = vlaneseq
        %v2575 = vshrl.u32 %v2574, 7
        %v2576 = vsub.s32 %v2573, %v2575
        %v2577 = vrot.slane %v2570, %v2576
        %v2578 = vcombine.low %v2517, %v2551
        %v2580 = vunpack.c.l.s4 1983009808
        %v2581 = vunpack.c.0.s8 %v2580
        %v2582 = vlaneseq
        %v2583 = vshrl.u32 %v2582, 7
        %v2584 = vsub.s32 %v2581, %v2583
        %v2585 = vrot.slane %v2578, %v2584
        %v2586 = vcombine.low %v2545, %v2557
        %v2588 = vunpack.c.l.s4 1983009808
        %v2589 = vunpack.c.0.s8 %v2588
        %v2590 = vlaneseq
        %v2591 = vshrl.u32 %v2590, 7
        %v2592 = vsub.s32 %v2589, %v2591
        %v2593 = vrot.slane %v2586, %v2592
        %v2594 = vcombine.low %v2569, %v2577
        %v2596 = vunpack.c.l.s4 1934713408
        %v2597 = vunpack.c.0.s8 %v2596
        %v2598 = vlaneseq
        %v2599 = vshrl.u32 %v2598, 7
        %v2600 = vsub.s32 %v2597, %v2599
        %v2601 = vrot.slane %v2594, %v2600
        %v2602 = vcombine.low %v2585, %v2593
        %v2604 = vunpack.c.l.s4 1934713408
        %v2605 = vunpack.c.0.s8 %v2604
        %v2606 = vlaneseq
        %v2607 = vshrl.u32 %v2606, 7
        %v2608 = vsub.s32 %v2605, %v2607
        %v2609 = vrot.slane %v2602, %v2608
        %v2610 = vcombine.low %v2601, %v2609
        %v2611 = vcombine.high %v2601, %v2609
        %v2612 = vcombine.low %v2520, %v2532
        %v2614 = vunpack.c.l.s4 1983009808
        %v2615 = vunpack.c.0.s8 %v2614
        %v2616 = vlaneseq
        %v2617 = vshrl.u32 %v2616, 7
        %v2618 = vsub.s32 %v2615, %v2617
        %v2619 = vrot.slane %v2612, %v2618
        %v2620 = vcombine.low %v2526, %v2538
        %v2622 = vunpack.c.l.s4 1983009808
        %v2623 = vunpack.c.0.s8 %v2622
        %v2624 = vlaneseq
        %v2625 = vshrl.u32 %v2624, 7
        %v2626 = vsub.s32 %v2623, %v2625
        %v2627 = vrot.slane %v2620, %v2626
        %v2628 = vcombine.low %v2542, %v2554
        %v2630 = vunpack.c.l.s4 1983009808
        %v2631 = vunpack.c.0.s8 %v2630
        %v2632 = vlaneseq
        %v2633 = vshrl.u32 %v2632, 7
        %v2634 = vsub.s32 %v2631, %v2633
        %v2635 = vrot.slane %v2628, %v2634
        %v2636 = vcombine.low %v2548, %v2560
        %v2638 = vunpack.c.l.s4 1983009808
        %v2639 = vunpack.c.0.s8 %v2638
        %v2640 = vlaneseq
        %v2641 = vshrl.u32 %v2640, 7
        %v2642 = vsub.s32 %v2639, %v2641
        %v2643 = vrot.slane %v2636, %v2642
        %v2644 = vcombine.low %v2619, %v2627
        %v2646 = vunpack.c.l.s4 1934713408
        %v2647 = vunpack.c.0.s8 %v2646
        %v2648 = vlaneseq
        %v2649 = vshrl.u32 %v2648, 7
        %v2650 = vsub.s32 %v2647, %v2649
        %v2651 = vrot.slane %v2644, %v2650
        %v2652 = vcombine.low %v2635, %v2643
        %v2654 = vunpack.c.l.s4 1934713408
        %v2655 = vunpack.c.0.s8 %v2654
        %v2656 = vlaneseq
        %v2657 = vshrl.u32 %v2656, 7
        %v2658 = vsub.s32 %v2655, %v2657
        %v2659 = vrot.slane %v2652, %v2658
        %v2660 = vcombine.low %v2651, %v2659
        %v2661 = vcombine.high %v2651, %v2659
        %v2664 = vpack.i.b16 %v2660, %v2610
        %v2665 = vshrl.u32 %v2610, 16
        %v2666 = vshrl.u32 %v2660, 16
        %v2667 = vpack.i.b16 %v2666, %v2665
        %v2670 = vpack.i.b16 %v2661, %v2611
        %v2671 = vshrl.u32 %v2611, 16
        %v2672 = vshrl.u32 %v2661, 16
        %v2673 = vpack.i.b16 %v2672, %v2671
        %v2675 = vshrl.u32 %v2664, 16
        %v2678 = vshrl.u32 %v2667, 16
        %v2681 = vshrl.u32 %v2670, 16
        %v2684 = vshrl.u32 %v2673, 16
        %v2690 = vrot.slane %v2675, 7
        %v2691 = vshll.u32 %v2664, 16
        %v2693 = vor.u32 %v2690, %v2691
        %v2694 = vrot.slane %v2678, 7
        %v2695 = vshll.u32 %v2667, 16
        %v2697 = vor.u32 %v2694, %v2695
        %v2698 = vrot.slane %v2681, 7
        %v2699 = vshll.u32 %v2670, 16
        %v2701 = vor.u32 %v2698, %v2699
        %v2702 = vrot.slane %v2684, 7
        %v2703 = vshll.u32 %v2673, 16
        %v2705 = vor.u32 %v2702, %v2703
        %v2714 = vrot.slane %v2691, 7
        %v2715 = vrot.slane %v2695, 7
        %v2716 = vrot.slane %v2699, 7
        %v2717 = vrot.slane %v2703, 7
        %vm2722 = vcmask 1040384
        %vm2723 = vsmask.f32 256
        %vm2724 = vmand %vm2722, %vm2723
        %v2725 = vsel %vm2724, %v2675, %v2693
        %v2726 = vsel %vm2724, %v2678, %v2697
        %v2727 = vsel %vm2724, %v2681, %v2701
        %v2728 = vsel %vm2724, %v2684, %v2705
        %v2729 = vsel %vm2724, %v2690, %v2714
        %v2730 = vsel %vm2724, %v2694, %v2715
        %v2731 = vsel %vm2724, %v2698, %v2716
        %v2732 = vsel %vm2724, %v2702, %v2717
        %v2741 = vunpack.c.l.b16 %v2725
        %v2742 = vunpack.c.h.b16 %v2725
        %v2743 = vunpack.c.l.b16 %v2729
        %v2744 = vunpack.c.l.b16 %v2726
        %v2745 = vunpack.c.h.b16 %v2726
        %v2746 = vunpack.c.l.b16 %v2730
        %v2747 = vunpack.c.l.b16 %v2727
        %v2748 = vunpack.c.h.b16 %v2727
        %v2749 = vunpack.c.l.b16 %v2731
        %v2750 = vunpack.c.l.b16 %v2728
        %v2751 = vunpack.c.h.b16 %v2728
        %v2752 = vunpack.c.l.b16 %v2732
        %v2753 = vpack.c.b16 %v2741, %v2741
        %v2754 = vpack.c.b16 %v2742, %v2742
        %v2755 = vpack.c.b16 %v2743, %v2743
        %v2756 = vpack.c.b16 %v2744, %v2744
        %v2757 = vpack.c.b16 %v2745, %v2745
        %v2758 = vpack.c.b16 %v2746, %v2746
        %v2759 = vpack.c.b16 %v2747, %v2747
        %v2760 = vpack.c.b16 %v2748, %v2748
        %v2761 = vpack.c.b16 %v2749, %v2749
        %v2762 = vpack.c.b16 %v2750, %v2750
        %v2763 = vpack.c.b16 %v2751, %v2751
        %v2764 = vpack.c.b16 %v2752, %v2752
        %2765 = vrot.lane.b32.xlu0 %v2753, 1
        %v2766 = vpop.permute.xlu0 %2765
        %2767 = vrot.lane.b32.xlu0 %v2754, 1
        %v2768 = vpop.permute.xlu0 %2767
        %2769 = vrot.lane.b32.xlu0 %v2755, 1
        %v2770 = vpop.permute.xlu0 %2769
        %2771 = vrot.lane.b32.xlu0 %v2756, 1
        %v2772 = vpop.permute.xlu0 %2771
        %2773 = vrot.lane.b32.xlu0 %v2757, 1
        %v2774 = vpop.permute.xlu0 %2773
        %2775 = vrot.lane.b32.xlu0 %v2758, 1
        %v2776 = vpop.permute.xlu0 %2775
        %2777 = vrot.lane.b32.xlu0 %v2759, 1
        %v2778 = vpop.permute.xlu0 %2777
        %2779 = vrot.lane.b32.xlu0 %v2760, 1
        %v2780 = vpop.permute.xlu0 %2779
        %2781 = vrot.lane.b32.xlu0 %v2761, 1
        %v2782 = vpop.permute.xlu0 %2781
        %2783 = vrot.lane.b32.xlu0 %v2762, 1
        %v2784 = vpop.permute.xlu0 %2783
        %2785 = vrot.lane.b32.xlu0 %v2763, 1
        %v2786 = vpop.permute.xlu0 %2785
        %2787 = vrot.lane.b32.xlu0 %v2764, 1
        %v2788 = vpop.permute.xlu0 %2787
        %vm2801 = vcmask 134152
        %2802 = vst.msk [vmem:[#allocation3] sm:$0xf] %vm2801, %v2766
        %2803 = vst.msk [vmem:[#allocation3 + $0x4] sm:$0xf] %vm2801, %v2768
        %vm2804 = vcmask 131080
        %2805 = vst.msk [vmem:[#allocation3 + $0x8] sm:$0x1] %vm2804, %v2770
        %2806 = vst.msk [vmem:[#allocation3 + $0xc] sm:$0xf] %vm2801, %v2772
        %2807 = vst.msk [vmem:[#allocation3 + $0x10] sm:$0xf] %vm2801, %v2774
        %2808 = vst.msk [vmem:[#allocation3 + $0x14] sm:$0x1] %vm2804, %v2776
        %2809 = vst.msk [vmem:[#allocation3 + $0x18] sm:$0xf] %vm2801, %v2778
        %2810 = vst.msk [vmem:[#allocation3 + $0x1c] sm:$0xf] %vm2801, %v2780
        %2811 = vst.msk [vmem:[#allocation3 + $0x20] sm:$0x1] %vm2804, %v2782
        %2812 = vst.msk [vmem:[#allocation3 + $0x24] sm:$0xf] %vm2801, %v2784
        %2813 = vst.msk [vmem:[#allocation3 + $0x28] sm:$0xf] %vm2801, %v2786
        %2814 = vst.msk [vmem:[#allocation3 + $0x2c] sm:$0x1] %vm2804, %v2788
        %2815 = vrot.lane.b32.xlu0 %v2753, 127
        %v2816 = vpop.permute.xlu0 %2815
        %2817 = vrot.lane.b32.xlu0 %v2754, 127
        %v2818 = vpop.permute.xlu0 %2817
        %2819 = vrot.lane.b32.xlu0 %v2755, 127
        %v2820 = vpop.permute.xlu0 %2819
        %2821 = vrot.lane.b32.xlu0 %v2756, 127
        %v2822 = vpop.permute.xlu0 %2821
        %2823 = vrot.lane.b32.xlu0 %v2757, 127
        %v2824 = vpop.permute.xlu0 %2823
        %2825 = vrot.lane.b32.xlu0 %v2758, 127
        %v2826 = vpop.permute.xlu0 %2825
        %2827 = vrot.lane.b32.xlu0 %v2759, 127
        %v2828 = vpop.permute.xlu0 %2827
        %2829 = vrot.lane.b32.xlu0 %v2760, 127
        %v2830 = vpop.permute.xlu0 %2829
        %2831 = vrot.lane.b32.xlu0 %v2761, 127
        %v2832 = vpop.permute.xlu0 %2831
        %2833 = vrot.lane.b32.xlu0 %v2762, 127
        %v2834 = vpop.permute.xlu0 %2833
        %2835 = vrot.lane.b32.xlu0 %v2763, 127
        %v2836 = vpop.permute.xlu0 %2835
        %2837 = vrot.lane.b32.xlu0 %v2764, 127
        %v2838 = vpop.permute.xlu0 %2837
        %vm2851 = vcmask 3072
        %2852 = vst.msk [vmem:[#allocation3] sm:$0xf] %vm2851, %v2816
        %2853 = vst.msk [vmem:[#allocation3 + $0x4] sm:$0xf] %vm2851, %v2818
        %vm2854 = vcmask 0
        %2855 = vst.msk [vmem:[#allocation3 + $0x8] sm:$0x1] %vm2854, %v2820
        %2856 = vst.msk [vmem:[#allocation3 + $0xc] sm:$0xf] %vm2851, %v2822
        %2857 = vst.msk [vmem:[#allocation3 + $0x10] sm:$0xf] %vm2851, %v2824
        %2858 = vst.msk [vmem:[#allocation3 + $0x14] sm:$0x1] %vm2854, %v2826
        %2859 = vst.msk [vmem:[#allocation3 + $0x18] sm:$0xf] %vm2851, %v2828
        %2860 = vst.msk [vmem:[#allocation3 + $0x1c] sm:$0xf] %vm2851, %v2830
        %2861 = vst.msk [vmem:[#allocation3 + $0x20] sm:$0x1] %vm2854, %v2832
        %2862 = vst.msk [vmem:[#allocation3 + $0x24] sm:$0xf] %vm2851, %v2834
        %2863 = vst.msk [vmem:[#allocation3 + $0x28] sm:$0xf] %vm2851, %v2836
        %2864 = vst.msk [vmem:[#allocation3 + $0x2c] sm:$0x1] %vm2854, %v2838
        %2865 = vrot.lane.b32.xlu0 %v2753, 3
        %v2866 = vpop.permute.xlu0 %2865
        %2867 = vrot.lane.b32.xlu0 %v2754, 3
        %v2868 = vpop.permute.xlu0 %2867
        %2869 = vrot.lane.b32.xlu0 %v2755, 3
        %v2870 = vpop.permute.xlu0 %2869
        %2871 = vrot.lane.b32.xlu0 %v2756, 3
        %v2872 = vpop.permute.xlu0 %2871
        %2873 = vrot.lane.b32.xlu0 %v2757, 3
        %v2874 = vpop.permute.xlu0 %2873
        %2875 = vrot.lane.b32.xlu0 %v2758, 3
        %v2876 = vpop.permute.xlu0 %2875
        %2877 = vrot.lane.b32.xlu0 %v2759, 3
        %v2878 = vpop.permute.xlu0 %2877
        %2879 = vrot.lane.b32.xlu0 %v2760, 3
        %v2880 = vpop.permute.xlu0 %2879
        %2881 = vrot.lane.b32.xlu0 %v2761, 3
        %v2882 = vpop.permute.xlu0 %2881
        %2883 = vrot.lane.b32.xlu0 %v2762, 3
        %v2884 = vpop.permute.xlu0 %2883
        %2885 = vrot.lane.b32.xlu0 %v2763, 3
        %v2886 = vpop.permute.xlu0 %2885
        %2887 = vrot.lane.b32.xlu0 %v2764, 3
        %v2888 = vpop.permute.xlu0 %2887
        %vm2901 = vcmask 142472
        %2902 = vst.msk [vmem:[#allocation3] sm:$0xf] %vm2901, %v2866
        %2903 = vst.msk [vmem:[#allocation3 + $0x4] sm:$0xf] %vm2901, %v2868
        %vm2904 = vcmask 139400
        %2905 = vst.msk [vmem:[#allocation3 + $0x8] sm:$0x1] %vm2904, %v2870
        %2906 = vst.msk [vmem:[#allocation3 + $0xc] sm:$0xf] %vm2901, %v2872
        %2907 = vst.msk [vmem:[#allocation3 + $0x10] sm:$0xf] %vm2901, %v2874
        %2908 = vst.msk [vmem:[#allocation3 + $0x14] sm:$0x1] %vm2904, %v2876
        %2909 = vst.msk [vmem:[#allocation3 + $0x18] sm:$0xf] %vm2901, %v2878
        %2910 = vst.msk [vmem:[#allocation3 + $0x1c] sm:$0xf] %vm2901, %v2880
        %2911 = vst.msk [vmem:[#allocation3 + $0x20] sm:$0x1] %vm2904, %v2882
        %2912 = vst.msk [vmem:[#allocation3 + $0x24] sm:$0xf] %vm2901, %v2884
        %2913 = vst.msk [vmem:[#allocation3 + $0x28] sm:$0xf] %vm2901, %v2886
        %2914 = vst.msk [vmem:[#allocation3 + $0x2c] sm:$0x1] %vm2904, %v2888
        %v2915 = vld [vmem:[#allocation3] sm:$0xf]
        %v2916 = vld [vmem:[#allocation3 + $0x4] sm:$0xf]
        %v2917 = vld [vmem:[#allocation3 + $0xc] sm:$0xf]
        %v2918 = vld [vmem:[#allocation3 + $0x10] sm:$0xf]
        %v2919 = vld [vmem:[#allocation3 + $0x18] sm:$0xf]
        %v2920 = vld [vmem:[#allocation3 + $0x1c] sm:$0xf]
        %v2921 = vld [vmem:[#allocation3 + $0x24] sm:$0xf]
        %v2922 = vld [vmem:[#allocation3 + $0x28] sm:$0xf]
        %v2925 = vpack.i.b16 %v2917, %v2915
        %v2926 = vshrl.u32 %v2915, 16
        %v2927 = vshrl.u32 %v2917, 16
        %v2928 = vpack.i.b16 %v2927, %v2926
        %v2931 = vpack.i.b16 %v2921, %v2919
        %v2932 = vshrl.u32 %v2919, 16
        %v2933 = vshrl.u32 %v2921, 16
        %v2934 = vpack.i.b16 %v2933, %v2932
        %v2937 = vpack.i.b16 %v2918, %v2916
        %v2938 = vshrl.u32 %v2916, 16
        %v2939 = vshrl.u32 %v2918, 16
        %v2940 = vpack.i.b16 %v2939, %v2938
        %v2943 = vpack.i.b16 %v2922, %v2920
        %v2944 = vshrl.u32 %v2920, 16
        %v2945 = vshrl.u32 %v2922, 16
        %v2946 = vpack.i.b16 %v2945, %v2944
        %v2949 = vunpack.c.l.s4 1983009808
        %v2950 = vunpack.c.0.s8 %v2949
        %v2951 = vlaneseq
        %v2952 = vshrl.u32 %v2951, 7
        %v2953 = vsub.s32 %v2950, %v2952
        %v2954 = vrot.slane %v2925, %v2953
        %v2957 = vunpack.c.l.s4 1983009808
        %v2958 = vunpack.c.0.s8 %v2957
        %v2959 = vlaneseq
        %v2960 = vshrl.u32 %v2959, 7
        %v2961 = vsub.s32 %v2958, %v2960
        %v2962 = vrot.slane %v2931, %v2961
        %v2963 = vcombine.low %v2954, %v2962
        %v2964 = vcombine.high %v2954, %v2962
        %v2966 = vunpack.c.l.s4 1934713408
        %v2967 = vunpack.c.0.s8 %v2966
        %v2968 = vlaneseq
        %v2969 = vshrl.u32 %v2968, 7
        %v2970 = vsub.s32 %v2967, %v2969
        %v2971 = vrot.slane %v2963, %v2970
        %v2973 = vunpack.c.l.s4 1934713408
        %v2974 = vunpack.c.0.s8 %v2973
        %v2975 = vlaneseq
        %v2976 = vshrl.u32 %v2975, 7
        %v2977 = vsub.s32 %v2974, %v2976
        %v2978 = vrot.slane %v2964, %v2977
        %v2979 = vcombine.high %v2971, 0
        %v2980 = vcombine.high %v2978, 0
        %v2983 = vunpack.c.l.s4 1983009808
        %v2984 = vunpack.c.0.s8 %v2983
        %v2985 = vlaneseq
        %v2986 = vshrl.u32 %v2985, 7
        %v2987 = vsub.s32 %v2984, %v2986
        %v2988 = vrot.slane %v2928, %v2987
        %v2991 = vunpack.c.l.s4 1983009808
        %v2992 = vunpack.c.0.s8 %v2991
        %v2993 = vlaneseq
        %v2994 = vshrl.u32 %v2993, 7
        %v2995 = vsub.s32 %v2992, %v2994
        %v2996 = vrot.slane %v2934, %v2995
        %v2997 = vcombine.low %v2988, %v2996
        %v2998 = vcombine.high %v2988, %v2996
        %v3000 = vunpack.c.l.s4 1934713408
        %v3001 = vunpack.c.0.s8 %v3000
        %v3002 = vlaneseq
        %v3003 = vshrl.u32 %v3002, 7
        %v3004 = vsub.s32 %v3001, %v3003
        %v3005 = vrot.slane %v2997, %v3004
        %v3007 = vunpack.c.l.s4 1934713408
        %v3008 = vunpack.c.0.s8 %v3007
        %v3009 = vlaneseq
        %v3010 = vshrl.u32 %v3009, 7
        %v3011 = vsub.s32 %v3008, %v3010
        %v3012 = vrot.slane %v2998, %v3011
        %v3013 = vcombine.high %v3005, 0
        %v3014 = vcombine.high %v3012, 0
        %v3017 = vunpack.c.l.s4 1983009808
        %v3018 = vunpack.c.0.s8 %v3017
        %v3019 = vlaneseq
        %v3020 = vshrl.u32 %v3019, 7
        %v3021 = vsub.s32 %v3018, %v3020
        %v3022 = vrot.slane %v2937, %v3021
        %v3025 = vunpack.c.l.s4 1983009808
        %v3026 = vunpack.c.0.s8 %v3025
        %v3027 = vlaneseq
        %v3028 = vshrl.u32 %v3027, 7
        %v3029 = vsub.s32 %v3026, %v3028
        %v3030 = vrot.slane %v2943, %v3029
        %v3031 = vcombine.low %v3022, %v3030
        %v3032 = vcombine.high %v3022, %v3030
        %v3034 = vunpack.c.l.s4 1934713408
        %v3035 = vunpack.c.0.s8 %v3034
        %v3036 = vlaneseq
        %v3037 = vshrl.u32 %v3036, 7
        %v3038 = vsub.s32 %v3035, %v3037
        %v3039 = vrot.slane %v3031, %v3038
        %v3041 = vunpack.c.l.s4 1934713408
        %v3042 = vunpack.c.0.s8 %v3041
        %v3043 = vlaneseq
        %v3044 = vshrl.u32 %v3043, 7
        %v3045 = vsub.s32 %v3042, %v3044
        %v3046 = vrot.slane %v3032, %v3045
        %v3047 = vcombine.high %v3039, 0
        %v3048 = vcombine.high %v3046, 0
        %v3051 = vunpack.c.l.s4 1983009808
        %v3052 = vunpack.c.0.s8 %v3051
        %v3053 = vlaneseq
        %v3054 = vshrl.u32 %v3053, 7
        %v3055 = vsub.s32 %v3052, %v3054
        %v3056 = vrot.slane %v2940, %v3055
        %v3059 = vunpack.c.l.s4 1983009808
        %v3060 = vunpack.c.0.s8 %v3059
        %v3061 = vlaneseq
        %v3062 = vshrl.u32 %v3061, 7
        %v3063 = vsub.s32 %v3060, %v3062
        %v3064 = vrot.slane %v2946, %v3063
        %v3065 = vcombine.low %v3056, %v3064
        %v3066 = vcombine.high %v3056, %v3064
        %v3068 = vunpack.c.l.s4 1934713408
        %v3069 = vunpack.c.0.s8 %v3068
        %v3070 = vlaneseq
        %v3071 = vshrl.u32 %v3070, 7
        %v3072 = vsub.s32 %v3069, %v3071
        %v3073 = vrot.slane %v3065, %v3072
        %v3075 = vunpack.c.l.s4 1934713408
        %v3076 = vunpack.c.0.s8 %v3075
        %v3077 = vlaneseq
        %v3078 = vshrl.u32 %v3077, 7
        %v3079 = vsub.s32 %v3076, %v3078
        %v3080 = vrot.slane %v3066, %v3079
        %v3081 = vcombine.high %v3073, 0
        %v3082 = vcombine.high %v3080, 0
        %v3084 = vunpack.c.l.b16 %v3005
        %v3085 = vpack.c.b16 %v3084, %v3084
        %3086 = vrot.lane.b32.xlu0 %v3085, 16
        %v3087 = vpop.permute.xlu0 %3086
        %v3089 = vunpack.c.l.b16 %v2979
        %v3090 = vpack.c.b16 %v3089, %v3089
        %3091 = vrot.lane.b32.xlu0 %v3090, 32
        %v3092 = vpop.permute.xlu0 %3091
        %v3094 = vunpack.c.l.b16 %v3013
        %v3095 = vpack.c.b16 %v3094, %v3094
        %3096 = vrot.lane.b32.xlu0 %v3095, 48
        %v3097 = vpop.permute.xlu0 %3096
        %v3099 = vunpack.c.l.b16 %v2978
        %v3100 = vpack.c.b16 %v3099, %v3099
        %3101 = vrot.lane.b32.xlu0 %v3100, 64
        %v3102 = vpop.permute.xlu0 %3101
        %v3104 = vunpack.c.l.b16 %v3012
        %v3105 = vpack.c.b16 %v3104, %v3104
        %3106 = vrot.lane.b32.xlu0 %v3105, 80
        %v3107 = vpop.permute.xlu0 %3106
        %v3109 = vunpack.c.l.b16 %v2980
        %v3110 = vpack.c.b16 %v3109, %v3109
        %3111 = vrot.lane.b32.xlu0 %v3110, 96
        %v3112 = vpop.permute.xlu0 %3111
        %v3114 = vunpack.c.l.b16 %v3014
        %v3115 = vpack.c.b16 %v3114, %v3114
        %3116 = vrot.lane.b32.xlu0 %v3115, 112
        %v3117 = vpop.permute.xlu0 %3116
        %v3119 = vunpack.c.l.b16 %v3073
        %v3120 = vpack.c.b16 %v3119, %v3119
        %3121 = vrot.lane.b32.xlu0 %v3120, 16
        %v3122 = vpop.permute.xlu0 %3121
        %v3124 = vunpack.c.l.b16 %v3047
        %v3125 = vpack.c.b16 %v3124, %v3124
        %3126 = vrot.lane.b32.xlu0 %v3125, 32
        %v3127 = vpop.permute.xlu0 %3126
        %v3129 = vunpack.c.l.b16 %v3081
        %v3130 = vpack.c.b16 %v3129, %v3129
        %3131 = vrot.lane.b32.xlu0 %v3130, 48
        %v3132 = vpop.permute.xlu0 %3131
        %v3134 = vunpack.c.l.b16 %v3046
        %v3135 = vpack.c.b16 %v3134, %v3134
        %3136 = vrot.lane.b32.xlu0 %v3135, 64
        %v3137 = vpop.permute.xlu0 %3136
        %v3139 = vunpack.c.l.b16 %v3080
        %v3140 = vpack.c.b16 %v3139, %v3139
        %3141 = vrot.lane.b32.xlu0 %v3140, 80
        %v3142 = vpop.permute.xlu0 %3141
        %v3144 = vunpack.c.l.b16 %v3048
        %v3145 = vpack.c.b16 %v3144, %v3144
        %3146 = vrot.lane.b32.xlu0 %v3145, 96
        %v3147 = vpop.permute.xlu0 %3146
        %v3149 = vunpack.c.l.b16 %v3082
        %v3150 = vpack.c.b16 %v3149, %v3149
        %3151 = vrot.lane.b32.xlu0 %v3150, 112
        %v3152 = vpop.permute.xlu0 %3151
        %v3155 = vsel %vm433, %v2971, %v3087
        %v3157 = vsel %vm437, %v3155, %v3092
        %v3159 = vsel %vm440, %v3157, %v3097
        %v3161 = vsel %vm443, %v3159, %v3102
        %v3163 = vsel %vm446, %v3161, %v3107
        %v3165 = vsel %vm449, %v3163, %v3112
        %v3167 = vsel %vm452, %v3165, %v3117
        %v3170 = vsel %vm433, %v3039, %v3122
        %v3172 = vsel %vm437, %v3170, %v3127
        %v3174 = vsel %vm440, %v3172, %v3132
        %v3176 = vsel %vm443, %v3174, %v3137
        %v3178 = vsel %vm446, %v3176, %v3142
        %v3180 = vsel %vm449, %v3178, %v3147
        %v3182 = vsel %vm452, %v3180, %v3152
        %v3185 = vunpack.c.l.b16 %v3167
        %v3186 = vunpack.c.l.b16 %v3182
        %v3187 = vpack.c.b16 %v3186, %v3185
        %3189 = vst [vmem:[#allocation2] sm:$0x33] %v3187
        %v3190 = vld [vmem:[#allocation3] sm:$0xf]
        %v3191 = vld [vmem:[#allocation3 + $0x4] sm:$0xf]
        %v3192 = vld [vmem:[#allocation3 + $0xc] sm:$0xf]
        %v3193 = vld [vmem:[#allocation3 + $0x10] sm:$0xf]
        %v3194 = vld [vmem:[#allocation3 + $0x18] sm:$0xf]
        %v3195 = vld [vmem:[#allocation3 + $0x1c] sm:$0xf]
        %v3196 = vld [vmem:[#allocation3 + $0x24] sm:$0xf]
        %v3197 = vld [vmem:[#allocation3 + $0x28] sm:$0xf]
        %3206 = vrot.lane.b32.xlu0 %v3190, 127
        %v3207 = vpop.permute.xlu0 %3206
        %3208 = vrot.lane.b32.xlu0 %v3191, 127
        %v3209 = vpop.permute.xlu0 %3208
        %3210 = vrot.lane.b32.xlu0 %v3192, 127
        %v3211 = vpop.permute.xlu0 %3210
        %3212 = vrot.lane.b32.xlu0 %v3193, 127
        %v3213 = vpop.permute.xlu0 %3212
        %3214 = vrot.lane.b32.xlu0 %v3194, 127
        %v3215 = vpop.permute.xlu0 %3214
        %3216 = vrot.lane.b32.xlu0 %v3195, 127
        %v3217 = vpop.permute.xlu0 %3216
        %3218 = vrot.lane.b32.xlu0 %v3196, 127
        %v3219 = vpop.permute.xlu0 %3218
        %3220 = vrot.lane.b32.xlu0 %v3197, 127
        %v3221 = vpop.permute.xlu0 %3220
        %v3224 = vpack.i.b16 %v3211, %v3207
        %v3225 = vshrl.u32 %v3207, 16
        %v3226 = vshrl.u32 %v3211, 16
        %v3227 = vpack.i.b16 %v3226, %v3225
        %v3230 = vpack.i.b16 %v3219, %v3215
        %v3231 = vshrl.u32 %v3215, 16
        %v3232 = vshrl.u32 %v3219, 16
        %v3233 = vpack.i.b16 %v3232, %v3231
        %v3236 = vpack.i.b16 %v3213, %v3209
        %v3237 = vshrl.u32 %v3209, 16
        %v3238 = vshrl.u32 %v3213, 16
        %v3239 = vpack.i.b16 %v3238, %v3237
        %v3242 = vpack.i.b16 %v3221, %v3217
        %v3243 = vshrl.u32 %v3217, 16
        %v3244 = vshrl.u32 %v3221, 16
        %v3245 = vpack.i.b16 %v3244, %v3243
        %v3248 = vunpack.c.l.s4 1983009808
        %v3249 = vunpack.c.0.s8 %v3248
        %v3250 = vlaneseq
        %v3251 = vshrl.u32 %v3250, 7
        %v3252 = vsub.s32 %v3249, %v3251
        %v3253 = vrot.slane %v3224, %v3252
        %v3256 = vunpack.c.l.s4 1983009808
        %v3257 = vunpack.c.0.s8 %v3256
        %v3258 = vlaneseq
        %v3259 = vshrl.u32 %v3258, 7
        %v3260 = vsub.s32 %v3257, %v3259
        %v3261 = vrot.slane %v3230, %v3260
        %v3262 = vcombine.low %v3253, %v3261
        %v3263 = vcombine.high %v3253, %v3261
        %v3265 = vunpack.c.l.s4 1934713408
        %v3266 = vunpack.c.0.s8 %v3265
        %v3267 = vlaneseq
        %v3268 = vshrl.u32 %v3267, 7
        %v3269 = vsub.s32 %v3266, %v3268
        %v3270 = vrot.slane %v3262, %v3269
        %v3272 = vunpack.c.l.s4 1934713408
        %v3273 = vunpack.c.0.s8 %v3272
        %v3274 = vlaneseq
        %v3275 = vshrl.u32 %v3274, 7
        %v3276 = vsub.s32 %v3273, %v3275
        %v3277 = vrot.slane %v3263, %v3276
        %v3278 = vcombine.high %v3270, 0
        %v3279 = vcombine.high %v3277, 0
        %v3282 = vunpack.c.l.s4 1983009808
        %v3283 = vunpack.c.0.s8 %v3282
        %v3284 = vlaneseq
        %v3285 = vshrl.u32 %v3284, 7
        %v3286 = vsub.s32 %v3283, %v3285
        %v3287 = vrot.slane %v3227, %v3286
        %v3290 = vunpack.c.l.s4 1983009808
        %v3291 = vunpack.c.0.s8 %v3290
        %v3292 = vlaneseq
        %v3293 = vshrl.u32 %v3292, 7
        %v3294 = vsub.s32 %v3291, %v3293
        %v3295 = vrot.slane %v3233, %v3294
        %v3296 = vcombine.low %v3287, %v3295
        %v3297 = vcombine.high %v3287, %v3295
        %v3299 = vunpack.c.l.s4 1934713408
        %v3300 = vunpack.c.0.s8 %v3299
        %v3301 = vlaneseq
        %v3302 = vshrl.u32 %v3301, 7
        %v3303 = vsub.s32 %v3300, %v3302
        %v3304 = vrot.slane %v3296, %v3303
        %v3306 = vunpack.c.l.s4 1934713408
        %v3307 = vunpack.c.0.s8 %v3306
        %v3308 = vlaneseq
        %v3309 = vshrl.u32 %v3308, 7
        %v3310 = vsub.s32 %v3307, %v3309
        %v3311 = vrot.slane %v3297, %v3310
        %v3312 = vcombine.high %v3304, 0
        %v3313 = vcombine.high %v3311, 0
        %v3316 = vunpack.c.l.s4 1983009808
        %v3317 = vunpack.c.0.s8 %v3316
        %v3318 = vlaneseq
        %v3319 = vshrl.u32 %v3318, 7
        %v3320 = vsub.s32 %v3317, %v3319
        %v3321 = vrot.slane %v3236, %v3320
        %v3324 = vunpack.c.l.s4 1983009808
        %v3325 = vunpack.c.0.s8 %v3324
        %v3326 = vlaneseq
        %v3327 = vshrl.u32 %v3326, 7
        %v3328 = vsub.s32 %v3325, %v3327
        %v3329 = vrot.slane %v3242, %v3328
        %v3330 = vcombine.low %v3321, %v3329
        %v3331 = vcombine.high %v3321, %v3329
        %v3333 = vunpack.c.l.s4 1934713408
        %v3334 = vunpack.c.0.s8 %v3333
        %v3335 = vlaneseq
        %v3336 = vshrl.u32 %v3335, 7
        %v3337 = vsub.s32 %v3334, %v3336
        %v3338 = vrot.slane %v3330, %v3337
        %v3340 = vunpack.c.l.s4 1934713408
        %v3341 = vunpack.c.0.s8 %v3340
        %v3342 = vlaneseq
        %v3343 = vshrl.u32 %v3342, 7
        %v3344 = vsub.s32 %v3341, %v3343
        %v3345 = vrot.slane %v3331, %v3344
        %v3346 = vcombine.high %v3338, 0
        %v3347 = vcombine.high %v3345, 0
        %v3350 = vunpack.c.l.s4 1983009808
        %v3351 = vunpack.c.0.s8 %v3350
        %v3352 = vlaneseq
        %v3353 = vshrl.u32 %v3352, 7
        %v3354 = vsub.s32 %v3351, %v3353
        %v3355 = vrot.slane %v3239, %v3354
        %v3358 = vunpack.c.l.s4 1983009808
        %v3359 = vunpack.c.0.s8 %v3358
        %v3360 = vlaneseq
        %v3361 = vshrl.u32 %v3360, 7
        %v3362 = vsub.s32 %v3359, %v3361
        %v3363 = vrot.slane %v3245, %v3362
        %v3364 = vcombine.low %v3355, %v3363
        %v3365 = vcombine.high %v3355, %v3363
        %v3367 = vunpack.c.l.s4 1934713408
        %v3368 = vunpack.c.0.s8 %v3367
        %v3369 = vlaneseq
        %v3370 = vshrl.u32 %v3369, 7
        %v3371 = vsub.s32 %v3368, %v3370
        %v3372 = vrot.slane %v3364, %v3371
        %v3374 = vunpack.c.l.s4 1934713408
        %v3375 = vunpack.c.0.s8 %v3374
        %v3376 = vlaneseq
        %v3377 = vshrl.u32 %v3376, 7
        %v3378 = vsub.s32 %v3375, %v3377
        %v3379 = vrot.slane %v3365, %v3378
        %v3380 = vcombine.high %v3372, 0
        %v3381 = vcombine.high %v3379, 0
        %v3383 = vunpack.c.l.b16 %v3304
        %v3384 = vpack.c.b16 %v3383, %v3383
        %3385 = vrot.lane.b32.xlu0 %v3384, 16
        %v3386 = vpop.permute.xlu0 %3385
        %v3388 = vunpack.c.l.b16 %v3278
        %v3389 = vpack.c.b16 %v3388, %v3388
        %3390 = vrot.lane.b32.xlu0 %v3389, 32
        %v3391 = vpop.permute.xlu0 %3390
        %v3393 = vunpack.c.l.b16 %v3312
        %v3394 = vpack.c.b16 %v3393, %v3393
        %3395 = vrot.lane.b32.xlu0 %v3394, 48
        %v3396 = vpop.permute.xlu0 %3395
        %v3398 = vunpack.c.l.b16 %v3277
        %v3399 = vpack.c.b16 %v3398, %v3398
        %3400 = vrot.lane.b32.xlu0 %v3399, 64
        %v3401 = vpop.permute.xlu0 %3400
        %v3403 = vunpack.c.l.b16 %v3311
        %v3404 = vpack.c.b16 %v3403, %v3403
        %3405 = vrot.lane.b32.xlu0 %v3404, 80
        %v3406 = vpop.permute.xlu0 %3405
        %v3408 = vunpack.c.l.b16 %v3279
        %v3409 = vpack.c.b16 %v3408, %v3408
        %3410 = vrot.lane.b32.xlu0 %v3409, 96
        %v3411 = vpop.permute.xlu0 %3410
        %v3413 = vunpack.c.l.b16 %v3313
        %v3414 = vpack.c.b16 %v3413, %v3413
        %3415 = vrot.lane.b32.xlu0 %v3414, 112
        %v3416 = vpop.permute.xlu0 %3415
        %v3418 = vunpack.c.l.b16 %v3372
        %v3419 = vpack.c.b16 %v3418, %v3418
        %3420 = vrot.lane.b32.xlu0 %v3419, 16
        %v3421 = vpop.permute.xlu0 %3420
        %v3423 = vunpack.c.l.b16 %v3346
        %v3424 = vpack.c.b16 %v3423, %v3423
        %3425 = vrot.lane.b32.xlu0 %v3424, 32
        %v3426 = vpop.permute.xlu0 %3425
        %v3428 = vunpack.c.l.b16 %v3380
        %v3429 = vpack.c.b16 %v3428, %v3428
        %3430 = vrot.lane.b32.xlu0 %v3429, 48
        %v3431 = vpop.permute.xlu0 %3430
        %v3433 = vunpack.c.l.b16 %v3345
        %v3434 = vpack.c.b16 %v3433, %v3433
        %3435 = vrot.lane.b32.xlu0 %v3434, 64
        %v3436 = vpop.permute.xlu0 %3435
        %v3438 = vunpack.c.l.b16 %v3379
        %v3439 = vpack.c.b16 %v3438, %v3438
        %3440 = vrot.lane.b32.xlu0 %v3439, 80
        %v3441 = vpop.permute.xlu0 %3440
        %v3443 = vunpack.c.l.b16 %v3347
        %v3444 = vpack.c.b16 %v3443, %v3443
        %3445 = vrot.lane.b32.xlu0 %v3444, 96
        %v3446 = vpop.permute.xlu0 %3445
        %v3448 = vunpack.c.l.b16 %v3381
        %v3449 = vpack.c.b16 %v3448, %v3448
        %3450 = vrot.lane.b32.xlu0 %v3449, 112
        %v3451 = vpop.permute.xlu0 %3450
        %v3454 = vsel %vm433, %v3270, %v3386
        %v3456 = vsel %vm437, %v3454, %v3391
        %v3458 = vsel %vm440, %v3456, %v3396
        %v3460 = vsel %vm443, %v3458, %v3401
        %v3462 = vsel %vm446, %v3460, %v3406
        %v3464 = vsel %vm449, %v3462, %v3411
        %v3466 = vsel %vm452, %v3464, %v3416
        %v3469 = vsel %vm433, %v3338, %v3421
        %v3471 = vsel %vm437, %v3469, %v3426
        %v3473 = vsel %vm440, %v3471, %v3431
        %v3475 = vsel %vm443, %v3473, %v3436
        %v3477 = vsel %vm446, %v3475, %v3441
        %v3479 = vsel %vm449, %v3477, %v3446
        %v3481 = vsel %vm452, %v3479, %v3451
        %v3484 = vunpack.c.l.b16 %v3466
        %v3485 = vunpack.c.l.b16 %v3481
        %v3486 = vpack.c.b16 %v3485, %v3484
        %v3487 = vrot.slane %v3486, 6
        %3489 = vst [vmem:[#allocation2] sm:$0xcc] %v3487
        %v3490 = vld [vmem:[#allocation3] sm:$0xf]
        %v3491 = vld [vmem:[#allocation3 + $0x4] sm:$0xf]
        %v3492 = vld [vmem:[#allocation3 + $0xc] sm:$0xf]
        %v3493 = vld [vmem:[#allocation3 + $0x10] sm:$0xf]
        %v3494 = vld [vmem:[#allocation3 + $0x18] sm:$0xf]
        %v3495 = vld [vmem:[#allocation3 + $0x1c] sm:$0xf]
        %v3496 = vld [vmem:[#allocation3 + $0x24] sm:$0xf]
        %v3497 = vld [vmem:[#allocation3 + $0x28] sm:$0xf]
        %3506 = vrot.lane.b32.xlu0 %v3490, 126
        %v3507 = vpop.permute.xlu0 %3506
        %3508 = vrot.lane.b32.xlu0 %v3491, 126
        %v3509 = vpop.permute.xlu0 %3508
        %3510 = vrot.lane.b32.xlu0 %v3492, 126
        %v3511 = vpop.permute.xlu0 %3510
        %3512 = vrot.lane.b32.xlu0 %v3493, 126
        %v3513 = vpop.permute.xlu0 %3512
        %3514 = vrot.lane.b32.xlu0 %v3494, 126
        %v3515 = vpop.permute.xlu0 %3514
        %3516 = vrot.lane.b32.xlu0 %v3495, 126
        %v3517 = vpop.permute.xlu0 %3516
        %3518 = vrot.lane.b32.xlu0 %v3496, 126
        %v3519 = vpop.permute.xlu0 %3518
        %3520 = vrot.lane.b32.xlu0 %v3497, 126
        %v3521 = vpop.permute.xlu0 %3520
        %v3524 = vpack.i.b16 %v3511, %v3507
        %v3525 = vshrl.u32 %v3507, 16
        %v3526 = vshrl.u32 %v3511, 16
        %v3527 = vpack.i.b16 %v3526, %v3525
        %v3530 = vpack.i.b16 %v3519, %v3515
        %v3531 = vshrl.u32 %v3515, 16
        %v3532 = vshrl.u32 %v3519, 16
        %v3533 = vpack.i.b16 %v3532, %v3531
        %v3536 = vpack.i.b16 %v3513, %v3509
        %v3537 = vshrl.u32 %v3509, 16
        %v3538 = vshrl.u32 %v3513, 16
        %v3539 = vpack.i.b16 %v3538, %v3537
        %v3542 = vpack.i.b16 %v3521, %v3517
        %v3543 = vshrl.u32 %v3517, 16
        %v3544 = vshrl.u32 %v3521, 16
        %v3545 = vpack.i.b16 %v3544, %v3543
        %v3548 = vunpack.c.l.s4 1983009808
        %v3549 = vunpack.c.0.s8 %v3548
        %v3550 = vlaneseq
        %v3551 = vshrl.u32 %v3550, 7
        %v3552 = vsub.s32 %v3549, %v3551
        %v3553 = vrot.slane %v3524, %v3552
        %v3556 = vunpack.c.l.s4 1983009808
        %v3557 = vunpack.c.0.s8 %v3556
        %v3558 = vlaneseq
        %v3559 = vshrl.u32 %v3558, 7
        %v3560 = vsub.s32 %v3557, %v3559
        %v3561 = vrot.slane %v3530, %v3560
        %v3562 = vcombine.low %v3553, %v3561
        %v3563 = vcombine.high %v3553, %v3561
        %v3565 = vunpack.c.l.s4 1934713408
        %v3566 = vunpack.c.0.s8 %v3565
        %v3567 = vlaneseq
        %v3568 = vshrl.u32 %v3567, 7
        %v3569 = vsub.s32 %v3566, %v3568
        %v3570 = vrot.slane %v3562, %v3569
        %v3572 = vunpack.c.l.s4 1934713408
        %v3573 = vunpack.c.0.s8 %v3572
        %v3574 = vlaneseq
        %v3575 = vshrl.u32 %v3574, 7
        %v3576 = vsub.s32 %v3573, %v3575
        %v3577 = vrot.slane %v3563, %v3576
        %v3578 = vcombine.high %v3570, 0
        %v3579 = vcombine.high %v3577, 0
        %v3582 = vunpack.c.l.s4 1983009808
        %v3583 = vunpack.c.0.s8 %v3582
        %v3584 = vlaneseq
        %v3585 = vshrl.u32 %v3584, 7
        %v3586 = vsub.s32 %v3583, %v3585
        %v3587 = vrot.slane %v3527, %v3586
        %v3590 = vunpack.c.l.s4 1983009808
        %v3591 = vunpack.c.0.s8 %v3590
        %v3592 = vlaneseq
        %v3593 = vshrl.u32 %v3592, 7
        %v3594 = vsub.s32 %v3591, %v3593
        %v3595 = vrot.slane %v3533, %v3594
        %v3596 = vcombine.low %v3587, %v3595
        %v3597 = vcombine.high %v3587, %v3595
        %v3599 = vunpack.c.l.s4 1934713408
        %v3600 = vunpack.c.0.s8 %v3599
        %v3601 = vlaneseq
        %v3602 = vshrl.u32 %v3601, 7
        %v3603 = vsub.s32 %v3600, %v3602
        %v3604 = vrot.slane %v3596, %v3603
        %v3606 = vunpack.c.l.s4 1934713408
        %v3607 = vunpack.c.0.s8 %v3606
        %v3608 = vlaneseq
        %v3609 = vshrl.u32 %v3608, 7
        %v3610 = vsub.s32 %v3607, %v3609
        %v3611 = vrot.slane %v3597, %v3610
        %v3612 = vcombine.high %v3604, 0
        %v3613 = vcombine.high %v3611, 0
        %v3616 = vunpack.c.l.s4 1983009808
        %v3617 = vunpack.c.0.s8 %v3616
        %v3618 = vlaneseq
        %v3619 = vshrl.u32 %v3618, 7
        %v3620 = vsub.s32 %v3617, %v3619
        %v3621 = vrot.slane %v3536, %v3620
        %v3624 = vunpack.c.l.s4 1983009808
        %v3625 = vunpack.c.0.s8 %v3624
        %v3626 = vlaneseq
        %v3627 = vshrl.u32 %v3626, 7
        %v3628 = vsub.s32 %v3625, %v3627
        %v3629 = vrot.slane %v3542, %v3628
        %v3630 = vcombine.low %v3621, %v3629
        %v3631 = vcombine.high %v3621, %v3629
        %v3633 = vunpack.c.l.s4 1934713408
        %v3634 = vunpack.c.0.s8 %v3633
        %v3635 = vlaneseq
        %v3636 = vshrl.u32 %v3635, 7
        %v3637 = vsub.s32 %v3634, %v3636
        %v3638 = vrot.slane %v3630, %v3637
        %v3640 = vunpack.c.l.s4 1934713408
        %v3641 = vunpack.c.0.s8 %v3640
        %v3642 = vlaneseq
        %v3643 = vshrl.u32 %v3642, 7
        %v3644 = vsub.s32 %v3641, %v3643
        %v3645 = vrot.slane %v3631, %v3644
        %v3646 = vcombine.high %v3638, 0
        %v3647 = vcombine.high %v3645, 0
        %v3650 = vunpack.c.l.s4 1983009808
        %v3651 = vunpack.c.0.s8 %v3650
        %v3652 = vlaneseq
        %v3653 = vshrl.u32 %v3652, 7
        %v3654 = vsub.s32 %v3651, %v3653
        %v3655 = vrot.slane %v3539, %v3654
        %v3658 = vunpack.c.l.s4 1983009808
        %v3659 = vunpack.c.0.s8 %v3658
        %v3660 = vlaneseq
        %v3661 = vshrl.u32 %v3660, 7
        %v3662 = vsub.s32 %v3659, %v3661
        %v3663 = vrot.slane %v3545, %v3662
        %v3664 = vcombine.low %v3655, %v3663
        %v3665 = vcombine.high %v3655, %v3663
        %v3667 = vunpack.c.l.s4 1934713408
        %v3668 = vunpack.c.0.s8 %v3667
        %v3669 = vlaneseq
        %v3670 = vshrl.u32 %v3669, 7
        %v3671 = vsub.s32 %v3668, %v3670
        %v3672 = vrot.slane %v3664, %v3671
        %v3674 = vunpack.c.l.s4 1934713408
        %v3675 = vunpack.c.0.s8 %v3674
        %v3676 = vlaneseq
        %v3677 = vshrl.u32 %v3676, 7
        %v3678 = vsub.s32 %v3675, %v3677
        %v3679 = vrot.slane %v3665, %v3678
        %v3680 = vcombine.high %v3672, 0
        %v3681 = vcombine.high %v3679, 0
        %v3683 = vunpack.c.l.b16 %v3604
        %v3684 = vpack.c.b16 %v3683, %v3683
        %3685 = vrot.lane.b32.xlu0 %v3684, 16
        %v3686 = vpop.permute.xlu0 %3685
        %v3688 = vunpack.c.l.b16 %v3578
        %v3689 = vpack.c.b16 %v3688, %v3688
        %3690 = vrot.lane.b32.xlu0 %v3689, 32
        %v3691 = vpop.permute.xlu0 %3690
        %v3693 = vunpack.c.l.b16 %v3612
        %v3694 = vpack.c.b16 %v3693, %v3693
        %3695 = vrot.lane.b32.xlu0 %v3694, 48
        %v3696 = vpop.permute.xlu0 %3695
        %v3698 = vunpack.c.l.b16 %v3577
        %v3699 = vpack.c.b16 %v3698, %v3698
        %3700 = vrot.lane.b32.xlu0 %v3699, 64
        %v3701 = vpop.permute.xlu0 %3700
        %v3703 = vunpack.c.l.b16 %v3611
        %v3704 = vpack.c.b16 %v3703, %v3703
        %3705 = vrot.lane.b32.xlu0 %v3704, 80
        %v3706 = vpop.permute.xlu0 %3705
        %v3708 = vunpack.c.l.b16 %v3579
        %v3709 = vpack.c.b16 %v3708, %v3708
        %3710 = vrot.lane.b32.xlu0 %v3709, 96
        %v3711 = vpop.permute.xlu0 %3710
        %v3713 = vunpack.c.l.b16 %v3613
        %v3714 = vpack.c.b16 %v3713, %v3713
        %3715 = vrot.lane.b32.xlu0 %v3714, 112
        %v3716 = vpop.permute.xlu0 %3715
        %v3718 = vunpack.c.l.b16 %v3672
        %v3719 = vpack.c.b16 %v3718, %v3718
        %3720 = vrot.lane.b32.xlu0 %v3719, 16
        %v3721 = vpop.permute.xlu0 %3720
        %v3723 = vunpack.c.l.b16 %v3646
        %v3724 = vpack.c.b16 %v3723, %v3723
        %3725 = vrot.lane.b32.xlu0 %v3724, 32
        %v3726 = vpop.permute.xlu0 %3725
        %v3728 = vunpack.c.l.b16 %v3680
        %v3729 = vpack.c.b16 %v3728, %v3728
        %3730 = vrot.lane.b32.xlu0 %v3729, 48
        %v3731 = vpop.permute.xlu0 %3730
        %v3733 = vunpack.c.l.b16 %v3645
        %v3734 = vpack.c.b16 %v3733, %v3733
        %3735 = vrot.lane.b32.xlu0 %v3734, 64
        %v3736 = vpop.permute.xlu0 %3735
        %v3738 = vunpack.c.l.b16 %v3679
        %v3739 = vpack.c.b16 %v3738, %v3738
        %3740 = vrot.lane.b32.xlu0 %v3739, 80
        %v3741 = vpop.permute.xlu0 %3740
        %v3743 = vunpack.c.l.b16 %v3647
        %v3744 = vpack.c.b16 %v3743, %v3743
        %3745 = vrot.lane.b32.xlu0 %v3744, 96
        %v3746 = vpop.permute.xlu0 %3745
        %v3748 = vunpack.c.l.b16 %v3681
        %v3749 = vpack.c.b16 %v3748, %v3748
        %3750 = vrot.lane.b32.xlu0 %v3749, 112
        %v3751 = vpop.permute.xlu0 %3750
        %v3754 = vsel %vm433, %v3570, %v3686
        %v3756 = vsel %vm437, %v3754, %v3691
        %v3758 = vsel %vm440, %v3756, %v3696
        %v3760 = vsel %vm443, %v3758, %v3701
        %v3762 = vsel %vm446, %v3760, %v3706
        %v3764 = vsel %vm449, %v3762, %v3711
        %v3766 = vsel %vm452, %v3764, %v3716
        %v3769 = vsel %vm433, %v3638, %v3721
        %v3771 = vsel %vm437, %v3769, %v3726
        %v3773 = vsel %vm440, %v3771, %v3731
        %v3775 = vsel %vm443, %v3773, %v3736
        %v3777 = vsel %vm446, %v3775, %v3741
        %v3779 = vsel %vm449, %v3777, %v3746
        %v3781 = vsel %vm452, %v3779, %v3751
        %v3784 = vunpack.c.l.b16 %v3766
        %v3785 = vunpack.c.l.b16 %v3781
        %v3786 = vpack.c.b16 %v3785, %v3784
        %3788 = vst [vmem:[#allocation2 + $0x8] sm:$0x33] %v3786
        %v3789 = vld [vmem:[#allocation3] sm:$0xf]
        %v3790 = vld [vmem:[#allocation3 + $0x4] sm:$0xf]
        %v3791 = vld [vmem:[#allocation3 + $0x8] sm:$0x1]
        %v3792 = vld [vmem:[#allocation3 + $0xc] sm:$0xf]
        %v3793 = vld [vmem:[#allocation3 + $0x10] sm:$0xf]
        %v3794 = vld [vmem:[#allocation3 + $0x14] sm:$0x1]
        %v3795 = vld [vmem:[#allocation3 + $0x18] sm:$0xf]
        %v3796 = vld [vmem:[#allocation3 + $0x1c] sm:$0xf]
        %v3797 = vld [vmem:[#allocation3 + $0x20] sm:$0x1]
        %v3798 = vld [vmem:[#allocation3 + $0x24] sm:$0xf]
        %v3799 = vld [vmem:[#allocation3 + $0x28] sm:$0xf]
        %v3800 = vld [vmem:[#allocation3 + $0x2c] sm:$0x1]
        %vm3801 = vsmask.f32 3328
        %vm3802 = vsmask.f32 7440
        %vm3803 = vmor %vm3801, %vm3802
        %v3805 = vshrl.u32 %v3789, 16
        %v3807 = vrot.slane %v3805, 4
        %v3808 = vshll.u32 %v3789, 16
        %v3810 = vrot.slane %v3808, 5
        %v3811 = vor.u32 %v3807, %v3810
        %v3812 = vrot.slane %v3811, 4
        %v3814 = vshll.u32 %v3790, 16
        %v3816 = vrot.slane %v3814, 5
        %v3817 = vsel %vm3803, %v3812, %v3816
        %v3818 = vshrl.u32 %v3790, 16
        %v3820 = vrot.slane %v3818, 4
        %v3821 = vor.u32 %v3820, %v3816
        %v3822 = vrot.slane %v3821, 4
        %v3824 = vshll.u32 %v3791, 16
        %v3826 = vrot.slane %v3824, 5
        %v3827 = vsel %vm3803, %v3822, %v3826
        %v3829 = vshrl.u32 %v3792, 16
        %v3831 = vrot.slane %v3829, 4
        %v3832 = vshll.u32 %v3792, 16
        %v3834 = vrot.slane %v3832, 5
        %v3835 = vor.u32 %v3831, %v3834
        %v3836 = vrot.slane %v3835, 4
        %v3838 = vshll.u32 %v3793, 16
        %v3840 = vrot.slane %v3838, 5
        %v3841 = vsel %vm3803, %v3836, %v3840
        %v3842 = vshrl.u32 %v3793, 16
        %v3844 = vrot.slane %v3842, 4
        %v3845 = vor.u32 %v3844, %v3840
        %v3846 = vrot.slane %v3845, 4
        %v3848 = vshll.u32 %v3794, 16
        %v3850 = vrot.slane %v3848, 5
        %v3851 = vsel %vm3803, %v3846, %v3850
        %v3853 = vshrl.u32 %v3795, 16
        %v3855 = vrot.slane %v3853, 4
        %v3856 = vshll.u32 %v3795, 16
        %v3858 = vrot.slane %v3856, 5
        %v3859 = vor.u32 %v3855, %v3858
        %v3860 = vrot.slane %v3859, 4
        %v3862 = vshll.u32 %v3796, 16
        %v3864 = vrot.slane %v3862, 5
        %v3865 = vsel %vm3803, %v3860, %v3864
        %v3866 = vshrl.u32 %v3796, 16
        %v3868 = vrot.slane %v3866, 4
        %v3869 = vor.u32 %v3868, %v3864
        %v3870 = vrot.slane %v3869, 4
        %v3872 = vshll.u32 %v3797, 16
        %v3874 = vrot.slane %v3872, 5
        %v3875 = vsel %vm3803, %v3870, %v3874
        %v3877 = vshrl.u32 %v3798, 16
        %v3879 = vrot.slane %v3877, 4
        %v3880 = vshll.u32 %v3798, 16
        %v3882 = vrot.slane %v3880, 5
        %v3883 = vor.u32 %v3879, %v3882
        %v3884 = vrot.slane %v3883, 4
        %v3886 = vshll.u32 %v3799, 16
        %v3888 = vrot.slane %v3886, 5
        %v3889 = vsel %vm3803, %v3884, %v3888
        %v3890 = vshrl.u32 %v3799, 16
        %v3892 = vrot.slane %v3890, 4
        %v3893 = vor.u32 %v3892, %v3888
        %v3894 = vrot.slane %v3893, 4
        %v3896 = vshll.u32 %v3800, 16
        %v3898 = vrot.slane %v3896, 5
        %v3899 = vsel %vm3803, %v3894, %v3898
        %v3902 = vpack.i.b16 %v3841, %v3817
        %v3903 = vshrl.u32 %v3817, 16
        %v3904 = vshrl.u32 %v3841, 16
        %v3905 = vpack.i.b16 %v3904, %v3903
        %v3908 = vpack.i.b16 %v3889, %v3865
        %v3909 = vshrl.u32 %v3865, 16
        %v3910 = vshrl.u32 %v3889, 16
        %v3911 = vpack.i.b16 %v3910, %v3909
        %v3914 = vpack.i.b16 %v3851, %v3827
        %v3915 = vshrl.u32 %v3827, 16
        %v3916 = vshrl.u32 %v3851, 16
        %v3917 = vpack.i.b16 %v3916, %v3915
        %v3920 = vpack.i.b16 %v3899, %v3875
        %v3921 = vshrl.u32 %v3875, 16
        %v3922 = vshrl.u32 %v3899, 16
        %v3923 = vpack.i.b16 %v3922, %v3921
        %v3926 = vunpack.c.l.s4 1983009808
        %v3927 = vunpack.c.0.s8 %v3926
        %v3928 = vlaneseq
        %v3929 = vshrl.u32 %v3928, 7
        %v3930 = vsub.s32 %v3927, %v3929
        %v3931 = vrot.slane %v3902, %v3930
        %v3934 = vunpack.c.l.s4 1983009808
        %v3935 = vunpack.c.0.s8 %v3934
        %v3936 = vlaneseq
        %v3937 = vshrl.u32 %v3936, 7
        %v3938 = vsub.s32 %v3935, %v3937
        %v3939 = vrot.slane %v3908, %v3938
        %v3940 = vcombine.low %v3931, %v3939
        %v3941 = vcombine.high %v3931, %v3939
        %v3943 = vunpack.c.l.s4 1934713408
        %v3944 = vunpack.c.0.s8 %v3943
        %v3945 = vlaneseq
        %v3946 = vshrl.u32 %v3945, 7
        %v3947 = vsub.s32 %v3944, %v3946
        %v3948 = vrot.slane %v3940, %v3947
        %v3950 = vunpack.c.l.s4 1934713408
        %v3951 = vunpack.c.0.s8 %v3950
        %v3952 = vlaneseq
        %v3953 = vshrl.u32 %v3952, 7
        %v3954 = vsub.s32 %v3951, %v3953
        %v3955 = vrot.slane %v3941, %v3954
        %v3956 = vcombine.high %v3948, 0
        %v3957 = vcombine.high %v3955, 0
        %v3960 = vunpack.c.l.s4 1983009808
        %v3961 = vunpack.c.0.s8 %v3960
        %v3962 = vlaneseq
        %v3963 = vshrl.u32 %v3962, 7
        %v3964 = vsub.s32 %v3961, %v3963
        %v3965 = vrot.slane %v3905, %v3964
        %v3968 = vunpack.c.l.s4 1983009808
        %v3969 = vunpack.c.0.s8 %v3968
        %v3970 = vlaneseq
        %v3971 = vshrl.u32 %v3970, 7
        %v3972 = vsub.s32 %v3969, %v3971
        %v3973 = vrot.slane %v3911, %v3972
        %v3974 = vcombine.low %v3965, %v3973
        %v3975 = vcombine.high %v3965, %v3973
        %v3977 = vunpack.c.l.s4 1934713408
        %v3978 = vunpack.c.0.s8 %v3977
        %v3979 = vlaneseq
        %v3980 = vshrl.u32 %v3979, 7
        %v3981 = vsub.s32 %v3978, %v3980
        %v3982 = vrot.slane %v3974, %v3981
        %v3984 = vunpack.c.l.s4 1934713408
        %v3985 = vunpack.c.0.s8 %v3984
        %v3986 = vlaneseq
        %v3987 = vshrl.u32 %v3986, 7
        %v3988 = vsub.s32 %v3985, %v3987
        %v3989 = vrot.slane %v3975, %v3988
        %v3990 = vcombine.high %v3982, 0
        %v3991 = vcombine.high %v3989, 0
        %v3994 = vunpack.c.l.s4 1983009808
        %v3995 = vunpack.c.0.s8 %v3994
        %v3996 = vlaneseq
        %v3997 = vshrl.u32 %v3996, 7
        %v3998 = vsub.s32 %v3995, %v3997
        %v3999 = vrot.slane %v3914, %v3998
        %v4002 = vunpack.c.l.s4 1983009808
        %v4003 = vunpack.c.0.s8 %v4002
        %v4004 = vlaneseq
        %v4005 = vshrl.u32 %v4004, 7
        %v4006 = vsub.s32 %v4003, %v4005
        %v4007 = vrot.slane %v3920, %v4006
        %v4008 = vcombine.low %v3999, %v4007
        %v4009 = vcombine.high %v3999, %v4007
        %v4011 = vunpack.c.l.s4 1934713408
        %v4012 = vunpack.c.0.s8 %v4011
        %v4013 = vlaneseq
        %v4014 = vshrl.u32 %v4013, 7
        %v4015 = vsub.s32 %v4012, %v4014
        %v4016 = vrot.slane %v4008, %v4015
        %v4018 = vunpack.c.l.s4 1934713408
        %v4019 = vunpack.c.0.s8 %v4018
        %v4020 = vlaneseq
        %v4021 = vshrl.u32 %v4020, 7
        %v4022 = vsub.s32 %v4019, %v4021
        %v4023 = vrot.slane %v4009, %v4022
        %v4024 = vcombine.high %v4016, 0
        %v4025 = vcombine.high %v4023, 0
        %v4028 = vunpack.c.l.s4 1983009808
        %v4029 = vunpack.c.0.s8 %v4028
        %v4030 = vlaneseq
        %v4031 = vshrl.u32 %v4030, 7
        %v4032 = vsub.s32 %v4029, %v4031
        %v4033 = vrot.slane %v3917, %v4032
        %v4036 = vunpack.c.l.s4 1983009808
        %v4037 = vunpack.c.0.s8 %v4036
        %v4038 = vlaneseq
        %v4039 = vshrl.u32 %v4038, 7
        %v4040 = vsub.s32 %v4037, %v4039
        %v4041 = vrot.slane %v3923, %v4040
        %v4042 = vcombine.low %v4033, %v4041
        %v4043 = vcombine.high %v4033, %v4041
        %v4045 = vunpack.c.l.s4 1934713408
        %v4046 = vunpack.c.0.s8 %v4045
        %v4047 = vlaneseq
        %v4048 = vshrl.u32 %v4047, 7
        %v4049 = vsub.s32 %v4046, %v4048
        %v4050 = vrot.slane %v4042, %v4049
        %v4052 = vunpack.c.l.s4 1934713408
        %v4053 = vunpack.c.0.s8 %v4052
        %v4054 = vlaneseq
        %v4055 = vshrl.u32 %v4054, 7
        %v4056 = vsub.s32 %v4053, %v4055
        %v4057 = vrot.slane %v4043, %v4056
        %v4058 = vcombine.high %v4050, 0
        %v4059 = vcombine.high %v4057, 0
        %v4061 = vunpack.c.l.b16 %v3982
        %v4062 = vpack.c.b16 %v4061, %v4061
        %4063 = vrot.lane.b32.xlu0 %v4062, 16
        %v4064 = vpop.permute.xlu0 %4063
        %v4066 = vunpack.c.l.b16 %v3956
        %v4067 = vpack.c.b16 %v4066, %v4066
        %4068 = vrot.lane.b32.xlu0 %v4067, 32
        %v4069 = vpop.permute.xlu0 %4068
        %v4071 = vunpack.c.l.b16 %v3990
        %v4072 = vpack.c.b16 %v4071, %v4071
        %4073 = vrot.lane.b32.xlu0 %v4072, 48
        %v4074 = vpop.permute.xlu0 %4073
        %v4076 = vunpack.c.l.b16 %v3955
        %v4077 = vpack.c.b16 %v4076, %v4076
        %4078 = vrot.lane.b32.xlu0 %v4077, 64
        %v4079 = vpop.permute.xlu0 %4078
        %v4081 = vunpack.c.l.b16 %v3989
        %v4082 = vpack.c.b16 %v4081, %v4081
        %4083 = vrot.lane.b32.xlu0 %v4082, 80
        %v4084 = vpop.permute.xlu0 %4083
        %v4086 = vunpack.c.l.b16 %v3957
        %v4087 = vpack.c.b16 %v4086, %v4086
        %4088 = vrot.lane.b32.xlu0 %v4087, 96
        %v4089 = vpop.permute.xlu0 %4088
        %v4091 = vunpack.c.l.b16 %v3991
        %v4092 = vpack.c.b16 %v4091, %v4091
        %4093 = vrot.lane.b32.xlu0 %v4092, 112
        %v4094 = vpop.permute.xlu0 %4093
        %v4096 = vunpack.c.l.b16 %v4050
        %v4097 = vpack.c.b16 %v4096, %v4096
        %4098 = vrot.lane.b32.xlu0 %v4097, 16
        %v4099 = vpop.permute.xlu0 %4098
        %v4101 = vunpack.c.l.b16 %v4024
        %v4102 = vpack.c.b16 %v4101, %v4101
        %4103 = vrot.lane.b32.xlu0 %v4102, 32
        %v4104 = vpop.permute.xlu0 %4103
        %v4106 = vunpack.c.l.b16 %v4058
        %v4107 = vpack.c.b16 %v4106, %v4106
        %4108 = vrot.lane.b32.xlu0 %v4107, 48
        %v4109 = vpop.permute.xlu0 %4108
        %v4111 = vunpack.c.l.b16 %v4023
        %v4112 = vpack.c.b16 %v4111, %v4111
        %4113 = vrot.lane.b32.xlu0 %v4112, 64
        %v4114 = vpop.permute.xlu0 %4113
        %v4116 = vunpack.c.l.b16 %v4057
        %v4117 = vpack.c.b16 %v4116, %v4116
        %4118 = vrot.lane.b32.xlu0 %v4117, 80
        %v4119 = vpop.permute.xlu0 %4118
        %v4121 = vunpack.c.l.b16 %v4025
        %v4122 = vpack.c.b16 %v4121, %v4121
        %4123 = vrot.lane.b32.xlu0 %v4122, 96
        %v4124 = vpop.permute.xlu0 %4123
        %v4126 = vunpack.c.l.b16 %v4059
        %v4127 = vpack.c.b16 %v4126, %v4126
        %4128 = vrot.lane.b32.xlu0 %v4127, 112
        %v4129 = vpop.permute.xlu0 %4128
        %v4132 = vsel %vm433, %v3948, %v4064
        %v4134 = vsel %vm437, %v4132, %v4069
        %v4136 = vsel %vm440, %v4134, %v4074
        %v4138 = vsel %vm443, %v4136, %v4079
        %v4140 = vsel %vm446, %v4138, %v4084
        %v4142 = vsel %vm449, %v4140, %v4089
        %v4144 = vsel %vm452, %v4142, %v4094
        %v4147 = vsel %vm433, %v4016, %v4099
        %v4149 = vsel %vm437, %v4147, %v4104
        %v4151 = vsel %vm440, %v4149, %v4109
        %v4153 = vsel %vm443, %v4151, %v4114
        %v4155 = vsel %vm446, %v4153, %v4119
        %v4157 = vsel %vm449, %v4155, %v4124
        %v4159 = vsel %vm452, %v4157, %v4129
        %v4162 = vunpack.c.l.b16 %v4144
        %v4163 = vunpack.c.l.b16 %v4159
        %v4164 = vpack.c.b16 %v4163, %v4162
        %v4165 = vrot.slane %v4164, 6
        %4167 = vst [vmem:[#allocation2 + $0x8] sm:$0xcc] %v4165
        %v4168 = vld [vmem:[#allocation3] sm:$0xf]
        %v4169 = vld [vmem:[#allocation3 + $0x4] sm:$0xf]
        %v4170 = vld [vmem:[#allocation3 + $0x8] sm:$0x1]
        %v4171 = vld [vmem:[#allocation3 + $0xc] sm:$0xf]
        %v4172 = vld [vmem:[#allocation3 + $0x10] sm:$0xf]
        %v4173 = vld [vmem:[#allocation3 + $0x14] sm:$0x1]
        %v4174 = vld [vmem:[#allocation3 + $0x18] sm:$0xf]
        %v4175 = vld [vmem:[#allocation3 + $0x1c] sm:$0xf]
        %v4176 = vld [vmem:[#allocation3 + $0x20] sm:$0x1]
        %v4177 = vld [vmem:[#allocation3 + $0x24] sm:$0xf]
        %v4178 = vld [vmem:[#allocation3 + $0x28] sm:$0xf]
        %v4179 = vld [vmem:[#allocation3 + $0x2c] sm:$0x1]
        %v4181 = vshrl.u32 %v4168, 16
        %v4183 = vrot.slane %v4181, 4
        %v4184 = vshll.u32 %v4168, 16
        %v4186 = vrot.slane %v4184, 5
        %v4187 = vor.u32 %v4183, %v4186
        %v4188 = vrot.slane %v4187, 4
        %v4190 = vshll.u32 %v4169, 16
        %v4192 = vrot.slane %v4190, 5
        %v4193 = vsel %vm3803, %v4188, %v4192
        %v4194 = vshrl.u32 %v4169, 16
        %v4196 = vrot.slane %v4194, 4
        %v4197 = vor.u32 %v4196, %v4192
        %v4198 = vrot.slane %v4197, 4
        %v4200 = vshll.u32 %v4170, 16
        %v4202 = vrot.slane %v4200, 5
        %v4203 = vsel %vm3803, %v4198, %v4202
        %v4205 = vshrl.u32 %v4171, 16
        %v4207 = vrot.slane %v4205, 4
        %v4208 = vshll.u32 %v4171, 16
        %v4210 = vrot.slane %v4208, 5
        %v4211 = vor.u32 %v4207, %v4210
        %v4212 = vrot.slane %v4211, 4
        %v4214 = vshll.u32 %v4172, 16
        %v4216 = vrot.slane %v4214, 5
        %v4217 = vsel %vm3803, %v4212, %v4216
        %v4218 = vshrl.u32 %v4172, 16
        %v4220 = vrot.slane %v4218, 4
        %v4221 = vor.u32 %v4220, %v4216
        %v4222 = vrot.slane %v4221, 4
        %v4224 = vshll.u32 %v4173, 16
        %v4226 = vrot.slane %v4224, 5
        %v4227 = vsel %vm3803, %v4222, %v4226
        %v4229 = vshrl.u32 %v4174, 16
        %v4231 = vrot.slane %v4229, 4
        %v4232 = vshll.u32 %v4174, 16
        %v4234 = vrot.slane %v4232, 5
        %v4235 = vor.u32 %v4231, %v4234
        %v4236 = vrot.slane %v4235, 4
        %v4238 = vshll.u32 %v4175, 16
        %v4240 = vrot.slane %v4238, 5
        %v4241 = vsel %vm3803, %v4236, %v4240
        %v4242 = vshrl.u32 %v4175, 16
        %v4244 = vrot.slane %v4242, 4
        %v4245 = vor.u32 %v4244, %v4240
        %v4246 = vrot.slane %v4245, 4
        %v4248 = vshll.u32 %v4176, 16
        %v4250 = vrot.slane %v4248, 5
        %v4251 = vsel %vm3803, %v4246, %v4250
        %v4253 = vshrl.u32 %v4177, 16
        %v4255 = vrot.slane %v4253, 4
        %v4256 = vshll.u32 %v4177, 16
        %v4258 = vrot.slane %v4256, 5
        %v4259 = vor.u32 %v4255, %v4258
        %v4260 = vrot.slane %v4259, 4
        %v4262 = vshll.u32 %v4178, 16
        %v4264 = vrot.slane %v4262, 5
        %v4265 = vsel %vm3803, %v4260, %v4264
        %v4266 = vshrl.u32 %v4178, 16
        %v4268 = vrot.slane %v4266, 4
        %v4269 = vor.u32 %v4268, %v4264
        %v4270 = vrot.slane %v4269, 4
        %v4272 = vshll.u32 %v4179, 16
        %v4274 = vrot.slane %v4272, 5
        %v4275 = vsel %vm3803, %v4270, %v4274
        %4276 = vrot.lane.b32.xlu0 %v4193, 127
        %v4277 = vpop.permute.xlu0 %4276
        %4278 = vrot.lane.b32.xlu0 %v4203, 127
        %v4279 = vpop.permute.xlu0 %4278
        %4280 = vrot.lane.b32.xlu0 %v4217, 127
        %v4281 = vpop.permute.xlu0 %4280
        %4282 = vrot.lane.b32.xlu0 %v4227, 127
        %v4283 = vpop.permute.xlu0 %4282
        %4284 = vrot.lane.b32.xlu0 %v4241, 127
        %v4285 = vpop.permute.xlu0 %4284
        %4286 = vrot.lane.b32.xlu0 %v4251, 127
        %v4287 = vpop.permute.xlu0 %4286
        %4288 = vrot.lane.b32.xlu0 %v4265, 127
        %v4289 = vpop.permute.xlu0 %4288
        %4290 = vrot.lane.b32.xlu0 %v4275, 127
        %v4291 = vpop.permute.xlu0 %4290
        %v4294 = vpack.i.b16 %v4281, %v4277
        %v4295 = vshrl.u32 %v4277, 16
        %v4296 = vshrl.u32 %v4281, 16
        %v4297 = vpack.i.b16 %v4296, %v4295
        %v4300 = vpack.i.b16 %v4289, %v4285
        %v4301 = vshrl.u32 %v4285, 16
        %v4302 = vshrl.u32 %v4289, 16
        %v4303 = vpack.i.b16 %v4302, %v4301
        %v4306 = vpack.i.b16 %v4283, %v4279
        %v4307 = vshrl.u32 %v4279, 16
        %v4308 = vshrl.u32 %v4283, 16
        %v4309 = vpack.i.b16 %v4308, %v4307
        %v4312 = vpack.i.b16 %v4291, %v4287
        %v4313 = vshrl.u32 %v4287, 16
        %v4314 = vshrl.u32 %v4291, 16
        %v4315 = vpack.i.b16 %v4314, %v4313
        %v4318 = vunpack.c.l.s4 1983009808
        %v4319 = vunpack.c.0.s8 %v4318
        %v4320 = vlaneseq
        %v4321 = vshrl.u32 %v4320, 7
        %v4322 = vsub.s32 %v4319, %v4321
        %v4323 = vrot.slane %v4294, %v4322
        %v4326 = vunpack.c.l.s4 1983009808
        %v4327 = vunpack.c.0.s8 %v4326
        %v4328 = vlaneseq
        %v4329 = vshrl.u32 %v4328, 7
        %v4330 = vsub.s32 %v4327, %v4329
        %v4331 = vrot.slane %v4300, %v4330
        %v4332 = vcombine.low %v4323, %v4331
        %v4333 = vcombine.high %v4323, %v4331
        %v4335 = vunpack.c.l.s4 1934713408
        %v4336 = vunpack.c.0.s8 %v4335
        %v4337 = vlaneseq
        %v4338 = vshrl.u32 %v4337, 7
        %v4339 = vsub.s32 %v4336, %v4338
        %v4340 = vrot.slane %v4332, %v4339
        %v4342 = vunpack.c.l.s4 1934713408
        %v4343 = vunpack.c.0.s8 %v4342
        %v4344 = vlaneseq
        %v4345 = vshrl.u32 %v4344, 7
        %v4346 = vsub.s32 %v4343, %v4345
        %v4347 = vrot.slane %v4333, %v4346
        %v4348 = vcombine.high %v4340, 0
        %v4349 = vcombine.high %v4347, 0
        %v4352 = vunpack.c.l.s4 1983009808
        %v4353 = vunpack.c.0.s8 %v4352
        %v4354 = vlaneseq
        %v4355 = vshrl.u32 %v4354, 7
        %v4356 = vsub.s32 %v4353, %v4355
        %v4357 = vrot.slane %v4297, %v4356
        %v4360 = vunpack.c.l.s4 1983009808
        %v4361 = vunpack.c.0.s8 %v4360
        %v4362 = vlaneseq
        %v4363 = vshrl.u32 %v4362, 7
        %v4364 = vsub.s32 %v4361, %v4363
        %v4365 = vrot.slane %v4303, %v4364
        %v4366 = vcombine.low %v4357, %v4365
        %v4367 = vcombine.high %v4357, %v4365
        %v4369 = vunpack.c.l.s4 1934713408
        %v4370 = vunpack.c.0.s8 %v4369
        %v4371 = vlaneseq
        %v4372 = vshrl.u32 %v4371, 7
        %v4373 = vsub.s32 %v4370, %v4372
        %v4374 = vrot.slane %v4366, %v4373
        %v4376 = vunpack.c.l.s4 1934713408
        %v4377 = vunpack.c.0.s8 %v4376
        %v4378 = vlaneseq
        %v4379 = vshrl.u32 %v4378, 7
        %v4380 = vsub.s32 %v4377, %v4379
        %v4381 = vrot.slane %v4367, %v4380
        %v4382 = vcombine.high %v4374, 0
        %v4383 = vcombine.high %v4381, 0
        %v4386 = vunpack.c.l.s4 1983009808
        %v4387 = vunpack.c.0.s8 %v4386
        %v4388 = vlaneseq
        %v4389 = vshrl.u32 %v4388, 7
        %v4390 = vsub.s32 %v4387, %v4389
        %v4391 = vrot.slane %v4306, %v4390
        %v4394 = vunpack.c.l.s4 1983009808
        %v4395 = vunpack.c.0.s8 %v4394
        %v4396 = vlaneseq
        %v4397 = vshrl.u32 %v4396, 7
        %v4398 = vsub.s32 %v4395, %v4397
        %v4399 = vrot.slane %v4312, %v4398
        %v4400 = vcombine.low %v4391, %v4399
        %v4401 = vcombine.high %v4391, %v4399
        %v4403 = vunpack.c.l.s4 1934713408
        %v4404 = vunpack.c.0.s8 %v4403
        %v4405 = vlaneseq
        %v4406 = vshrl.u32 %v4405, 7
        %v4407 = vsub.s32 %v4404, %v4406
        %v4408 = vrot.slane %v4400, %v4407
        %v4410 = vunpack.c.l.s4 1934713408
        %v4411 = vunpack.c.0.s8 %v4410
        %v4412 = vlaneseq
        %v4413 = vshrl.u32 %v4412, 7
        %v4414 = vsub.s32 %v4411, %v4413
        %v4415 = vrot.slane %v4401, %v4414
        %v4416 = vcombine.high %v4408, 0
        %v4417 = vcombine.high %v4415, 0
        %v4420 = vunpack.c.l.s4 1983009808
        %v4421 = vunpack.c.0.s8 %v4420
        %v4422 = vlaneseq
        %v4423 = vshrl.u32 %v4422, 7
        %v4424 = vsub.s32 %v4421, %v4423
        %v4425 = vrot.slane %v4309, %v4424
        %v4428 = vunpack.c.l.s4 1983009808
        %v4429 = vunpack.c.0.s8 %v4428
        %v4430 = vlaneseq
        %v4431 = vshrl.u32 %v4430, 7
        %v4432 = vsub.s32 %v4429, %v4431
        %v4433 = vrot.slane %v4315, %v4432
        %v4434 = vcombine.low %v4425, %v4433
        %v4435 = vcombine.high %v4425, %v4433
        %v4437 = vunpack.c.l.s4 1934713408
        %v4438 = vunpack.c.0.s8 %v4437
        %v4439 = vlaneseq
        %v4440 = vshrl.u32 %v4439, 7
        %v4441 = vsub.s32 %v4438, %v4440
        %v4442 = vrot.slane %v4434, %v4441
        %v4444 = vunpack.c.l.s4 1934713408
        %v4445 = vunpack.c.0.s8 %v4444
        %v4446 = vlaneseq
        %v4447 = vshrl.u32 %v4446, 7
        %v4448 = vsub.s32 %v4445, %v4447
        %v4449 = vrot.slane %v4435, %v4448
        %v4450 = vcombine.high %v4442, 0
        %v4451 = vcombine.high %v4449, 0
        %v4453 = vunpack.c.l.b16 %v4374
        %v4454 = vpack.c.b16 %v4453, %v4453
        %4455 = vrot.lane.b32.xlu0 %v4454, 16
        %v4456 = vpop.permute.xlu0 %4455
        %v4458 = vunpack.c.l.b16 %v4348
        %v4459 = vpack.c.b16 %v4458, %v4458
        %4460 = vrot.lane.b32.xlu0 %v4459, 32
        %v4461 = vpop.permute.xlu0 %4460
        %v4463 = vunpack.c.l.b16 %v4382
        %v4464 = vpack.c.b16 %v4463, %v4463
        %4465 = vrot.lane.b32.xlu0 %v4464, 48
        %v4466 = vpop.permute.xlu0 %4465
        %v4468 = vunpack.c.l.b16 %v4347
        %v4469 = vpack.c.b16 %v4468, %v4468
        %4470 = vrot.lane.b32.xlu0 %v4469, 64
        %v4471 = vpop.permute.xlu0 %4470
        %v4473 = vunpack.c.l.b16 %v4381
        %v4474 = vpack.c.b16 %v4473, %v4473
        %4475 = vrot.lane.b32.xlu0 %v4474, 80
        %v4476 = vpop.permute.xlu0 %4475
        %v4478 = vunpack.c.l.b16 %v4349
        %v4479 = vpack.c.b16 %v4478, %v4478
        %4480 = vrot.lane.b32.xlu0 %v4479, 96
        %v4481 = vpop.permute.xlu0 %4480
        %v4483 = vunpack.c.l.b16 %v4383
        %v4484 = vpack.c.b16 %v4483, %v4483
        %4485 = vrot.lane.b32.xlu0 %v4484, 112
        %v4486 = vpop.permute.xlu0 %4485
        %v4488 = vunpack.c.l.b16 %v4442
        %v4489 = vpack.c.b16 %v4488, %v4488
        %4490 = vrot.lane.b32.xlu0 %v4489, 16
        %v4491 = vpop.permute.xlu0 %4490
        %v4493 = vunpack.c.l.b16 %v4416
        %v4494 = vpack.c.b16 %v4493, %v4493
        %4495 = vrot.lane.b32.xlu0 %v4494, 32
        %v4496 = vpop.permute.xlu0 %4495
        %v4498 = vunpack.c.l.b16 %v4450
        %v4499 = vpack.c.b16 %v4498, %v4498
        %4500 = vrot.lane.b32.xlu0 %v4499, 48
        %v4501 = vpop.permute.xlu0 %4500
        %v4503 = vunpack.c.l.b16 %v4415
        %v4504 = vpack.c.b16 %v4503, %v4503
        %4505 = vrot.lane.b32.xlu0 %v4504, 64
        %v4506 = vpop.permute.xlu0 %4505
        %v4508 = vunpack.c.l.b16 %v4449
        %v4509 = vpack.c.b16 %v4508, %v4508
        %4510 = vrot.lane.b32.xlu0 %v4509, 80
        %v4511 = vpop.permute.xlu0 %4510
        %v4513 = vunpack.c.l.b16 %v4417
        %v4514 = vpack.c.b16 %v4513, %v4513
        %4515 = vrot.lane.b32.xlu0 %v4514, 96
        %v4516 = vpop.permute.xlu0 %4515
        %v4518 = vunpack.c.l.b16 %v4451
        %v4519 = vpack.c.b16 %v4518, %v4518
        %4520 = vrot.lane.b32.xlu0 %v4519, 112
        %v4521 = vpop.permute.xlu0 %4520
        %v4524 = vsel %vm433, %v4340, %v4456
        %v4526 = vsel %vm437, %v4524, %v4461
        %v4528 = vsel %vm440, %v4526, %v4466
        %v4530 = vsel %vm443, %v4528, %v4471
        %v4532 = vsel %vm446, %v4530, %v4476
        %v4534 = vsel %vm449, %v4532, %v4481
        %v4536 = vsel %vm452, %v4534, %v4486
        %v4539 = vsel %vm433, %v4408, %v4491
        %v4541 = vsel %vm437, %v4539, %v4496
        %v4543 = vsel %vm440, %v4541, %v4501
        %v4545 = vsel %vm443, %v4543, %v4506
        %v4547 = vsel %vm446, %v4545, %v4511
        %v4549 = vsel %vm449, %v4547, %v4516
        %v4551 = vsel %vm452, %v4549, %v4521
        %v4554 = vunpack.c.l.b16 %v4536
        %v4555 = vunpack.c.l.b16 %v4551
        %v4556 = vpack.c.b16 %v4555, %v4554
        %4558 = vst [vmem:[#allocation2 + $0x10] sm:$0x33] %v4556
        %v4559 = vld [vmem:[#allocation3] sm:$0xf]
        %v4560 = vld [vmem:[#allocation3 + $0x4] sm:$0xf]
        %v4561 = vld [vmem:[#allocation3 + $0x8] sm:$0x1]
        %v4562 = vld [vmem:[#allocation3 + $0xc] sm:$0xf]
        %v4563 = vld [vmem:[#allocation3 + $0x10] sm:$0xf]
        %v4564 = vld [vmem:[#allocation3 + $0x14] sm:$0x1]
        %v4565 = vld [vmem:[#allocation3 + $0x18] sm:$0xf]
        %v4566 = vld [vmem:[#allocation3 + $0x1c] sm:$0xf]
        %v4567 = vld [vmem:[#allocation3 + $0x20] sm:$0x1]
        %v4568 = vld [vmem:[#allocation3 + $0x24] sm:$0xf]
        %v4569 = vld [vmem:[#allocation3 + $0x28] sm:$0xf]
        %v4570 = vld [vmem:[#allocation3 + $0x2c] sm:$0x1]
        %v4572 = vshrl.u32 %v4559, 16
        %v4574 = vrot.slane %v4572, 4
        %v4575 = vshll.u32 %v4559, 16
        %v4577 = vrot.slane %v4575, 5
        %v4578 = vor.u32 %v4574, %v4577
        %v4579 = vrot.slane %v4578, 4
        %v4581 = vshll.u32 %v4560, 16
        %v4583 = vrot.slane %v4581, 5
        %v4584 = vsel %vm3803, %v4579, %v4583
        %v4585 = vshrl.u32 %v4560, 16
        %v4587 = vrot.slane %v4585, 4
        %v4588 = vor.u32 %v4587, %v4583
        %v4589 = vrot.slane %v4588, 4
        %v4591 = vshll.u32 %v4561, 16
        %v4593 = vrot.slane %v4591, 5
        %v4594 = vsel %vm3803, %v4589, %v4593
        %v4596 = vshrl.u32 %v4562, 16
        %v4598 = vrot.slane %v4596, 4
        %v4599 = vshll.u32 %v4562, 16
        %v4601 = vrot.slane %v4599, 5
        %v4602 = vor.u32 %v4598, %v4601
        %v4603 = vrot.slane %v4602, 4
        %v4605 = vshll.u32 %v4563, 16
        %v4607 = vrot.slane %v4605, 5
        %v4608 = vsel %vm3803, %v4603, %v4607
        %v4609 = vshrl.u32 %v4563, 16
        %v4611 = vrot.slane %v4609, 4
        %v4612 = vor.u32 %v4611, %v4607
        %v4613 = vrot.slane %v4612, 4
        %v4615 = vshll.u32 %v4564, 16
        %v4617 = vrot.slane %v4615, 5
        %v4618 = vsel %vm3803, %v4613, %v4617
        %v4620 = vshrl.u32 %v4565, 16
        %v4622 = vrot.slane %v4620, 4
        %v4623 = vshll.u32 %v4565, 16
        %v4625 = vrot.slane %v4623, 5
        %v4626 = vor.u32 %v4622, %v4625
        %v4627 = vrot.slane %v4626, 4
        %v4629 = vshll.u32 %v4566, 16
        %v4631 = vrot.slane %v4629, 5
        %v4632 = vsel %vm3803, %v4627, %v4631
        %v4633 = vshrl.u32 %v4566, 16
        %v4635 = vrot.slane %v4633, 4
        %v4636 = vor.u32 %v4635, %v4631
        %v4637 = vrot.slane %v4636, 4
        %v4639 = vshll.u32 %v4567, 16
        %v4641 = vrot.slane %v4639, 5
        %v4642 = vsel %vm3803, %v4637, %v4641
        %v4644 = vshrl.u32 %v4568, 16
        %v4646 = vrot.slane %v4644, 4
        %v4647 = vshll.u32 %v4568, 16
        %v4649 = vrot.slane %v4647, 5
        %v4650 = vor.u32 %v4646, %v4649
        %v4651 = vrot.slane %v4650, 4
        %v4653 = vshll.u32 %v4569, 16
        %v4655 = vrot.slane %v4653, 5
        %v4656 = vsel %vm3803, %v4651, %v4655
        %v4657 = vshrl.u32 %v4569, 16
        %v4659 = vrot.slane %v4657, 4
        %v4660 = vor.u32 %v4659, %v4655
        %v4661 = vrot.slane %v4660, 4
        %v4663 = vshll.u32 %v4570, 16
        %v4665 = vrot.slane %v4663, 5
        %v4666 = vsel %vm3803, %v4661, %v4665
        %4667 = vrot.lane.b32.xlu0 %v4584, 126
        %v4668 = vpop.permute.xlu0 %4667
        %4669 = vrot.lane.b32.xlu0 %v4594, 126
        %v4670 = vpop.permute.xlu0 %4669
        %4671 = vrot.lane.b32.xlu0 %v4608, 126
        %v4672 = vpop.permute.xlu0 %4671
        %4673 = vrot.lane.b32.xlu0 %v4618, 126
        %v4674 = vpop.permute.xlu0 %4673
        %4675 = vrot.lane.b32.xlu0 %v4632, 126
        %v4676 = vpop.permute.xlu0 %4675
        %4677 = vrot.lane.b32.xlu0 %v4642, 126
        %v4678 = vpop.permute.xlu0 %4677
        %4679 = vrot.lane.b32.xlu0 %v4656, 126
        %v4680 = vpop.permute.xlu0 %4679
        %4681 = vrot.lane.b32.xlu0 %v4666, 126
        %v4682 = vpop.permute.xlu0 %4681
        %v4685 = vpack.i.b16 %v4672, %v4668
        %v4686 = vshrl.u32 %v4668, 16
        %v4687 = vshrl.u32 %v4672, 16
        %v4688 = vpack.i.b16 %v4687, %v4686
        %v4691 = vpack.i.b16 %v4680, %v4676
        %v4692 = vshrl.u32 %v4676, 16
        %v4693 = vshrl.u32 %v4680, 16
        %v4694 = vpack.i.b16 %v4693, %v4692
        %v4697 = vpack.i.b16 %v4674, %v4670
        %v4698 = vshrl.u32 %v4670, 16
        %v4699 = vshrl.u32 %v4674, 16
        %v4700 = vpack.i.b16 %v4699, %v4698
        %v4703 = vpack.i.b16 %v4682, %v4678
        %v4704 = vshrl.u32 %v4678, 16
        %v4705 = vshrl.u32 %v4682, 16
        %v4706 = vpack.i.b16 %v4705, %v4704
        %v4709 = vunpack.c.l.s4 1983009808
        %v4710 = vunpack.c.0.s8 %v4709
        %v4711 = vlaneseq
        %v4712 = vshrl.u32 %v4711, 7
        %v4713 = vsub.s32 %v4710, %v4712
        %v4714 = vrot.slane %v4685, %v4713
        %v4717 = vunpack.c.l.s4 1983009808
        %v4718 = vunpack.c.0.s8 %v4717
        %v4719 = vlaneseq
        %v4720 = vshrl.u32 %v4719, 7
        %v4721 = vsub.s32 %v4718, %v4720
        %v4722 = vrot.slane %v4691, %v4721
        %v4723 = vcombine.low %v4714, %v4722
        %v4724 = vcombine.high %v4714, %v4722
        %v4726 = vunpack.c.l.s4 1934713408
        %v4727 = vunpack.c.0.s8 %v4726
        %v4728 = vlaneseq
        %v4729 = vshrl.u32 %v4728, 7
        %v4730 = vsub.s32 %v4727, %v4729
        %v4731 = vrot.slane %v4723, %v4730
        %v4733 = vunpack.c.l.s4 1934713408
        %v4734 = vunpack.c.0.s8 %v4733
        %v4735 = vlaneseq
        %v4736 = vshrl.u32 %v4735, 7
        %v4737 = vsub.s32 %v4734, %v4736
        %v4738 = vrot.slane %v4724, %v4737
        %v4739 = vcombine.high %v4731, 0
        %v4740 = vcombine.high %v4738, 0
        %v4743 = vunpack.c.l.s4 1983009808
        %v4744 = vunpack.c.0.s8 %v4743
        %v4745 = vlaneseq
        %v4746 = vshrl.u32 %v4745, 7
        %v4747 = vsub.s32 %v4744, %v4746
        %v4748 = vrot.slane %v4688, %v4747
        %v4751 = vunpack.c.l.s4 1983009808
        %v4752 = vunpack.c.0.s8 %v4751
        %v4753 = vlaneseq
        %v4754 = vshrl.u32 %v4753, 7
        %v4755 = vsub.s32 %v4752, %v4754
        %v4756 = vrot.slane %v4694, %v4755
        %v4757 = vcombine.low %v4748, %v4756
        %v4758 = vcombine.high %v4748, %v4756
        %v4760 = vunpack.c.l.s4 1934713408
        %v4761 = vunpack.c.0.s8 %v4760
        %v4762 = vlaneseq
        %v4763 = vshrl.u32 %v4762, 7
        %v4764 = vsub.s32 %v4761, %v4763
        %v4765 = vrot.slane %v4757, %v4764
        %v4767 = vunpack.c.l.s4 1934713408
        %v4768 = vunpack.c.0.s8 %v4767
        %v4769 = vlaneseq
        %v4770 = vshrl.u32 %v4769, 7
        %v4771 = vsub.s32 %v4768, %v4770
        %v4772 = vrot.slane %v4758, %v4771
        %v4773 = vcombine.high %v4765, 0
        %v4774 = vcombine.high %v4772, 0
        %v4777 = vunpack.c.l.s4 1983009808
        %v4778 = vunpack.c.0.s8 %v4777
        %v4779 = vlaneseq
        %v4780 = vshrl.u32 %v4779, 7
        %v4781 = vsub.s32 %v4778, %v4780
        %v4782 = vrot.slane %v4697, %v4781
        %v4785 = vunpack.c.l.s4 1983009808
        %v4786 = vunpack.c.0.s8 %v4785
        %v4787 = vlaneseq
        %v4788 = vshrl.u32 %v4787, 7
        %v4789 = vsub.s32 %v4786, %v4788
        %v4790 = vrot.slane %v4703, %v4789
        %v4791 = vcombine.low %v4782, %v4790
        %v4792 = vcombine.high %v4782, %v4790
        %v4794 = vunpack.c.l.s4 1934713408
        %v4795 = vunpack.c.0.s8 %v4794
        %v4796 = vlaneseq
        %v4797 = vshrl.u32 %v4796, 7
        %v4798 = vsub.s32 %v4795, %v4797
        %v4799 = vrot.slane %v4791, %v4798
        %v4801 = vunpack.c.l.s4 1934713408
        %v4802 = vunpack.c.0.s8 %v4801
        %v4803 = vlaneseq
        %v4804 = vshrl.u32 %v4803, 7
        %v4805 = vsub.s32 %v4802, %v4804
        %v4806 = vrot.slane %v4792, %v4805
        %v4807 = vcombine.high %v4799, 0
        %v4808 = vcombine.high %v4806, 0
        %v4811 = vunpack.c.l.s4 1983009808
        %v4812 = vunpack.c.0.s8 %v4811
        %v4813 = vlaneseq
        %v4814 = vshrl.u32 %v4813, 7
        %v4815 = vsub.s32 %v4812, %v4814
        %v4816 = vrot.slane %v4700, %v4815
        %v4819 = vunpack.c.l.s4 1983009808
        %v4820 = vunpack.c.0.s8 %v4819
        %v4821 = vlaneseq
        %v4822 = vshrl.u32 %v4821, 7
        %v4823 = vsub.s32 %v4820, %v4822
        %v4824 = vrot.slane %v4706, %v4823
        %v4825 = vcombine.low %v4816, %v4824
        %v4826 = vcombine.high %v4816, %v4824
        %v4828 = vunpack.c.l.s4 1934713408
        %v4829 = vunpack.c.0.s8 %v4828
        %v4830 = vlaneseq
        %v4831 = vshrl.u32 %v4830, 7
        %v4832 = vsub.s32 %v4829, %v4831
        %v4833 = vrot.slane %v4825, %v4832
        %v4835 = vunpack.c.l.s4 1934713408
        %v4836 = vunpack.c.0.s8 %v4835
        %v4837 = vlaneseq
        %v4838 = vshrl.u32 %v4837, 7
        %v4839 = vsub.s32 %v4836, %v4838
        %v4840 = vrot.slane %v4826, %v4839
        %v4841 = vcombine.high %v4833, 0
        %v4842 = vcombine.high %v4840, 0
        %v4844 = vunpack.c.l.b16 %v4765
        %v4845 = vpack.c.b16 %v4844, %v4844
        %4846 = vrot.lane.b32.xlu0 %v4845, 16
        %v4847 = vpop.permute.xlu0 %4846
        %v4849 = vunpack.c.l.b16 %v4739
        %v4850 = vpack.c.b16 %v4849, %v4849
        %4851 = vrot.lane.b32.xlu0 %v4850, 32
        %v4852 = vpop.permute.xlu0 %4851
        %v4854 = vunpack.c.l.b16 %v4773
        %v4855 = vpack.c.b16 %v4854, %v4854
        %4856 = vrot.lane.b32.xlu0 %v4855, 48
        %v4857 = vpop.permute.xlu0 %4856
        %v4859 = vunpack.c.l.b16 %v4738
        %v4860 = vpack.c.b16 %v4859, %v4859
        %4861 = vrot.lane.b32.xlu0 %v4860, 64
        %v4862 = vpop.permute.xlu0 %4861
        %v4864 = vunpack.c.l.b16 %v4772
        %v4865 = vpack.c.b16 %v4864, %v4864
        %4866 = vrot.lane.b32.xlu0 %v4865, 80
        %v4867 = vpop.permute.xlu0 %4866
        %v4869 = vunpack.c.l.b16 %v4740
        %v4870 = vpack.c.b16 %v4869, %v4869
        %4871 = vrot.lane.b32.xlu0 %v4870, 96
        %v4872 = vpop.permute.xlu0 %4871
        %v4874 = vunpack.c.l.b16 %v4774
        %v4875 = vpack.c.b16 %v4874, %v4874
        %4876 = vrot.lane.b32.xlu0 %v4875, 112
        %v4877 = vpop.permute.xlu0 %4876
        %v4879 = vunpack.c.l.b16 %v4833
        %v4880 = vpack.c.b16 %v4879, %v4879
        %4881 = vrot.lane.b32.xlu0 %v4880, 16
        %v4882 = vpop.permute.xlu0 %4881
        %v4884 = vunpack.c.l.b16 %v4807
        %v4885 = vpack.c.b16 %v4884, %v4884
        %4886 = vrot.lane.b32.xlu0 %v4885, 32
        %v4887 = vpop.permute.xlu0 %4886
        %v4889 = vunpack.c.l.b16 %v4841
        %v4890 = vpack.c.b16 %v4889, %v4889
        %4891 = vrot.lane.b32.xlu0 %v4890, 48
        %v4892 = vpop.permute.xlu0 %4891
        %v4894 = vunpack.c.l.b16 %v4806
        %v4895 = vpack.c.b16 %v4894, %v4894
        %4896 = vrot.lane.b32.xlu0 %v4895, 64
        %v4897 = vpop.permute.xlu0 %4896
        %v4899 = vunpack.c.l.b16 %v4840
        %v4900 = vpack.c.b16 %v4899, %v4899
        %4901 = vrot.lane.b32.xlu0 %v4900, 80
        %v4902 = vpop.permute.xlu0 %4901
        %v4904 = vunpack.c.l.b16 %v4808
        %v4905 = vpack.c.b16 %v4904, %v4904
        %4906 = vrot.lane.b32.xlu0 %v4905, 96
        %v4907 = vpop.permute.xlu0 %4906
        %v4909 = vunpack.c.l.b16 %v4842
        %v4910 = vpack.c.b16 %v4909, %v4909
        %4911 = vrot.lane.b32.xlu0 %v4910, 112
        %v4912 = vpop.permute.xlu0 %4911
        %v4915 = vsel %vm433, %v4731, %v4847
        %v4917 = vsel %vm437, %v4915, %v4852
        %v4919 = vsel %vm440, %v4917, %v4857
        %v4921 = vsel %vm443, %v4919, %v4862
        %v4923 = vsel %vm446, %v4921, %v4867
        %v4925 = vsel %vm449, %v4923, %v4872
        %v4927 = vsel %vm452, %v4925, %v4877
        %v4930 = vsel %vm433, %v4799, %v4882
        %v4932 = vsel %vm437, %v4930, %v4887
        %v4934 = vsel %vm440, %v4932, %v4892
        %v4936 = vsel %vm443, %v4934, %v4897
        %v4938 = vsel %vm446, %v4936, %v4902
        %v4940 = vsel %vm449, %v4938, %v4907
        %v4942 = vsel %vm452, %v4940, %v4912
        %v4945 = vunpack.c.l.b16 %v4927
        %v4946 = vunpack.c.l.b16 %v4942
        %v4947 = vpack.c.b16 %v4946, %v4945
        %v4948 = vrot.slane %v4947, 6
        %4950 = vst [vmem:[#allocation2 + $0x10] sm:$0xcc] %v4948
        %v4951 = vld [vmem:[#allocation3] sm:$0xe]
        %v4952 = vld [vmem:[#allocation3 + $0x4] sm:$0xf]
        %v4953 = vld [vmem:[#allocation3 + $0x8] sm:$0x1]
        %v4954 = vld [vmem:[#allocation3 + $0xc] sm:$0xe]
        %v4955 = vld [vmem:[#allocation3 + $0x10] sm:$0xf]
        %v4956 = vld [vmem:[#allocation3 + $0x14] sm:$0x1]
        %v4957 = vld [vmem:[#allocation3 + $0x18] sm:$0xe]
        %v4958 = vld [vmem:[#allocation3 + $0x1c] sm:$0xf]
        %v4959 = vld [vmem:[#allocation3 + $0x20] sm:$0x1]
        %v4960 = vld [vmem:[#allocation3 + $0x24] sm:$0xe]
        %v4961 = vld [vmem:[#allocation3 + $0x28] sm:$0xf]
        %v4962 = vld [vmem:[#allocation3 + $0x2c] sm:$0x1]
        %vm4975 = vcmask 1042432
        %vm4976 = vcmask 1046532
        %vm4977 = vmor %vm4975, %vm4976
        %v4978 = vrot.slane %v4951, 5
        %v4979 = vrot.slane %v4978, 4
        %v4980 = vrot.slane %v4952, 5
        %v4981 = vsel %vm4977, %v4979, %v4980
        %v4982 = vrot.slane %v4980, 4
        %v4983 = vrot.slane %v4953, 5
        %v4984 = vsel %vm4977, %v4982, %v4983
        %v4985 = vrot.slane %v4954, 5
        %v4986 = vrot.slane %v4985, 4
        %v4987 = vrot.slane %v4955, 5
        %v4988 = vsel %vm4977, %v4986, %v4987
        %v4989 = vrot.slane %v4987, 4
        %v4990 = vrot.slane %v4956, 5
        %v4991 = vsel %vm4977, %v4989, %v4990
        %v4992 = vrot.slane %v4957, 5
        %v4993 = vrot.slane %v4992, 4
        %v4994 = vrot.slane %v4958, 5
        %v4995 = vsel %vm4977, %v4993, %v4994
        %v4996 = vrot.slane %v4994, 4
        %v4997 = vrot.slane %v4959, 5
        %v4998 = vsel %vm4977, %v4996, %v4997
        %v4999 = vrot.slane %v4960, 5
        %v5000 = vrot.slane %v4999, 4
        %v5001 = vrot.slane %v4961, 5
        %v5002 = vsel %vm4977, %v5000, %v5001
        %v5003 = vrot.slane %v5001, 4
        %v5004 = vrot.slane %v4962, 5
        %v5005 = vsel %vm4977, %v5003, %v5004
        %v5008 = vpack.i.b16 %v4988, %v4981
        %v5009 = vshrl.u32 %v4981, 16
        %v5010 = vshrl.u32 %v4988, 16
        %v5011 = vpack.i.b16 %v5010, %v5009
        %v5014 = vpack.i.b16 %v5002, %v4995
        %v5015 = vshrl.u32 %v4995, 16
        %v5016 = vshrl.u32 %v5002, 16
        %v5017 = vpack.i.b16 %v5016, %v5015
        %v5020 = vpack.i.b16 %v4991, %v4984
        %v5021 = vshrl.u32 %v4984, 16
        %v5022 = vshrl.u32 %v4991, 16
        %v5023 = vpack.i.b16 %v5022, %v5021
        %v5026 = vpack.i.b16 %v5005, %v4998
        %v5027 = vshrl.u32 %v4998, 16
        %v5028 = vshrl.u32 %v5005, 16
        %v5029 = vpack.i.b16 %v5028, %v5027
        %v5032 = vunpack.c.l.s4 1983009808
        %v5033 = vunpack.c.0.s8 %v5032
        %v5034 = vlaneseq
        %v5035 = vshrl.u32 %v5034, 7
        %v5036 = vsub.s32 %v5033, %v5035
        %v5037 = vrot.slane %v5008, %v5036
        %v5040 = vunpack.c.l.s4 1983009808
        %v5041 = vunpack.c.0.s8 %v5040
        %v5042 = vlaneseq
        %v5043 = vshrl.u32 %v5042, 7
        %v5044 = vsub.s32 %v5041, %v5043
        %v5045 = vrot.slane %v5014, %v5044
        %v5046 = vcombine.low %v5037, %v5045
        %v5047 = vcombine.high %v5037, %v5045
        %v5049 = vunpack.c.l.s4 1934713408
        %v5050 = vunpack.c.0.s8 %v5049
        %v5051 = vlaneseq
        %v5052 = vshrl.u32 %v5051, 7
        %v5053 = vsub.s32 %v5050, %v5052
        %v5054 = vrot.slane %v5046, %v5053
        %v5056 = vunpack.c.l.s4 1934713408
        %v5057 = vunpack.c.0.s8 %v5056
        %v5058 = vlaneseq
        %v5059 = vshrl.u32 %v5058, 7
        %v5060 = vsub.s32 %v5057, %v5059
        %v5061 = vrot.slane %v5047, %v5060
        %v5062 = vcombine.high %v5054, 0
        %v5063 = vcombine.high %v5061, 0
        %v5066 = vunpack.c.l.s4 1983009808
        %v5067 = vunpack.c.0.s8 %v5066
        %v5068 = vlaneseq
        %v5069 = vshrl.u32 %v5068, 7
        %v5070 = vsub.s32 %v5067, %v5069
        %v5071 = vrot.slane %v5011, %v5070
        %v5074 = vunpack.c.l.s4 1983009808
        %v5075 = vunpack.c.0.s8 %v5074
        %v5076 = vlaneseq
        %v5077 = vshrl.u32 %v5076, 7
        %v5078 = vsub.s32 %v5075, %v5077
        %v5079 = vrot.slane %v5017, %v5078
        %v5080 = vcombine.low %v5071, %v5079
        %v5081 = vcombine.high %v5071, %v5079
        %v5083 = vunpack.c.l.s4 1934713408
        %v5084 = vunpack.c.0.s8 %v5083
        %v5085 = vlaneseq
        %v5086 = vshrl.u32 %v5085, 7
        %v5087 = vsub.s32 %v5084, %v5086
        %v5088 = vrot.slane %v5080, %v5087
        %v5090 = vunpack.c.l.s4 1934713408
        %v5091 = vunpack.c.0.s8 %v5090
        %v5092 = vlaneseq
        %v5093 = vshrl.u32 %v5092, 7
        %v5094 = vsub.s32 %v5091, %v5093
        %v5095 = vrot.slane %v5081, %v5094
        %v5096 = vcombine.high %v5088, 0
        %v5097 = vcombine.high %v5095, 0
        %v5100 = vunpack.c.l.s4 1983009808
        %v5101 = vunpack.c.0.s8 %v5100
        %v5102 = vlaneseq
        %v5103 = vshrl.u32 %v5102, 7
        %v5104 = vsub.s32 %v5101, %v5103
        %v5105 = vrot.slane %v5020, %v5104
        %v5108 = vunpack.c.l.s4 1983009808
        %v5109 = vunpack.c.0.s8 %v5108
        %v5110 = vlaneseq
        %v5111 = vshrl.u32 %v5110, 7
        %v5112 = vsub.s32 %v5109, %v5111
        %v5113 = vrot.slane %v5026, %v5112
        %v5114 = vcombine.low %v5105, %v5113
        %v5115 = vcombine.high %v5105, %v5113
        %v5117 = vunpack.c.l.s4 1934713408
        %v5118 = vunpack.c.0.s8 %v5117
        %v5119 = vlaneseq
        %v5120 = vshrl.u32 %v5119, 7
        %v5121 = vsub.s32 %v5118, %v5120
        %v5122 = vrot.slane %v5114, %v5121
        %v5124 = vunpack.c.l.s4 1934713408
        %v5125 = vunpack.c.0.s8 %v5124
        %v5126 = vlaneseq
        %v5127 = vshrl.u32 %v5126, 7
        %v5128 = vsub.s32 %v5125, %v5127
        %v5129 = vrot.slane %v5115, %v5128
        %v5130 = vcombine.high %v5122, 0
        %v5131 = vcombine.high %v5129, 0
        %v5134 = vunpack.c.l.s4 1983009808
        %v5135 = vunpack.c.0.s8 %v5134
        %v5136 = vlaneseq
        %v5137 = vshrl.u32 %v5136, 7
        %v5138 = vsub.s32 %v5135, %v5137
        %v5139 = vrot.slane %v5023, %v5138
        %v5142 = vunpack.c.l.s4 1983009808
        %v5143 = vunpack.c.0.s8 %v5142
        %v5144 = vlaneseq
        %v5145 = vshrl.u32 %v5144, 7
        %v5146 = vsub.s32 %v5143, %v5145
        %v5147 = vrot.slane %v5029, %v5146
        %v5148 = vcombine.low %v5139, %v5147
        %v5149 = vcombine.high %v5139, %v5147
        %v5151 = vunpack.c.l.s4 1934713408
        %v5152 = vunpack.c.0.s8 %v5151
        %v5153 = vlaneseq
        %v5154 = vshrl.u32 %v5153, 7
        %v5155 = vsub.s32 %v5152, %v5154
        %v5156 = vrot.slane %v5148, %v5155
        %v5158 = vunpack.c.l.s4 1934713408
        %v5159 = vunpack.c.0.s8 %v5158
        %v5160 = vlaneseq
        %v5161 = vshrl.u32 %v5160, 7
        %v5162 = vsub.s32 %v5159, %v5161
        %v5163 = vrot.slane %v5149, %v5162
        %v5164 = vcombine.high %v5156, 0
        %v5165 = vcombine.high %v5163, 0
        %v5167 = vunpack.c.l.b16 %v5088
        %v5168 = vpack.c.b16 %v5167, %v5167
        %5169 = vrot.lane.b32.xlu0 %v5168, 16
        %v5170 = vpop.permute.xlu0 %5169
        %v5172 = vunpack.c.l.b16 %v5062
        %v5173 = vpack.c.b16 %v5172, %v5172
        %5174 = vrot.lane.b32.xlu0 %v5173, 32
        %v5175 = vpop.permute.xlu0 %5174
        %v5177 = vunpack.c.l.b16 %v5096
        %v5178 = vpack.c.b16 %v5177, %v5177
        %5179 = vrot.lane.b32.xlu0 %v5178, 48
        %v5180 = vpop.permute.xlu0 %5179
        %v5182 = vunpack.c.l.b16 %v5061
        %v5183 = vpack.c.b16 %v5182, %v5182
        %5184 = vrot.lane.b32.xlu0 %v5183, 64
        %v5185 = vpop.permute.xlu0 %5184
        %v5187 = vunpack.c.l.b16 %v5095
        %v5188 = vpack.c.b16 %v5187, %v5187
        %5189 = vrot.lane.b32.xlu0 %v5188, 80
        %v5190 = vpop.permute.xlu0 %5189
        %v5192 = vunpack.c.l.b16 %v5063
        %v5193 = vpack.c.b16 %v5192, %v5192
        %5194 = vrot.lane.b32.xlu0 %v5193, 96
        %v5195 = vpop.permute.xlu0 %5194
        %v5197 = vunpack.c.l.b16 %v5097
        %v5198 = vpack.c.b16 %v5197, %v5197
        %5199 = vrot.lane.b32.xlu0 %v5198, 112
        %v5200 = vpop.permute.xlu0 %5199
        %v5202 = vunpack.c.l.b16 %v5156
        %v5203 = vpack.c.b16 %v5202, %v5202
        %5204 = vrot.lane.b32.xlu0 %v5203, 16
        %v5205 = vpop.permute.xlu0 %5204
        %v5207 = vunpack.c.l.b16 %v5130
        %v5208 = vpack.c.b16 %v5207, %v5207
        %5209 = vrot.lane.b32.xlu0 %v5208, 32
        %v5210 = vpop.permute.xlu0 %5209
        %v5212 = vunpack.c.l.b16 %v5164
        %v5213 = vpack.c.b16 %v5212, %v5212
        %5214 = vrot.lane.b32.xlu0 %v5213, 48
        %v5215 = vpop.permute.xlu0 %5214
        %v5217 = vunpack.c.l.b16 %v5129
        %v5218 = vpack.c.b16 %v5217, %v5217
        %5219 = vrot.lane.b32.xlu0 %v5218, 64
        %v5220 = vpop.permute.xlu0 %5219
        %v5222 = vunpack.c.l.b16 %v5163
        %v5223 = vpack.c.b16 %v5222, %v5222
        %5224 = vrot.lane.b32.xlu0 %v5223, 80
        %v5225 = vpop.permute.xlu0 %5224
        %v5227 = vunpack.c.l.b16 %v5131
        %v5228 = vpack.c.b16 %v5227, %v5227
        %5229 = vrot.lane.b32.xlu0 %v5228, 96
        %v5230 = vpop.permute.xlu0 %5229
        %v5232 = vunpack.c.l.b16 %v5165
        %v5233 = vpack.c.b16 %v5232, %v5232
        %5234 = vrot.lane.b32.xlu0 %v5233, 112
        %v5235 = vpop.permute.xlu0 %5234
        %v5238 = vsel %vm433, %v5054, %v5170
        %v5240 = vsel %vm437, %v5238, %v5175
        %v5242 = vsel %vm440, %v5240, %v5180
        %v5244 = vsel %vm443, %v5242, %v5185
        %v5246 = vsel %vm446, %v5244, %v5190
        %v5248 = vsel %vm449, %v5246, %v5195
        %v5250 = vsel %vm452, %v5248, %v5200
        %v5253 = vsel %vm433, %v5122, %v5205
        %v5255 = vsel %vm437, %v5253, %v5210
        %v5257 = vsel %vm440, %v5255, %v5215
        %v5259 = vsel %vm443, %v5257, %v5220
        %v5261 = vsel %vm446, %v5259, %v5225
        %v5263 = vsel %vm449, %v5261, %v5230
        %v5265 = vsel %vm452, %v5263, %v5235
        %v5268 = vunpack.c.l.b16 %v5250
        %v5269 = vunpack.c.l.b16 %v5265
        %v5270 = vpack.c.b16 %v5269, %v5268
        %5272 = vst [vmem:[#allocation2 + $0x18] sm:$0x33] %v5270
        %v5273 = vld [vmem:[#allocation3] sm:$0xe]
        %v5274 = vld [vmem:[#allocation3 + $0x4] sm:$0xf]
        %v5275 = vld [vmem:[#allocation3 + $0x8] sm:$0x1]
        %v5276 = vld [vmem:[#allocation3 + $0xc] sm:$0xe]
        %v5277 = vld [vmem:[#allocation3 + $0x10] sm:$0xf]
        %v5278 = vld [vmem:[#allocation3 + $0x14] sm:$0x1]
        %v5279 = vld [vmem:[#allocation3 + $0x18] sm:$0xe]
        %v5280 = vld [vmem:[#allocation3 + $0x1c] sm:$0xf]
        %v5281 = vld [vmem:[#allocation3 + $0x20] sm:$0x1]
        %v5282 = vld [vmem:[#allocation3 + $0x24] sm:$0xe]
        %v5283 = vld [vmem:[#allocation3 + $0x28] sm:$0xf]
        %v5284 = vld [vmem:[#allocation3 + $0x2c] sm:$0x1]
        %v5297 = vrot.slane %v5273, 5
        %v5298 = vrot.slane %v5297, 4
        %v5299 = vrot.slane %v5274, 5
        %v5300 = vsel %vm4977, %v5298, %v5299
        %v5301 = vrot.slane %v5299, 4
        %v5302 = vrot.slane %v5275, 5
        %v5303 = vsel %vm4977, %v5301, %v5302
        %v5304 = vrot.slane %v5276, 5
        %v5305 = vrot.slane %v5304, 4
        %v5306 = vrot.slane %v5277, 5
        %v5307 = vsel %vm4977, %v5305, %v5306
        %v5308 = vrot.slane %v5306, 4
        %v5309 = vrot.slane %v5278, 5
        %v5310 = vsel %vm4977, %v5308, %v5309
        %v5311 = vrot.slane %v5279, 5
        %v5312 = vrot.slane %v5311, 4
        %v5313 = vrot.slane %v5280, 5
        %v5314 = vsel %vm4977, %v5312, %v5313
        %v5315 = vrot.slane %v5313, 4
        %v5316 = vrot.slane %v5281, 5
        %v5317 = vsel %vm4977, %v5315, %v5316
        %v5318 = vrot.slane %v5282, 5
        %v5319 = vrot.slane %v5318, 4
        %v5320 = vrot.slane %v5283, 5
        %v5321 = vsel %vm4977, %v5319, %v5320
        %v5322 = vrot.slane %v5320, 4
        %v5323 = vrot.slane %v5284, 5
        %v5324 = vsel %vm4977, %v5322, %v5323
        %5325 = vrot.lane.b32.xlu0 %v5300, 127
        %v5326 = vpop.permute.xlu0 %5325
        %5327 = vrot.lane.b32.xlu0 %v5303, 127
        %v5328 = vpop.permute.xlu0 %5327
        %5329 = vrot.lane.b32.xlu0 %v5307, 127
        %v5330 = vpop.permute.xlu0 %5329
        %5331 = vrot.lane.b32.xlu0 %v5310, 127
        %v5332 = vpop.permute.xlu0 %5331
        %5333 = vrot.lane.b32.xlu0 %v5314, 127
        %v5334 = vpop.permute.xlu0 %5333
        %5335 = vrot.lane.b32.xlu0 %v5317, 127
        %v5336 = vpop.permute.xlu0 %5335
        %5337 = vrot.lane.b32.xlu0 %v5321, 127
        %v5338 = vpop.permute.xlu0 %5337
        %5339 = vrot.lane.b32.xlu0 %v5324, 127
        %v5340 = vpop.permute.xlu0 %5339
        %v5343 = vpack.i.b16 %v5330, %v5326
        %v5344 = vshrl.u32 %v5326, 16
        %v5345 = vshrl.u32 %v5330, 16
        %v5346 = vpack.i.b16 %v5345, %v5344
        %v5349 = vpack.i.b16 %v5338, %v5334
        %v5350 = vshrl.u32 %v5334, 16
        %v5351 = vshrl.u32 %v5338, 16
        %v5352 = vpack.i.b16 %v5351, %v5350
        %v5355 = vpack.i.b16 %v5332, %v5328
        %v5356 = vshrl.u32 %v5328, 16
        %v5357 = vshrl.u32 %v5332, 16
        %v5358 = vpack.i.b16 %v5357, %v5356
        %v5361 = vpack.i.b16 %v5340, %v5336
        %v5362 = vshrl.u32 %v5336, 16
        %v5363 = vshrl.u32 %v5340, 16
        %v5364 = vpack.i.b16 %v5363, %v5362
        %v5367 = vunpack.c.l.s4 1983009808
        %v5368 = vunpack.c.0.s8 %v5367
        %v5369 = vlaneseq
        %v5370 = vshrl.u32 %v5369, 7
        %v5371 = vsub.s32 %v5368, %v5370
        %v5372 = vrot.slane %v5343, %v5371
        %v5375 = vunpack.c.l.s4 1983009808
        %v5376 = vunpack.c.0.s8 %v5375
        %v5377 = vlaneseq
        %v5378 = vshrl.u32 %v5377, 7
        %v5379 = vsub.s32 %v5376, %v5378
        %v5380 = vrot.slane %v5349, %v5379
        %v5381 = vcombine.low %v5372, %v5380
        %v5382 = vcombine.high %v5372, %v5380
        %v5384 = vunpack.c.l.s4 1934713408
        %v5385 = vunpack.c.0.s8 %v5384
        %v5386 = vlaneseq
        %v5387 = vshrl.u32 %v5386, 7
        %v5388 = vsub.s32 %v5385, %v5387
        %v5389 = vrot.slane %v5381, %v5388
        %v5391 = vunpack.c.l.s4 1934713408
        %v5392 = vunpack.c.0.s8 %v5391
        %v5393 = vlaneseq
        %v5394 = vshrl.u32 %v5393, 7
        %v5395 = vsub.s32 %v5392, %v5394
        %v5396 = vrot.slane %v5382, %v5395
        %v5397 = vcombine.high %v5389, 0
        %v5398 = vcombine.high %v5396, 0
        %v5401 = vunpack.c.l.s4 1983009808
        %v5402 = vunpack.c.0.s8 %v5401
        %v5403 = vlaneseq
        %v5404 = vshrl.u32 %v5403, 7
        %v5405 = vsub.s32 %v5402, %v5404
        %v5406 = vrot.slane %v5346, %v5405
        %v5409 = vunpack.c.l.s4 1983009808
        %v5410 = vunpack.c.0.s8 %v5409
        %v5411 = vlaneseq
        %v5412 = vshrl.u32 %v5411, 7
        %v5413 = vsub.s32 %v5410, %v5412
        %v5414 = vrot.slane %v5352, %v5413
        %v5415 = vcombine.low %v5406, %v5414
        %v5416 = vcombine.high %v5406, %v5414
        %v5418 = vunpack.c.l.s4 1934713408
        %v5419 = vunpack.c.0.s8 %v5418
        %v5420 = vlaneseq
        %v5421 = vshrl.u32 %v5420, 7
        %v5422 = vsub.s32 %v5419, %v5421
        %v5423 = vrot.slane %v5415, %v5422
        %v5425 = vunpack.c.l.s4 1934713408
        %v5426 = vunpack.c.0.s8 %v5425
        %v5427 = vlaneseq
        %v5428 = vshrl.u32 %v5427, 7
        %v5429 = vsub.s32 %v5426, %v5428
        %v5430 = vrot.slane %v5416, %v5429
        %v5431 = vcombine.high %v5423, 0
        %v5432 = vcombine.high %v5430, 0
        %v5435 = vunpack.c.l.s4 1983009808
        %v5436 = vunpack.c.0.s8 %v5435
        %v5437 = vlaneseq
        %v5438 = vshrl.u32 %v5437, 7
        %v5439 = vsub.s32 %v5436, %v5438
        %v5440 = vrot.slane %v5355, %v5439
        %v5443 = vunpack.c.l.s4 1983009808
        %v5444 = vunpack.c.0.s8 %v5443
        %v5445 = vlaneseq
        %v5446 = vshrl.u32 %v5445, 7
        %v5447 = vsub.s32 %v5444, %v5446
        %v5448 = vrot.slane %v5361, %v5447
        %v5449 = vcombine.low %v5440, %v5448
        %v5450 = vcombine.high %v5440, %v5448
        %v5452 = vunpack.c.l.s4 1934713408
        %v5453 = vunpack.c.0.s8 %v5452
        %v5454 = vlaneseq
        %v5455 = vshrl.u32 %v5454, 7
        %v5456 = vsub.s32 %v5453, %v5455
        %v5457 = vrot.slane %v5449, %v5456
        %v5459 = vunpack.c.l.s4 1934713408
        %v5460 = vunpack.c.0.s8 %v5459
        %v5461 = vlaneseq
        %v5462 = vshrl.u32 %v5461, 7
        %v5463 = vsub.s32 %v5460, %v5462
        %v5464 = vrot.slane %v5450, %v5463
        %v5465 = vcombine.high %v5457, 0
        %v5466 = vcombine.high %v5464, 0
        %v5469 = vunpack.c.l.s4 1983009808
        %v5470 = vunpack.c.0.s8 %v5469
        %v5471 = vlaneseq
        %v5472 = vshrl.u32 %v5471, 7
        %v5473 = vsub.s32 %v5470, %v5472
        %v5474 = vrot.slane %v5358, %v5473
        %v5477 = vunpack.c.l.s4 1983009808
        %v5478 = vunpack.c.0.s8 %v5477
        %v5479 = vlaneseq
        %v5480 = vshrl.u32 %v5479, 7
        %v5481 = vsub.s32 %v5478, %v5480
        %v5482 = vrot.slane %v5364, %v5481
        %v5483 = vcombine.low %v5474, %v5482
        %v5484 = vcombine.high %v5474, %v5482
        %v5486 = vunpack.c.l.s4 1934713408
        %v5487 = vunpack.c.0.s8 %v5486
        %v5488 = vlaneseq
        %v5489 = vshrl.u32 %v5488, 7
        %v5490 = vsub.s32 %v5487, %v5489
        %v5491 = vrot.slane %v5483, %v5490
        %v5493 = vunpack.c.l.s4 1934713408
        %v5494 = vunpack.c.0.s8 %v5493
        %v5495 = vlaneseq
        %v5496 = vshrl.u32 %v5495, 7
        %v5497 = vsub.s32 %v5494, %v5496
        %v5498 = vrot.slane %v5484, %v5497
        %v5499 = vcombine.high %v5491, 0
        %v5500 = vcombine.high %v5498, 0
        %v5502 = vunpack.c.l.b16 %v5423
        %v5503 = vpack.c.b16 %v5502, %v5502
        %5504 = vrot.lane.b32.xlu0 %v5503, 16
        %v5505 = vpop.permute.xlu0 %5504
        %v5507 = vunpack.c.l.b16 %v5397
        %v5508 = vpack.c.b16 %v5507, %v5507
        %5509 = vrot.lane.b32.xlu0 %v5508, 32
        %v5510 = vpop.permute.xlu0 %5509
        %v5512 = vunpack.c.l.b16 %v5431
        %v5513 = vpack.c.b16 %v5512, %v5512
        %5514 = vrot.lane.b32.xlu0 %v5513, 48
        %v5515 = vpop.permute.xlu0 %5514
        %v5517 = vunpack.c.l.b16 %v5396
        %v5518 = vpack.c.b16 %v5517, %v5517
        %5519 = vrot.lane.b32.xlu0 %v5518, 64
        %v5520 = vpop.permute.xlu0 %5519
        %v5522 = vunpack.c.l.b16 %v5430
        %v5523 = vpack.c.b16 %v5522, %v5522
        %5524 = vrot.lane.b32.xlu0 %v5523, 80
        %v5525 = vpop.permute.xlu0 %5524
        %v5527 = vunpack.c.l.b16 %v5398
        %v5528 = vpack.c.b16 %v5527, %v5527
        %5529 = vrot.lane.b32.xlu0 %v5528, 96
        %v5530 = vpop.permute.xlu0 %5529
        %v5532 = vunpack.c.l.b16 %v5432
        %v5533 = vpack.c.b16 %v5532, %v5532
        %5534 = vrot.lane.b32.xlu0 %v5533, 112
        %v5535 = vpop.permute.xlu0 %5534
        %v5537 = vunpack.c.l.b16 %v5491
        %v5538 = vpack.c.b16 %v5537, %v5537
        %5539 = vrot.lane.b32.xlu0 %v5538, 16
        %v5540 = vpop.permute.xlu0 %5539
        %v5542 = vunpack.c.l.b16 %v5465
        %v5543 = vpack.c.b16 %v5542, %v5542
        %5544 = vrot.lane.b32.xlu0 %v5543, 32
        %v5545 = vpop.permute.xlu0 %5544
        %v5547 = vunpack.c.l.b16 %v5499
        %v5548 = vpack.c.b16 %v5547, %v5547
        %5549 = vrot.lane.b32.xlu0 %v5548, 48
        %v5550 = vpop.permute.xlu0 %5549
        %v5552 = vunpack.c.l.b16 %v5464
        %v5553 = vpack.c.b16 %v5552, %v5552
        %5554 = vrot.lane.b32.xlu0 %v5553, 64
        %v5555 = vpop.permute.xlu0 %5554
        %v5557 = vunpack.c.l.b16 %v5498
        %v5558 = vpack.c.b16 %v5557, %v5557
        %5559 = vrot.lane.b32.xlu0 %v5558, 80
        %v5560 = vpop.permute.xlu0 %5559
        %v5562 = vunpack.c.l.b16 %v5466
        %v5563 = vpack.c.b16 %v5562, %v5562
        %5564 = vrot.lane.b32.xlu0 %v5563, 96
        %v5565 = vpop.permute.xlu0 %5564
        %v5567 = vunpack.c.l.b16 %v5500
        %v5568 = vpack.c.b16 %v5567, %v5567
        %5569 = vrot.lane.b32.xlu0 %v5568, 112
        %v5570 = vpop.permute.xlu0 %5569
        %v5573 = vsel %vm433, %v5389, %v5505
        %v5575 = vsel %vm437, %v5573, %v5510
        %v5577 = vsel %vm440, %v5575, %v5515
        %v5579 = vsel %vm443, %v5577, %v5520
        %v5581 = vsel %vm446, %v5579, %v5525
        %v5583 = vsel %vm449, %v5581, %v5530
        %v5585 = vsel %vm452, %v5583, %v5535
        %v5588 = vsel %vm433, %v5457, %v5540
        %v5590 = vsel %vm437, %v5588, %v5545
        %v5592 = vsel %vm440, %v5590, %v5550
        %v5594 = vsel %vm443, %v5592, %v5555
        %v5596 = vsel %vm446, %v5594, %v5560
        %v5598 = vsel %vm449, %v5596, %v5565
        %v5600 = vsel %vm452, %v5598, %v5570
        %v5603 = vunpack.c.l.b16 %v5585
        %v5604 = vunpack.c.l.b16 %v5600
        %v5605 = vpack.c.b16 %v5604, %v5603
        %v5606 = vrot.slane %v5605, 6
        %5608 = vst [vmem:[#allocation2 + $0x18] sm:$0xcc] %v5606
        %v5609 = vld [vmem:[#allocation3] sm:$0xe]
        %v5610 = vld [vmem:[#allocation3 + $0x4] sm:$0xf]
        %v5611 = vld [vmem:[#allocation3 + $0x8] sm:$0x1]
        %v5612 = vld [vmem:[#allocation3 + $0xc] sm:$0xe]
        %v5613 = vld [vmem:[#allocation3 + $0x10] sm:$0xf]
        %v5614 = vld [vmem:[#allocation3 + $0x14] sm:$0x1]
        %v5615 = vld [vmem:[#allocation3 + $0x18] sm:$0xe]
        %v5616 = vld [vmem:[#allocation3 + $0x1c] sm:$0xf]
        %v5617 = vld [vmem:[#allocation3 + $0x20] sm:$0x1]
        %v5618 = vld [vmem:[#allocation3 + $0x24] sm:$0xe]
        %v5619 = vld [vmem:[#allocation3 + $0x28] sm:$0xf]
        %v5620 = vld [vmem:[#allocation3 + $0x2c] sm:$0x1]
        %v5633 = vrot.slane %v5609, 5
        %v5634 = vrot.slane %v5633, 4
        %v5635 = vrot.slane %v5610, 5
        %v5636 = vsel %vm4977, %v5634, %v5635
        %v5637 = vrot.slane %v5635, 4
        %v5638 = vrot.slane %v5611, 5
        %v5639 = vsel %vm4977, %v5637, %v5638
        %v5640 = vrot.slane %v5612, 5
        %v5641 = vrot.slane %v5640, 4
        %v5642 = vrot.slane %v5613, 5
        %v5643 = vsel %vm4977, %v5641, %v5642
        %v5644 = vrot.slane %v5642, 4
        %v5645 = vrot.slane %v5614, 5
        %v5646 = vsel %vm4977, %v5644, %v5645
        %v5647 = vrot.slane %v5615, 5
        %v5648 = vrot.slane %v5647, 4
        %v5649 = vrot.slane %v5616, 5
        %v5650 = vsel %vm4977, %v5648, %v5649
        %v5651 = vrot.slane %v5649, 4
        %v5652 = vrot.slane %v5617, 5
        %v5653 = vsel %vm4977, %v5651, %v5652
        %v5654 = vrot.slane %v5618, 5
        %v5655 = vrot.slane %v5654, 4
        %v5656 = vrot.slane %v5619, 5
        %v5657 = vsel %vm4977, %v5655, %v5656
        %v5658 = vrot.slane %v5656, 4
        %v5659 = vrot.slane %v5620, 5
        %v5660 = vsel %vm4977, %v5658, %v5659
        %5661 = vrot.lane.b32.xlu0 %v5636, 126
        %v5662 = vpop.permute.xlu0 %5661
        %5663 = vrot.lane.b32.xlu0 %v5639, 126
        %v5664 = vpop.permute.xlu0 %5663
        %5665 = vrot.lane.b32.xlu0 %v5643, 126
        %v5666 = vpop.permute.xlu0 %5665
        %5667 = vrot.lane.b32.xlu0 %v5646, 126
        %v5668 = vpop.permute.xlu0 %5667
        %5669 = vrot.lane.b32.xlu0 %v5650, 126
        %v5670 = vpop.permute.xlu0 %5669
        %5671 = vrot.lane.b32.xlu0 %v5653, 126
        %v5672 = vpop.permute.xlu0 %5671
        %5673 = vrot.lane.b32.xlu0 %v5657, 126
        %v5674 = vpop.permute.xlu0 %5673
        %5675 = vrot.lane.b32.xlu0 %v5660, 126
        %v5676 = vpop.permute.xlu0 %5675
        %v5679 = vpack.i.b16 %v5666, %v5662
        %v5680 = vshrl.u32 %v5662, 16
        %v5681 = vshrl.u32 %v5666, 16
        %v5682 = vpack.i.b16 %v5681, %v5680
        %v5685 = vpack.i.b16 %v5674, %v5670
        %v5686 = vshrl.u32 %v5670, 16
        %v5687 = vshrl.u32 %v5674, 16
        %v5688 = vpack.i.b16 %v5687, %v5686
        %v5691 = vpack.i.b16 %v5668, %v5664
        %v5692 = vshrl.u32 %v5664, 16
        %v5693 = vshrl.u32 %v5668, 16
        %v5694 = vpack.i.b16 %v5693, %v5692
        %v5697 = vpack.i.b16 %v5676, %v5672
        %v5698 = vshrl.u32 %v5672, 16
        %v5699 = vshrl.u32 %v5676, 16
        %v5700 = vpack.i.b16 %v5699, %v5698
        %v5703 = vunpack.c.l.s4 1983009808
        %v5704 = vunpack.c.0.s8 %v5703
        %v5705 = vlaneseq
        %v5706 = vshrl.u32 %v5705, 7
        %v5707 = vsub.s32 %v5704, %v5706
        %v5708 = vrot.slane %v5679, %v5707
        %v5711 = vunpack.c.l.s4 1983009808
        %v5712 = vunpack.c.0.s8 %v5711
        %v5713 = vlaneseq
        %v5714 = vshrl.u32 %v5713, 7
        %v5715 = vsub.s32 %v5712, %v5714
        %v5716 = vrot.slane %v5685, %v5715
        %v5717 = vcombine.low %v5708, %v5716
        %v5718 = vcombine.high %v5708, %v5716
        %v5720 = vunpack.c.l.s4 1934713408
        %v5721 = vunpack.c.0.s8 %v5720
        %v5722 = vlaneseq
        %v5723 = vshrl.u32 %v5722, 7
        %v5724 = vsub.s32 %v5721, %v5723
        %v5725 = vrot.slane %v5717, %v5724
        %v5727 = vunpack.c.l.s4 1934713408
        %v5728 = vunpack.c.0.s8 %v5727
        %v5729 = vlaneseq
        %v5730 = vshrl.u32 %v5729, 7
        %v5731 = vsub.s32 %v5728, %v5730
        %v5732 = vrot.slane %v5718, %v5731
        %v5733 = vcombine.high %v5725, 0
        %v5734 = vcombine.high %v5732, 0
        %v5737 = vunpack.c.l.s4 1983009808
        %v5738 = vunpack.c.0.s8 %v5737
        %v5739 = vlaneseq
        %v5740 = vshrl.u32 %v5739, 7
        %v5741 = vsub.s32 %v5738, %v5740
        %v5742 = vrot.slane %v5682, %v5741
        %v5745 = vunpack.c.l.s4 1983009808
        %v5746 = vunpack.c.0.s8 %v5745
        %v5747 = vlaneseq
        %v5748 = vshrl.u32 %v5747, 7
        %v5749 = vsub.s32 %v5746, %v5748
        %v5750 = vrot.slane %v5688, %v5749
        %v5751 = vcombine.low %v5742, %v5750
        %v5752 = vcombine.high %v5742, %v5750
        %v5754 = vunpack.c.l.s4 1934713408
        %v5755 = vunpack.c.0.s8 %v5754
        %v5756 = vlaneseq
        %v5757 = vshrl.u32 %v5756, 7
        %v5758 = vsub.s32 %v5755, %v5757
        %v5759 = vrot.slane %v5751, %v5758
        %v5761 = vunpack.c.l.s4 1934713408
        %v5762 = vunpack.c.0.s8 %v5761
        %v5763 = vlaneseq
        %v5764 = vshrl.u32 %v5763, 7
        %v5765 = vsub.s32 %v5762, %v5764
        %v5766 = vrot.slane %v5752, %v5765
        %v5767 = vcombine.high %v5759, 0
        %v5768 = vcombine.high %v5766, 0
        %v5771 = vunpack.c.l.s4 1983009808
        %v5772 = vunpack.c.0.s8 %v5771
        %v5773 = vlaneseq
        %v5774 = vshrl.u32 %v5773, 7
        %v5775 = vsub.s32 %v5772, %v5774
        %v5776 = vrot.slane %v5691, %v5775
        %v5779 = vunpack.c.l.s4 1983009808
        %v5780 = vunpack.c.0.s8 %v5779
        %v5781 = vlaneseq
        %v5782 = vshrl.u32 %v5781, 7
        %v5783 = vsub.s32 %v5780, %v5782
        %v5784 = vrot.slane %v5697, %v5783
        %v5785 = vcombine.low %v5776, %v5784
        %v5786 = vcombine.high %v5776, %v5784
        %v5788 = vunpack.c.l.s4 1934713408
        %v5789 = vunpack.c.0.s8 %v5788
        %v5790 = vlaneseq
        %v5791 = vshrl.u32 %v5790, 7
        %v5792 = vsub.s32 %v5789, %v5791
        %v5793 = vrot.slane %v5785, %v5792
        %v5795 = vunpack.c.l.s4 1934713408
        %v5796 = vunpack.c.0.s8 %v5795
        %v5797 = vlaneseq
        %v5798 = vshrl.u32 %v5797, 7
        %v5799 = vsub.s32 %v5796, %v5798
        %v5800 = vrot.slane %v5786, %v5799
        %v5801 = vcombine.high %v5793, 0
        %v5802 = vcombine.high %v5800, 0
        %v5805 = vunpack.c.l.s4 1983009808
        %v5806 = vunpack.c.0.s8 %v5805
        %v5807 = vlaneseq
        %v5808 = vshrl.u32 %v5807, 7
        %v5809 = vsub.s32 %v5806, %v5808
        %v5810 = vrot.slane %v5694, %v5809
        %v5813 = vunpack.c.l.s4 1983009808
        %v5814 = vunpack.c.0.s8 %v5813
        %v5815 = vlaneseq
        %v5816 = vshrl.u32 %v5815, 7
        %v5817 = vsub.s32 %v5814, %v5816
        %v5818 = vrot.slane %v5700, %v5817
        %v5819 = vcombine.low %v5810, %v5818
        %v5820 = vcombine.high %v5810, %v5818
        %v5822 = vunpack.c.l.s4 1934713408
        %v5823 = vunpack.c.0.s8 %v5822
        %v5824 = vlaneseq
        %v5825 = vshrl.u32 %v5824, 7
        %v5826 = vsub.s32 %v5823, %v5825
        %v5827 = vrot.slane %v5819, %v5826
        %v5829 = vunpack.c.l.s4 1934713408
        %v5830 = vunpack.c.0.s8 %v5829
        %v5831 = vlaneseq
        %v5832 = vshrl.u32 %v5831, 7
        %v5833 = vsub.s32 %v5830, %v5832
        %v5834 = vrot.slane %v5820, %v5833
        %v5835 = vcombine.high %v5827, 0
        %v5836 = vcombine.high %v5834, 0
        %v5838 = vunpack.c.l.b16 %v5759
        %v5839 = vpack.c.b16 %v5838, %v5838
        %5840 = vrot.lane.b32.xlu0 %v5839, 16
        %v5841 = vpop.permute.xlu0 %5840
        %v5843 = vunpack.c.l.b16 %v5733
        %v5844 = vpack.c.b16 %v5843, %v5843
        %5845 = vrot.lane.b32.xlu0 %v5844, 32
        %v5846 = vpop.permute.xlu0 %5845
        %v5848 = vunpack.c.l.b16 %v5767
        %v5849 = vpack.c.b16 %v5848, %v5848
        %5850 = vrot.lane.b32.xlu0 %v5849, 48
        %v5851 = vpop.permute.xlu0 %5850
        %v5853 = vunpack.c.l.b16 %v5732
        %v5854 = vpack.c.b16 %v5853, %v5853
        %5855 = vrot.lane.b32.xlu0 %v5854, 64
        %v5856 = vpop.permute.xlu0 %5855
        %v5858 = vunpack.c.l.b16 %v5766
        %v5859 = vpack.c.b16 %v5858, %v5858
        %5860 = vrot.lane.b32.xlu0 %v5859, 80
        %v5861 = vpop.permute.xlu0 %5860
        %v5863 = vunpack.c.l.b16 %v5734
        %v5864 = vpack.c.b16 %v5863, %v5863
        %5865 = vrot.lane.b32.xlu0 %v5864, 96
        %v5866 = vpop.permute.xlu0 %5865
        %v5868 = vunpack.c.l.b16 %v5768
        %v5869 = vpack.c.b16 %v5868, %v5868
        %5870 = vrot.lane.b32.xlu0 %v5869, 112
        %v5871 = vpop.permute.xlu0 %5870
        %v5873 = vunpack.c.l.b16 %v5827
        %v5874 = vpack.c.b16 %v5873, %v5873
        %5875 = vrot.lane.b32.xlu0 %v5874, 16
        %v5876 = vpop.permute.xlu0 %5875
        %v5878 = vunpack.c.l.b16 %v5801
        %v5879 = vpack.c.b16 %v5878, %v5878
        %5880 = vrot.lane.b32.xlu0 %v5879, 32
        %v5881 = vpop.permute.xlu0 %5880
        %v5883 = vunpack.c.l.b16 %v5835
        %v5884 = vpack.c.b16 %v5883, %v5883
        %5885 = vrot.lane.b32.xlu0 %v5884, 48
        %v5886 = vpop.permute.xlu0 %5885
        %v5888 = vunpack.c.l.b16 %v5800
        %v5889 = vpack.c.b16 %v5888, %v5888
        %5890 = vrot.lane.b32.xlu0 %v5889, 64
        %v5891 = vpop.permute.xlu0 %5890
        %v5893 = vunpack.c.l.b16 %v5834
        %v5894 = vpack.c.b16 %v5893, %v5893
        %5895 = vrot.lane.b32.xlu0 %v5894, 80
        %v5896 = vpop.permute.xlu0 %5895
        %v5898 = vunpack.c.l.b16 %v5802
        %v5899 = vpack.c.b16 %v5898, %v5898
        %5900 = vrot.lane.b32.xlu0 %v5899, 96
        %v5901 = vpop.permute.xlu0 %5900
        %v5903 = vunpack.c.l.b16 %v5836
        %v5904 = vpack.c.b16 %v5903, %v5903
        %5905 = vrot.lane.b32.xlu0 %v5904, 112
        %v5906 = vpop.permute.xlu0 %5905
        %v5909 = vsel %vm433, %v5725, %v5841
        %v5911 = vsel %vm437, %v5909, %v5846
        %v5913 = vsel %vm440, %v5911, %v5851
        %v5915 = vsel %vm443, %v5913, %v5856
        %v5917 = vsel %vm446, %v5915, %v5861
        %v5919 = vsel %vm449, %v5917, %v5866
        %v5921 = vsel %vm452, %v5919, %v5871
        %v5924 = vsel %vm433, %v5793, %v5876
        %v5926 = vsel %vm437, %v5924, %v5881
        %v5928 = vsel %vm440, %v5926, %v5886
        %v5930 = vsel %vm443, %v5928, %v5891
        %v5932 = vsel %vm446, %v5930, %v5896
        %v5934 = vsel %vm449, %v5932, %v5901
        %v5936 = vsel %vm452, %v5934, %v5906
        %v5939 = vunpack.c.l.b16 %v5921
        %v5940 = vunpack.c.l.b16 %v5936
        %v5941 = vpack.c.b16 %v5940, %v5939
        %5943 = vst [vmem:[#allocation2 + $0x20] sm:$0x33] %v5941
        %v5944 = vld [vmem:[%s3] sm:$0x3]
        %v5945 = vld [vmem:[#allocation2] sm:$0xff]
        %v5946 = vld [vmem:[#allocation2 + $0x8] sm:$0xff]
        %v5947 = vld [vmem:[#allocation2 + $0x10] sm:$0xff]
        %v5948 = vld [vmem:[#allocation2 + $0x18] sm:$0xff]
        %v5949 = vld [vmem:[#allocation2 + $0x20] sm:$0x33]
        %v5955 = vunpack.c.l.b16 %v5945
        %v5956 = vunpack.c.h.b16 %v5945
        %v5957 = vunpack.c.l.b16 %v5946
        %v5958 = vunpack.c.h.b16 %v5946
        %v5959 = vunpack.c.l.b16 %v5947
        %v5960 = vunpack.c.h.b16 %v5947
        %v5961 = vunpack.c.l.b16 %v5948
        %v5962 = vunpack.c.h.b16 %v5948
        %v5963 = vunpack.c.l.b16 %v5949
        %v5964 = vunpack.c.h.b16 %v5949
        %v5965 = vpack.c.b16 %v5957, %v5955
        %v5966 = vpack.c.b16 %v5958, %v5956
        %v5967 = vpack.c.b16 %v5961, %v5959
        %v5968 = vpack.c.b16 %v5962, %v5960
        %v5969 = vpack.c.b16 %v5963, %v5963
        %v5970 = vpack.c.b16 %v5964, %v5964
        %v5976 = vsel %vm2438, %v5944, 0
        %v5979 = vsel %vm2442, %v5969, 0
        %v5982 = vsel %vm2442, %v5970, 0
        %5984 = vmatprep.subr.bf16.mxu0 %v5966
        %5985 = vmatpush1.bf16.msra.mxu0 %v5965
        %5986 = vmatprep.subr.bf16.mxu0 %v5968
        %5987 = vmatpush1.bf16.msra.mxu0 %v5967
        %5988 = vmatprep.subr.bf16.mxu0 %v5982
        %5989 = vmatpush1.bf16.msra.mxu0 %v5979
        %5990 = vmatprep.subr.bf16.mxu0 0
        %5991 = vmatpush1.bf16.msra.mxu0 0
        %5992 = vmatprep.subr.bf16.mxu0 0
        %5993 = vmatpush1.bf16.msra.mxu0 0
        %5994 = vmatprep.subr.bf16.mxu0 0
        %5995 = vmatpush1.bf16.msra.mxu0 0
        %5996 = vmatprep.subr.bf16.mxu0 0
        %5997 = vmatpush1.bf16.msra.mxu0 0
        %5998 = vmatprep.subr.bf16.mxu0 0
        %5999 = vmatpush1.bf16.msra.mxu0 0
        %6000 = vmatprep.subr.bf16.mxu0 0
        %6001 = vmatpush1.bf16.msra.mxu0 0
        %6002 = vmatprep.subr.bf16.mxu0 0
        %6003 = vmatpush1.bf16.msra.mxu0 0
        %6004 = vmatprep.subr.bf16.mxu0 0
        %6005 = vmatpush1.bf16.msra.mxu0 0
        %6006 = vmatprep.subr.bf16.mxu0 0
        %6007 = vmatpush1.bf16.msra.mxu0 0
        %6008 = vmatprep.subr.bf16.mxu0 0
        %6009 = vmatpush1.bf16.msra.mxu0 0
        %6010 = vmatprep.subr.bf16.mxu0 0
        %6011 = vmatpush1.bf16.msra.mxu0 0
        %6012 = vmatprep.subr.bf16.mxu0 0
        %6013 = vmatpush1.bf16.msra.mxu0 0
        %6014 = vmatprep.subr.bf16.mxu0 0
        %6015 = vmatpush1.bf16.msra.mxu0 0
        %6016 = vmatprep.mubr.bf16.mxu0 0
        %6017 = vmatmul.mubr.bf16.gmra.mrb[0].mxu0 %v5976
        %v6018 = vpop.f32.mrb[0].mxu0
        %v6019 = vadd.f32 0.0, %v6018
        %v6020 = vpop.f32.mrb[0].mxu0
        %v6021 = vadd.f32 0.0, %v6020
        %v6022 = vpop.f32.mrb[0].mxu0
        %v6023 = vpop.f32.mrb[0].mxu0
        %6024 = vdwg.mxu0
        %v6025 = vsel %vm2490, %v6019, 0.0
        %v6026 = vsel %vm2490, %v6021, 0.0
        %v6027 = vadd.f32 %v6025, %v6026
        %6028 = vadd.xlane.f32.xlu0 %v6027
        %v6029 = vpop.xlane.xlu0 %6028
        %v6030 = vmul.f32 %v6019, %v6019
        %v6031 = vmul.f32 %v6021, %v6021
        %v6032 = vsel %vm2490, %v6030, 0.0
        %v6033 = vsel %vm2490, %v6031, 0.0
        %v6034 = vadd.f32 %v6032, %v6033
        %6035 = vadd.xlane.f32.xlu0 %v6034
        %v6036 = vpop.xlane.xlu0 %6035
        %v6037 = vmul.f32 %v6029, 0.00390625
        %v6038 = vmul.f32 %v6036, 0.00390625
        %v6039 = vmul.f32 %v6037, %v6037
        %v6040 = vsub.f32 %v6038, %v6039
        %v6041 = vmax.f32 %v6040, 0.0
        %v6042 = vsub.f32 %v6019, %v6037
        %v6043 = vsub.f32 %v6021, %v6037
        %v6044 = vadd.f32 %v6041, 1e-05
        %v6045 = vrsqrt.pop %v6044
        %v6046 = vmul.f32 %v6042, %v6045
        %v6047 = vmul.f32 %v6043, %v6045
        %v6048 = vld [vmem:[%s215] sm:$0xff]
        %v6051 = vcombine.low %v6046, %v6047
        %v6053 = vadd.f32 %v6048, %v6051
        %6054 = vst [vmem:[%s205] sm:$0xff] %v6053
        %s6055 = sand.u32 %s120, 1
        %s6056 = scalar_lea.sflag [#allocation5], %s6055
        %s6057 = sand.u32 %s120, 1
        %s6058 = smul.addr %s6057, 8
        %s6059 = scalar_lea.vmem [#allocation4], %s6058
        // Predicated region
        $region37: #{tpu_custom_call.1} parent=35 // pred_check
          %p6060 = pneg %p130
        $region38: #{tpu_custom_call.1} parent=35 // pred_check_branch
          %6062 = sbr.rel (%p6060) target = $region40
        $region39: #{tpu_custom_call.1} parent=35 // pred_region
          %s6064 = ssub.s32 128, 128
          %6065 = vsyncadd %s6056, %s6064
          %s6066 = smul.addr %s18, 2
          %s6067 = smul.addr %s6066, 64
          %s6068 = scalar_lea.hbm %s4, %s6067
          %s6070 = sshll.u32 %s6059, 4
          %s6071 = int_to_ptr.vmem [resolvable:$true] %s6070
          %6073 = dma.vmem_to_hbm [thread:$0]  %s6071, 128, %s6068, %s6056
        $region40: #{tpu_custom_call.1} parent=35 // pred_fallthru
          _
      $region36: #{tpu_custom_call.1} parent=5 // pred_fallthru
        _
      %p6074 = scmp.le.s32.totalorder 2, %s13
      // Predicated region
      $region41: #{tpu_custom_call.1} parent=5 // pred_check
        %p6075 = pneg %p6074
      $region42: #{tpu_custom_call.1} parent=5 // pred_check_branch
        %6077 = sbr.rel (%p6075) target = $region44
      $region43: #{tpu_custom_call.1} parent=5 // pred_region
        %s6078 = ssub.s32 %s13, 2
        // Predicated region
        $region45: #{tpu_custom_call.1} parent=43 // pred_check
          %p6079 = pneg %p136
        $region46: #{tpu_custom_call.1} parent=43 // pred_check_branch
          %6081 = sbr.rel (%p6079) target = $region48
        $region47: #{tpu_custom_call.1} parent=43 // pred_region
          %s6082 = sand.u32 %s121, 1
          %s6083 = scalar_lea.sflag [#allocation5], %s6082
          %s6084 = sand.u32 %s121, 1
          %s6085 = smul.addr %s6084, 8
          %s6086 = scalar_lea.vmem [#allocation4], %s6085
          %6087 = dma.done %s6083, 128
        $region48: #{tpu_custom_call.1} parent=43 // pred_fallthru
          _
      $region44: #{tpu_custom_call.1} parent=5 // pred_fallthru
        _
    $region6: #{tpu_custom_call.1} parent=1 // loop_footer
      %s17 = sadd.s32 1, %s13
    $region7: #{tpu_custom_call.1} parent=1 // loop_footer_branch
      %12 = sbr.rel target = $region3
    $region8: #{tpu_custom_call.1} parent=1 // loop_exit
      _
    %6088 = vsyncpa [#allocation5], 1
    %s6089 = scalar_lea.sflag [#allocation5], 1
    %6090 = vsyncpa %s6089, 1

// kernel: tpu_custom_call.1
$region0: #{tpu_custom_call.1}
  #allocation0 [shape = 'u32[]', space=smem, size = 0x4, offset = 0x4, fixed_abs, tag = 'smem constant byte address 0x4 - core index']
  #allocation1 [shape = 'u32[144,128]{1,0:T(1,128)}', space=vmem, size = 0x12000, scoped, tag = 'internal scratch']
  #allocation2 [shape = 'bf16[36,256]{1,0:T(8,128)(2,1)}', space=vmem, size = 0x5000, scoped, tag = 'scratch operand']
  #allocation3 [shape = 'bf16[4,18,18]{2,1,0:T(8,128)(2,1)}', space=vmem, size = 0x6000, scoped, tag = 'scratch operand']
  %s0 = inlined_call_operand.vmem [shape: f32[2,4,18,18], index: 0, kind: input, shape index: {}]
  %s1 = inlined_call_operand.vmem [shape: f32[2,4,256], index: 1, kind: input, shape index: {}]
  %s2 = inlined_call_operand.vmem [shape: bf16[4,36], index: 2, kind: input, shape index: {}]
  %s3 = inlined_call_operand.vmem [shape: bf16[4,36], index: 3, kind: input, shape index: {}]
  %s4 = inlined_call_operand.hbm [shape: f32[2,4,256], index: 4, kind: output, shape index: {}]
  %s5 = sld [smem:[#allocation0]]
  $region49: #{tpu_custom_call.1} parent=0
    _
  %s7 = ssub.s32 1, %s5
  %s8 = scalar_select 0, %s7, %s5
  $region1: #{tpu_custom_call.1} parent=0
    #allocation4 [shape = 'u8[8192]{0}', space=vmem, size = 0x2000, scoped, tag = 'output window, operand 0']
    #allocation5 [shape = 's32[2]{0}', space=sflag, size = 0x8, scoped, tag = 'scoped memory for tpu_custom_call.1']
    %9 = vsyncpa [#allocation5], 0
    %s10 = scalar_lea.sflag [#allocation5], 1
    %11 = vsyncpa %s10, 0
    loop: start=0, step=1, limit=4
    $region2: #{tpu_custom_call.1} parent=1 // loop_pre_header
      _
    $region3: #{tpu_custom_call.1} parent=1 // loop_header
      %s13 = sphi 0, %s17
      %p14 = scmp.ge.s32.totalorder %s13, 4
      %s23 = sphi 0, %s25
      %s26 = sphi 0, %s23
      %s27 = sphi 0, %s26
      %s43 = sphi 0, %s27
      %s49 = sphi 0, %s51
      %s52 = sphi 0, %s49
      %s53 = sphi 0, %s52
      %s69 = sphi 0, %s53
      %s73 = sphi 0, %s73
      %s75 = sphi 0, %s73
      %s76 = sphi 0, %s75
      %s90 = sphi 0, %s76
      %s94 = sphi 0, %s94
      %s96 = sphi 0, %s94
      %s97 = sphi 0, %s96
      %s111 = sphi 0, %s97
      %s117 = sphi 0, %s119
      %s120 = sphi 0, %s117
      %s121 = sphi 0, %s120
      %s137 = sphi 0, %s121
    $region4: #{tpu_custom_call.1} parent=1 // loop_header_branch
      %16 = sbr.rel (%p14) target = $region8
    $region5: #{tpu_custom_call.1} parent=1 // loop_body
      %s18 = ssub.s32 %s13, 1
      %s19 = ssub.s32 %s13, 2
      %s20 = sadd.s32 %s13, 1
      %s21 = ssub.s32 %s13, %s20
      %p22 = scmp.eq.s32.totalorder %s21, 0
      %s24 = sadd.s32 %s23, 1
      %s25 = scalar_select %p22, %s23, %s24
      %p28 = pneg %p22
      %p29 = scmp.eq.s32.totalorder %s13, 1
      %p30 = por %p28, %p29
      %p31 = scmp.ne.s32.totalorder %s23, %s26
      %p32 = scmp.eq.s32.totalorder %s13, 0
      %p33 = por %p31, %p32
      %p34 = scmp.ne.s32.totalorder %s23, %s26
      %p35 = scmp.eq.s32.totalorder %s18, 1
      %p36 = por %p34, %p35
      %p37 = scmp.ne.s32.totalorder %s26, %s27
      %p38 = scmp.eq.s32.totalorder %s18, 0
      %p39 = por %p37, %p38
      %p40 = scmp.ne.s32.totalorder %s26, %s27
      %p41 = scmp.eq.s32.totalorder %s19, 1
      %p42 = por %p40, %p41
      %p44 = scmp.ne.s32.totalorder %s27, %s43
      %p45 = scmp.eq.s32.totalorder %s19, 0
      %p46 = por %p44, %p45
      %s47 = ssub.s32 %s13, %s20
      %p48 = scmp.eq.s32.totalorder %s47, 0
      %s50 = sadd.s32 %s49, 1
      %s51 = scalar_select %p48, %s49, %s50
      %p54 = pneg %p48
      %p55 = scmp.eq.s32.totalorder %s13, 1
      %p56 = por %p54, %p55
      %p57 = scmp.ne.s32.totalorder %s49, %s52
      %p58 = scmp.eq.s32.totalorder %s13, 0
      %p59 = por %p57, %p58
      %p60 = scmp.ne.s32.totalorder %s49, %s52
      %p61 = scmp.eq.s32.totalorder %s18, 1
      %p62 = por %p60, %p61
      %p63 = scmp.ne.s32.totalorder %s52, %s53
      %p64 = scmp.eq.s32.totalorder %s18, 0
      %p65 = por %p63, %p64
      %p66 = scmp.ne.s32.totalorder %s52, %s53
      %p67 = scmp.eq.s32.totalorder %s19, 1
      %p68 = por %p66, %p67
      %p70 = scmp.ne.s32.totalorder %s53, %s69
      %p71 = scmp.eq.s32.totalorder %s19, 0
      %p72 = por %p70, %p71
      %s74 = sadd.s32 %s73, 1
      %p77 = scmp.eq.s32.totalorder %s13, 1
      %p78 = scmp.ne.s32.totalorder %s73, %s75
      %p79 = scmp.eq.s32.totalorder %s13, 0
      %p80 = por %p78, %p79
      %p81 = scmp.ne.s32.totalorder %s73, %s75
      %p82 = scmp.eq.s32.totalorder %s18, 1
      %p83 = por %p81, %p82
      %p84 = scmp.ne.s32.totalorder %s75, %s76
      %p85 = scmp.eq.s32.totalorder %s18, 0
      %p86 = por %p84, %p85
      %p87 = scmp.ne.s32.totalorder %s75, %s76
      %p88 = scmp.eq.s32.totalorder %s19, 1
      %p89 = por %p87, %p88
      %p91 = scmp.ne.s32.totalorder %s76, %s90
      %p92 = scmp.eq.s32.totalorder %s19, 0
      %p93 = por %p91, %p92
      %s95 = sadd.s32 %s94, 1
      %p98 = scmp.eq.s32.totalorder %s13, 1
      %p99 = scmp.ne.s32.totalorder %s94, %s96
      %p100 = scmp.eq.s32.totalorder %s13, 0
      %p101 = por %p99, %p100
      %p102 = scmp.ne.s32.totalorder %s94, %s96
      %p103 = scmp.eq.s32.totalorder %s18, 1
      %p104 = por %p102, %p103
      %p105 = scmp.ne.s32.totalorder %s96, %s97
      %p106 = scmp.eq.s32.totalorder %s18, 0
      %p107 = por %p105, %p106
      %p108 = scmp.ne.s32.totalorder %s96, %s97
      %p109 = scmp.eq.s32.totalorder %s19, 1
      %p110 = por %p108, %p109
      %p112 = scmp.ne.s32.totalorder %s97, %s111
      %p113 = scmp.eq.s32.totalorder %s19, 0
      %p114 = por %p112, %p113
      %s115 = ssub.s32 %s13, %s20
      %p116 = scmp.eq.s32.totalorder %s115, 0
      %s118 = sadd.s32 %s117, 1
      %s119 = scalar_select %p116, %s117, %s118
      %p122 = pneg %p116
      %p123 = scmp.eq.s32.totalorder %s13, 1
      %p124 = por %p122, %p123
      %p125 = scmp.ne.s32.totalorder %s117, %s120
      %p126 = scmp.eq.s32.totalorder %s13, 0
      %p127 = por %p125, %p126
      %p128 = scmp.ne.s32.totalorder %s117, %s120
      %p129 = scmp.eq.s32.totalorder %s18, 1
      %p130 = por %p128, %p129
      %p131 = scmp.ne.s32.totalorder %s120, %s121
      %p132 = scmp.eq.s32.totalorder %s18, 0
      %p133 = por %p131, %p132
      %p134 = scmp.ne.s32.totalorder %s120, %s121
      %p135 = scmp.eq.s32.totalorder %s19, 1
      %p136 = por %p134, %p135
      %p138 = scmp.ne.s32.totalorder %s121, %s137
      %p139 = scmp.eq.s32.totalorder %s19, 0
      %p140 = por %p138, %p139
      %p141 = scmp.le.s32.totalorder 1, %s13
      %p142 = scmp.lt.s32.totalorder %s13, 3
      %p143 = pnand %p141, %p142
      %p144 = pneg %p143
      // Predicated region
      $region9: #{tpu_custom_call.1} parent=5 // pred_check
        _
      $region10: #{tpu_custom_call.1} parent=5 // pred_check_branch
        %146 = sbr.rel (%p143) target = $region12
      $region11: #{tpu_custom_call.1} parent=5 // pred_region
        %s147 = ssub.s32 %s13, 1
        // Predicated region
        $region13: #{tpu_custom_call.1} parent=11 // pred_check
          %p148 = pneg %p86
        $region14: #{tpu_custom_call.1} parent=11 // pred_check_branch
          %150 = sbr.rel (%p148) target = $region16
        $region15: #{tpu_custom_call.1} parent=11 // pred_region
          _
        $region16: #{tpu_custom_call.1} parent=11 // pred_fallthru
          _
        // Predicated region
        $region17: #{tpu_custom_call.1} parent=11 // pred_check
          %p151 = pneg %p107
        $region18: #{tpu_custom_call.1} parent=11 // pred_check_branch
          %153 = sbr.rel (%p151) target = $region20
        $region19: #{tpu_custom_call.1} parent=11 // pred_region
          _
        $region20: #{tpu_custom_call.1} parent=11 // pred_fallthru
          _
      $region12: #{tpu_custom_call.1} parent=5 // pred_fallthru
        _
      %p154 = scmp.lt.s32.totalorder %s13, 2
      // Predicated region
      $region21: #{tpu_custom_call.1} parent=5 // pred_check
        %p155 = pneg %p154
      $region22: #{tpu_custom_call.1} parent=5 // pred_check_branch
        %157 = sbr.rel (%p155) target = $region24
      $region23: #{tpu_custom_call.1} parent=5 // pred_region
        // Predicated region
        $region25: #{tpu_custom_call.1} parent=23 // pred_check
          %p158 = pneg %p33
        $region26: #{tpu_custom_call.1} parent=23 // pred_check_branch
          %160 = sbr.rel (%p158) target = $region28
        $region27: #{tpu_custom_call.1} parent=23 // pred_region
          %p161 = scmp.lt.s32.totalorder %s13, 1
          %s162 = scalar_select %p161, %s13, 1
          %s163 = smul.addr %s162, 12
          %s164 = smul.addr %s163, 8
          %s165 = scalar_lea.vmem %s0, %s164
        $region28: #{tpu_custom_call.1} parent=23 // pred_fallthru
          _
        // Predicated region
        $region29: #{tpu_custom_call.1} parent=23 // pred_check
          %p166 = pneg %p59
        $region30: #{tpu_custom_call.1} parent=23 // pred_check_branch
          %168 = sbr.rel (%p166) target = $region32
        $region31: #{tpu_custom_call.1} parent=23 // pred_region
          %p169 = scmp.lt.s32.totalorder %s13, 1
          %s170 = scalar_select %p169, %s13, 1
          %s171 = smul.addr %s170, 2
          %s172 = smul.addr %s171, 4
          %s173 = scalar_lea.vmem %s1, %s172
        $region32: #{tpu_custom_call.1} parent=23 // pred_fallthru
          _
      $region24: #{tpu_custom_call.1} parent=5 // pred_fallthru
        _
      %p174 = scmp.le.s32.totalorder 1, %s13
      %p175 = scmp.lt.s32.totalorder %s13, 3
      %p176 = pnand %p174, %p175
      %p177 = pneg %p176
      // Predicated region
      $region33: #{tpu_custom_call.1} parent=5 // pred_check
        _
      $region34: #{tpu_custom_call.1} parent=5 // pred_check_branch
        %179 = sbr.rel (%p176) target = $region36
      $region35: #{tpu_custom_call.1} parent=5 // pred_region
        %s180 = ssub.s32 %s13, 1
        %p181 = scmp.lt.s32.totalorder %s18, 1
        %s182 = scalar_select %p181, %s18, 1
        %s183 = smul.addr %s182, 12
        %s184 = smul.addr %s183, 8
        %s185 = scalar_lea.vmem %s0, %s184
        %p186 = pneg %p39
        %p187 = pneg %p36
        %p188 = scmp.lt.s32.totalorder %s18, 1
        %s189 = scalar_select %p188, %s18, 1
        %s190 = smul.addr %s189, 2
        %s191 = smul.addr %s190, 4
        %s192 = scalar_lea.vmem %s1, %s191
        %p193 = pneg %p65
        %p194 = pneg %p62
        %p195 = pneg %p86
        %p196 = pneg %p83
        %p197 = pneg %p107
        %p198 = pneg %p104
        %p199 = pneg %p133
        %p200 = pneg %p130
        %s201 = sand.u32 %s120, 1
        %s202 = scalar_lea.sflag [#allocation5], %s201
        %s203 = sand.u32 %s120, 1
        %s204 = smul.addr %s203, 8
        %s205 = scalar_lea.vmem [#allocation4], %s204
        %p206 = scmp.lt.s32.totalorder %s18, 1
        %s207 = scalar_select %p206, %s18, 1
        %s208 = smul.addr %s207, 12
        %s209 = smul.addr %s208, 8
        %s210 = scalar_lea.vmem %s0, %s209
        %p211 = scmp.lt.s32.totalorder %s18, 1
        %s212 = scalar_select %p211, %s18, 1
        %s213 = smul.addr %s212, 2
        %s214 = smul.addr %s213, 4
        %s215 = scalar_lea.vmem %s1, %s214
        %v217 = vld [vmem:[%s210] sm:$0xff]
        %v218 = vld [vmem:[%s210 + $0x8] sm:$0xff]
        %v219 = vld [vmem:[%s210 + $0x10] sm:$0x3]
        %v220 = vld [vmem:[%s210 + $0x18] sm:$0xff]
        %v221 = vld [vmem:[%s210 + $0x20] sm:$0xff]
        %v222 = vld [vmem:[%s210 + $0x28] sm:$0x3]
        %v223 = vld [vmem:[%s210 + $0x30] sm:$0xff]
        %v224 = vld [vmem:[%s210 + $0x38] sm:$0xff]
        %v225 = vld [vmem:[%s210 + $0x40] sm:$0x3]
        %v226 = vld [vmem:[%s210 + $0x48] sm:$0xff]
        %v227 = vld [vmem:[%s210 + $0x50] sm:$0xff]
        %v228 = vld [vmem:[%s210 + $0x58] sm:$0x3]
        %v229 = vpack.c.bf16 %v218, %v217
        %v230 = vpack.c.bf16 %v219, %v219
        %v231 = vpack.c.bf16 %v221, %v220
        %v232 = vpack.c.bf16 %v222, %v222
        %v233 = vpack.c.bf16 %v224, %v223
        %v234 = vpack.c.bf16 %v225, %v225
        %v235 = vpack.c.bf16 %v227, %v226
        %v236 = vpack.c.bf16 %v228, %v228
        %v239 = vpack.i.b16 %v231, %v229
        %v241 = vshrl.u32 %v229, 16
        %v242 = vshrl.u32 %v231, 16
        %v243 = vpack.i.b16 %v242, %v241
        %v247 = vpack.i.b16 %v235, %v233
        %v249 = vshrl.u32 %v233, 16
        %v250 = vshrl.u32 %v235, 16
        %v251 = vpack.i.b16 %v250, %v249
        %v254 = vpack.i.b16 0, 0
        %v256 = vshrl.u32 0, 16
        %v257 = vpack.i.b16 %v256, %v256
        %v259 = vcombine.high %v239, %v254
        %v261 = vunpack.c.l.s4 1983009808
        %v262 = vunpack.c.0.s8 %v261
        %v263 = vlaneseq
        %v264 = vshrl.u32 %v263, 7
        %v265 = vsub.s32 %v262, %v264
        %v266 = vrot.slane %v239, %v265
        %v268 = vunpack.c.l.s4 1983009808
        %v269 = vunpack.c.0.s8 %v268
        %v270 = vlaneseq
        %v271 = vshrl.u32 %v270, 7
        %v272 = vsub.s32 %v269, %v271
        %v273 = vrot.slane %v259, %v272
        %v274 = vcombine.high %v247, %v254
        %v276 = vunpack.c.l.s4 1983009808
        %v277 = vunpack.c.0.s8 %v276
        %v278 = vlaneseq
        %v279 = vshrl.u32 %v278, 7
        %v280 = vsub.s32 %v277, %v279
        %v281 = vrot.slane %v247, %v280
        %v283 = vunpack.c.l.s4 1983009808
        %v284 = vunpack.c.0.s8 %v283
        %v285 = vlaneseq
        %v286 = vshrl.u32 %v285, 7
        %v287 = vsub.s32 %v284, %v286
        %v288 = vrot.slane %v274, %v287
        %v289 = vcombine.low %v266, %v281
        %v290 = vcombine.high %v266, %v281
        %v292 = vunpack.c.l.s4 1934713408
        %v293 = vunpack.c.0.s8 %v292
        %v294 = vlaneseq
        %v295 = vshrl.u32 %v294, 7
        %v296 = vsub.s32 %v293, %v295
        %v297 = vrot.slane %v289, %v296
        %v299 = vunpack.c.l.s4 1934713408
        %v300 = vunpack.c.0.s8 %v299
        %v301 = vlaneseq
        %v302 = vshrl.u32 %v301, 7
        %v303 = vsub.s32 %v300, %v302
        %v304 = vrot.slane %v290, %v303
        %v305 = vcombine.low %v273, %v288
        %v306 = vcombine.high %v273, %v288
        %v308 = vunpack.c.l.s4 1934713408
        %v309 = vunpack.c.0.s8 %v308
        %v310 = vlaneseq
        %v311 = vshrl.u32 %v310, 7
        %v312 = vsub.s32 %v309, %v311
        %v313 = vrot.slane %v305, %v312
        %v315 = vunpack.c.l.s4 1934713408
        %v316 = vunpack.c.0.s8 %v315
        %v317 = vlaneseq
        %v318 = vshrl.u32 %v317, 7
        %v319 = vsub.s32 %v316, %v318
        %v320 = vrot.slane %v306, %v319
        %v321 = vcombine.high %v297, 0
        %v322 = vcombine.high %v304, 0
        %v323 = vcombine.high %v313, 0
        %v324 = vcombine.high %v320, 0
        %v325 = vcombine.high %v243, %v257
        %v327 = vunpack.c.l.s4 1983009808
        %v328 = vunpack.c.0.s8 %v327
        %v329 = vlaneseq
        %v330 = vshrl.u32 %v329, 7
        %v331 = vsub.s32 %v328, %v330
        %v332 = vrot.slane %v243, %v331
        %v334 = vunpack.c.l.s4 1983009808
        %v335 = vunpack.c.0.s8 %v334
        %v336 = vlaneseq
        %v337 = vshrl.u32 %v336, 7
        %v338 = vsub.s32 %v335, %v337
        %v339 = vrot.slane %v325, %v338
        %v340 = vcombine.high %v251, %v257
        %v342 = vunpack.c.l.s4 1983009808
        %v343 = vunpack.c.0.s8 %v342
        %v344 = vlaneseq
        %v345 = vshrl.u32 %v344, 7
        %v346 = vsub.s32 %v343, %v345
        %v347 = vrot.slane %v251, %v346
        %v349 = vunpack.c.l.s4 1983009808
        %v350 = vunpack.c.0.s8 %v349
        %v351 = vlaneseq
        %v352 = vshrl.u32 %v351, 7
        %v353 = vsub.s32 %v350, %v352
        %v354 = vrot.slane %v340, %v353
        %v355 = vcombine.low %v332, %v347
        %v356 = vcombine.high %v332, %v347
        %v358 = vunpack.c.l.s4 1934713408
        %v359 = vunpack.c.0.s8 %v358
        %v360 = vlaneseq
        %v361 = vshrl.u32 %v360, 7
        %v362 = vsub.s32 %v359, %v361
        %v363 = vrot.slane %v355, %v362
        %v365 = vunpack.c.l.s4 1934713408
        %v366 = vunpack.c.0.s8 %v365
        %v367 = vlaneseq
        %v368 = vshrl.u32 %v367, 7
        %v369 = vsub.s32 %v366, %v368
        %v370 = vrot.slane %v356, %v369
        %v371 = vcombine.low %v339, %v354
        %v372 = vcombine.high %v339, %v354
        %v374 = vunpack.c.l.s4 1934713408
        %v375 = vunpack.c.0.s8 %v374
        %v376 = vlaneseq
        %v377 = vshrl.u32 %v376, 7
        %v378 = vsub.s32 %v375, %v377
        %v379 = vrot.slane %v371, %v378
        %v381 = vunpack.c.l.s4 1934713408
        %v382 = vunpack.c.0.s8 %v381
        %v383 = vlaneseq
        %v384 = vshrl.u32 %v383, 7
        %v385 = vsub.s32 %v382, %v384
        %v386 = vrot.slane %v372, %v385
        %v387 = vcombine.high %v363, 0
        %v388 = vcombine.high %v370, 0
        %v389 = vcombine.high %v379, 0
        %v390 = vcombine.high %v386, 0
        %392 = vrot.lane.b32.xlu0 %v363, 16
        %v393 = vpop.permute.xlu0 %392
        %395 = vrot.lane.b32.xlu0 %v321, 32
        %v396 = vpop.permute.xlu0 %395
        %398 = vrot.lane.b32.xlu0 %v387, 48
        %v399 = vpop.permute.xlu0 %398
        %401 = vrot.lane.b32.xlu0 %v304, 64
        %v402 = vpop.permute.xlu0 %401
        %404 = vrot.lane.b32.xlu0 %v370, 80
        %v405 = vpop.permute.xlu0 %404
        %407 = vrot.lane.b32.xlu0 %v322, 96
        %v408 = vpop.permute.xlu0 %407
        %410 = vrot.lane.b32.xlu0 %v388, 112
        %v411 = vpop.permute.xlu0 %410
        %413 = vrot.lane.b32.xlu0 %v379, 16
        %v414 = vpop.permute.xlu0 %413
        %416 = vrot.lane.b32.xlu0 %v323, 32
        %v417 = vpop.permute.xlu0 %416
        %419 = vrot.lane.b32.xlu0 %v389, 48
        %v420 = vpop.permute.xlu0 %419
        %422 = vrot.lane.b32.xlu0 %v320, 64
        %v423 = vpop.permute.xlu0 %422
        %425 = vrot.lane.b32.xlu0 %v386, 80
        %v426 = vpop.permute.xlu0 %425
        %428 = vrot.lane.b32.xlu0 %v324, 96
        %v429 = vpop.permute.xlu0 %428
        %431 = vrot.lane.b32.xlu0 %v390, 112
        %v432 = vpop.permute.xlu0 %431
        %vm433 = vcmask 130048
        %v436 = vsel %vm433, %v297, %v393
        %vm437 = vcmask 261120
        %v439 = vsel %vm437, %v436, %v396
        %vm440 = vcmask 392192
        %v442 = vsel %vm440, %v439, %v399
        %vm443 = vcmask 523264
        %v445 = vsel %vm443, %v442, %v402
        %vm446 = vcmask 654336
        %v448 = vsel %vm446, %v445, %v405
        %vm449 = vcmask 785408
        %v451 = vsel %vm449, %v448, %v408
        %vm452 = vcmask 916480
        %v454 = vsel %vm452, %v451, %v411
        %v457 = vsel %vm433, %v313, %v414
        %v459 = vsel %vm437, %v457, %v417
        %v461 = vsel %vm440, %v459, %v420
        %v463 = vsel %vm443, %v461, %v423
        %v465 = vsel %vm446, %v463, %v426
        %v467 = vsel %vm449, %v465, %v429
        %v469 = vsel %vm452, %v467, %v432
        %v472 = vunpack.c.l.b16 %v454
        %v473 = vunpack.c.l.b16 %v469
        %v474 = vpack.c.b16 %v473, %v472
        %476 = vst [vmem:[#allocation2] sm:$0x33] %v474
        %481 = vrot.lane.b32.xlu0 %v229, 127
        %v482 = vpop.permute.xlu0 %481
        %483 = vrot.lane.b32.xlu0 %v231, 127
        %v484 = vpop.permute.xlu0 %483
        %485 = vrot.lane.b32.xlu0 %v233, 127
        %v486 = vpop.permute.xlu0 %485
        %487 = vrot.lane.b32.xlu0 %v235, 127
        %v488 = vpop.permute.xlu0 %487
        %v491 = vpack.i.b16 %v484, %v482
        %v493 = vshrl.u32 %v482, 16
        %v494 = vshrl.u32 %v484, 16
        %v495 = vpack.i.b16 %v494, %v493
        %v499 = vpack.i.b16 %v488, %v486
        %v501 = vshrl.u32 %v486, 16
        %v502 = vshrl.u32 %v488, 16
        %v503 = vpack.i.b16 %v502, %v501
        %v505 = vcombine.high %v491, %v254
        %v507 = vunpack.c.l.s4 1983009808
        %v508 = vunpack.c.0.s8 %v507
        %v509 = vlaneseq
        %v510 = vshrl.u32 %v509, 7
        %v511 = vsub.s32 %v508, %v510
        %v512 = vrot.slane %v491, %v511
        %v514 = vunpack.c.l.s4 1983009808
        %v515 = vunpack.c.0.s8 %v514
        %v516 = vlaneseq
        %v517 = vshrl.u32 %v516, 7
        %v518 = vsub.s32 %v515, %v517
        %v519 = vrot.slane %v505, %v518
        %v520 = vcombine.high %v499, %v254
        %v522 = vunpack.c.l.s4 1983009808
        %v523 = vunpack.c.0.s8 %v522
        %v524 = vlaneseq
        %v525 = vshrl.u32 %v524, 7
        %v526 = vsub.s32 %v523, %v525
        %v527 = vrot.slane %v499, %v526
        %v529 = vunpack.c.l.s4 1983009808
        %v530 = vunpack.c.0.s8 %v529
        %v531 = vlaneseq
        %v532 = vshrl.u32 %v531, 7
        %v533 = vsub.s32 %v530, %v532
        %v534 = vrot.slane %v520, %v533
        %v535 = vcombine.low %v512, %v527
        %v536 = vcombine.high %v512, %v527
        %v538 = vunpack.c.l.s4 1934713408
        %v539 = vunpack.c.0.s8 %v538
        %v540 = vlaneseq
        %v541 = vshrl.u32 %v540, 7
        %v542 = vsub.s32 %v539, %v541
        %v543 = vrot.slane %v535, %v542
        %v545 = vunpack.c.l.s4 1934713408
        %v546 = vunpack.c.0.s8 %v545
        %v547 = vlaneseq
        %v548 = vshrl.u32 %v547, 7
        %v549 = vsub.s32 %v546, %v548
        %v550 = vrot.slane %v536, %v549
        %v551 = vcombine.low %v519, %v534
        %v552 = vcombine.high %v519, %v534
        %v554 = vunpack.c.l.s4 1934713408
        %v555 = vunpack.c.0.s8 %v554
        %v556 = vlaneseq
        %v557 = vshrl.u32 %v556, 7
        %v558 = vsub.s32 %v555, %v557
        %v559 = vrot.slane %v551, %v558
        %v561 = vunpack.c.l.s4 1934713408
        %v562 = vunpack.c.0.s8 %v561
        %v563 = vlaneseq
        %v564 = vshrl.u32 %v563, 7
        %v565 = vsub.s32 %v562, %v564
        %v566 = vrot.slane %v552, %v565
        %v567 = vcombine.high %v543, 0
        %v568 = vcombine.high %v550, 0
        %v569 = vcombine.high %v559, 0
        %v570 = vcombine.high %v566, 0
        %v571 = vcombine.high %v495, %v257
        %v573 = vunpack.c.l.s4 1983009808
        %v574 = vunpack.c.0.s8 %v573
        %v575 = vlaneseq
        %v576 = vshrl.u32 %v575, 7
        %v577 = vsub.s32 %v574, %v576
        %v578 = vrot.slane %v495, %v577
        %v580 = vunpack.c.l.s4 1983009808
        %v581 = vunpack.c.0.s8 %v580
        %v582 = vlaneseq
        %v583 = vshrl.u32 %v582, 7
        %v584 = vsub.s32 %v581, %v583
        %v585 = vrot.slane %v571, %v584
        %v586 = vcombine.high %v503, %v257
        %v588 = vunpack.c.l.s4 1983009808
        %v589 = vunpack.c.0.s8 %v588
        %v590 = vlaneseq
        %v591 = vshrl.u32 %v590, 7
        %v592 = vsub.s32 %v589, %v591
        %v593 = vrot.slane %v503, %v592
        %v595 = vunpack.c.l.s4 1983009808
        %v596 = vunpack.c.0.s8 %v595
        %v597 = vlaneseq
        %v598 = vshrl.u32 %v597, 7
        %v599 = vsub.s32 %v596, %v598
        %v600 = vrot.slane %v586, %v599
        %v601 = vcombine.low %v578, %v593
        %v602 = vcombine.high %v578, %v593
        %v604 = vunpack.c.l.s4 1934713408
        %v605 = vunpack.c.0.s8 %v604
        %v606 = vlaneseq
        %v607 = vshrl.u32 %v606, 7
        %v608 = vsub.s32 %v605, %v607
        %v609 = vrot.slane %v601, %v608
        %v611 = vunpack.c.l.s4 1934713408
        %v612 = vunpack.c.0.s8 %v611
        %v613 = vlaneseq
        %v614 = vshrl.u32 %v613, 7
        %v615 = vsub.s32 %v612, %v614
        %v616 = vrot.slane %v602, %v615
        %v617 = vcombine.low %v585, %v600
        %v618 = vcombine.high %v585, %v600
        %v620 = vunpack.c.l.s4 1934713408
        %v621 = vunpack.c.0.s8 %v620
        %v622 = vlaneseq
        %v623 = vshrl.u32 %v622, 7
        %v624 = vsub.s32 %v621, %v623
        %v625 = vrot.slane %v617, %v624
        %v627 = vunpack.c.l.s4 1934713408
        %v628 = vunpack.c.0.s8 %v627
        %v629 = vlaneseq
        %v630 = vshrl.u32 %v629, 7
        %v631 = vsub.s32 %v628, %v630
        %v632 = vrot.slane %v618, %v631
        %v633 = vcombine.high %v609, 0
        %v634 = vcombine.high %v616, 0
        %v635 = vcombine.high %v625, 0
        %v636 = vcombine.high %v632, 0
        %638 = vrot.lane.b32.xlu0 %v609, 16
        %v639 = vpop.permute.xlu0 %638
        %641 = vrot.lane.b32.xlu0 %v567, 32
        %v642 = vpop.permute.xlu0 %641
        %644 = vrot.lane.b32.xlu0 %v633, 48
        %v645 = vpop.permute.xlu0 %644
        %647 = vrot.lane.b32.xlu0 %v550, 64
        %v648 = vpop.permute.xlu0 %647
        %650 = vrot.lane.b32.xlu0 %v616, 80
        %v651 = vpop.permute.xlu0 %650
        %653 = vrot.lane.b32.xlu0 %v568, 96
        %v654 = vpop.permute.xlu0 %653
        %656 = vrot.lane.b32.xlu0 %v634, 112
        %v657 = vpop.permute.xlu0 %656
        %659 = vrot.lane.b32.xlu0 %v625, 16
        %v660 = vpop.permute.xlu0 %659
        %662 = vrot.lane.b32.xlu0 %v569, 32
        %v663 = vpop.permute.xlu0 %662
        %665 = vrot.lane.b32.xlu0 %v635, 48
        %v666 = vpop.permute.xlu0 %665
        %668 = vrot.lane.b32.xlu0 %v566, 64
        %v669 = vpop.permute.xlu0 %668
        %671 = vrot.lane.b32.xlu0 %v632, 80
        %v672 = vpop.permute.xlu0 %671
        %674 = vrot.lane.b32.xlu0 %v570, 96
        %v675 = vpop.permute.xlu0 %674
        %677 = vrot.lane.b32.xlu0 %v636, 112
        %v678 = vpop.permute.xlu0 %677
        %v681 = vsel %vm433, %v543, %v639
        %v683 = vsel %vm437, %v681, %v642
        %v685 = vsel %vm440, %v683, %v645
        %v687 = vsel %vm443, %v685, %v648
        %v689 = vsel %vm446, %v687, %v651
        %v691 = vsel %vm449, %v689, %v654
        %v693 = vsel %vm452, %v691, %v657
        %v696 = vsel %vm433, %v559, %v660
        %v698 = vsel %vm437, %v696, %v663
        %v700 = vsel %vm440, %v698, %v666
        %v702 = vsel %vm443, %v700, %v669
        %v704 = vsel %vm446, %v702, %v672
        %v706 = vsel %vm449, %v704, %v675
        %v708 = vsel %vm452, %v706, %v678
        %v711 = vunpack.c.l.b16 %v693
        %v712 = vunpack.c.l.b16 %v708
        %v713 = vpack.c.b16 %v712, %v711
        %v714 = vrot.slane %v713, 6
        %716 = vst [vmem:[#allocation2] sm:$0xcc] %v714
        %717 = vrot.lane.b32.xlu0 %v229, 126
        %v718 = vpop.permute.xlu0 %717
        %719 = vrot.lane.b32.xlu0 %v231, 126
        %v720 = vpop.permute.xlu0 %719
        %721 = vrot.lane.b32.xlu0 %v233, 126
        %v722 = vpop.permute.xlu0 %721
        %723 = vrot.lane.b32.xlu0 %v235, 126
        %v724 = vpop.permute.xlu0 %723
        %v727 = vpack.i.b16 %v720, %v718
        %v729 = vshrl.u32 %v718, 16
        %v730 = vshrl.u32 %v720, 16
        %v731 = vpack.i.b16 %v730, %v729
        %v735 = vpack.i.b16 %v724, %v722
        %v737 = vshrl.u32 %v722, 16
        %v738 = vshrl.u32 %v724, 16
        %v739 = vpack.i.b16 %v738, %v737
        %v741 = vcombine.high %v727, %v254
        %v743 = vunpack.c.l.s4 1983009808
        %v744 = vunpack.c.0.s8 %v743
        %v745 = vlaneseq
        %v746 = vshrl.u32 %v745, 7
        %v747 = vsub.s32 %v744, %v746
        %v748 = vrot.slane %v727, %v747
        %v750 = vunpack.c.l.s4 1983009808
        %v751 = vunpack.c.0.s8 %v750
        %v752 = vlaneseq
        %v753 = vshrl.u32 %v752, 7
        %v754 = vsub.s32 %v751, %v753
        %v755 = vrot.slane %v741, %v754
        %v756 = vcombine.high %v735, %v254
        %v758 = vunpack.c.l.s4 1983009808
        %v759 = vunpack.c.0.s8 %v758
        %v760 = vlaneseq
        %v761 = vshrl.u32 %v760, 7
        %v762 = vsub.s32 %v759, %v761
        %v763 = vrot.slane %v735, %v762
        %v765 = vunpack.c.l.s4 1983009808
        %v766 = vunpack.c.0.s8 %v765
        %v767 = vlaneseq
        %v768 = vshrl.u32 %v767, 7
        %v769 = vsub.s32 %v766, %v768
        %v770 = vrot.slane %v756, %v769
        %v771 = vcombine.low %v748, %v763
        %v772 = vcombine.high %v748, %v763
        %v774 = vunpack.c.l.s4 1934713408
        %v775 = vunpack.c.0.s8 %v774
        %v776 = vlaneseq
        %v777 = vshrl.u32 %v776, 7
        %v778 = vsub.s32 %v775, %v777
        %v779 = vrot.slane %v771, %v778
        %v781 = vunpack.c.l.s4 1934713408
        %v782 = vunpack.c.0.s8 %v781
        %v783 = vlaneseq
        %v784 = vshrl.u32 %v783, 7
        %v785 = vsub.s32 %v782, %v784
        %v786 = vrot.slane %v772, %v785
        %v787 = vcombine.low %v755, %v770
        %v788 = vcombine.high %v755, %v770
        %v790 = vunpack.c.l.s4 1934713408
        %v791 = vunpack.c.0.s8 %v790
        %v792 = vlaneseq
        %v793 = vshrl.u32 %v792, 7
        %v794 = vsub.s32 %v791, %v793
        %v795 = vrot.slane %v787, %v794
        %v797 = vunpack.c.l.s4 1934713408
        %v798 = vunpack.c.0.s8 %v797
        %v799 = vlaneseq
        %v800 = vshrl.u32 %v799, 7
        %v801 = vsub.s32 %v798, %v800
        %v802 = vrot.slane %v788, %v801
        %v803 = vcombine.high %v779, 0
        %v804 = vcombine.high %v786, 0
        %v805 = vcombine.high %v795, 0
        %v806 = vcombine.high %v802, 0
        %v807 = vcombine.high %v731, %v257
        %v809 = vunpack.c.l.s4 1983009808
        %v810 = vunpack.c.0.s8 %v809
        %v811 = vlaneseq
        %v812 = vshrl.u32 %v811, 7
        %v813 = vsub.s32 %v810, %v812
        %v814 = vrot.slane %v731, %v813
        %v816 = vunpack.c.l.s4 1983009808
        %v817 = vunpack.c.0.s8 %v816
        %v818 = vlaneseq
        %v819 = vshrl.u32 %v818, 7
        %v820 = vsub.s32 %v817, %v819
        %v821 = vrot.slane %v807, %v820
        %v822 = vcombine.high %v739, %v257
        %v824 = vunpack.c.l.s4 1983009808
        %v825 = vunpack.c.0.s8 %v824
        %v826 = vlaneseq
        %v827 = vshrl.u32 %v826, 7
        %v828 = vsub.s32 %v825, %v827
        %v829 = vrot.slane %v739, %v828
        %v831 = vunpack.c.l.s4 1983009808
        %v832 = vunpack.c.0.s8 %v831
        %v833 = vlaneseq
        %v834 = vshrl.u32 %v833, 7
        %v835 = vsub.s32 %v832, %v834
        %v836 = vrot.slane %v822, %v835
        %v837 = vcombine.low %v814, %v829
        %v838 = vcombine.high %v814, %v829
        %v840 = vunpack.c.l.s4 1934713408
        %v841 = vunpack.c.0.s8 %v840
        %v842 = vlaneseq
        %v843 = vshrl.u32 %v842, 7
        %v844 = vsub.s32 %v841, %v843
        %v845 = vrot.slane %v837, %v844
        %v847 = vunpack.c.l.s4 1934713408
        %v848 = vunpack.c.0.s8 %v847
        %v849 = vlaneseq
        %v850 = vshrl.u32 %v849, 7
        %v851 = vsub.s32 %v848, %v850
        %v852 = vrot.slane %v838, %v851
        %v853 = vcombine.low %v821, %v836
        %v854 = vcombine.high %v821, %v836
        %v856 = vunpack.c.l.s4 1934713408
        %v857 = vunpack.c.0.s8 %v856
        %v858 = vlaneseq
        %v859 = vshrl.u32 %v858, 7
        %v860 = vsub.s32 %v857, %v859
        %v861 = vrot.slane %v853, %v860
        %v863 = vunpack.c.l.s4 1934713408
        %v864 = vunpack.c.0.s8 %v863
        %v865 = vlaneseq
        %v866 = vshrl.u32 %v865, 7
        %v867 = vsub.s32 %v864, %v866
        %v868 = vrot.slane %v854, %v867
        %v869 = vcombine.high %v845, 0
        %v870 = vcombine.high %v852, 0
        %v871 = vcombine.high %v861, 0
        %v872 = vcombine.high %v868, 0
        %874 = vrot.lane.b32.xlu0 %v845, 16
        %v875 = vpop.permute.xlu0 %874
        %877 = vrot.lane.b32.xlu0 %v803, 32
        %v878 = vpop.permute.xlu0 %877
        %880 = vrot.lane.b32.xlu0 %v869, 48
        %v881 = vpop.permute.xlu0 %880
        %883 = vrot.lane.b32.xlu0 %v786, 64
        %v884 = vpop.permute.xlu0 %883
        %886 = vrot.lane.b32.xlu0 %v852, 80
        %v887 = vpop.permute.xlu0 %886
        %889 = vrot.lane.b32.xlu0 %v804, 96
        %v890 = vpop.permute.xlu0 %889
        %892 = vrot.lane.b32.xlu0 %v870, 112
        %v893 = vpop.permute.xlu0 %892
        %895 = vrot.lane.b32.xlu0 %v861, 16
        %v896 = vpop.permute.xlu0 %895
        %898 = vrot.lane.b32.xlu0 %v805, 32
        %v899 = vpop.permute.xlu0 %898
        %901 = vrot.lane.b32.xlu0 %v871, 48
        %v902 = vpop.permute.xlu0 %901
        %904 = vrot.lane.b32.xlu0 %v802, 64
        %v905 = vpop.permute.xlu0 %904
        %907 = vrot.lane.b32.xlu0 %v868, 80
        %v908 = vpop.permute.xlu0 %907
        %910 = vrot.lane.b32.xlu0 %v806, 96
        %v911 = vpop.permute.xlu0 %910
        %913 = vrot.lane.b32.xlu0 %v872, 112
        %v914 = vpop.permute.xlu0 %913
        %v917 = vsel %vm433, %v779, %v875
        %v919 = vsel %vm437, %v917, %v878
        %v921 = vsel %vm440, %v919, %v881
        %v923 = vsel %vm443, %v921, %v884
        %v925 = vsel %vm446, %v923, %v887
        %v927 = vsel %vm449, %v925, %v890
        %v929 = vsel %vm452, %v927, %v893
        %v932 = vsel %vm433, %v795, %v896
        %v934 = vsel %vm437, %v932, %v899
        %v936 = vsel %vm440, %v934, %v902
        %v938 = vsel %vm443, %v936, %v905
        %v940 = vsel %vm446, %v938, %v908
        %v942 = vsel %vm449, %v940, %v911
        %v944 = vsel %vm452, %v942, %v914
        %v947 = vunpack.c.l.b16 %v929
        %v948 = vunpack.c.l.b16 %v944
        %v949 = vpack.c.b16 %v948, %v947
        %951 = vst [vmem:[#allocation2 + $0x8] sm:$0x33] %v949
        %vm952 = vsmask.f32 7424
        %v954 = vshll.u32 %v229, 16
        %v956 = vrot.slane %v954, 1
        %v957 = vor.u32 %v241, %v956
        %v959 = vshll.u32 %v230, 16
        %v961 = vrot.slane %v959, 1
        %v962 = vsel %vm952, %v957, %v961
        %v964 = vshll.u32 %v231, 16
        %v966 = vrot.slane %v964, 1
        %v967 = vor.u32 %v242, %v966
        %v969 = vshll.u32 %v232, 16
        %v971 = vrot.slane %v969, 1
        %v972 = vsel %vm952, %v967, %v971
        %v974 = vshll.u32 %v233, 16
        %v976 = vrot.slane %v974, 1
        %v977 = vor.u32 %v249, %v976
        %v979 = vshll.u32 %v234, 16
        %v981 = vrot.slane %v979, 1
        %v982 = vsel %vm952, %v977, %v981
        %v984 = vshll.u32 %v235, 16
        %v986 = vrot.slane %v984, 1
        %v987 = vor.u32 %v250, %v986
        %v989 = vshll.u32 %v236, 16
        %v991 = vrot.slane %v989, 1
        %v992 = vsel %vm952, %v987, %v991
        %v995 = vpack.i.b16 %v972, %v962
        %v997 = vshrl.u32 %v962, 16
        %v998 = vshrl.u32 %v972, 16
        %v999 = vpack.i.b16 %v998, %v997
        %v1003 = vpack.i.b16 %v992, %v982
        %v1005 = vshrl.u32 %v982, 16
        %v1006 = vshrl.u32 %v992, 16
        %v1007 = vpack.i.b16 %v1006, %v1005
        %v1009 = vcombine.high %v995, %v254
        %v1011 = vunpack.c.l.s4 1983009808
        %v1012 = vunpack.c.0.s8 %v1011
        %v1013 = vlaneseq
        %v1014 = vshrl.u32 %v1013, 7
        %v1015 = vsub.s32 %v1012, %v1014
        %v1016 = vrot.slane %v995, %v1015
        %v1018 = vunpack.c.l.s4 1983009808
        %v1019 = vunpack.c.0.s8 %v1018
        %v1020 = vlaneseq
        %v1021 = vshrl.u32 %v1020, 7
        %v1022 = vsub.s32 %v1019, %v1021
        %v1023 = vrot.slane %v1009, %v1022
        %v1024 = vcombine.high %v1003, %v254
        %v1026 = vunpack.c.l.s4 1983009808
        %v1027 = vunpack.c.0.s8 %v1026
        %v1028 = vlaneseq
        %v1029 = vshrl.u32 %v1028, 7
        %v1030 = vsub.s32 %v1027, %v1029
        %v1031 = vrot.slane %v1003, %v1030
        %v1033 = vunpack.c.l.s4 1983009808
        %v1034 = vunpack.c.0.s8 %v1033
        %v1035 = vlaneseq
        %v1036 = vshrl.u32 %v1035, 7
        %v1037 = vsub.s32 %v1034, %v1036
        %v1038 = vrot.slane %v1024, %v1037
        %v1039 = vcombine.low %v1016, %v1031
        %v1040 = vcombine.high %v1016, %v1031
        %v1042 = vunpack.c.l.s4 1934713408
        %v1043 = vunpack.c.0.s8 %v1042
        %v1044 = vlaneseq
        %v1045 = vshrl.u32 %v1044, 7
        %v1046 = vsub.s32 %v1043, %v1045
        %v1047 = vrot.slane %v1039, %v1046
        %v1049 = vunpack.c.l.s4 1934713408
        %v1050 = vunpack.c.0.s8 %v1049
        %v1051 = vlaneseq
        %v1052 = vshrl.u32 %v1051, 7
        %v1053 = vsub.s32 %v1050, %v1052
        %v1054 = vrot.slane %v1040, %v1053
        %v1055 = vcombine.low %v1023, %v1038
        %v1056 = vcombine.high %v1023, %v1038
        %v1058 = vunpack.c.l.s4 1934713408
        %v1059 = vunpack.c.0.s8 %v1058
        %v1060 = vlaneseq
        %v1061 = vshrl.u32 %v1060, 7
        %v1062 = vsub.s32 %v1059, %v1061
        %v1063 = vrot.slane %v1055, %v1062
        %v1065 = vunpack.c.l.s4 1934713408
        %v1066 = vunpack.c.0.s8 %v1065
        %v1067 = vlaneseq
        %v1068 = vshrl.u32 %v1067, 7
        %v1069 = vsub.s32 %v1066, %v1068
        %v1070 = vrot.slane %v1056, %v1069
        %v1071 = vcombine.high %v1047, 0
        %v1072 = vcombine.high %v1054, 0
        %v1073 = vcombine.high %v1063, 0
        %v1074 = vcombine.high %v1070, 0
        %v1075 = vcombine.high %v999, %v257
        %v1077 = vunpack.c.l.s4 1983009808
        %v1078 = vunpack.c.0.s8 %v1077
        %v1079 = vlaneseq
        %v1080 = vshrl.u32 %v1079, 7
        %v1081 = vsub.s32 %v1078, %v1080
        %v1082 = vrot.slane %v999, %v1081
        %v1084 = vunpack.c.l.s4 1983009808
        %v1085 = vunpack.c.0.s8 %v1084
        %v1086 = vlaneseq
        %v1087 = vshrl.u32 %v1086, 7
        %v1088 = vsub.s32 %v1085, %v1087
        %v1089 = vrot.slane %v1075, %v1088
        %v1090 = vcombine.high %v1007, %v257
        %v1092 = vunpack.c.l.s4 1983009808
        %v1093 = vunpack.c.0.s8 %v1092
        %v1094 = vlaneseq
        %v1095 = vshrl.u32 %v1094, 7
        %v1096 = vsub.s32 %v1093, %v1095
        %v1097 = vrot.slane %v1007, %v1096
        %v1099 = vunpack.c.l.s4 1983009808
        %v1100 = vunpack.c.0.s8 %v1099
        %v1101 = vlaneseq
        %v1102 = vshrl.u32 %v1101, 7
        %v1103 = vsub.s32 %v1100, %v1102
        %v1104 = vrot.slane %v1090, %v1103
        %v1105 = vcombine.low %v1082, %v1097
        %v1106 = vcombine.high %v1082, %v1097
        %v1108 = vunpack.c.l.s4 1934713408
        %v1109 = vunpack.c.0.s8 %v1108
        %v1110 = vlaneseq
        %v1111 = vshrl.u32 %v1110, 7
        %v1112 = vsub.s32 %v1109, %v1111
        %v1113 = vrot.slane %v1105, %v1112
        %v1115 = vunpack.c.l.s4 1934713408
        %v1116 = vunpack.c.0.s8 %v1115
        %v1117 = vlaneseq
        %v1118 = vshrl.u32 %v1117, 7
        %v1119 = vsub.s32 %v1116, %v1118
        %v1120 = vrot.slane %v1106, %v1119
        %v1121 = vcombine.low %v1089, %v1104
        %v1122 = vcombine.high %v1089, %v1104
        %v1124 = vunpack.c.l.s4 1934713408
        %v1125 = vunpack.c.0.s8 %v1124
        %v1126 = vlaneseq
        %v1127 = vshrl.u32 %v1126, 7
        %v1128 = vsub.s32 %v1125, %v1127
        %v1129 = vrot.slane %v1121, %v1128
        %v1131 = vunpack.c.l.s4 1934713408
        %v1132 = vunpack.c.0.s8 %v1131
        %v1133 = vlaneseq
        %v1134 = vshrl.u32 %v1133, 7
        %v1135 = vsub.s32 %v1132, %v1134
        %v1136 = vrot.slane %v1122, %v1135
        %v1137 = vcombine.high %v1113, 0
        %v1138 = vcombine.high %v1120, 0
        %v1139 = vcombine.high %v1129, 0
        %v1140 = vcombine.high %v1136, 0
        %1142 = vrot.lane.b32.xlu0 %v1113, 16
        %v1143 = vpop.permute.xlu0 %1142
        %1145 = vrot.lane.b32.xlu0 %v1071, 32
        %v1146 = vpop.permute.xlu0 %1145
        %1148 = vrot.lane.b32.xlu0 %v1137, 48
        %v1149 = vpop.permute.xlu0 %1148
        %1151 = vrot.lane.b32.xlu0 %v1054, 64
        %v1152 = vpop.permute.xlu0 %1151
        %1154 = vrot.lane.b32.xlu0 %v1120, 80
        %v1155 = vpop.permute.xlu0 %1154
        %1157 = vrot.lane.b32.xlu0 %v1072, 96
        %v1158 = vpop.permute.xlu0 %1157
        %1160 = vrot.lane.b32.xlu0 %v1138, 112
        %v1161 = vpop.permute.xlu0 %1160
        %1163 = vrot.lane.b32.xlu0 %v1129, 16
        %v1164 = vpop.permute.xlu0 %1163
        %1166 = vrot.lane.b32.xlu0 %v1073, 32
        %v1167 = vpop.permute.xlu0 %1166
        %1169 = vrot.lane.b32.xlu0 %v1139, 48
        %v1170 = vpop.permute.xlu0 %1169
        %1172 = vrot.lane.b32.xlu0 %v1070, 64
        %v1173 = vpop.permute.xlu0 %1172
        %1175 = vrot.lane.b32.xlu0 %v1136, 80
        %v1176 = vpop.permute.xlu0 %1175
        %1178 = vrot.lane.b32.xlu0 %v1074, 96
        %v1179 = vpop.permute.xlu0 %1178
        %1181 = vrot.lane.b32.xlu0 %v1140, 112
        %v1182 = vpop.permute.xlu0 %1181
        %v1185 = vsel %vm433, %v1047, %v1143
        %v1187 = vsel %vm437, %v1185, %v1146
        %v1189 = vsel %vm440, %v1187, %v1149
        %v1191 = vsel %vm443, %v1189, %v1152
        %v1193 = vsel %vm446, %v1191, %v1155
        %v1195 = vsel %vm449, %v1193, %v1158
        %v1197 = vsel %vm452, %v1195, %v1161
        %v1200 = vsel %vm433, %v1063, %v1164
        %v1202 = vsel %vm437, %v1200, %v1167
        %v1204 = vsel %vm440, %v1202, %v1170
        %v1206 = vsel %vm443, %v1204, %v1173
        %v1208 = vsel %vm446, %v1206, %v1176
        %v1210 = vsel %vm449, %v1208, %v1179
        %v1212 = vsel %vm452, %v1210, %v1182
        %v1215 = vunpack.c.l.b16 %v1197
        %v1216 = vunpack.c.l.b16 %v1212
        %v1217 = vpack.c.b16 %v1216, %v1215
        %v1218 = vrot.slane %v1217, 6
        %1220 = vst [vmem:[#allocation2 + $0x8] sm:$0xcc] %v1218
        %1221 = vrot.lane.b32.xlu0 %v962, 127
        %v1222 = vpop.permute.xlu0 %1221
        %1223 = vrot.lane.b32.xlu0 %v972, 127
        %v1224 = vpop.permute.xlu0 %1223
        %1225 = vrot.lane.b32.xlu0 %v982, 127
        %v1226 = vpop.permute.xlu0 %1225
        %1227 = vrot.lane.b32.xlu0 %v992, 127
        %v1228 = vpop.permute.xlu0 %1227
        %v1231 = vpack.i.b16 %v1224, %v1222
        %v1233 = vshrl.u32 %v1222, 16
        %v1234 = vshrl.u32 %v1224, 16
        %v1235 = vpack.i.b16 %v1234, %v1233
        %v1239 = vpack.i.b16 %v1228, %v1226
        %v1241 = vshrl.u32 %v1226, 16
        %v1242 = vshrl.u32 %v1228, 16
        %v1243 = vpack.i.b16 %v1242, %v1241
        %v1245 = vcombine.high %v1231, %v254
        %v1247 = vunpack.c.l.s4 1983009808
        %v1248 = vunpack.c.0.s8 %v1247
        %v1249 = vlaneseq
        %v1250 = vshrl.u32 %v1249, 7
        %v1251 = vsub.s32 %v1248, %v1250
        %v1252 = vrot.slane %v1231, %v1251
        %v1254 = vunpack.c.l.s4 1983009808
        %v1255 = vunpack.c.0.s8 %v1254
        %v1256 = vlaneseq
        %v1257 = vshrl.u32 %v1256, 7
        %v1258 = vsub.s32 %v1255, %v1257
        %v1259 = vrot.slane %v1245, %v1258
        %v1260 = vcombine.high %v1239, %v254
        %v1262 = vunpack.c.l.s4 1983009808
        %v1263 = vunpack.c.0.s8 %v1262
        %v1264 = vlaneseq
        %v1265 = vshrl.u32 %v1264, 7
        %v1266 = vsub.s32 %v1263, %v1265
        %v1267 = vrot.slane %v1239, %v1266
        %v1269 = vunpack.c.l.s4 1983009808
        %v1270 = vunpack.c.0.s8 %v1269
        %v1271 = vlaneseq
        %v1272 = vshrl.u32 %v1271, 7
        %v1273 = vsub.s32 %v1270, %v1272
        %v1274 = vrot.slane %v1260, %v1273
        %v1275 = vcombine.low %v1252, %v1267
        %v1276 = vcombine.high %v1252, %v1267
        %v1278 = vunpack.c.l.s4 1934713408
        %v1279 = vunpack.c.0.s8 %v1278
        %v1280 = vlaneseq
        %v1281 = vshrl.u32 %v1280, 7
        %v1282 = vsub.s32 %v1279, %v1281
        %v1283 = vrot.slane %v1275, %v1282
        %v1285 = vunpack.c.l.s4 1934713408
        %v1286 = vunpack.c.0.s8 %v1285
        %v1287 = vlaneseq
        %v1288 = vshrl.u32 %v1287, 7
        %v1289 = vsub.s32 %v1286, %v1288
        %v1290 = vrot.slane %v1276, %v1289
        %v1291 = vcombine.low %v1259, %v1274
        %v1292 = vcombine.high %v1259, %v1274
        %v1294 = vunpack.c.l.s4 1934713408
        %v1295 = vunpack.c.0.s8 %v1294
        %v1296 = vlaneseq
        %v1297 = vshrl.u32 %v1296, 7
        %v1298 = vsub.s32 %v1295, %v1297
        %v1299 = vrot.slane %v1291, %v1298
        %v1301 = vunpack.c.l.s4 1934713408
        %v1302 = vunpack.c.0.s8 %v1301
        %v1303 = vlaneseq
        %v1304 = vshrl.u32 %v1303, 7
        %v1305 = vsub.s32 %v1302, %v1304
        %v1306 = vrot.slane %v1292, %v1305
        %v1307 = vcombine.high %v1283, 0
        %v1308 = vcombine.high %v1290, 0
        %v1309 = vcombine.high %v1299, 0
        %v1310 = vcombine.high %v1306, 0
        %v1311 = vcombine.high %v1235, %v257
        %v1313 = vunpack.c.l.s4 1983009808
        %v1314 = vunpack.c.0.s8 %v1313
        %v1315 = vlaneseq
        %v1316 = vshrl.u32 %v1315, 7
        %v1317 = vsub.s32 %v1314, %v1316
        %v1318 = vrot.slane %v1235, %v1317
        %v1320 = vunpack.c.l.s4 1983009808
        %v1321 = vunpack.c.0.s8 %v1320
        %v1322 = vlaneseq
        %v1323 = vshrl.u32 %v1322, 7
        %v1324 = vsub.s32 %v1321, %v1323
        %v1325 = vrot.slane %v1311, %v1324
        %v1326 = vcombine.high %v1243, %v257
        %v1328 = vunpack.c.l.s4 1983009808
        %v1329 = vunpack.c.0.s8 %v1328
        %v1330 = vlaneseq
        %v1331 = vshrl.u32 %v1330, 7
        %v1332 = vsub.s32 %v1329, %v1331
        %v1333 = vrot.slane %v1243, %v1332
        %v1335 = vunpack.c.l.s4 1983009808
        %v1336 = vunpack.c.0.s8 %v1335
        %v1337 = vlaneseq
        %v1338 = vshrl.u32 %v1337, 7
        %v1339 = vsub.s32 %v1336, %v1338
        %v1340 = vrot.slane %v1326, %v1339
        %v1341 = vcombine.low %v1318, %v1333
        %v1342 = vcombine.high %v1318, %v1333
        %v1344 = vunpack.c.l.s4 1934713408
        %v1345 = vunpack.c.0.s8 %v1344
        %v1346 = vlaneseq
        %v1347 = vshrl.u32 %v1346, 7
        %v1348 = vsub.s32 %v1345, %v1347
        %v1349 = vrot.slane %v1341, %v1348
        %v1351 = vunpack.c.l.s4 1934713408
        %v1352 = vunpack.c.0.s8 %v1351
        %v1353 = vlaneseq
        %v1354 = vshrl.u32 %v1353, 7
        %v1355 = vsub.s32 %v1352, %v1354
        %v1356 = vrot.slane %v1342, %v1355
        %v1357 = vcombine.low %v1325, %v1340
        %v1358 = vcombine.high %v1325, %v1340
        %v1360 = vunpack.c.l.s4 1934713408
        %v1361 = vunpack.c.0.s8 %v1360
        %v1362 = vlaneseq
        %v1363 = vshrl.u32 %v1362, 7
        %v1364 = vsub.s32 %v1361, %v1363
        %v1365 = vrot.slane %v1357, %v1364
        %v1367 = vunpack.c.l.s4 1934713408
        %v1368 = vunpack.c.0.s8 %v1367
        %v1369 = vlaneseq
        %v1370 = vshrl.u32 %v1369, 7
        %v1371 = vsub.s32 %v1368, %v1370
        %v1372 = vrot.slane %v1358, %v1371
        %v1373 = vcombine.high %v1349, 0
        %v1374 = vcombine.high %v1356, 0
        %v1375 = vcombine.high %v1365, 0
        %v1376 = vcombine.high %v1372, 0
        %1378 = vrot.lane.b32.xlu0 %v1349, 16
        %v1379 = vpop.permute.xlu0 %1378
        %1381 = vrot.lane.b32.xlu0 %v1307, 32
        %v1382 = vpop.permute.xlu0 %1381
        %1384 = vrot.lane.b32.xlu0 %v1373, 48
        %v1385 = vpop.permute.xlu0 %1384
        %1387 = vrot.lane.b32.xlu0 %v1290, 64
        %v1388 = vpop.permute.xlu0 %1387
        %1390 = vrot.lane.b32.xlu0 %v1356, 80
        %v1391 = vpop.permute.xlu0 %1390
        %1393 = vrot.lane.b32.xlu0 %v1308, 96
        %v1394 = vpop.permute.xlu0 %1393
        %1396 = vrot.lane.b32.xlu0 %v1374, 112
        %v1397 = vpop.permute.xlu0 %1396
        %1399 = vrot.lane.b32.xlu0 %v1365, 16
        %v1400 = vpop.permute.xlu0 %1399
        %1402 = vrot.lane.b32.xlu0 %v1309, 32
        %v1403 = vpop.permute.xlu0 %1402
        %1405 = vrot.lane.b32.xlu0 %v1375, 48
        %v1406 = vpop.permute.xlu0 %1405
        %1408 = vrot.lane.b32.xlu0 %v1306, 64
        %v1409 = vpop.permute.xlu0 %1408
        %1411 = vrot.lane.b32.xlu0 %v1372, 80
        %v1412 = vpop.permute.xlu0 %1411
        %1414 = vrot.lane.b32.xlu0 %v1310, 96
        %v1415 = vpop.permute.xlu0 %1414
        %1417 = vrot.lane.b32.xlu0 %v1376, 112
        %v1418 = vpop.permute.xlu0 %1417
        %v1421 = vsel %vm433, %v1283, %v1379
        %v1423 = vsel %vm437, %v1421, %v1382
        %v1425 = vsel %vm440, %v1423, %v1385
        %v1427 = vsel %vm443, %v1425, %v1388
        %v1429 = vsel %vm446, %v1427, %v1391
        %v1431 = vsel %vm449, %v1429, %v1394
        %v1433 = vsel %vm452, %v1431, %v1397
        %v1436 = vsel %vm433, %v1299, %v1400
        %v1438 = vsel %vm437, %v1436, %v1403
        %v1440 = vsel %vm440, %v1438, %v1406
        %v1442 = vsel %vm443, %v1440, %v1409
        %v1444 = vsel %vm446, %v1442, %v1412
        %v1446 = vsel %vm449, %v1444, %v1415
        %v1448 = vsel %vm452, %v1446, %v1418
        %v1451 = vunpack.c.l.b16 %v1433
        %v1452 = vunpack.c.l.b16 %v1448
        %v1453 = vpack.c.b16 %v1452, %v1451
        %1455 = vst [vmem:[#allocation2 + $0x10] sm:$0x33] %v1453
        %1456 = vrot.lane.b32.xlu0 %v962, 126
        %v1457 = vpop.permute.xlu0 %1456
        %1458 = vrot.lane.b32.xlu0 %v972, 126
        %v1459 = vpop.permute.xlu0 %1458
        %1460 = vrot.lane.b32.xlu0 %v982, 126
        %v1461 = vpop.permute.xlu0 %1460
        %1462 = vrot.lane.b32.xlu0 %v992, 126
        %v1463 = vpop.permute.xlu0 %1462
        %v1466 = vpack.i.b16 %v1459, %v1457
        %v1468 = vshrl.u32 %v1457, 16
        %v1469 = vshrl.u32 %v1459, 16
        %v1470 = vpack.i.b16 %v1469, %v1468
        %v1474 = vpack.i.b16 %v1463, %v1461
        %v1476 = vshrl.u32 %v1461, 16
        %v1477 = vshrl.u32 %v1463, 16
        %v1478 = vpack.i.b16 %v1477, %v1476
        %v1480 = vcombine.high %v1466, %v254
        %v1482 = vunpack.c.l.s4 1983009808
        %v1483 = vunpack.c.0.s8 %v1482
        %v1484 = vlaneseq
        %v1485 = vshrl.u32 %v1484, 7
        %v1486 = vsub.s32 %v1483, %v1485
        %v1487 = vrot.slane %v1466, %v1486
        %v1489 = vunpack.c.l.s4 1983009808
        %v1490 = vunpack.c.0.s8 %v1489
        %v1491 = vlaneseq
        %v1492 = vshrl.u32 %v1491, 7
        %v1493 = vsub.s32 %v1490, %v1492
        %v1494 = vrot.slane %v1480, %v1493
        %v1495 = vcombine.high %v1474, %v254
        %v1497 = vunpack.c.l.s4 1983009808
        %v1498 = vunpack.c.0.s8 %v1497
        %v1499 = vlaneseq
        %v1500 = vshrl.u32 %v1499, 7
        %v1501 = vsub.s32 %v1498, %v1500
        %v1502 = vrot.slane %v1474, %v1501
        %v1504 = vunpack.c.l.s4 1983009808
        %v1505 = vunpack.c.0.s8 %v1504
        %v1506 = vlaneseq
        %v1507 = vshrl.u32 %v1506, 7
        %v1508 = vsub.s32 %v1505, %v1507
        %v1509 = vrot.slane %v1495, %v1508
        %v1510 = vcombine.low %v1487, %v1502
        %v1511 = vcombine.high %v1487, %v1502
        %v1513 = vunpack.c.l.s4 1934713408
        %v1514 = vunpack.c.0.s8 %v1513
        %v1515 = vlaneseq
        %v1516 = vshrl.u32 %v1515, 7
        %v1517 = vsub.s32 %v1514, %v1516
        %v1518 = vrot.slane %v1510, %v1517
        %v1520 = vunpack.c.l.s4 1934713408
        %v1521 = vunpack.c.0.s8 %v1520
        %v1522 = vlaneseq
        %v1523 = vshrl.u32 %v1522, 7
        %v1524 = vsub.s32 %v1521, %v1523
        %v1525 = vrot.slane %v1511, %v1524
        %v1526 = vcombine.low %v1494, %v1509
        %v1527 = vcombine.high %v1494, %v1509
        %v1529 = vunpack.c.l.s4 1934713408
        %v1530 = vunpack.c.0.s8 %v1529
        %v1531 = vlaneseq
        %v1532 = vshrl.u32 %v1531, 7
        %v1533 = vsub.s32 %v1530, %v1532
        %v1534 = vrot.slane %v1526, %v1533
        %v1536 = vunpack.c.l.s4 1934713408
        %v1537 = vunpack.c.0.s8 %v1536
        %v1538 = vlaneseq
        %v1539 = vshrl.u32 %v1538, 7
        %v1540 = vsub.s32 %v1537, %v1539
        %v1541 = vrot.slane %v1527, %v1540
        %v1542 = vcombine.high %v1518, 0
        %v1543 = vcombine.high %v1525, 0
        %v1544 = vcombine.high %v1534, 0
        %v1545 = vcombine.high %v1541, 0
        %v1546 = vcombine.high %v1470, %v257
        %v1548 = vunpack.c.l.s4 1983009808
        %v1549 = vunpack.c.0.s8 %v1548
        %v1550 = vlaneseq
        %v1551 = vshrl.u32 %v1550, 7
        %v1552 = vsub.s32 %v1549, %v1551
        %v1553 = vrot.slane %v1470, %v1552
        %v1555 = vunpack.c.l.s4 1983009808
        %v1556 = vunpack.c.0.s8 %v1555
        %v1557 = vlaneseq
        %v1558 = vshrl.u32 %v1557, 7
        %v1559 = vsub.s32 %v1556, %v1558
        %v1560 = vrot.slane %v1546, %v1559
        %v1561 = vcombine.high %v1478, %v257
        %v1563 = vunpack.c.l.s4 1983009808
        %v1564 = vunpack.c.0.s8 %v1563
        %v1565 = vlaneseq
        %v1566 = vshrl.u32 %v1565, 7
        %v1567 = vsub.s32 %v1564, %v1566
        %v1568 = vrot.slane %v1478, %v1567
        %v1570 = vunpack.c.l.s4 1983009808
        %v1571 = vunpack.c.0.s8 %v1570
        %v1572 = vlaneseq
        %v1573 = vshrl.u32 %v1572, 7
        %v1574 = vsub.s32 %v1571, %v1573
        %v1575 = vrot.slane %v1561, %v1574
        %v1576 = vcombine.low %v1553, %v1568
        %v1577 = vcombine.high %v1553, %v1568
        %v1579 = vunpack.c.l.s4 1934713408
        %v1580 = vunpack.c.0.s8 %v1579
        %v1581 = vlaneseq
        %v1582 = vshrl.u32 %v1581, 7
        %v1583 = vsub.s32 %v1580, %v1582
        %v1584 = vrot.slane %v1576, %v1583
        %v1586 = vunpack.c.l.s4 1934713408
        %v1587 = vunpack.c.0.s8 %v1586
        %v1588 = vlaneseq
        %v1589 = vshrl.u32 %v1588, 7
        %v1590 = vsub.s32 %v1587, %v1589
        %v1591 = vrot.slane %v1577, %v1590
        %v1592 = vcombine.low %v1560, %v1575
        %v1593 = vcombine.high %v1560, %v1575
        %v1595 = vunpack.c.l.s4 1934713408
        %v1596 = vunpack.c.0.s8 %v1595
        %v1597 = vlaneseq
        %v1598 = vshrl.u32 %v1597, 7
        %v1599 = vsub.s32 %v1596, %v1598
        %v1600 = vrot.slane %v1592, %v1599
        %v1602 = vunpack.c.l.s4 1934713408
        %v1603 = vunpack.c.0.s8 %v1602
        %v1604 = vlaneseq
        %v1605 = vshrl.u32 %v1604, 7
        %v1606 = vsub.s32 %v1603, %v1605
        %v1607 = vrot.slane %v1593, %v1606
        %v1608 = vcombine.high %v1584, 0
        %v1609 = vcombine.high %v1591, 0
        %v1610 = vcombine.high %v1600, 0
        %v1611 = vcombine.high %v1607, 0
        %1613 = vrot.lane.b32.xlu0 %v1584, 16
        %v1614 = vpop.permute.xlu0 %1613
        %1616 = vrot.lane.b32.xlu0 %v1542, 32
        %v1617 = vpop.permute.xlu0 %1616
        %1619 = vrot.lane.b32.xlu0 %v1608, 48
        %v1620 = vpop.permute.xlu0 %1619
        %1622 = vrot.lane.b32.xlu0 %v1525, 64
        %v1623 = vpop.permute.xlu0 %1622
        %1625 = vrot.lane.b32.xlu0 %v1591, 80
        %v1626 = vpop.permute.xlu0 %1625
        %1628 = vrot.lane.b32.xlu0 %v1543, 96
        %v1629 = vpop.permute.xlu0 %1628
        %1631 = vrot.lane.b32.xlu0 %v1609, 112
        %v1632 = vpop.permute.xlu0 %1631
        %1634 = vrot.lane.b32.xlu0 %v1600, 16
        %v1635 = vpop.permute.xlu0 %1634
        %1637 = vrot.lane.b32.xlu0 %v1544, 32
        %v1638 = vpop.permute.xlu0 %1637
        %1640 = vrot.lane.b32.xlu0 %v1610, 48
        %v1641 = vpop.permute.xlu0 %1640
        %1643 = vrot.lane.b32.xlu0 %v1541, 64
        %v1644 = vpop.permute.xlu0 %1643
        %1646 = vrot.lane.b32.xlu0 %v1607, 80
        %v1647 = vpop.permute.xlu0 %1646
        %1649 = vrot.lane.b32.xlu0 %v1545, 96
        %v1650 = vpop.permute.xlu0 %1649
        %1652 = vrot.lane.b32.xlu0 %v1611, 112
        %v1653 = vpop.permute.xlu0 %1652
        %v1656 = vsel %vm433, %v1518, %v1614
        %v1658 = vsel %vm437, %v1656, %v1617
        %v1660 = vsel %vm440, %v1658, %v1620
        %v1662 = vsel %vm443, %v1660, %v1623
        %v1664 = vsel %vm446, %v1662, %v1626
        %v1666 = vsel %vm449, %v1664, %v1629
        %v1668 = vsel %vm452, %v1666, %v1632
        %v1671 = vsel %vm433, %v1534, %v1635
        %v1673 = vsel %vm437, %v1671, %v1638
        %v1675 = vsel %vm440, %v1673, %v1641
        %v1677 = vsel %vm443, %v1675, %v1644
        %v1679 = vsel %vm446, %v1677, %v1647
        %v1681 = vsel %vm449, %v1679, %v1650
        %v1683 = vsel %vm452, %v1681, %v1653
        %v1686 = vunpack.c.l.b16 %v1668
        %v1687 = vunpack.c.l.b16 %v1683
        %v1688 = vpack.c.b16 %v1687, %v1686
        %v1689 = vrot.slane %v1688, 6
        %1691 = vst [vmem:[#allocation2 + $0x10] sm:$0xcc] %v1689
        %vm1696 = vcmask 1046528
        %v1697 = vrot.slane %v229, 1
        %v1698 = vrot.slane %v230, 1
        %v1699 = vsel %vm1696, %v1697, %v1698
        %v1700 = vrot.slane %v231, 1
        %v1701 = vrot.slane %v232, 1
        %v1702 = vsel %vm1696, %v1700, %v1701
        %v1703 = vrot.slane %v233, 1
        %v1704 = vrot.slane %v234, 1
        %v1705 = vsel %vm1696, %v1703, %v1704
        %v1706 = vrot.slane %v235, 1
        %v1707 = vrot.slane %v236, 1
        %v1708 = vsel %vm1696, %v1706, %v1707
        %v1711 = vpack.i.b16 %v1702, %v1699
        %v1713 = vshrl.u32 %v1699, 16
        %v1714 = vshrl.u32 %v1702, 16
        %v1715 = vpack.i.b16 %v1714, %v1713
        %v1719 = vpack.i.b16 %v1708, %v1705
        %v1721 = vshrl.u32 %v1705, 16
        %v1722 = vshrl.u32 %v1708, 16
        %v1723 = vpack.i.b16 %v1722, %v1721
        %v1725 = vcombine.high %v1711, %v254
        %v1727 = vunpack.c.l.s4 1983009808
        %v1728 = vunpack.c.0.s8 %v1727
        %v1729 = vlaneseq
        %v1730 = vshrl.u32 %v1729, 7
        %v1731 = vsub.s32 %v1728, %v1730
        %v1732 = vrot.slane %v1711, %v1731
        %v1734 = vunpack.c.l.s4 1983009808
        %v1735 = vunpack.c.0.s8 %v1734
        %v1736 = vlaneseq
        %v1737 = vshrl.u32 %v1736, 7
        %v1738 = vsub.s32 %v1735, %v1737
        %v1739 = vrot.slane %v1725, %v1738
        %v1740 = vcombine.high %v1719, %v254
        %v1742 = vunpack.c.l.s4 1983009808
        %v1743 = vunpack.c.0.s8 %v1742
        %v1744 = vlaneseq
        %v1745 = vshrl.u32 %v1744, 7
        %v1746 = vsub.s32 %v1743, %v1745
        %v1747 = vrot.slane %v1719, %v1746
        %v1749 = vunpack.c.l.s4 1983009808
        %v1750 = vunpack.c.0.s8 %v1749
        %v1751 = vlaneseq
        %v1752 = vshrl.u32 %v1751, 7
        %v1753 = vsub.s32 %v1750, %v1752
        %v1754 = vrot.slane %v1740, %v1753
        %v1755 = vcombine.low %v1732, %v1747
        %v1756 = vcombine.high %v1732, %v1747
        %v1758 = vunpack.c.l.s4 1934713408
        %v1759 = vunpack.c.0.s8 %v1758
        %v1760 = vlaneseq
        %v1761 = vshrl.u32 %v1760, 7
        %v1762 = vsub.s32 %v1759, %v1761
        %v1763 = vrot.slane %v1755, %v1762
        %v1765 = vunpack.c.l.s4 1934713408
        %v1766 = vunpack.c.0.s8 %v1765
        %v1767 = vlaneseq
        %v1768 = vshrl.u32 %v1767, 7
        %v1769 = vsub.s32 %v1766, %v1768
        %v1770 = vrot.slane %v1756, %v1769
        %v1771 = vcombine.low %v1739, %v1754
        %v1772 = vcombine.high %v1739, %v1754
        %v1774 = vunpack.c.l.s4 1934713408
        %v1775 = vunpack.c.0.s8 %v1774
        %v1776 = vlaneseq
        %v1777 = vshrl.u32 %v1776, 7
        %v1778 = vsub.s32 %v1775, %v1777
        %v1779 = vrot.slane %v1771, %v1778
        %v1781 = vunpack.c.l.s4 1934713408
        %v1782 = vunpack.c.0.s8 %v1781
        %v1783 = vlaneseq
        %v1784 = vshrl.u32 %v1783, 7
        %v1785 = vsub.s32 %v1782, %v1784
        %v1786 = vrot.slane %v1772, %v1785
        %v1787 = vcombine.high %v1763, 0
        %v1788 = vcombine.high %v1770, 0
        %v1789 = vcombine.high %v1779, 0
        %v1790 = vcombine.high %v1786, 0
        %v1791 = vcombine.high %v1715, %v257
        %v1793 = vunpack.c.l.s4 1983009808
        %v1794 = vunpack.c.0.s8 %v1793
        %v1795 = vlaneseq
        %v1796 = vshrl.u32 %v1795, 7
        %v1797 = vsub.s32 %v1794, %v1796
        %v1798 = vrot.slane %v1715, %v1797
        %v1800 = vunpack.c.l.s4 1983009808
        %v1801 = vunpack.c.0.s8 %v1800
        %v1802 = vlaneseq
        %v1803 = vshrl.u32 %v1802, 7
        %v1804 = vsub.s32 %v1801, %v1803
        %v1805 = vrot.slane %v1791, %v1804
        %v1806 = vcombine.high %v1723, %v257
        %v1808 = vunpack.c.l.s4 1983009808
        %v1809 = vunpack.c.0.s8 %v1808
        %v1810 = vlaneseq
        %v1811 = vshrl.u32 %v1810, 7
        %v1812 = vsub.s32 %v1809, %v1811
        %v1813 = vrot.slane %v1723, %v1812
        %v1815 = vunpack.c.l.s4 1983009808
        %v1816 = vunpack.c.0.s8 %v1815
        %v1817 = vlaneseq
        %v1818 = vshrl.u32 %v1817, 7
        %v1819 = vsub.s32 %v1816, %v1818
        %v1820 = vrot.slane %v1806, %v1819
        %v1821 = vcombine.low %v1798, %v1813
        %v1822 = vcombine.high %v1798, %v1813
        %v1824 = vunpack.c.l.s4 1934713408
        %v1825 = vunpack.c.0.s8 %v1824
        %v1826 = vlaneseq
        %v1827 = vshrl.u32 %v1826, 7
        %v1828 = vsub.s32 %v1825, %v1827
        %v1829 = vrot.slane %v1821, %v1828
        %v1831 = vunpack.c.l.s4 1934713408
        %v1832 = vunpack.c.0.s8 %v1831
        %v1833 = vlaneseq
        %v1834 = vshrl.u32 %v1833, 7
        %v1835 = vsub.s32 %v1832, %v1834
        %v1836 = vrot.slane %v1822, %v1835
        %v1837 = vcombine.low %v1805, %v1820
        %v1838 = vcombine.high %v1805, %v1820
        %v1840 = vunpack.c.l.s4 1934713408
        %v1841 = vunpack.c.0.s8 %v1840
        %v1842 = vlaneseq
        %v1843 = vshrl.u32 %v1842, 7
        %v1844 = vsub.s32 %v1841, %v1843
        %v1845 = vrot.slane %v1837, %v1844
        %v1847 = vunpack.c.l.s4 1934713408
        %v1848 = vunpack.c.0.s8 %v1847
        %v1849 = vlaneseq
        %v1850 = vshrl.u32 %v1849, 7
        %v1851 = vsub.s32 %v1848, %v1850
        %v1852 = vrot.slane %v1838, %v1851
        %v1853 = vcombine.high %v1829, 0
        %v1854 = vcombine.high %v1836, 0
        %v1855 = vcombine.high %v1845, 0
        %v1856 = vcombine.high %v1852, 0
        %1858 = vrot.lane.b32.xlu0 %v1829, 16
        %v1859 = vpop.permute.xlu0 %1858
        %1861 = vrot.lane.b32.xlu0 %v1787, 32
        %v1862 = vpop.permute.xlu0 %1861
        %1864 = vrot.lane.b32.xlu0 %v1853, 48
        %v1865 = vpop.permute.xlu0 %1864
        %1867 = vrot.lane.b32.xlu0 %v1770, 64
        %v1868 = vpop.permute.xlu0 %1867
        %1870 = vrot.lane.b32.xlu0 %v1836, 80
        %v1871 = vpop.permute.xlu0 %1870
        %1873 = vrot.lane.b32.xlu0 %v1788, 96
        %v1874 = vpop.permute.xlu0 %1873
        %1876 = vrot.lane.b32.xlu0 %v1854, 112
        %v1877 = vpop.permute.xlu0 %1876
        %1879 = vrot.lane.b32.xlu0 %v1845, 16
        %v1880 = vpop.permute.xlu0 %1879
        %1882 = vrot.lane.b32.xlu0 %v1789, 32
        %v1883 = vpop.permute.xlu0 %1882
        %1885 = vrot.lane.b32.xlu0 %v1855, 48
        %v1886 = vpop.permute.xlu0 %1885
        %1888 = vrot.lane.b32.xlu0 %v1786, 64
        %v1889 = vpop.permute.xlu0 %1888
        %1891 = vrot.lane.b32.xlu0 %v1852, 80
        %v1892 = vpop.permute.xlu0 %1891
        %1894 = vrot.lane.b32.xlu0 %v1790, 96
        %v1895 = vpop.permute.xlu0 %1894
        %1897 = vrot.lane.b32.xlu0 %v1856, 112
        %v1898 = vpop.permute.xlu0 %1897
        %v1901 = vsel %vm433, %v1763, %v1859
        %v1903 = vsel %vm437, %v1901, %v1862
        %v1905 = vsel %vm440, %v1903, %v1865
        %v1907 = vsel %vm443, %v1905, %v1868
        %v1909 = vsel %vm446, %v1907, %v1871
        %v1911 = vsel %vm449, %v1909, %v1874
        %v1913 = vsel %vm452, %v1911, %v1877
        %v1916 = vsel %vm433, %v1779, %v1880
        %v1918 = vsel %vm437, %v1916, %v1883
        %v1920 = vsel %vm440, %v1918, %v1886
        %v1922 = vsel %vm443, %v1920, %v1889
        %v1924 = vsel %vm446, %v1922, %v1892
        %v1926 = vsel %vm449, %v1924, %v1895
        %v1928 = vsel %vm452, %v1926, %v1898
        %v1931 = vunpack.c.l.b16 %v1913
        %v1932 = vunpack.c.l.b16 %v1928
        %v1933 = vpack.c.b16 %v1932, %v1931
        %1935 = vst [vmem:[#allocation2 + $0x18] sm:$0x33] %v1933
        %1936 = vrot.lane.b32.xlu0 %v1699, 127
        %v1937 = vpop.permute.xlu0 %1936
        %1938 = vrot.lane.b32.xlu0 %v1702, 127
        %v1939 = vpop.permute.xlu0 %1938
        %1940 = vrot.lane.b32.xlu0 %v1705, 127
        %v1941 = vpop.permute.xlu0 %1940
        %1942 = vrot.lane.b32.xlu0 %v1708, 127
        %v1943 = vpop.permute.xlu0 %1942
        %v1946 = vpack.i.b16 %v1939, %v1937
        %v1948 = vshrl.u32 %v1937, 16
        %v1949 = vshrl.u32 %v1939, 16
        %v1950 = vpack.i.b16 %v1949, %v1948
        %v1954 = vpack.i.b16 %v1943, %v1941
        %v1956 = vshrl.u32 %v1941, 16
        %v1957 = vshrl.u32 %v1943, 16
        %v1958 = vpack.i.b16 %v1957, %v1956
        %v1960 = vcombine.high %v1946, %v254
        %v1962 = vunpack.c.l.s4 1983009808
        %v1963 = vunpack.c.0.s8 %v1962
        %v1964 = vlaneseq
        %v1965 = vshrl.u32 %v1964, 7
        %v1966 = vsub.s32 %v1963, %v1965
        %v1967 = vrot.slane %v1946, %v1966
        %v1969 = vunpack.c.l.s4 1983009808
        %v1970 = vunpack.c.0.s8 %v1969
        %v1971 = vlaneseq
        %v1972 = vshrl.u32 %v1971, 7
        %v1973 = vsub.s32 %v1970, %v1972
        %v1974 = vrot.slane %v1960, %v1973
        %v1975 = vcombine.high %v1954, %v254
        %v1977 = vunpack.c.l.s4 1983009808
        %v1978 = vunpack.c.0.s8 %v1977
        %v1979 = vlaneseq
        %v1980 = vshrl.u32 %v1979, 7
        %v1981 = vsub.s32 %v1978, %v1980
        %v1982 = vrot.slane %v1954, %v1981
        %v1984 = vunpack.c.l.s4 1983009808
        %v1985 = vunpack.c.0.s8 %v1984
        %v1986 = vlaneseq
        %v1987 = vshrl.u32 %v1986, 7
        %v1988 = vsub.s32 %v1985, %v1987
        %v1989 = vrot.slane %v1975, %v1988
        %v1990 = vcombine.low %v1967, %v1982
        %v1991 = vcombine.high %v1967, %v1982
        %v1993 = vunpack.c.l.s4 1934713408
        %v1994 = vunpack.c.0.s8 %v1993
        %v1995 = vlaneseq
        %v1996 = vshrl.u32 %v1995, 7
        %v1997 = vsub.s32 %v1994, %v1996
        %v1998 = vrot.slane %v1990, %v1997
        %v2000 = vunpack.c.l.s4 1934713408
        %v2001 = vunpack.c.0.s8 %v2000
        %v2002 = vlaneseq
        %v2003 = vshrl.u32 %v2002, 7
        %v2004 = vsub.s32 %v2001, %v2003
        %v2005 = vrot.slane %v1991, %v2004
        %v2006 = vcombine.low %v1974, %v1989
        %v2007 = vcombine.high %v1974, %v1989
        %v2009 = vunpack.c.l.s4 1934713408
        %v2010 = vunpack.c.0.s8 %v2009
        %v2011 = vlaneseq
        %v2012 = vshrl.u32 %v2011, 7
        %v2013 = vsub.s32 %v2010, %v2012
        %v2014 = vrot.slane %v2006, %v2013
        %v2016 = vunpack.c.l.s4 1934713408
        %v2017 = vunpack.c.0.s8 %v2016
        %v2018 = vlaneseq
        %v2019 = vshrl.u32 %v2018, 7
        %v2020 = vsub.s32 %v2017, %v2019
        %v2021 = vrot.slane %v2007, %v2020
        %v2022 = vcombine.high %v1998, 0
        %v2023 = vcombine.high %v2005, 0
        %v2024 = vcombine.high %v2014, 0
        %v2025 = vcombine.high %v2021, 0
        %v2026 = vcombine.high %v1950, %v257
        %v2028 = vunpack.c.l.s4 1983009808
        %v2029 = vunpack.c.0.s8 %v2028
        %v2030 = vlaneseq
        %v2031 = vshrl.u32 %v2030, 7
        %v2032 = vsub.s32 %v2029, %v2031
        %v2033 = vrot.slane %v1950, %v2032
        %v2035 = vunpack.c.l.s4 1983009808
        %v2036 = vunpack.c.0.s8 %v2035
        %v2037 = vlaneseq
        %v2038 = vshrl.u32 %v2037, 7
        %v2039 = vsub.s32 %v2036, %v2038
        %v2040 = vrot.slane %v2026, %v2039
        %v2041 = vcombine.high %v1958, %v257
        %v2043 = vunpack.c.l.s4 1983009808
        %v2044 = vunpack.c.0.s8 %v2043
        %v2045 = vlaneseq
        %v2046 = vshrl.u32 %v2045, 7
        %v2047 = vsub.s32 %v2044, %v2046
        %v2048 = vrot.slane %v1958, %v2047
        %v2050 = vunpack.c.l.s4 1983009808
        %v2051 = vunpack.c.0.s8 %v2050
        %v2052 = vlaneseq
        %v2053 = vshrl.u32 %v2052, 7
        %v2054 = vsub.s32 %v2051, %v2053
        %v2055 = vrot.slane %v2041, %v2054
        %v2056 = vcombine.low %v2033, %v2048
        %v2057 = vcombine.high %v2033, %v2048
        %v2059 = vunpack.c.l.s4 1934713408
        %v2060 = vunpack.c.0.s8 %v2059
        %v2061 = vlaneseq
        %v2062 = vshrl.u32 %v2061, 7
        %v2063 = vsub.s32 %v2060, %v2062
        %v2064 = vrot.slane %v2056, %v2063
        %v2066 = vunpack.c.l.s4 1934713408
        %v2067 = vunpack.c.0.s8 %v2066
        %v2068 = vlaneseq
        %v2069 = vshrl.u32 %v2068, 7
        %v2070 = vsub.s32 %v2067, %v2069
        %v2071 = vrot.slane %v2057, %v2070
        %v2072 = vcombine.low %v2040, %v2055
        %v2073 = vcombine.high %v2040, %v2055
        %v2075 = vunpack.c.l.s4 1934713408
        %v2076 = vunpack.c.0.s8 %v2075
        %v2077 = vlaneseq
        %v2078 = vshrl.u32 %v2077, 7
        %v2079 = vsub.s32 %v2076, %v2078
        %v2080 = vrot.slane %v2072, %v2079
        %v2082 = vunpack.c.l.s4 1934713408
        %v2083 = vunpack.c.0.s8 %v2082
        %v2084 = vlaneseq
        %v2085 = vshrl.u32 %v2084, 7
        %v2086 = vsub.s32 %v2083, %v2085
        %v2087 = vrot.slane %v2073, %v2086
        %v2088 = vcombine.high %v2064, 0
        %v2089 = vcombine.high %v2071, 0
        %v2090 = vcombine.high %v2080, 0
        %v2091 = vcombine.high %v2087, 0
        %2093 = vrot.lane.b32.xlu0 %v2064, 16
        %v2094 = vpop.permute.xlu0 %2093
        %2096 = vrot.lane.b32.xlu0 %v2022, 32
        %v2097 = vpop.permute.xlu0 %2096
        %2099 = vrot.lane.b32.xlu0 %v2088, 48
        %v2100 = vpop.permute.xlu0 %2099
        %2102 = vrot.lane.b32.xlu0 %v2005, 64
        %v2103 = vpop.permute.xlu0 %2102
        %2105 = vrot.lane.b32.xlu0 %v2071, 80
        %v2106 = vpop.permute.xlu0 %2105
        %2108 = vrot.lane.b32.xlu0 %v2023, 96
        %v2109 = vpop.permute.xlu0 %2108
        %2111 = vrot.lane.b32.xlu0 %v2089, 112
        %v2112 = vpop.permute.xlu0 %2111
        %2114 = vrot.lane.b32.xlu0 %v2080, 16
        %v2115 = vpop.permute.xlu0 %2114
        %2117 = vrot.lane.b32.xlu0 %v2024, 32
        %v2118 = vpop.permute.xlu0 %2117
        %2120 = vrot.lane.b32.xlu0 %v2090, 48
        %v2121 = vpop.permute.xlu0 %2120
        %2123 = vrot.lane.b32.xlu0 %v2021, 64
        %v2124 = vpop.permute.xlu0 %2123
        %2126 = vrot.lane.b32.xlu0 %v2087, 80
        %v2127 = vpop.permute.xlu0 %2126
        %2129 = vrot.lane.b32.xlu0 %v2025, 96
        %v2130 = vpop.permute.xlu0 %2129
        %2132 = vrot.lane.b32.xlu0 %v2091, 112
        %v2133 = vpop.permute.xlu0 %2132
        %v2136 = vsel %vm433, %v1998, %v2094
        %v2138 = vsel %vm437, %v2136, %v2097
        %v2140 = vsel %vm440, %v2138, %v2100
        %v2142 = vsel %vm443, %v2140, %v2103
        %v2144 = vsel %vm446, %v2142, %v2106
        %v2146 = vsel %vm449, %v2144, %v2109
        %v2148 = vsel %vm452, %v2146, %v2112
        %v2151 = vsel %vm433, %v2014, %v2115
        %v2153 = vsel %vm437, %v2151, %v2118
        %v2155 = vsel %vm440, %v2153, %v2121
        %v2157 = vsel %vm443, %v2155, %v2124
        %v2159 = vsel %vm446, %v2157, %v2127
        %v2161 = vsel %vm449, %v2159, %v2130
        %v2163 = vsel %vm452, %v2161, %v2133
        %v2166 = vunpack.c.l.b16 %v2148
        %v2167 = vunpack.c.l.b16 %v2163
        %v2168 = vpack.c.b16 %v2167, %v2166
        %v2169 = vrot.slane %v2168, 6
        %2171 = vst [vmem:[#allocation2 + $0x18] sm:$0xcc] %v2169
        %2172 = vrot.lane.b32.xlu0 %v1699, 126
        %v2173 = vpop.permute.xlu0 %2172
        %2174 = vrot.lane.b32.xlu0 %v1702, 126
        %v2175 = vpop.permute.xlu0 %2174
        %2176 = vrot.lane.b32.xlu0 %v1705, 126
        %v2177 = vpop.permute.xlu0 %2176
        %2178 = vrot.lane.b32.xlu0 %v1708, 126
        %v2179 = vpop.permute.xlu0 %2178
        %v2182 = vpack.i.b16 %v2175, %v2173
        %v2184 = vshrl.u32 %v2173, 16
        %v2185 = vshrl.u32 %v2175, 16
        %v2186 = vpack.i.b16 %v2185, %v2184
        %v2190 = vpack.i.b16 %v2179, %v2177
        %v2192 = vshrl.u32 %v2177, 16
        %v2193 = vshrl.u32 %v2179, 16
        %v2194 = vpack.i.b16 %v2193, %v2192
        %v2196 = vcombine.high %v2182, %v254
        %v2198 = vunpack.c.l.s4 1983009808
        %v2199 = vunpack.c.0.s8 %v2198
        %v2200 = vlaneseq
        %v2201 = vshrl.u32 %v2200, 7
        %v2202 = vsub.s32 %v2199, %v2201
        %v2203 = vrot.slane %v2182, %v2202
        %v2205 = vunpack.c.l.s4 1983009808
        %v2206 = vunpack.c.0.s8 %v2205
        %v2207 = vlaneseq
        %v2208 = vshrl.u32 %v2207, 7
        %v2209 = vsub.s32 %v2206, %v2208
        %v2210 = vrot.slane %v2196, %v2209
        %v2211 = vcombine.high %v2190, %v254
        %v2213 = vunpack.c.l.s4 1983009808
        %v2214 = vunpack.c.0.s8 %v2213
        %v2215 = vlaneseq
        %v2216 = vshrl.u32 %v2215, 7
        %v2217 = vsub.s32 %v2214, %v2216
        %v2218 = vrot.slane %v2190, %v2217
        %v2220 = vunpack.c.l.s4 1983009808
        %v2221 = vunpack.c.0.s8 %v2220
        %v2222 = vlaneseq
        %v2223 = vshrl.u32 %v2222, 7
        %v2224 = vsub.s32 %v2221, %v2223
        %v2225 = vrot.slane %v2211, %v2224
        %v2226 = vcombine.low %v2203, %v2218
        %v2227 = vcombine.high %v2203, %v2218
        %v2229 = vunpack.c.l.s4 1934713408
        %v2230 = vunpack.c.0.s8 %v2229
        %v2231 = vlaneseq
        %v2232 = vshrl.u32 %v2231, 7
        %v2233 = vsub.s32 %v2230, %v2232
        %v2234 = vrot.slane %v2226, %v2233
        %v2236 = vunpack.c.l.s4 1934713408
        %v2237 = vunpack.c.0.s8 %v2236
        %v2238 = vlaneseq
        %v2239 = vshrl.u32 %v2238, 7
        %v2240 = vsub.s32 %v2237, %v2239
        %v2241 = vrot.slane %v2227, %v2240
        %v2242 = vcombine.low %v2210, %v2225
        %v2243 = vcombine.high %v2210, %v2225
        %v2245 = vunpack.c.l.s4 1934713408
        %v2246 = vunpack.c.0.s8 %v2245
        %v2247 = vlaneseq
        %v2248 = vshrl.u32 %v2247, 7
        %v2249 = vsub.s32 %v2246, %v2248
        %v2250 = vrot.slane %v2242, %v2249
        %v2252 = vunpack.c.l.s4 1934713408
        %v2253 = vunpack.c.0.s8 %v2252
        %v2254 = vlaneseq
        %v2255 = vshrl.u32 %v2254, 7
        %v2256 = vsub.s32 %v2253, %v2255
        %v2257 = vrot.slane %v2243, %v2256
        %v2258 = vcombine.high %v2234, 0
        %v2259 = vcombine.high %v2241, 0
        %v2260 = vcombine.high %v2250, 0
        %v2261 = vcombine.high %v2257, 0
        %v2262 = vcombine.high %v2186, %v257
        %v2264 = vunpack.c.l.s4 1983009808
        %v2265 = vunpack.c.0.s8 %v2264
        %v2266 = vlaneseq
        %v2267 = vshrl.u32 %v2266, 7
        %v2268 = vsub.s32 %v2265, %v2267
        %v2269 = vrot.slane %v2186, %v2268
        %v2271 = vunpack.c.l.s4 1983009808
        %v2272 = vunpack.c.0.s8 %v2271
        %v2273 = vlaneseq
        %v2274 = vshrl.u32 %v2273, 7
        %v2275 = vsub.s32 %v2272, %v2274
        %v2276 = vrot.slane %v2262, %v2275
        %v2277 = vcombine.high %v2194, %v257
        %v2279 = vunpack.c.l.s4 1983009808
        %v2280 = vunpack.c.0.s8 %v2279
        %v2281 = vlaneseq
        %v2282 = vshrl.u32 %v2281, 7
        %v2283 = vsub.s32 %v2280, %v2282
        %v2284 = vrot.slane %v2194, %v2283
        %v2286 = vunpack.c.l.s4 1983009808
        %v2287 = vunpack.c.0.s8 %v2286
        %v2288 = vlaneseq
        %v2289 = vshrl.u32 %v2288, 7
        %v2290 = vsub.s32 %v2287, %v2289
        %v2291 = vrot.slane %v2277, %v2290
        %v2292 = vcombine.low %v2269, %v2284
        %v2293 = vcombine.high %v2269, %v2284
        %v2295 = vunpack.c.l.s4 1934713408
        %v2296 = vunpack.c.0.s8 %v2295
        %v2297 = vlaneseq
        %v2298 = vshrl.u32 %v2297, 7
        %v2299 = vsub.s32 %v2296, %v2298
        %v2300 = vrot.slane %v2292, %v2299
        %v2302 = vunpack.c.l.s4 1934713408
        %v2303 = vunpack.c.0.s8 %v2302
        %v2304 = vlaneseq
        %v2305 = vshrl.u32 %v2304, 7
        %v2306 = vsub.s32 %v2303, %v2305
        %v2307 = vrot.slane %v2293, %v2306
        %v2308 = vcombine.low %v2276, %v2291
        %v2309 = vcombine.high %v2276, %v2291
        %v2311 = vunpack.c.l.s4 1934713408
        %v2312 = vunpack.c.0.s8 %v2311
        %v2313 = vlaneseq
        %v2314 = vshrl.u32 %v2313, 7
        %v2315 = vsub.s32 %v2312, %v2314
        %v2316 = vrot.slane %v2308, %v2315
        %v2318 = vunpack.c.l.s4 1934713408
        %v2319 = vunpack.c.0.s8 %v2318
        %v2320 = vlaneseq
        %v2321 = vshrl.u32 %v2320, 7
        %v2322 = vsub.s32 %v2319, %v2321
        %v2323 = vrot.slane %v2309, %v2322
        %v2324 = vcombine.high %v2300, 0
        %v2325 = vcombine.high %v2307, 0
        %v2326 = vcombine.high %v2316, 0
        %v2327 = vcombine.high %v2323, 0
        %2329 = vrot.lane.b32.xlu0 %v2300, 16
        %v2330 = vpop.permute.xlu0 %2329
        %2332 = vrot.lane.b32.xlu0 %v2258, 32
        %v2333 = vpop.permute.xlu0 %2332
        %2335 = vrot.lane.b32.xlu0 %v2324, 48
        %v2336 = vpop.permute.xlu0 %2335
        %2338 = vrot.lane.b32.xlu0 %v2241, 64
        %v2339 = vpop.permute.xlu0 %2338
        %2341 = vrot.lane.b32.xlu0 %v2307, 80
        %v2342 = vpop.permute.xlu0 %2341
        %2344 = vrot.lane.b32.xlu0 %v2259, 96
        %v2345 = vpop.permute.xlu0 %2344
        %2347 = vrot.lane.b32.xlu0 %v2325, 112
        %v2348 = vpop.permute.xlu0 %2347
        %2350 = vrot.lane.b32.xlu0 %v2316, 16
        %v2351 = vpop.permute.xlu0 %2350
        %2353 = vrot.lane.b32.xlu0 %v2260, 32
        %v2354 = vpop.permute.xlu0 %2353
        %2356 = vrot.lane.b32.xlu0 %v2326, 48
        %v2357 = vpop.permute.xlu0 %2356
        %2359 = vrot.lane.b32.xlu0 %v2257, 64
        %v2360 = vpop.permute.xlu0 %2359
        %2362 = vrot.lane.b32.xlu0 %v2323, 80
        %v2363 = vpop.permute.xlu0 %2362
        %2365 = vrot.lane.b32.xlu0 %v2261, 96
        %v2366 = vpop.permute.xlu0 %2365
        %2368 = vrot.lane.b32.xlu0 %v2327, 112
        %v2369 = vpop.permute.xlu0 %2368
        %v2372 = vsel %vm433, %v2234, %v2330
        %v2374 = vsel %vm437, %v2372, %v2333
        %v2376 = vsel %vm440, %v2374, %v2336
        %v2378 = vsel %vm443, %v2376, %v2339
        %v2380 = vsel %vm446, %v2378, %v2342
        %v2382 = vsel %vm449, %v2380, %v2345
        %v2384 = vsel %vm452, %v2382, %v2348
        %v2387 = vsel %vm433, %v2250, %v2351
        %v2389 = vsel %vm437, %v2387, %v2354
        %v2391 = vsel %vm440, %v2389, %v2357
        %v2393 = vsel %vm443, %v2391, %v2360
        %v2395 = vsel %vm446, %v2393, %v2363
        %v2397 = vsel %vm449, %v2395, %v2366
        %v2399 = vsel %vm452, %v2397, %v2369
        %v2402 = vunpack.c.l.b16 %v2384
        %v2403 = vunpack.c.l.b16 %v2399
        %v2404 = vpack.c.b16 %v2403, %v2402
        %2406 = vst [vmem:[#allocation2 + $0x20] sm:$0x33] %v2404
        %v2407 = vld [vmem:[%s2] sm:$0x3]
        %v2408 = vld [vmem:[#allocation2] sm:$0xff]
        %v2409 = vld [vmem:[#allocation2 + $0x8] sm:$0xff]
        %v2410 = vld [vmem:[#allocation2 + $0x10] sm:$0xff]
        %v2411 = vld [vmem:[#allocation2 + $0x18] sm:$0xff]
        %v2412 = vld [vmem:[#allocation2 + $0x20] sm:$0x33]
        %v2418 = vunpack.c.l.b16 %v2408
        %v2419 = vunpack.c.h.b16 %v2408
        %v2420 = vunpack.c.l.b16 %v2409
        %v2421 = vunpack.c.h.b16 %v2409
        %v2422 = vunpack.c.l.b16 %v2410
        %v2423 = vunpack.c.h.b16 %v2410
        %v2424 = vunpack.c.l.b16 %v2411
        %v2425 = vunpack.c.h.b16 %v2411
        %v2426 = vunpack.c.l.b16 %v2412
        %v2427 = vunpack.c.h.b16 %v2412
        %v2428 = vpack.c.b16 %v2420, %v2418
        %v2429 = vpack.c.b16 %v2421, %v2419
        %v2430 = vpack.c.b16 %v2424, %v2422
        %v2431 = vpack.c.b16 %v2425, %v2423
        %v2432 = vpack.c.b16 %v2426, %v2426
        %v2433 = vpack.c.b16 %v2427, %v2427
        %vm2438 = vcmask 293888
        %v2440 = vsel %vm2438, %v2407, 0
        %vm2442 = vcmask 1041408
        %v2444 = vsel %vm2442, %v2432, 0
        %v2447 = vsel %vm2442, %v2433, 0
        %2449 = vmatprep.subr.bf16.mxu0 %v2429
        %2450 = vmatpush1.bf16.msra.mxu0 %v2428
        %2451 = vmatprep.subr.bf16.mxu0 %v2431
        %2452 = vmatpush1.bf16.msra.mxu0 %v2430
        %2453 = vmatprep.subr.bf16.mxu0 %v2447
        %2454 = vmatpush1.bf16.msra.mxu0 %v2444
        %2455 = vmatprep.subr.bf16.mxu0 0
        %2456 = vmatpush1.bf16.msra.mxu0 0
        %2457 = vmatprep.subr.bf16.mxu0 0
        %2458 = vmatpush1.bf16.msra.mxu0 0
        %2459 = vmatprep.subr.bf16.mxu0 0
        %2460 = vmatpush1.bf16.msra.mxu0 0
        %2461 = vmatprep.subr.bf16.mxu0 0
        %2462 = vmatpush1.bf16.msra.mxu0 0
        %2463 = vmatprep.subr.bf16.mxu0 0
        %2464 = vmatpush1.bf16.msra.mxu0 0
        %2465 = vmatprep.subr.bf16.mxu0 0
        %2466 = vmatpush1.bf16.msra.mxu0 0
        %2467 = vmatprep.subr.bf16.mxu0 0
        %2468 = vmatpush1.bf16.msra.mxu0 0
        %2469 = vmatprep.subr.bf16.mxu0 0
        %2470 = vmatpush1.bf16.msra.mxu0 0
        %2471 = vmatprep.subr.bf16.mxu0 0
        %2472 = vmatpush1.bf16.msra.mxu0 0
        %2473 = vmatprep.subr.bf16.mxu0 0
        %2474 = vmatpush1.bf16.msra.mxu0 0
        %2475 = vmatprep.subr.bf16.mxu0 0
        %2476 = vmatpush1.bf16.msra.mxu0 0
        %2477 = vmatprep.subr.bf16.mxu0 0
        %2478 = vmatpush1.bf16.msra.mxu0 0
        %2479 = vmatprep.subr.bf16.mxu0 0
        %2480 = vmatpush1.bf16.msra.mxu0 0
        %2481 = vmatprep.mubr.bf16.mxu0 0
        %2482 = vmatmul.mubr.bf16.gmra.mrb[0].mxu0 %v2440
        %v2483 = vpop.f32.mrb[0].mxu0
        %v2484 = vadd.f32 0.0, %v2483
        %v2485 = vpop.f32.mrb[0].mxu0
        %v2486 = vadd.f32 0.0, %v2485
        %v2487 = vpop.f32.mrb[0].mxu0
        %v2488 = vpop.f32.mrb[0].mxu0
        %2489 = vdwg.mxu0
        %vm2490 = vcmask 1043456
        %v2491 = vsel %vm2490, %v2484, 0.0
        %v2492 = vsel %vm2490, %v2486, 0.0
        %v2493 = vadd.f32 %v2491, %v2492
        %2494 = vadd.xlane.f32.xlu0 %v2493
        %v2495 = vpop.xlane.xlu0 %2494
        %v2496 = vmul.f32 %v2484, %v2484
        %v2497 = vmul.f32 %v2486, %v2486
        %v2498 = vsel %vm2490, %v2496, 0.0
        %v2499 = vsel %vm2490, %v2497, 0.0
        %v2500 = vadd.f32 %v2498, %v2499
        %2501 = vadd.xlane.f32.xlu0 %v2500
        %v2502 = vpop.xlane.xlu0 %2501
        %v2503 = vmul.f32 %v2495, 0.00390625
        %v2504 = vmul.f32 %v2502, 0.00390625
        %v2505 = vmul.f32 %v2503, %v2503
        %v2506 = vsub.f32 %v2504, %v2505
        %v2507 = vmax.f32 %v2506, 0.0
        %v2508 = vsub.f32 %v2484, %v2503
        %v2509 = vsub.f32 %v2486, %v2503
        %v2510 = vadd.f32 %v2507, 1e-05
        %v2511 = vrsqrt.pop %v2510
        %v2512 = vmul.f32 %v2508, %v2511
        %v2513 = vmul.f32 %v2509, %v2511
        %v2514 = vmax.f32 %v2512, 0.0
        %v2515 = vmax.f32 %v2513, 0.0
        %v2516 = vpack.c.bf16 %v2514, %v2514
        %v2517 = vpack.c.bf16 %v2515, %v2515
        %2519 = vrot.lane.b32.xlu0 %v2516, 112
        %v2520 = vpop.permute.xlu0 %2519
        %2522 = vrot.lane.b32.xlu0 %v2516, 96
        %v2523 = vpop.permute.xlu0 %2522
        %2525 = vrot.lane.b32.xlu0 %v2516, 80
        %v2526 = vpop.permute.xlu0 %2525
        %2528 = vrot.lane.b32.xlu0 %v2516, 64
        %v2529 = vpop.permute.xlu0 %2528
        %2531 = vrot.lane.b32.xlu0 %v2516, 48
        %v2532 = vpop.permute.xlu0 %2531
        %2534 = vrot.lane.b32.xlu0 %v2516, 32
        %v2535 = vpop.permute.xlu0 %2534
        %2537 = vrot.lane.b32.xlu0 %v2516, 16
        %v2538 = vpop.permute.xlu0 %2537
        %2541 = vrot.lane.b32.xlu0 %v2517, 112
        %v2542 = vpop.permute.xlu0 %2541
        %2544 = vrot.lane.b32.xlu0 %v2517, 96
        %v2545 = vpop.permute.xlu0 %2544
        %2547 = vrot.lane.b32.xlu0 %v2517, 80
        %v2548 = vpop.permute.xlu0 %2547
        %2550 = vrot.lane.b32.xlu0 %v2517, 64
        %v2551 = vpop.permute.xlu0 %2550
        %2553 = vrot.lane.b32.xlu0 %v2517, 48
        %v2554 = vpop.permute.xlu0 %2553
        %2556 = vrot.lane.b32.xlu0 %v2517, 32
        %v2557 = vpop.permute.xlu0 %2556
        %2559 = vrot.lane.b32.xlu0 %v2517, 16
        %v2560 = vpop.permute.xlu0 %2559
        %v2562 = vcombine.low %v2516, %v2529
        %v2564 = vunpack.c.l.s4 1983009808
        %v2565 = vunpack.c.0.s8 %v2564
        %v2566 = vlaneseq
        %v2567 = vshrl.u32 %v2566, 7
        %v2568 = vsub.s32 %v2565, %v2567
        %v2569 = vrot.slane %v2562, %v2568
        %v2570 = vcombine.low %v2523, %v2535
        %v2572 = vunpack.c.l.s4 1983009808
        %v2573 = vunpack.c.0.s8 %v2572
        %v2574 = vlaneseq
        %v2575 = vshrl.u32 %v2574, 7
        %v2576 = vsub.s32 %v2573, %v2575
        %v2577 = vrot.slane %v2570, %v2576
        %v2578 = vcombine.low %v2517, %v2551
        %v2580 = vunpack.c.l.s4 1983009808
        %v2581 = vunpack.c.0.s8 %v2580
        %v2582 = vlaneseq
        %v2583 = vshrl.u32 %v2582, 7
        %v2584 = vsub.s32 %v2581, %v2583
        %v2585 = vrot.slane %v2578, %v2584
        %v2586 = vcombine.low %v2545, %v2557
        %v2588 = vunpack.c.l.s4 1983009808
        %v2589 = vunpack.c.0.s8 %v2588
        %v2590 = vlaneseq
        %v2591 = vshrl.u32 %v2590, 7
        %v2592 = vsub.s32 %v2589, %v2591
        %v2593 = vrot.slane %v2586, %v2592
        %v2594 = vcombine.low %v2569, %v2577
        %v2596 = vunpack.c.l.s4 1934713408
        %v2597 = vunpack.c.0.s8 %v2596
        %v2598 = vlaneseq
        %v2599 = vshrl.u32 %v2598, 7
        %v2600 = vsub.s32 %v2597, %v2599
        %v2601 = vrot.slane %v2594, %v2600
        %v2602 = vcombine.low %v2585, %v2593
        %v2604 = vunpack.c.l.s4 1934713408
        %v2605 = vunpack.c.0.s8 %v2604
        %v2606 = vlaneseq
        %v2607 = vshrl.u32 %v2606, 7
        %v2608 = vsub.s32 %v2605, %v2607
        %v2609 = vrot.slane %v2602, %v2608
        %v2610 = vcombine.low %v2601, %v2609
        %v2611 = vcombine.high %v2601, %v2609
        %v2612 = vcombine.low %v2520, %v2532
        %v2614 = vunpack.c.l.s4 1983009808
        %v2615 = vunpack.c.0.s8 %v2614
        %v2616 = vlaneseq
        %v2617 = vshrl.u32 %v2616, 7
        %v2618 = vsub.s32 %v2615, %v2617
        %v2619 = vrot.slane %v2612, %v2618
        %v2620 = vcombine.low %v2526, %v2538
        %v2622 = vunpack.c.l.s4 1983009808
        %v2623 = vunpack.c.0.s8 %v2622
        %v2624 = vlaneseq
        %v2625 = vshrl.u32 %v2624, 7
        %v2626 = vsub.s32 %v2623, %v2625
        %v2627 = vrot.slane %v2620, %v2626
        %v2628 = vcombine.low %v2542, %v2554
        %v2630 = vunpack.c.l.s4 1983009808
        %v2631 = vunpack.c.0.s8 %v2630
        %v2632 = vlaneseq
        %v2633 = vshrl.u32 %v2632, 7
        %v2634 = vsub.s32 %v2631, %v2633
        %v2635 = vrot.slane %v2628, %v2634
        %v2636 = vcombine.low %v2548, %v2560
        %v2638 = vunpack.c.l.s4 1983009808
        %v2639 = vunpack.c.0.s8 %v2638
        %v2640 = vlaneseq
        %v2641 = vshrl.u32 %v2640, 7
        %v2642 = vsub.s32 %v2639, %v2641
        %v2643 = vrot.slane %v2636, %v2642
        %v2644 = vcombine.low %v2619, %v2627
        %v2646 = vunpack.c.l.s4 1934713408
        %v2647 = vunpack.c.0.s8 %v2646
        %v2648 = vlaneseq
        %v2649 = vshrl.u32 %v2648, 7
        %v2650 = vsub.s32 %v2647, %v2649
        %v2651 = vrot.slane %v2644, %v2650
        %v2652 = vcombine.low %v2635, %v2643
        %v2654 = vunpack.c.l.s4 1934713408
        %v2655 = vunpack.c.0.s8 %v2654
        %v2656 = vlaneseq
        %v2657 = vshrl.u32 %v2656, 7
        %v2658 = vsub.s32 %v2655, %v2657
        %v2659 = vrot.slane %v2652, %v2658
        %v2660 = vcombine.low %v2651, %v2659
        %v2661 = vcombine.high %v2651, %v2659
        %v2664 = vpack.i.b16 %v2660, %v2610
        %v2665 = vshrl.u32 %v2610, 16
        %v2666 = vshrl.u32 %v2660, 16
        %v2667 = vpack.i.b16 %v2666, %v2665
        %v2670 = vpack.i.b16 %v2661, %v2611
        %v2671 = vshrl.u32 %v2611, 16
        %v2672 = vshrl.u32 %v2661, 16
        %v2673 = vpack.i.b16 %v2672, %v2671
        %v2675 = vshrl.u32 %v2664, 16
        %v2678 = vshrl.u32 %v2667, 16
        %v2681 = vshrl.u32 %v2670, 16
        %v2684 = vshrl.u32 %v2673, 16
        %v2690 = vrot.slane %v2675, 7
        %v2691 = vshll.u32 %v2664, 16
        %v2693 = vor.u32 %v2690, %v2691
        %v2694 = vrot.slane %v2678, 7
        %v2695 = vshll.u32 %v2667, 16
        %v2697 = vor.u32 %v2694, %v2695
        %v2698 = vrot.slane %v2681, 7
        %v2699 = vshll.u32 %v2670, 16
        %v2701 = vor.u32 %v2698, %v2699
        %v2702 = vrot.slane %v2684, 7
        %v2703 = vshll.u32 %v2673, 16
        %v2705 = vor.u32 %v2702, %v2703
        %v2714 = vrot.slane %v2691, 7
        %v2715 = vrot.slane %v2695, 7
        %v2716 = vrot.slane %v2699, 7
        %v2717 = vrot.slane %v2703, 7
        %vm2722 = vcmask 1040384
        %vm2723 = vsmask.f32 256
        %vm2724 = vmand %vm2722, %vm2723
        %v2725 = vsel %vm2724, %v2675, %v2693
        %v2726 = vsel %vm2724, %v2678, %v2697
        %v2727 = vsel %vm2724, %v2681, %v2701
        %v2728 = vsel %vm2724, %v2684, %v2705
        %v2729 = vsel %vm2724, %v2690, %v2714
        %v2730 = vsel %vm2724, %v2694, %v2715
        %v2731 = vsel %vm2724, %v2698, %v2716
        %v2732 = vsel %vm2724, %v2702, %v2717
        %v2741 = vunpack.c.l.b16 %v2725
        %v2742 = vunpack.c.h.b16 %v2725
        %v2743 = vunpack.c.l.b16 %v2729
        %v2744 = vunpack.c.l.b16 %v2726
        %v2745 = vunpack.c.h.b16 %v2726
        %v2746 = vunpack.c.l.b16 %v2730
        %v2747 = vunpack.c.l.b16 %v2727
        %v2748 = vunpack.c.h.b16 %v2727
        %v2749 = vunpack.c.l.b16 %v2731
        %v2750 = vunpack.c.l.b16 %v2728
        %v2751 = vunpack.c.h.b16 %v2728
        %v2752 = vunpack.c.l.b16 %v2732
        %v2753 = vpack.c.b16 %v2741, %v2741
        %v2754 = vpack.c.b16 %v2742, %v2742
        %v2755 = vpack.c.b16 %v2743, %v2743
        %v2756 = vpack.c.b16 %v2744, %v2744
        %v2757 = vpack.c.b16 %v2745, %v2745
        %v2758 = vpack.c.b16 %v2746, %v2746
        %v2759 = vpack.c.b16 %v2747, %v2747
        %v2760 = vpack.c.b16 %v2748, %v2748
        %v2761 = vpack.c.b16 %v2749, %v2749
        %v2762 = vpack.c.b16 %v2750, %v2750
        %v2763 = vpack.c.b16 %v2751, %v2751
        %v2764 = vpack.c.b16 %v2752, %v2752
        %2765 = vrot.lane.b32.xlu0 %v2753, 1
        %v2766 = vpop.permute.xlu0 %2765
        %2767 = vrot.lane.b32.xlu0 %v2754, 1
        %v2768 = vpop.permute.xlu0 %2767
        %2769 = vrot.lane.b32.xlu0 %v2755, 1
        %v2770 = vpop.permute.xlu0 %2769
        %2771 = vrot.lane.b32.xlu0 %v2756, 1
        %v2772 = vpop.permute.xlu0 %2771
        %2773 = vrot.lane.b32.xlu0 %v2757, 1
        %v2774 = vpop.permute.xlu0 %2773
        %2775 = vrot.lane.b32.xlu0 %v2758, 1
        %v2776 = vpop.permute.xlu0 %2775
        %2777 = vrot.lane.b32.xlu0 %v2759, 1
        %v2778 = vpop.permute.xlu0 %2777
        %2779 = vrot.lane.b32.xlu0 %v2760, 1
        %v2780 = vpop.permute.xlu0 %2779
        %2781 = vrot.lane.b32.xlu0 %v2761, 1
        %v2782 = vpop.permute.xlu0 %2781
        %2783 = vrot.lane.b32.xlu0 %v2762, 1
        %v2784 = vpop.permute.xlu0 %2783
        %2785 = vrot.lane.b32.xlu0 %v2763, 1
        %v2786 = vpop.permute.xlu0 %2785
        %2787 = vrot.lane.b32.xlu0 %v2764, 1
        %v2788 = vpop.permute.xlu0 %2787
        %vm2801 = vcmask 134152
        %2802 = vst.msk [vmem:[#allocation3] sm:$0xf] %vm2801, %v2766
        %2803 = vst.msk [vmem:[#allocation3 + $0x4] sm:$0xf] %vm2801, %v2768
        %vm2804 = vcmask 131080
        %2805 = vst.msk [vmem:[#allocation3 + $0x8] sm:$0x1] %vm2804, %v2770
        %2806 = vst.msk [vmem:[#allocation3 + $0xc] sm:$0xf] %vm2801, %v2772
        %2807 = vst.msk [vmem:[#allocation3 + $0x10] sm:$0xf] %vm2801, %v2774
        %2808 = vst.msk [vmem:[#allocation3 + $0x14] sm:$0x1] %vm2804, %v2776
        %2809 = vst.msk [vmem:[#allocation3 + $0x18] sm:$0xf] %vm2801, %v2778
        %2810 = vst.msk [vmem:[#allocation3 + $0x1c] sm:$0xf] %vm2801, %v2780
        %2811 = vst.msk [vmem:[#allocation3 + $0x20] sm:$0x1] %vm2804, %v2782
        %2812 = vst.msk [vmem:[#allocation3 + $0x24] sm:$0xf] %vm2801, %v2784
        %2813 = vst.msk [vmem:[#allocation3 + $0x28] sm:$0xf] %vm2801, %v2786
        %2814 = vst.msk [vmem:[#allocation3 + $0x2c] sm:$0x1] %vm2804, %v2788
        %2815 = vrot.lane.b32.xlu0 %v2753, 127
        %v2816 = vpop.permute.xlu0 %2815
        %2817 = vrot.lane.b32.xlu0 %v2754, 127
        %v2818 = vpop.permute.xlu0 %2817
        %2819 = vrot.lane.b32.xlu0 %v2755, 127
        %v2820 = vpop.permute.xlu0 %2819
        %2821 = vrot.lane.b32.xlu0 %v2756, 127
        %v2822 = vpop.permute.xlu0 %2821
        %2823 = vrot.lane.b32.xlu0 %v2757, 127
        %v2824 = vpop.permute.xlu0 %2823
        %2825 = vrot.lane.b32.xlu0 %v2758, 127
        %v2826 = vpop.permute.xlu0 %2825
        %2827 = vrot.lane.b32.xlu0 %v2759, 127
        %v2828 = vpop.permute.xlu0 %2827
        %2829 = vrot.lane.b32.xlu0 %v2760, 127
        %v2830 = vpop.permute.xlu0 %2829
        %2831 = vrot.lane.b32.xlu0 %v2761, 127
        %v2832 = vpop.permute.xlu0 %2831
        %2833 = vrot.lane.b32.xlu0 %v2762, 127
        %v2834 = vpop.permute.xlu0 %2833
        %2835 = vrot.lane.b32.xlu0 %v2763, 127
        %v2836 = vpop.permute.xlu0 %2835
        %2837 = vrot.lane.b32.xlu0 %v2764, 127
        %v2838 = vpop.permute.xlu0 %2837
        %vm2851 = vcmask 3072
        %2852 = vst.msk [vmem:[#allocation3] sm:$0xf] %vm2851, %v2816
        %2853 = vst.msk [vmem:[#allocation3 + $0x4] sm:$0xf] %vm2851, %v2818
        %vm2854 = vcmask 0
        %2855 = vst.msk [vmem:[#allocation3 + $0x8] sm:$0x1] %vm2854, %v2820
        %2856 = vst.msk [vmem:[#allocation3 + $0xc] sm:$0xf] %vm2851, %v2822
        %2857 = vst.msk [vmem:[#allocation3 + $0x10] sm:$0xf] %vm2851, %v2824
        %2858 = vst.msk [vmem:[#allocation3 + $0x14] sm:$0x1] %vm2854, %v2826
        %2859 = vst.msk [vmem:[#allocation3 + $0x18] sm:$0xf] %vm2851, %v2828
        %2860 = vst.msk [vmem:[#allocation3 + $0x1c] sm:$0xf] %vm2851, %v2830
        %2861 = vst.msk [vmem:[#allocation3 + $0x20] sm:$0x1] %vm2854, %v2832
        %2862 = vst.msk [vmem:[#allocation3 + $0x24] sm:$0xf] %vm2851, %v2834
        %2863 = vst.msk [vmem:[#allocation3 + $0x28] sm:$0xf] %vm2851, %v2836
        %2864 = vst.msk [vmem:[#allocation3 + $0x2c] sm:$0x1] %vm2854, %v2838
        %2865 = vrot.lane.b32.xlu0 %v2753, 3
        %v2866 = vpop.permute.xlu0 %2865
        %2867 = vrot.lane.b32.xlu0 %v2754, 3
        %v2868 = vpop.permute.xlu0 %2867
        %2869 = vrot.lane.b32.xlu0 %v2755, 3
        %v2870 = vpop.permute.xlu0 %2869
        %2871 = vrot.lane.b32.xlu0 %v2756, 3
        %v2872 = vpop.permute.xlu0 %2871
        %2873 = vrot.lane.b32.xlu0 %v2757, 3
        %v2874 = vpop.permute.xlu0 %2873
        %2875 = vrot.lane.b32.xlu0 %v2758, 3
        %v2876 = vpop.permute.xlu0 %2875
        %2877 = vrot.lane.b32.xlu0 %v2759, 3
        %v2878 = vpop.permute.xlu0 %2877
        %2879 = vrot.lane.b32.xlu0 %v2760, 3
        %v2880 = vpop.permute.xlu0 %2879
        %2881 = vrot.lane.b32.xlu0 %v2761, 3
        %v2882 = vpop.permute.xlu0 %2881
        %2883 = vrot.lane.b32.xlu0 %v2762, 3
        %v2884 = vpop.permute.xlu0 %2883
        %2885 = vrot.lane.b32.xlu0 %v2763, 3
        %v2886 = vpop.permute.xlu0 %2885
        %2887 = vrot.lane.b32.xlu0 %v2764, 3
        %v2888 = vpop.permute.xlu0 %2887
        %vm2901 = vcmask 142472
        %2902 = vst.msk [vmem:[#allocation3] sm:$0xf] %vm2901, %v2866
        %2903 = vst.msk [vmem:[#allocation3 + $0x4] sm:$0xf] %vm2901, %v2868
        %vm2904 = vcmask 139400
        %2905 = vst.msk [vmem:[#allocation3 + $0x8] sm:$0x1] %vm2904, %v2870
        %2906 = vst.msk [vmem:[#allocation3 + $0xc] sm:$0xf] %vm2901, %v2872
        %2907 = vst.msk [vmem:[#allocation3 + $0x10] sm:$0xf] %vm2901, %v2874
        %2908 = vst.msk [vmem:[#allocation3 + $0x14] sm:$0x1] %vm2904, %v2876
        %2909 = vst.msk [vmem:[#allocation3 + $0x18] sm:$0xf] %vm2901, %v2878
        %2910 = vst.msk [vmem:[#allocation3 + $0x1c] sm:$0xf] %vm2901, %v2880
        %2911 = vst.msk [vmem:[#allocation3 + $0x20] sm:$0x1] %vm2904, %v2882
        %2912 = vst.msk [vmem:[#allocation3 + $0x24] sm:$0xf] %vm2901, %v2884
        %2913 = vst.msk [vmem:[#allocation3 + $0x28] sm:$0xf] %vm2901, %v2886
        %2914 = vst.msk [vmem:[#allocation3 + $0x2c] sm:$0x1] %vm2904, %v2888
        %v2915 = vld [vmem:[#allocation3] sm:$0xf]
        %v2916 = vld [vmem:[#allocation3 + $0x4] sm:$0xf]
        %v2917 = vld [vmem:[#allocation3 + $0xc] sm:$0xf]
        %v2918 = vld [vmem:[#allocation3 + $0x10] sm:$0xf]
        %v2919 = vld [vmem:[#allocation3 + $0x18] sm:$0xf]
        %v2920 = vld [vmem:[#allocation3 + $0x1c] sm:$0xf]
        %v2921 = vld [vmem:[#allocation3 + $0x24] sm:$0xf]
        %v2922 = vld [vmem:[#allocation3 + $0x28] sm:$0xf]
        %v2925 = vpack.i.b16 %v2917, %v2915
        %v2926 = vshrl.u32 %v2915, 16
        %v2927 = vshrl.u32 %v2917, 16
        %v2928 = vpack.i.b16 %v2927, %v2926
        %v2931 = vpack.i.b16 %v2921, %v2919
        %v2932 = vshrl.u32 %v2919, 16
        %v2933 = vshrl.u32 %v2921, 16
        %v2934 = vpack.i.b16 %v2933, %v2932
        %v2937 = vpack.i.b16 %v2918, %v2916
        %v2938 = vshrl.u32 %v2916, 16
        %v2939 = vshrl.u32 %v2918, 16
        %v2940 = vpack.i.b16 %v2939, %v2938
        %v2943 = vpack.i.b16 %v2922, %v2920
        %v2944 = vshrl.u32 %v2920, 16
        %v2945 = vshrl.u32 %v2922, 16
        %v2946 = vpack.i.b16 %v2945, %v2944
        %v2949 = vunpack.c.l.s4 1983009808
        %v2950 = vunpack.c.0.s8 %v2949
        %v2951 = vlaneseq
        %v2952 = vshrl.u32 %v2951, 7
        %v2953 = vsub.s32 %v2950, %v2952
        %v2954 = vrot.slane %v2925, %v2953
        %v2957 = vunpack.c.l.s4 1983009808
        %v2958 = vunpack.c.0.s8 %v2957
        %v2959 = vlaneseq
        %v2960 = vshrl.u32 %v2959, 7
        %v2961 = vsub.s32 %v2958, %v2960
        %v2962 = vrot.slane %v2931, %v2961
        %v2963 = vcombine.low %v2954, %v2962
        %v2964 = vcombine.high %v2954, %v2962
        %v2966 = vunpack.c.l.s4 1934713408
        %v2967 = vunpack.c.0.s8 %v2966
        %v2968 = vlaneseq
        %v2969 = vshrl.u32 %v2968, 7
        %v2970 = vsub.s32 %v2967, %v2969
        %v2971 = vrot.slane %v2963, %v2970
        %v2973 = vunpack.c.l.s4 1934713408
        %v2974 = vunpack.c.0.s8 %v2973
        %v2975 = vlaneseq
        %v2976 = vshrl.u32 %v2975, 7
        %v2977 = vsub.s32 %v2974, %v2976
        %v2978 = vrot.slane %v2964, %v2977
        %v2979 = vcombine.high %v2971, 0
        %v2980 = vcombine.high %v2978, 0
        %v2983 = vunpack.c.l.s4 1983009808
        %v2984 = vunpack.c.0.s8 %v2983
        %v2985 = vlaneseq
        %v2986 = vshrl.u32 %v2985, 7
        %v2987 = vsub.s32 %v2984, %v2986
        %v2988 = vrot.slane %v2928, %v2987
        %v2991 = vunpack.c.l.s4 1983009808
        %v2992 = vunpack.c.0.s8 %v2991
        %v2993 = vlaneseq
        %v2994 = vshrl.u32 %v2993, 7
        %v2995 = vsub.s32 %v2992, %v2994
        %v2996 = vrot.slane %v2934, %v2995
        %v2997 = vcombine.low %v2988, %v2996
        %v2998 = vcombine.high %v2988, %v2996
        %v3000 = vunpack.c.l.s4 1934713408
        %v3001 = vunpack.c.0.s8 %v3000
        %v3002 = vlaneseq
        %v3003 = vshrl.u32 %v3002, 7
        %v3004 = vsub.s32 %v3001, %v3003
        %v3005 = vrot.slane %v2997, %v3004
        %v3007 = vunpack.c.l.s4 1934713408
        %v3008 = vunpack.c.0.s8 %v3007
        %v3009 = vlaneseq
        %v3010 = vshrl.u32 %v3009, 7
        %v3011 = vsub.s32 %v3008, %v3010
        %v3012 = vrot.slane %v2998, %v3011
        %v3013 = vcombine.high %v3005, 0
        %v3014 = vcombine.high %v3012, 0
        %v3017 = vunpack.c.l.s4 1983009808
        %v3018 = vunpack.c.0.s8 %v3017
        %v3019 = vlaneseq
        %v3020 = vshrl.u32 %v3019, 7
        %v3021 = vsub.s32 %v3018, %v3020
        %v3022 = vrot.slane %v2937, %v3021
        %v3025 = vunpack.c.l.s4 1983009808
        %v3026 = vunpack.c.0.s8 %v3025
        %v3027 = vlaneseq
        %v3028 = vshrl.u32 %v3027, 7
        %v3029 = vsub.s32 %v3026, %v3028
        %v3030 = vrot.slane %v2943, %v3029
        %v3031 = vcombine.low %v3022, %v3030
        %v3032 = vcombine.high %v3022, %v3030
        %v3034 = vunpack.c.l.s4 1934713408
        %v3035 = vunpack.c.0.s8 %v3034
        %v3036 = vlaneseq
        %v3037 = vshrl.u32 %v3036, 7
        %v3038 = vsub.s32 %v3035, %v3037
        %v3039 = vrot.slane %v3031, %v3038
        %v3041 = vunpack.c.l.s4 1934713408
        %v3042 = vunpack.c.0.s8 %v3041
        %v3043 = vlaneseq
        %v3044 = vshrl.u32 %v3043, 7
        %v3045 = vsub.s32 %v3042, %v3044
        %v3046 = vrot.slane %v3032, %v3045
        %v3047 = vcombine.high %v3039, 0
        %v3048 = vcombine.high %v3046, 0
        %v3051 = vunpack.c.l.s4 1983009808
        %v3052 = vunpack.c.0.s8 %v3051
        %v3053 = vlaneseq
        %v3054 = vshrl.u32 %v3053, 7
        %v3055 = vsub.s32 %v3052, %v3054
        %v3056 = vrot.slane %v2940, %v3055
        %v3059 = vunpack.c.l.s4 1983009808
        %v3060 = vunpack.c.0.s8 %v3059
        %v3061 = vlaneseq
        %v3062 = vshrl.u32 %v3061, 7
        %v3063 = vsub.s32 %v3060, %v3062
        %v3064 = vrot.slane %v2946, %v3063
        %v3065 = vcombine.low %v3056, %v3064
        %v3066 = vcombine.high %v3056, %v3064
        %v3068 = vunpack.c.l.s4 1934713408
        %v3069 = vunpack.c.0.s8 %v3068
        %v3070 = vlaneseq
        %v3071 = vshrl.u32 %v3070, 7
        %v3072 = vsub.s32 %v3069, %v3071
        %v3073 = vrot.slane %v3065, %v3072
        %v3075 = vunpack.c.l.s4 1934713408
        %v3076 = vunpack.c.0.s8 %v3075
        %v3077 = vlaneseq
        %v3078 = vshrl.u32 %v3077, 7
        %v3079 = vsub.s32 %v3076, %v3078
        %v3080 = vrot.slane %v3066, %v3079
        %v3081 = vcombine.high %v3073, 0
        %v3082 = vcombine.high %v3080, 0
        %v3084 = vunpack.c.l.b16 %v3005
        %v3085 = vpack.c.b16 %v3084, %v3084
        %3086 = vrot.lane.b32.xlu0 %v3085, 16
        %v3087 = vpop.permute.xlu0 %3086
        %v3089 = vunpack.c.l.b16 %v2979
        %v3090 = vpack.c.b16 %v3089, %v3089
        %3091 = vrot.lane.b32.xlu0 %v3090, 32
        %v3092 = vpop.permute.xlu0 %3091
        %v3094 = vunpack.c.l.b16 %v3013
        %v3095 = vpack.c.b16 %v3094, %v3094
        %3096 = vrot.lane.b32.xlu0 %v3095, 48
        %v3097 = vpop.permute.xlu0 %3096
        %v3099 = vunpack.c.l.b16 %v2978
        %v3100 = vpack.c.b16 %v3099, %v3099
        %3101 = vrot.lane.b32.xlu0 %v3100, 64
        %v3102 = vpop.permute.xlu0 %3101
        %v3104 = vunpack.c.l.b16 %v3012
        %v3105 = vpack.c.b16 %v3104, %v3104
        %3106 = vrot.lane.b32.xlu0 %v3105, 80
        %v3107 = vpop.permute.xlu0 %3106
        %v3109 = vunpack.c.l.b16 %v2980
        %v3110 = vpack.c.b16 %v3109, %v3109
        %3111 = vrot.lane.b32.xlu0 %v3110, 96
        %v3112 = vpop.permute.xlu0 %3111
        %v3114 = vunpack.c.l.b16 %v3014
        %v3115 = vpack.c.b16 %v3114, %v3114
        %3116 = vrot.lane.b32.xlu0 %v3115, 112
        %v3117 = vpop.permute.xlu0 %3116
        %v3119 = vunpack.c.l.b16 %v3073
        %v3120 = vpack.c.b16 %v3119, %v3119
        %3121 = vrot.lane.b32.xlu0 %v3120, 16
        %v3122 = vpop.permute.xlu0 %3121
        %v3124 = vunpack.c.l.b16 %v3047
        %v3125 = vpack.c.b16 %v3124, %v3124
        %3126 = vrot.lane.b32.xlu0 %v3125, 32
        %v3127 = vpop.permute.xlu0 %3126
        %v3129 = vunpack.c.l.b16 %v3081
        %v3130 = vpack.c.b16 %v3129, %v3129
        %3131 = vrot.lane.b32.xlu0 %v3130, 48
        %v3132 = vpop.permute.xlu0 %3131
        %v3134 = vunpack.c.l.b16 %v3046
        %v3135 = vpack.c.b16 %v3134, %v3134
        %3136 = vrot.lane.b32.xlu0 %v3135, 64
        %v3137 = vpop.permute.xlu0 %3136
        %v3139 = vunpack.c.l.b16 %v3080
        %v3140 = vpack.c.b16 %v3139, %v3139
        %3141 = vrot.lane.b32.xlu0 %v3140, 80
        %v3142 = vpop.permute.xlu0 %3141
        %v3144 = vunpack.c.l.b16 %v3048
        %v3145 = vpack.c.b16 %v3144, %v3144
        %3146 = vrot.lane.b32.xlu0 %v3145, 96
        %v3147 = vpop.permute.xlu0 %3146
        %v3149 = vunpack.c.l.b16 %v3082
        %v3150 = vpack.c.b16 %v3149, %v3149
        %3151 = vrot.lane.b32.xlu0 %v3150, 112
        %v3152 = vpop.permute.xlu0 %3151
        %v3155 = vsel %vm433, %v2971, %v3087
        %v3157 = vsel %vm437, %v3155, %v3092
        %v3159 = vsel %vm440, %v3157, %v3097
        %v3161 = vsel %vm443, %v3159, %v3102
        %v3163 = vsel %vm446, %v3161, %v3107
        %v3165 = vsel %vm449, %v3163, %v3112
        %v3167 = vsel %vm452, %v3165, %v3117
        %v3170 = vsel %vm433, %v3039, %v3122
        %v3172 = vsel %vm437, %v3170, %v3127
        %v3174 = vsel %vm440, %v3172, %v3132
        %v3176 = vsel %vm443, %v3174, %v3137
        %v3178 = vsel %vm446, %v3176, %v3142
        %v3180 = vsel %vm449, %v3178, %v3147
        %v3182 = vsel %vm452, %v3180, %v3152
        %v3185 = vunpack.c.l.b16 %v3167
        %v3186 = vunpack.c.l.b16 %v3182
        %v3187 = vpack.c.b16 %v3186, %v3185
        %3189 = vst [vmem:[#allocation2] sm:$0x33] %v3187
        %v3190 = vld [vmem:[#allocation3] sm:$0xf]
        %v3191 = vld [vmem:[#allocation3 + $0x4] sm:$0xf]
        %v3192 = vld [vmem:[#allocation3 + $0xc] sm:$0xf]
        %v3193 = vld [vmem:[#allocation3 + $0x10] sm:$0xf]
        %v3194 = vld [vmem:[#allocation3 + $0x18] sm:$0xf]
        %v3195 = vld [vmem:[#allocation3 + $0x1c] sm:$0xf]
        %v3196 = vld [vmem:[#allocation3 + $0x24] sm:$0xf]
        %v3197 = vld [vmem:[#allocation3 + $0x28] sm:$0xf]
        %3206 = vrot.lane.b32.xlu0 %v3190, 127
        %v3207 = vpop.permute.xlu0 %3206
        %3208 = vrot.lane.b32.xlu0 %v3191, 127
        %v3209 = vpop.permute.xlu0 %3208
        %3210 = vrot.lane.b32.xlu0 %v3192, 127
        %v3211 = vpop.permute.xlu0 %3210
        %3212 = vrot.lane.b32.xlu0 %v3193, 127
        %v3213 = vpop.permute.xlu0 %3212
        %3214 = vrot.lane.b32.xlu0 %v3194, 127
        %v3215 = vpop.permute.xlu0 %3214
        %3216 = vrot.lane.b32.xlu0 %v3195, 127
        %v3217 = vpop.permute.xlu0 %3216
        %3218 = vrot.lane.b32.xlu0 %v3196, 127
        %v3219 = vpop.permute.xlu0 %3218
        %3220 = vrot.lane.b32.xlu0 %v3197, 127
        %v3221 = vpop.permute.xlu0 %3220
        %v3224 = vpack.i.b16 %v3211, %v3207
        %v3225 = vshrl.u32 %v3207, 16
        %v3226 = vshrl.u32 %v3211, 16
        %v3227 = vpack.i.b16 %v3226, %v3225
        %v3230 = vpack.i.b16 %v3219, %v3215
        %v3231 = vshrl.u32 %v3215, 16
        %v3232 = vshrl.u32 %v3219, 16
        %v3233 = vpack.i.b16 %v3232, %v3231
        %v3236 = vpack.i.b16 %v3213, %v3209
        %v3237 = vshrl.u32 %v3209, 16
        %v3238 = vshrl.u32 %v3213, 16
        %v3239 = vpack.i.b16 %v3238, %v3237
        %v3242 = vpack.i.b16 %v3221, %v3217
        %v3243 = vshrl.u32 %v3217, 16
        %v3244 = vshrl.u32 %v3221, 16
        %v3245 = vpack.i.b16 %v3244, %v3243
        %v3248 = vunpack.c.l.s4 1983009808
        %v3249 = vunpack.c.0.s8 %v3248
        %v3250 = vlaneseq
        %v3251 = vshrl.u32 %v3250, 7
        %v3252 = vsub.s32 %v3249, %v3251
        %v3253 = vrot.slane %v3224, %v3252
        %v3256 = vunpack.c.l.s4 1983009808
        %v3257 = vunpack.c.0.s8 %v3256
        %v3258 = vlaneseq
        %v3259 = vshrl.u32 %v3258, 7
        %v3260 = vsub.s32 %v3257, %v3259
        %v3261 = vrot.slane %v3230, %v3260
        %v3262 = vcombine.low %v3253, %v3261
        %v3263 = vcombine.high %v3253, %v3261
        %v3265 = vunpack.c.l.s4 1934713408
        %v3266 = vunpack.c.0.s8 %v3265
        %v3267 = vlaneseq
        %v3268 = vshrl.u32 %v3267, 7
        %v3269 = vsub.s32 %v3266, %v3268
        %v3270 = vrot.slane %v3262, %v3269
        %v3272 = vunpack.c.l.s4 1934713408
        %v3273 = vunpack.c.0.s8 %v3272
        %v3274 = vlaneseq
        %v3275 = vshrl.u32 %v3274, 7
        %v3276 = vsub.s32 %v3273, %v3275
        %v3277 = vrot.slane %v3263, %v3276
        %v3278 = vcombine.high %v3270, 0
        %v3279 = vcombine.high %v3277, 0
        %v3282 = vunpack.c.l.s4 1983009808
        %v3283 = vunpack.c.0.s8 %v3282
        %v3284 = vlaneseq
        %v3285 = vshrl.u32 %v3284, 7
        %v3286 = vsub.s32 %v3283, %v3285
        %v3287 = vrot.slane %v3227, %v3286
        %v3290 = vunpack.c.l.s4 1983009808
        %v3291 = vunpack.c.0.s8 %v3290
        %v3292 = vlaneseq
        %v3293 = vshrl.u32 %v3292, 7
        %v3294 = vsub.s32 %v3291, %v3293
        %v3295 = vrot.slane %v3233, %v3294
        %v3296 = vcombine.low %v3287, %v3295
        %v3297 = vcombine.high %v3287, %v3295
        %v3299 = vunpack.c.l.s4 1934713408
        %v3300 = vunpack.c.0.s8 %v3299
        %v3301 = vlaneseq
        %v3302 = vshrl.u32 %v3301, 7
        %v3303 = vsub.s32 %v3300, %v3302
        %v3304 = vrot.slane %v3296, %v3303
        %v3306 = vunpack.c.l.s4 1934713408
        %v3307 = vunpack.c.0.s8 %v3306
        %v3308 = vlaneseq
        %v3309 = vshrl.u32 %v3308, 7
        %v3310 = vsub.s32 %v3307, %v3309
        %v3311 = vrot.slane %v3297, %v3310
        %v3312 = vcombine.high %v3304, 0
        %v3313 = vcombine.high %v3311, 0
        %v3316 = vunpack.c.l.s4 1983009808
        %v3317 = vunpack.c.0.s8 %v3316
        %v3318 = vlaneseq
        %v3319 = vshrl.u32 %v3318, 7
        %v3320 = vsub.s32 %v3317, %v3319
        %v3321 = vrot.slane %v3236, %v3320
        %v3324 = vunpack.c.l.s4 1983009808
        %v3325 = vunpack.c.0.s8 %v3324
        %v3326 = vlaneseq
        %v3327 = vshrl.u32 %v3326, 7
        %v3328 = vsub.s32 %v3325, %v3327
        %v3329 = vrot.slane %v3242, %v3328
        %v3330 = vcombine.low %v3321, %v3329
        %v3331 = vcombine.high %v3321, %v3329
        %v3333 = vunpack.c.l.s4 1934713408
        %v3334 = vunpack.c.0.s8 %v3333
        %v3335 = vlaneseq
        %v3336 = vshrl.u32 %v3335, 7
        %v3337 = vsub.s32 %v3334, %v3336
        %v3338 = vrot.slane %v3330, %v3337
        %v3340 = vunpack.c.l.s4 1934713408
        %v3341 = vunpack.c.0.s8 %v3340
        %v3342 = vlaneseq
        %v3343 = vshrl.u32 %v3342, 7
        %v3344 = vsub.s32 %v3341, %v3343
        %v3345 = vrot.slane %v3331, %v3344
        %v3346 = vcombine.high %v3338, 0
        %v3347 = vcombine.high %v3345, 0
        %v3350 = vunpack.c.l.s4 1983009808
        %v3351 = vunpack.c.0.s8 %v3350
        %v3352 = vlaneseq
        %v3353 = vshrl.u32 %v3352, 7
        %v3354 = vsub.s32 %v3351, %v3353
        %v3355 = vrot.slane %v3239, %v3354
        %v3358 = vunpack.c.l.s4 1983009808
        %v3359 = vunpack.c.0.s8 %v3358
        %v3360 = vlaneseq
        %v3361 = vshrl.u32 %v3360, 7
        %v3362 = vsub.s32 %v3359, %v3361
        %v3363 = vrot.slane %v3245, %v3362
        %v3364 = vcombine.low %v3355, %v3363
        %v3365 = vcombine.high %v3355, %v3363
        %v3367 = vunpack.c.l.s4 1934713408
        %v3368 = vunpack.c.0.s8 %v3367
        %v3369 = vlaneseq
        %v3370 = vshrl.u32 %v3369, 7
        %v3371 = vsub.s32 %v3368, %v3370
        %v3372 = vrot.slane %v3364, %v3371
        %v3374 = vunpack.c.l.s4 1934713408
        %v3375 = vunpack.c.0.s8 %v3374
        %v3376 = vlaneseq
        %v3377 = vshrl.u32 %v3376, 7
        %v3378 = vsub.s32 %v3375, %v3377
        %v3379 = vrot.slane %v3365, %v3378
        %v3380 = vcombine.high %v3372, 0
        %v3381 = vcombine.high %v3379, 0
        %v3383 = vunpack.c.l.b16 %v3304
        %v3384 = vpack.c.b16 %v3383, %v3383
        %3385 = vrot.lane.b32.xlu0 %v3384, 16
        %v3386 = vpop.permute.xlu0 %3385
        %v3388 = vunpack.c.l.b16 %v3278
        %v3389 = vpack.c.b16 %v3388, %v3388
        %3390 = vrot.lane.b32.xlu0 %v3389, 32
        %v3391 = vpop.permute.xlu0 %3390
        %v3393 = vunpack.c.l.b16 %v3312
        %v3394 = vpack.c.b16 %v3393, %v3393
        %3395 = vrot.lane.b32.xlu0 %v3394, 48
        %v3396 = vpop.permute.xlu0 %3395
        %v3398 = vunpack.c.l.b16 %v3277
        %v3399 = vpack.c.b16 %v3398, %v3398
        %3400 = vrot.lane.b32.xlu0 %v3399, 64
        %v3401 = vpop.permute.xlu0 %3400
        %v3403 = vunpack.c.l.b16 %v3311
        %v3404 = vpack.c.b16 %v3403, %v3403
        %3405 = vrot.lane.b32.xlu0 %v3404, 80
        %v3406 = vpop.permute.xlu0 %3405
        %v3408 = vunpack.c.l.b16 %v3279
        %v3409 = vpack.c.b16 %v3408, %v3408
        %3410 = vrot.lane.b32.xlu0 %v3409, 96
        %v3411 = vpop.permute.xlu0 %3410
        %v3413 = vunpack.c.l.b16 %v3313
        %v3414 = vpack.c.b16 %v3413, %v3413
        %3415 = vrot.lane.b32.xlu0 %v3414, 112
        %v3416 = vpop.permute.xlu0 %3415
        %v3418 = vunpack.c.l.b16 %v3372
        %v3419 = vpack.c.b16 %v3418, %v3418
        %3420 = vrot.lane.b32.xlu0 %v3419, 16
        %v3421 = vpop.permute.xlu0 %3420
        %v3423 = vunpack.c.l.b16 %v3346
        %v3424 = vpack.c.b16 %v3423, %v3423
        %3425 = vrot.lane.b32.xlu0 %v3424, 32
        %v3426 = vpop.permute.xlu0 %3425
        %v3428 = vunpack.c.l.b16 %v3380
        %v3429 = vpack.c.b16 %v3428, %v3428
        %3430 = vrot.lane.b32.xlu0 %v3429, 48
        %v3431 = vpop.permute.xlu0 %3430
        %v3433 = vunpack.c.l.b16 %v3345
        %v3434 = vpack.c.b16 %v3433, %v3433
        %3435 = vrot.lane.b32.xlu0 %v3434, 64
        %v3436 = vpop.permute.xlu0 %3435
        %v3438 = vunpack.c.l.b16 %v3379
        %v3439 = vpack.c.b16 %v3438, %v3438
        %3440 = vrot.lane.b32.xlu0 %v3439, 80
        %v3441 = vpop.permute.xlu0 %3440
        %v3443 = vunpack.c.l.b16 %v3347
        %v3444 = vpack.c.b16 %v3443, %v3443
        %3445 = vrot.lane.b32.xlu0 %v3444, 96
        %v3446 = vpop.permute.xlu0 %3445
        %v3448 = vunpack.c.l.b16 %v3381
        %v3449 = vpack.c.b16 %v3448, %v3448
        %3450 = vrot.lane.b32.xlu0 %v3449, 112
        %v3451 = vpop.permute.xlu0 %3450
        %v3454 = vsel %vm433, %v3270, %v3386
        %v3456 = vsel %vm437, %v3454, %v3391
        %v3458 = vsel %vm440, %v3456, %v3396
        %v3460 = vsel %vm443, %v3458, %v3401
        %v3462 = vsel %vm446, %v3460, %v3406
        %v3464 = vsel %vm449, %v3462, %v3411
        %v3466 = vsel %vm452, %v3464, %v3416
        %v3469 = vsel %vm433, %v3338, %v3421
        %v3471 = vsel %vm437, %v3469, %v3426
        %v3473 = vsel %vm440, %v3471, %v3431
        %v3475 = vsel %vm443, %v3473, %v3436
        %v3477 = vsel %vm446, %v3475, %v3441
        %v3479 = vsel %vm449, %v3477, %v3446
        %v3481 = vsel %vm452, %v3479, %v3451
        %v3484 = vunpack.c.l.b16 %v3466
        %v3485 = vunpack.c.l.b16 %v3481
        %v3486 = vpack.c.b16 %v3485, %v3484
        %v3487 = vrot.slane %v3486, 6
        %3489 = vst [vmem:[#allocation2] sm:$0xcc] %v3487
        %v3490 = vld [vmem:[#allocation3] sm:$0xf]
        %v3491 = vld [vmem:[#allocation3 + $0x4] sm:$0xf]
        %v3492 = vld [vmem:[#allocation3 + $0xc] sm:$0xf]
        %v3493 = vld [vmem:[#allocation3 + $0x10] sm:$0xf]
        %v3494 = vld [vmem:[#allocation3 + $0x18] sm:$0xf]
        %v3495 = vld [vmem:[#allocation3 + $0x1c] sm:$0xf]
        %v3496 = vld [vmem:[#allocation3 + $0x24] sm:$0xf]
        %v3497 = vld [vmem:[#allocation3 + $0x28] sm:$0xf]
        %3506 = vrot.lane.b32.xlu0 %v3490, 126
        %v3507 = vpop.permute.xlu0 %3506
        %3508 = vrot.lane.b32.xlu0 %v3491, 126
        %v3509 = vpop.permute.xlu0 %3508
        %3510 = vrot.lane.b32.xlu0 %v3492, 126
        %v3511 = vpop.permute.xlu0 %3510
        %3512 = vrot.lane.b32.xlu0 %v3493, 126
        %v3513 = vpop.permute.xlu0 %3512
        %3514 = vrot.lane.b32.xlu0 %v3494, 126
        %v3515 = vpop.permute.xlu0 %3514
        %3516 = vrot.lane.b32.xlu0 %v3495, 126
        %v3517 = vpop.permute.xlu0 %3516
        %3518 = vrot.lane.b32.xlu0 %v3496, 126
        %v3519 = vpop.permute.xlu0 %3518
        %3520 = vrot.lane.b32.xlu0 %v3497, 126
        %v3521 = vpop.permute.xlu0 %3520
        %v3524 = vpack.i.b16 %v3511, %v3507
        %v3525 = vshrl.u32 %v3507, 16
        %v3526 = vshrl.u32 %v3511, 16
        %v3527 = vpack.i.b16 %v3526, %v3525
        %v3530 = vpack.i.b16 %v3519, %v3515
        %v3531 = vshrl.u32 %v3515, 16
        %v3532 = vshrl.u32 %v3519, 16
        %v3533 = vpack.i.b16 %v3532, %v3531
        %v3536 = vpack.i.b16 %v3513, %v3509
        %v3537 = vshrl.u32 %v3509, 16
        %v3538 = vshrl.u32 %v3513, 16
        %v3539 = vpack.i.b16 %v3538, %v3537
        %v3542 = vpack.i.b16 %v3521, %v3517
        %v3543 = vshrl.u32 %v3517, 16
        %v3544 = vshrl.u32 %v3521, 16
        %v3545 = vpack.i.b16 %v3544, %v3543
        %v3548 = vunpack.c.l.s4 1983009808
        %v3549 = vunpack.c.0.s8 %v3548
        %v3550 = vlaneseq
        %v3551 = vshrl.u32 %v3550, 7
        %v3552 = vsub.s32 %v3549, %v3551
        %v3553 = vrot.slane %v3524, %v3552
        %v3556 = vunpack.c.l.s4 1983009808
        %v3557 = vunpack.c.0.s8 %v3556
        %v3558 = vlaneseq
        %v3559 = vshrl.u32 %v3558, 7
        %v3560 = vsub.s32 %v3557, %v3559
        %v3561 = vrot.slane %v3530, %v3560
        %v3562 = vcombine.low %v3553, %v3561
        %v3563 = vcombine.high %v3553, %v3561
        %v3565 = vunpack.c.l.s4 1934713408
        %v3566 = vunpack.c.0.s8 %v3565
        %v3567 = vlaneseq
        %v3568 = vshrl.u32 %v3567, 7
        %v3569 = vsub.s32 %v3566, %v3568
        %v3570 = vrot.slane %v3562, %v3569
        %v3572 = vunpack.c.l.s4 1934713408
        %v3573 = vunpack.c.0.s8 %v3572
        %v3574 = vlaneseq
        %v3575 = vshrl.u32 %v3574, 7
        %v3576 = vsub.s32 %v3573, %v3575
        %v3577 = vrot.slane %v3563, %v3576
        %v3578 = vcombine.high %v3570, 0
        %v3579 = vcombine.high %v3577, 0
        %v3582 = vunpack.c.l.s4 1983009808
        %v3583 = vunpack.c.0.s8 %v3582
        %v3584 = vlaneseq
        %v3585 = vshrl.u32 %v3584, 7
        %v3586 = vsub.s32 %v3583, %v3585
        %v3587 = vrot.slane %v3527, %v3586
        %v3590 = vunpack.c.l.s4 1983009808
        %v3591 = vunpack.c.0.s8 %v3590
        %v3592 = vlaneseq
        %v3593 = vshrl.u32 %v3592, 7
        %v3594 = vsub.s32 %v3591, %v3593
        %v3595 = vrot.slane %v3533, %v3594
        %v3596 = vcombine.low %v3587, %v3595
        %v3597 = vcombine.high %v3587, %v3595
        %v3599 = vunpack.c.l.s4 1934713408
        %v3600 = vunpack.c.0.s8 %v3599
        %v3601 = vlaneseq
        %v3602 = vshrl.u32 %v3601, 7
        %v3603 = vsub.s32 %v3600, %v3602
        %v3604 = vrot.slane %v3596, %v3603
        %v3606 = vunpack.c.l.s4 1934713408
        %v3607 = vunpack.c.0.s8 %v3606
        %v3608 = vlaneseq
        %v3609 = vshrl.u32 %v3608, 7
        %v3610 = vsub.s32 %v3607, %v3609
        %v3611 = vrot.slane %v3597, %v3610
        %v3612 = vcombine.high %v3604, 0
        %v3613 = vcombine.high %v3611, 0
        %v3616 = vunpack.c.l.s4 1983009808
        %v3617 = vunpack.c.0.s8 %v3616
        %v3618 = vlaneseq
        %v3619 = vshrl.u32 %v3618, 7
        %v3620 = vsub.s32 %v3617, %v3619
        %v3621 = vrot.slane %v3536, %v3620
        %v3624 = vunpack.c.l.s4 1983009808
        %v3625 = vunpack.c.0.s8 %v3624
        %v3626 = vlaneseq
        %v3627 = vshrl.u32 %v3626, 7
        %v3628 = vsub.s32 %v3625, %v3627
        %v3629 = vrot.slane %v3542, %v3628
        %v3630 = vcombine.low %v3621, %v3629
        %v3631 = vcombine.high %v3621, %v3629
        %v3633 = vunpack.c.l.s4 1934713408
        %v3634 = vunpack.c.0.s8 %v3633
        %v3635 = vlaneseq
        %v3636 = vshrl.u32 %v3635, 7
        %v3637 = vsub.s32 %v3634, %v3636
        %v3638 = vrot.slane %v3630, %v3637
        %v3640 = vunpack.c.l.s4 1934713408
        %v3641 = vunpack.c.0.s8 %v3640
        %v3642 = vlaneseq
        %v3643 = vshrl.u32 %v3642, 7
        %v3644 = vsub.s32 %v3641, %v3643
        %v3645 = vrot.slane %v3631, %v3644
        %v3646 = vcombine.high %v3638, 0
        %v3647 = vcombine.high %v3645, 0
        %v3650 = vunpack.c.l.s4 1983009808
        %v3651 = vunpack.c.0.s8 %v3650
        %v3652 = vlaneseq
        %v3653 = vshrl.u32 %v3652, 7
        %v3654 = vsub.s32 %v3651, %v3653
        %v3655 = vrot.slane %v3539, %v3654
        %v3658 = vunpack.c.l.s4 1983009808
        %v3659 = vunpack.c.0.s8 %v3658
        %v3660 = vlaneseq
        %v3661 = vshrl.u32 %v3660, 7
        %v3662 = vsub.s32 %v3659, %v3661
        %v3663 = vrot.slane %v3545, %v3662
        %v3664 = vcombine.low %v3655, %v3663
        %v3665 = vcombine.high %v3655, %v3663
        %v3667 = vunpack.c.l.s4 1934713408
        %v3668 = vunpack.c.0.s8 %v3667
        %v3669 = vlaneseq
        %v3670 = vshrl.u32 %v3669, 7
        %v3671 = vsub.s32 %v3668, %v3670
        %v3672 = vrot.slane %v3664, %v3671
        %v3674 = vunpack.c.l.s4 1934713408
        %v3675 = vunpack.c.0.s8 %v3674
        %v3676 = vlaneseq
        %v3677 = vshrl.u32 %v3676, 7
        %v3678 = vsub.s32 %v3675, %v3677
        %v3679 = vrot.slane %v3665, %v3678
        %v3680 = vcombine.high %v3672, 0
        %v3681 = vcombine.high %v3679, 0
        %v3683 = vunpack.c.l.b16 %v3604
        %v3684 = vpack.c.b16 %v3683, %v3683
        %3685 = vrot.lane.b32.xlu0 %v3684, 16
        %v3686 = vpop.permute.xlu0 %3685
        %v3688 = vunpack.c.l.b16 %v3578
        %v3689 = vpack.c.b16 %v3688, %v3688
        %3690 = vrot.lane.b32.xlu0 %v3689, 32
        %v3691 = vpop.permute.xlu0 %3690
        %v3693 = vunpack.c.l.b16 %v3612
        %v3694 = vpack.c.b16 %v3693, %v3693
        %3695 = vrot.lane.b32.xlu0 %v3694, 48
        %v3696 = vpop.permute.xlu0 %3695
        %v3698 = vunpack.c.l.b16 %v3577
        %v3699 = vpack.c.b16 %v3698, %v3698
        %3700 = vrot.lane.b32.xlu0 %v3699, 64
        %v3701 = vpop.permute.xlu0 %3700
        %v3703 = vunpack.c.l.b16 %v3611
        %v3704 = vpack.c.b16 %v3703, %v3703
        %3705 = vrot.lane.b32.xlu0 %v3704, 80
        %v3706 = vpop.permute.xlu0 %3705
        %v3708 = vunpack.c.l.b16 %v3579
        %v3709 = vpack.c.b16 %v3708, %v3708
        %3710 = vrot.lane.b32.xlu0 %v3709, 96
        %v3711 = vpop.permute.xlu0 %3710
        %v3713 = vunpack.c.l.b16 %v3613
        %v3714 = vpack.c.b16 %v3713, %v3713
        %3715 = vrot.lane.b32.xlu0 %v3714, 112
        %v3716 = vpop.permute.xlu0 %3715
        %v3718 = vunpack.c.l.b16 %v3672
        %v3719 = vpack.c.b16 %v3718, %v3718
        %3720 = vrot.lane.b32.xlu0 %v3719, 16
        %v3721 = vpop.permute.xlu0 %3720
        %v3723 = vunpack.c.l.b16 %v3646
        %v3724 = vpack.c.b16 %v3723, %v3723
        %3725 = vrot.lane.b32.xlu0 %v3724, 32
        %v3726 = vpop.permute.xlu0 %3725
        %v3728 = vunpack.c.l.b16 %v3680
        %v3729 = vpack.c.b16 %v3728, %v3728
        %3730 = vrot.lane.b32.xlu0 %v3729, 48
        %v3731 = vpop.permute.xlu0 %3730
        %v3733 = vunpack.c.l.b16 %v3645
        %v3734 = vpack.c.b16 %v3733, %v3733
        %3735 = vrot.lane.b32.xlu0 %v3734, 64
        %v3736 = vpop.permute.xlu0 %3735
        %v3738 = vunpack.c.l.b16 %v3679
        %v3739 = vpack.c.b16 %v3738, %v3738
        %3740 = vrot.lane.b32.xlu0 %v3739, 80
        %v3741 = vpop.permute.xlu0 %3740
        %v3743 = vunpack.c.l.b16 %v3647
        %v3744 = vpack.c.b16 %v3743, %v3743
        %3745 = vrot.lane.b32.xlu0 %v3744, 96
        %v3746 = vpop.permute.xlu0 %3745
        %v3748 = vunpack.c.l.b16 %v3681
        %v3749 = vpack.c.b16 %v3748, %v3748
        %3750 = vrot.lane.b32.xlu0 %v3749, 112
        %v3751 = vpop.permute.xlu0 %3750
        %v3754 = vsel %vm433, %v3570, %v3686
        %v3756 = vsel %vm437, %v3754, %v3691
        %v3758 = vsel %vm440, %v3756, %v3696
        %v3760 = vsel %vm443, %v3758, %v3701
        %v3762 = vsel %vm446, %v3760, %v3706
        %v3764 = vsel %vm449, %v3762, %v3711
        %v3766 = vsel %vm452, %v3764, %v3716
        %v3769 = vsel %vm433, %v3638, %v3721
        %v3771 = vsel %vm437, %v3769, %v3726
        %v3773 = vsel %vm440, %v3771, %v3731
        %v3775 = vsel %vm443, %v3773, %v3736
        %v3777 = vsel %vm446, %v3775, %v3741
        %v3779 = vsel %vm449, %v3777, %v3746
        %v3781 = vsel %vm452, %v3779, %v3751
        %v3784 = vunpack.c.l.b16 %v3766
        %v3785 = vunpack.c.l.b16 %v3781
        %v3786 = vpack.c.b16 %v3785, %v3784
        %3788 = vst [vmem:[#allocation2 + $0x8] sm:$0x33] %v3786
        %v3789 = vld [vmem:[#allocation3] sm:$0xf]
        %v3790 = vld [vmem:[#allocation3 + $0x4] sm:$0xf]
        %v3791 = vld [vmem:[#allocation3 + $0x8] sm:$0x1]
        %v3792 = vld [vmem:[#allocation3 + $0xc] sm:$0xf]
        %v3793 = vld [vmem:[#allocation3 + $0x10] sm:$0xf]
        %v3794 = vld [vmem:[#allocation3 + $0x14] sm:$0x1]
        %v3795 = vld [vmem:[#allocation3 + $0x18] sm:$0xf]
        %v3796 = vld [vmem:[#allocation3 + $0x1c] sm:$0xf]
        %v3797 = vld [vmem:[#allocation3 + $0x20] sm:$0x1]
        %v3798 = vld [vmem:[#allocation3 + $0x24] sm:$0xf]
        %v3799 = vld [vmem:[#allocation3 + $0x28] sm:$0xf]
        %v3800 = vld [vmem:[#allocation3 + $0x2c] sm:$0x1]
        %vm3801 = vsmask.f32 3328
        %vm3802 = vsmask.f32 7440
        %vm3803 = vmor %vm3801, %vm3802
        %v3805 = vshrl.u32 %v3789, 16
        %v3807 = vrot.slane %v3805, 4
        %v3808 = vshll.u32 %v3789, 16
        %v3810 = vrot.slane %v3808, 5
        %v3811 = vor.u32 %v3807, %v3810
        %v3812 = vrot.slane %v3811, 4
        %v3814 = vshll.u32 %v3790, 16
        %v3816 = vrot.slane %v3814, 5
        %v3817 = vsel %vm3803, %v3812, %v3816
        %v3818 = vshrl.u32 %v3790, 16
        %v3820 = vrot.slane %v3818, 4
        %v3821 = vor.u32 %v3820, %v3816
        %v3822 = vrot.slane %v3821, 4
        %v3824 = vshll.u32 %v3791, 16
        %v3826 = vrot.slane %v3824, 5
        %v3827 = vsel %vm3803, %v3822, %v3826
        %v3829 = vshrl.u32 %v3792, 16
        %v3831 = vrot.slane %v3829, 4
        %v3832 = vshll.u32 %v3792, 16
        %v3834 = vrot.slane %v3832, 5
        %v3835 = vor.u32 %v3831, %v3834
        %v3836 = vrot.slane %v3835, 4
        %v3838 = vshll.u32 %v3793, 16
        %v3840 = vrot.slane %v3838, 5
        %v3841 = vsel %vm3803, %v3836, %v3840
        %v3842 = vshrl.u32 %v3793, 16
        %v3844 = vrot.slane %v3842, 4
        %v3845 = vor.u32 %v3844, %v3840
        %v3846 = vrot.slane %v3845, 4
        %v3848 = vshll.u32 %v3794, 16
        %v3850 = vrot.slane %v3848, 5
        %v3851 = vsel %vm3803, %v3846, %v3850
        %v3853 = vshrl.u32 %v3795, 16
        %v3855 = vrot.slane %v3853, 4
        %v3856 = vshll.u32 %v3795, 16
        %v3858 = vrot.slane %v3856, 5
        %v3859 = vor.u32 %v3855, %v3858
        %v3860 = vrot.slane %v3859, 4
        %v3862 = vshll.u32 %v3796, 16
        %v3864 = vrot.slane %v3862, 5
        %v3865 = vsel %vm3803, %v3860, %v3864
        %v3866 = vshrl.u32 %v3796, 16
        %v3868 = vrot.slane %v3866, 4
        %v3869 = vor.u32 %v3868, %v3864
        %v3870 = vrot.slane %v3869, 4
        %v3872 = vshll.u32 %v3797, 16
        %v3874 = vrot.slane %v3872, 5
        %v3875 = vsel %vm3803, %v3870, %v3874
        %v3877 = vshrl.u32 %v3798, 16
        %v3879 = vrot.slane %v3877, 4
        %v3880 = vshll.u32 %v3798, 16
        %v3882 = vrot.slane %v3880, 5
        %v3883 = vor.u32 %v3879, %v3882
        %v3884 = vrot.slane %v3883, 4
        %v3886 = vshll.u32 %v3799, 16
        %v3888 = vrot.slane %v3886, 5
        %v3889 = vsel %vm3803, %v3884, %v3888
        %v3890 = vshrl.u32 %v3799, 16
        %v3892 = vrot.slane %v3890, 4
        %v3893 = vor.u32 %v3892, %v3888
        %v3894 = vrot.slane %v3893, 4
        %v3896 = vshll.u32 %v3800, 16
        %v3898 = vrot.slane %v3896, 5
        %v3899 = vsel %vm3803, %v3894, %v3898
        %v3902 = vpack.i.b16 %v3841, %v3817
        %v3903 = vshrl.u32 %v3817, 16
        %v3904 = vshrl.u32 %v3841, 16
        %v3905 = vpack.i.b16 %v3904, %v3903
        %v3908 = vpack.i.b16 %v3889, %v3865
        %v3909 = vshrl.u32 %v3865, 16
        %v3910 = vshrl.u32 %v3889, 16
        %v3911 = vpack.i.b16 %v3910, %v3909
        %v3914 = vpack.i.b16 %v3851, %v3827
        %v3915 = vshrl.u32 %v3827, 16
        %v3916 = vshrl.u32 %v3851, 16
        %v3917 = vpack.i.b16 %v3916, %v3915
        %v3920 = vpack.i.b16 %v3899, %v3875
        %v3921 = vshrl.u32 %v3875, 16
        %v3922 = vshrl.u32 %v3899, 16
        %v3923 = vpack.i.b16 %v3922, %v3921
        %v3926 = vunpack.c.l.s4 1983009808
        %v3927 = vunpack.c.0.s8 %v3926
        %v3928 = vlaneseq
        %v3929 = vshrl.u32 %v3928, 7
        %v3930 = vsub.s32 %v3927, %v3929
        %v3931 = vrot.slane %v3902, %v3930
        %v3934 = vunpack.c.l.s4 1983009808
        %v3935 = vunpack.c.0.s8 %v3934
        %v3936 = vlaneseq
        %v3937 = vshrl.u32 %v3936, 7
        %v3938 = vsub.s32 %v3935, %v3937
        %v3939 = vrot.slane %v3908, %v3938
        %v3940 = vcombine.low %v3931, %v3939
        %v3941 = vcombine.high %v3931, %v3939
        %v3943 = vunpack.c.l.s4 1934713408
        %v3944 = vunpack.c.0.s8 %v3943
        %v3945 = vlaneseq
        %v3946 = vshrl.u32 %v3945, 7
        %v3947 = vsub.s32 %v3944, %v3946
        %v3948 = vrot.slane %v3940, %v3947
        %v3950 = vunpack.c.l.s4 1934713408
        %v3951 = vunpack.c.0.s8 %v3950
        %v3952 = vlaneseq
        %v3953 = vshrl.u32 %v3952, 7
        %v3954 = vsub.s32 %v3951, %v3953
        %v3955 = vrot.slane %v3941, %v3954
        %v3956 = vcombine.high %v3948, 0
        %v3957 = vcombine.high %v3955, 0
        %v3960 = vunpack.c.l.s4 1983009808
        %v3961 = vunpack.c.0.s8 %v3960
        %v3962 = vlaneseq
        %v3963 = vshrl.u32 %v3962, 7
        %v3964 = vsub.s32 %v3961, %v3963
        %v3965 = vrot.slane %v3905, %v3964
        %v3968 = vunpack.c.l.s4 1983009808
        %v3969 = vunpack.c.0.s8 %v3968
        %v3970 = vlaneseq
        %v3971 = vshrl.u32 %v3970, 7
        %v3972 = vsub.s32 %v3969, %v3971
        %v3973 = vrot.slane %v3911, %v3972
        %v3974 = vcombine.low %v3965, %v3973
        %v3975 = vcombine.high %v3965, %v3973
        %v3977 = vunpack.c.l.s4 1934713408
        %v3978 = vunpack.c.0.s8 %v3977
        %v3979 = vlaneseq
        %v3980 = vshrl.u32 %v3979, 7
        %v3981 = vsub.s32 %v3978, %v3980
        %v3982 = vrot.slane %v3974, %v3981
        %v3984 = vunpack.c.l.s4 1934713408
        %v3985 = vunpack.c.0.s8 %v3984
        %v3986 = vlaneseq
        %v3987 = vshrl.u32 %v3986, 7
        %v3988 = vsub.s32 %v3985, %v3987
        %v3989 = vrot.slane %v3975, %v3988
        %v3990 = vcombine.high %v3982, 0
        %v3991 = vcombine.high %v3989, 0
        %v3994 = vunpack.c.l.s4 1983009808
        %v3995 = vunpack.c.0.s8 %v3994
        %v3996 = vlaneseq
        %v3997 = vshrl.u32 %v3996, 7
        %v3998 = vsub.s32 %v3995, %v3997
        %v3999 = vrot.slane %v3914, %v3998
        %v4002 = vunpack.c.l.s4 1983009808
        %v4003 = vunpack.c.0.s8 %v4002
        %v4004 = vlaneseq
        %v4005 = vshrl.u32 %v4004, 7
        %v4006 = vsub.s32 %v4003, %v4005
        %v4007 = vrot.slane %v3920, %v4006
        %v4008 = vcombine.low %v3999, %v4007
        %v4009 = vcombine.high %v3999, %v4007
        %v4011 = vunpack.c.l.s4 1934713408
        %v4012 = vunpack.c.0.s8 %v4011
        %v4013 = vlaneseq
        %v4014 = vshrl.u32 %v4013, 7
        %v4015 = vsub.s32 %v4012, %v4014
        %v4016 = vrot.slane %v4008, %v4015
        %v4018 = vunpack.c.l.s4 1934713408
        %v4019 = vunpack.c.0.s8 %v4018
        %v4020 = vlaneseq
        %v4021 = vshrl.u32 %v4020, 7
        %v4022 = vsub.s32 %v4019, %v4021
        %v4023 = vrot.slane %v4009, %v4022
        %v4024 = vcombine.high %v4016, 0
        %v4025 = vcombine.high %v4023, 0
        %v4028 = vunpack.c.l.s4 1983009808
        %v4029 = vunpack.c.0.s8 %v4028
        %v4030 = vlaneseq
        %v4031 = vshrl.u32 %v4030, 7
        %v4032 = vsub.s32 %v4029, %v4031
        %v4033 = vrot.slane %v3917, %v4032
        %v4036 = vunpack.c.l.s4 1983009808
        %v4037 = vunpack.c.0.s8 %v4036
        %v4038 = vlaneseq
        %v4039 = vshrl.u32 %v4038, 7
        %v4040 = vsub.s32 %v4037, %v4039
        %v4041 = vrot.slane %v3923, %v4040
        %v4042 = vcombine.low %v4033, %v4041
        %v4043 = vcombine.high %v4033, %v4041
        %v4045 = vunpack.c.l.s4 1934713408
        %v4046 = vunpack.c.0.s8 %v4045
        %v4047 = vlaneseq
        %v4048 = vshrl.u32 %v4047, 7
        %v4049 = vsub.s32 %v4046, %v4048
        %v4050 = vrot.slane %v4042, %v4049
        %v4052 = vunpack.c.l.s4 1934713408
        %v4053 = vunpack.c.0.s8 %v4052
        %v4054 = vlaneseq
        %v4055 = vshrl.u32 %v4054, 7
        %v4056 = vsub.s32 %v4053, %v4055
        %v4057 = vrot.slane %v4043, %v4056
        %v4058 = vcombine.high %v4050, 0
        %v4059 = vcombine.high %v4057, 0
        %v4061 = vunpack.c.l.b16 %v3982
        %v4062 = vpack.c.b16 %v4061, %v4061
        %4063 = vrot.lane.b32.xlu0 %v4062, 16
        %v4064 = vpop.permute.xlu0 %4063
        %v4066 = vunpack.c.l.b16 %v3956
        %v4067 = vpack.c.b16 %v4066, %v4066
        %4068 = vrot.lane.b32.xlu0 %v4067, 32
        %v4069 = vpop.permute.xlu0 %4068
        %v4071 = vunpack.c.l.b16 %v3990
        %v4072 = vpack.c.b16 %v4071, %v4071
        %4073 = vrot.lane.b32.xlu0 %v4072, 48
        %v4074 = vpop.permute.xlu0 %4073
        %v4076 = vunpack.c.l.b16 %v3955
        %v4077 = vpack.c.b16 %v4076, %v4076
        %4078 = vrot.lane.b32.xlu0 %v4077, 64
        %v4079 = vpop.permute.xlu0 %4078
        %v4081 = vunpack.c.l.b16 %v3989
        %v4082 = vpack.c.b16 %v4081, %v4081
        %4083 = vrot.lane.b32.xlu0 %v4082, 80
        %v4084 = vpop.permute.xlu0 %4083
        %v4086 = vunpack.c.l.b16 %v3957
        %v4087 = vpack.c.b16 %v4086, %v4086
        %4088 = vrot.lane.b32.xlu0 %v4087, 96
        %v4089 = vpop.permute.xlu0 %4088
        %v4091 = vunpack.c.l.b16 %v3991
        %v4092 = vpack.c.b16 %v4091, %v4091
        %4093 = vrot.lane.b32.xlu0 %v4092, 112
        %v4094 = vpop.permute.xlu0 %4093
        %v4096 = vunpack.c.l.b16 %v4050
        %v4097 = vpack.c.b16 %v4096, %v4096
        %4098 = vrot.lane.b32.xlu0 %v4097, 16
        %v4099 = vpop.permute.xlu0 %4098
        %v4101 = vunpack.c.l.b16 %v4024
        %v4102 = vpack.c.b16 %v4101, %v4101
        %4103 = vrot.lane.b32.xlu0 %v4102, 32
        %v4104 = vpop.permute.xlu0 %4103
        %v4106 = vunpack.c.l.b16 %v4058
        %v4107 = vpack.c.b16 %v4106, %v4106
        %4108 = vrot.lane.b32.xlu0 %v4107, 48
        %v4109 = vpop.permute.xlu0 %4108
        %v4111 = vunpack.c.l.b16 %v4023
        %v4112 = vpack.c.b16 %v4111, %v4111
        %4113 = vrot.lane.b32.xlu0 %v4112, 64
        %v4114 = vpop.permute.xlu0 %4113
        %v4116 = vunpack.c.l.b16 %v4057
        %v4117 = vpack.c.b16 %v4116, %v4116
        %4118 = vrot.lane.b32.xlu0 %v4117, 80
        %v4119 = vpop.permute.xlu0 %4118
        %v4121 = vunpack.c.l.b16 %v4025
        %v4122 = vpack.c.b16 %v4121, %v4121
        %4123 = vrot.lane.b32.xlu0 %v4122, 96
        %v4124 = vpop.permute.xlu0 %4123
        %v4126 = vunpack.c.l.b16 %v4059
        %v4127 = vpack.c.b16 %v4126, %v4126
        %4128 = vrot.lane.b32.xlu0 %v4127, 112
        %v4129 = vpop.permute.xlu0 %4128
        %v4132 = vsel %vm433, %v3948, %v4064
        %v4134 = vsel %vm437, %v4132, %v4069
        %v4136 = vsel %vm440, %v4134, %v4074
        %v4138 = vsel %vm443, %v4136, %v4079
        %v4140 = vsel %vm446, %v4138, %v4084
        %v4142 = vsel %vm449, %v4140, %v4089
        %v4144 = vsel %vm452, %v4142, %v4094
        %v4147 = vsel %vm433, %v4016, %v4099
        %v4149 = vsel %vm437, %v4147, %v4104
        %v4151 = vsel %vm440, %v4149, %v4109
        %v4153 = vsel %vm443, %v4151, %v4114
        %v4155 = vsel %vm446, %v4153, %v4119
        %v4157 = vsel %vm449, %v4155, %v4124
        %v4159 = vsel %vm452, %v4157, %v4129
        %v4162 = vunpack.c.l.b16 %v4144
        %v4163 = vunpack.c.l.b16 %v4159
        %v4164 = vpack.c.b16 %v4163, %v4162
        %v4165 = vrot.slane %v4164, 6
        %4167 = vst [vmem:[#allocation2 + $0x8] sm:$0xcc] %v4165
        %v4168 = vld [vmem:[#allocation3] sm:$0xf]
        %v4169 = vld [vmem:[#allocation3 + $0x4] sm:$0xf]
        %v4170 = vld [vmem:[#allocation3 + $0x8] sm:$0x1]
        %v4171 = vld [vmem:[#allocation3 + $0xc] sm:$0xf]
        %v4172 = vld [vmem:[#allocation3 + $0x10] sm:$0xf]
        %v4173 = vld [vmem:[#allocation3 + $0x14] sm:$0x1]
        %v4174 = vld [vmem:[#allocation3 + $0x18] sm:$0xf]
        %v4175 = vld [vmem:[#allocation3 + $0x1c] sm:$0xf]
        %v4176 = vld [vmem:[#allocation3 + $0x20] sm:$0x1]
        %v4177 = vld [vmem:[#allocation3 + $0x24] sm:$0xf]
        %v4178 = vld [vmem:[#allocation3 + $0x28] sm:$0xf]
        %v4179 = vld [vmem:[#allocation3 + $0x2c] sm:$0x1]
        %v4181 = vshrl.u32 %v4168, 16
        %v4183 = vrot.slane %v4181, 4
        %v4184 = vshll.u32 %v4168, 16
        %v4186 = vrot.slane %v4184, 5
        %v4187 = vor.u32 %v4183, %v4186
        %v4188 = vrot.slane %v4187, 4
        %v4190 = vshll.u32 %v4169, 16
        %v4192 = vrot.slane %v4190, 5
        %v4193 = vsel %vm3803, %v4188, %v4192
        %v4194 = vshrl.u32 %v4169, 16
        %v4196 = vrot.slane %v4194, 4
        %v4197 = vor.u32 %v4196, %v4192
        %v4198 = vrot.slane %v4197, 4
        %v4200 = vshll.u32 %v4170, 16
        %v4202 = vrot.slane %v4200, 5
        %v4203 = vsel %vm3803, %v4198, %v4202
        %v4205 = vshrl.u32 %v4171, 16
        %v4207 = vrot.slane %v4205, 4
        %v4208 = vshll.u32 %v4171, 16
        %v4210 = vrot.slane %v4208, 5
        %v4211 = vor.u32 %v4207, %v4210
        %v4212 = vrot.slane %v4211, 4
        %v4214 = vshll.u32 %v4172, 16
        %v4216 = vrot.slane %v4214, 5
        %v4217 = vsel %vm3803, %v4212, %v4216
        %v4218 = vshrl.u32 %v4172, 16
        %v4220 = vrot.slane %v4218, 4
        %v4221 = vor.u32 %v4220, %v4216
        %v4222 = vrot.slane %v4221, 4
        %v4224 = vshll.u32 %v4173, 16
        %v4226 = vrot.slane %v4224, 5
        %v4227 = vsel %vm3803, %v4222, %v4226
        %v4229 = vshrl.u32 %v4174, 16
        %v4231 = vrot.slane %v4229, 4
        %v4232 = vshll.u32 %v4174, 16
        %v4234 = vrot.slane %v4232, 5
        %v4235 = vor.u32 %v4231, %v4234
        %v4236 = vrot.slane %v4235, 4
        %v4238 = vshll.u32 %v4175, 16
        %v4240 = vrot.slane %v4238, 5
        %v4241 = vsel %vm3803, %v4236, %v4240
        %v4242 = vshrl.u32 %v4175, 16
        %v4244 = vrot.slane %v4242, 4
        %v4245 = vor.u32 %v4244, %v4240
        %v4246 = vrot.slane %v4245, 4
        %v4248 = vshll.u32 %v4176, 16
        %v4250 = vrot.slane %v4248, 5
        %v4251 = vsel %vm3803, %v4246, %v4250
        %v4253 = vshrl.u32 %v4177, 16
        %v4255 = vrot.slane %v4253, 4
        %v4256 = vshll.u32 %v4177, 16
        %v4258 = vrot.slane %v4256, 5
        %v4259 = vor.u32 %v4255, %v4258
        %v4260 = vrot.slane %v4259, 4
        %v4262 = vshll.u32 %v4178, 16
        %v4264 = vrot.slane %v4262, 5
        %v4265 = vsel %vm3803, %v4260, %v4264
        %v4266 = vshrl.u32 %v4178, 16
        %v4268 = vrot.slane %v4266, 4
        %v4269 = vor.u32 %v4268, %v4264
        %v4270 = vrot.slane %v4269, 4
        %v4272 = vshll.u32 %v4179, 16
        %v4274 = vrot.slane %v4272, 5
        %v4275 = vsel %vm3803, %v4270, %v4274
        %4276 = vrot.lane.b32.xlu0 %v4193, 127
        %v4277 = vpop.permute.xlu0 %4276
        %4278 = vrot.lane.b32.xlu0 %v4203, 127
        %v4279 = vpop.permute.xlu0 %4278
        %4280 = vrot.lane.b32.xlu0 %v4217, 127
        %v4281 = vpop.permute.xlu0 %4280
        %4282 = vrot.lane.b32.xlu0 %v4227, 127
        %v4283 = vpop.permute.xlu0 %4282
        %4284 = vrot.lane.b32.xlu0 %v4241, 127
        %v4285 = vpop.permute.xlu0 %4284
        %4286 = vrot.lane.b32.xlu0 %v4251, 127
        %v4287 = vpop.permute.xlu0 %4286
        %4288 = vrot.lane.b32.xlu0 %v4265, 127
        %v4289 = vpop.permute.xlu0 %4288
        %4290 = vrot.lane.b32.xlu0 %v4275, 127
        %v4291 = vpop.permute.xlu0 %4290
        %v4294 = vpack.i.b16 %v4281, %v4277
        %v4295 = vshrl.u32 %v4277, 16
        %v4296 = vshrl.u32 %v4281, 16
        %v4297 = vpack.i.b16 %v4296, %v4295
        %v4300 = vpack.i.b16 %v4289, %v4285
        %v4301 = vshrl.u32 %v4285, 16
        %v4302 = vshrl.u32 %v4289, 16
        %v4303 = vpack.i.b16 %v4302, %v4301
        %v4306 = vpack.i.b16 %v4283, %v4279
        %v4307 = vshrl.u32 %v4279, 16
        %v4308 = vshrl.u32 %v4283, 16
        %v4309 = vpack.i.b16 %v4308, %v4307
        %v4312 = vpack.i.b16 %v4291, %v4287
        %v4313 = vshrl.u32 %v4287, 16
        %v4314 = vshrl.u32 %v4291, 16
        %v4315 = vpack.i.b16 %v4314, %v4313
        %v4318 = vunpack.c.l.s4 1983009808
        %v4319 = vunpack.c.0.s8 %v4318
        %v4320 = vlaneseq
        %v4321 = vshrl.u32 %v4320, 7
        %v4322 = vsub.s32 %v4319, %v4321
        %v4323 = vrot.slane %v4294, %v4322
        %v4326 = vunpack.c.l.s4 1983009808
        %v4327 = vunpack.c.0.s8 %v4326
        %v4328 = vlaneseq
        %v4329 = vshrl.u32 %v4328, 7
        %v4330 = vsub.s32 %v4327, %v4329
        %v4331 = vrot.slane %v4300, %v4330
        %v4332 = vcombine.low %v4323, %v4331
        %v4333 = vcombine.high %v4323, %v4331
        %v4335 = vunpack.c.l.s4 1934713408
        %v4336 = vunpack.c.0.s8 %v4335
        %v4337 = vlaneseq
        %v4338 = vshrl.u32 %v4337, 7
        %v4339 = vsub.s32 %v4336, %v4338
        %v4340 = vrot.slane %v4332, %v4339
        %v4342 = vunpack.c.l.s4 1934713408
        %v4343 = vunpack.c.0.s8 %v4342
        %v4344 = vlaneseq
        %v4345 = vshrl.u32 %v4344, 7
        %v4346 = vsub.s32 %v4343, %v4345
        %v4347 = vrot.slane %v4333, %v4346
        %v4348 = vcombine.high %v4340, 0
        %v4349 = vcombine.high %v4347, 0
        %v4352 = vunpack.c.l.s4 1983009808
        %v4353 = vunpack.c.0.s8 %v4352
        %v4354 = vlaneseq
        %v4355 = vshrl.u32 %v4354, 7
        %v4356 = vsub.s32 %v4353, %v4355
        %v4357 = vrot.slane %v4297, %v4356
        %v4360 = vunpack.c.l.s4 1983009808
        %v4361 = vunpack.c.0.s8 %v4360
        %v4362 = vlaneseq
        %v4363 = vshrl.u32 %v4362, 7
        %v4364 = vsub.s32 %v4361, %v4363
        %v4365 = vrot.slane %v4303, %v4364
        %v4366 = vcombine.low %v4357, %v4365
        %v4367 = vcombine.high %v4357, %v4365
        %v4369 = vunpack.c.l.s4 1934713408
        %v4370 = vunpack.c.0.s8 %v4369
        %v4371 = vlaneseq
        %v4372 = vshrl.u32 %v4371, 7
        %v4373 = vsub.s32 %v4370, %v4372
        %v4374 = vrot.slane %v4366, %v4373
        %v4376 = vunpack.c.l.s4 1934713408
        %v4377 = vunpack.c.0.s8 %v4376
        %v4378 = vlaneseq
        %v4379 = vshrl.u32 %v4378, 7
        %v4380 = vsub.s32 %v4377, %v4379
        %v4381 = vrot.slane %v4367, %v4380
        %v4382 = vcombine.high %v4374, 0
        %v4383 = vcombine.high %v4381, 0
        %v4386 = vunpack.c.l.s4 1983009808
        %v4387 = vunpack.c.0.s8 %v4386
        %v4388 = vlaneseq
        %v4389 = vshrl.u32 %v4388, 7
        %v4390 = vsub.s32 %v4387, %v4389
        %v4391 = vrot.slane %v4306, %v4390
        %v4394 = vunpack.c.l.s4 1983009808
        %v4395 = vunpack.c.0.s8 %v4394
        %v4396 = vlaneseq
        %v4397 = vshrl.u32 %v4396, 7
        %v4398 = vsub.s32 %v4395, %v4397
        %v4399 = vrot.slane %v4312, %v4398
        %v4400 = vcombine.low %v4391, %v4399
        %v4401 = vcombine.high %v4391, %v4399
        %v4403 = vunpack.c.l.s4 1934713408
        %v4404 = vunpack.c.0.s8 %v4403
        %v4405 = vlaneseq
        %v4406 = vshrl.u32 %v4405, 7
        %v4407 = vsub.s32 %v4404, %v4406
        %v4408 = vrot.slane %v4400, %v4407
        %v4410 = vunpack.c.l.s4 1934713408
        %v4411 = vunpack.c.0.s8 %v4410
        %v4412 = vlaneseq
        %v4413 = vshrl.u32 %v4412, 7
        %v4414 = vsub.s32 %v4411, %v4413
        %v4415 = vrot.slane %v4401, %v4414
        %v4416 = vcombine.high %v4408, 0
        %v4417 = vcombine.high %v4415, 0
        %v4420 = vunpack.c.l.s4 1983009808
        %v4421 = vunpack.c.0.s8 %v4420
        %v4422 = vlaneseq
        %v4423 = vshrl.u32 %v4422, 7
        %v4424 = vsub.s32 %v4421, %v4423
        %v4425 = vrot.slane %v4309, %v4424
        %v4428 = vunpack.c.l.s4 1983009808
        %v4429 = vunpack.c.0.s8 %v4428
        %v4430 = vlaneseq
        %v4431 = vshrl.u32 %v4430, 7
        %v4432 = vsub.s32 %v4429, %v4431
        %v4433 = vrot.slane %v4315, %v4432
        %v4434 = vcombine.low %v4425, %v4433
        %v4435 = vcombine.high %v4425, %v4433
        %v4437 = vunpack.c.l.s4 1934713408
        %v4438 = vunpack.c.0.s8 %v4437
        %v4439 = vlaneseq
        %v4440 = vshrl.u32 %v4439, 7
        %v4441 = vsub.s32 %v4438, %v4440
        %v4442 = vrot.slane %v4434, %v4441
        %v4444 = vunpack.c.l.s4 1934713408
        %v4445 = vunpack.c.0.s8 %v4444
        %v4446 = vlaneseq
        %v4447 = vshrl.u32 %v4446, 7
        %v4448 = vsub.s32 %v4445, %v4447
        %v4449 = vrot.slane %v4435, %v4448
        %v4450 = vcombine.high %v4442, 0
        %v4451 = vcombine.high %v4449, 0
        %v4453 = vunpack.c.l.b16 %v4374
        %v4454 = vpack.c.b16 %v4453, %v4453
        %4455 = vrot.lane.b32.xlu0 %v4454, 16
        %v4456 = vpop.permute.xlu0 %4455
        %v4458 = vunpack.c.l.b16 %v4348
        %v4459 = vpack.c.b16 %v4458, %v4458
        %4460 = vrot.lane.b32.xlu0 %v4459, 32
        %v4461 = vpop.permute.xlu0 %4460
        %v4463 = vunpack.c.l.b16 %v4382
        %v4464 = vpack.c.b16 %v4463, %v4463
        %4465 = vrot.lane.b32.xlu0 %v4464, 48
        %v4466 = vpop.permute.xlu0 %4465
        %v4468 = vunpack.c.l.b16 %v4347
        %v4469 = vpack.c.b16 %v4468, %v4468
        %4470 = vrot.lane.b32.xlu0 %v4469, 64
        %v4471 = vpop.permute.xlu0 %4470
        %v4473 = vunpack.c.l.b16 %v4381
        %v4474 = vpack.c.b16 %v4473, %v4473
        %4475 = vrot.lane.b32.xlu0 %v4474, 80
        %v4476 = vpop.permute.xlu0 %4475
        %v4478 = vunpack.c.l.b16 %v4349
        %v4479 = vpack.c.b16 %v4478, %v4478
        %4480 = vrot.lane.b32.xlu0 %v4479, 96
        %v4481 = vpop.permute.xlu0 %4480
        %v4483 = vunpack.c.l.b16 %v4383
        %v4484 = vpack.c.b16 %v4483, %v4483
        %4485 = vrot.lane.b32.xlu0 %v4484, 112
        %v4486 = vpop.permute.xlu0 %4485
        %v4488 = vunpack.c.l.b16 %v4442
        %v4489 = vpack.c.b16 %v4488, %v4488
        %4490 = vrot.lane.b32.xlu0 %v4489, 16
        %v4491 = vpop.permute.xlu0 %4490
        %v4493 = vunpack.c.l.b16 %v4416
        %v4494 = vpack.c.b16 %v4493, %v4493
        %4495 = vrot.lane.b32.xlu0 %v4494, 32
        %v4496 = vpop.permute.xlu0 %4495
        %v4498 = vunpack.c.l.b16 %v4450
        %v4499 = vpack.c.b16 %v4498, %v4498
        %4500 = vrot.lane.b32.xlu0 %v4499, 48
        %v4501 = vpop.permute.xlu0 %4500
        %v4503 = vunpack.c.l.b16 %v4415
        %v4504 = vpack.c.b16 %v4503, %v4503
        %4505 = vrot.lane.b32.xlu0 %v4504, 64
        %v4506 = vpop.permute.xlu0 %4505
        %v4508 = vunpack.c.l.b16 %v4449
        %v4509 = vpack.c.b16 %v4508, %v4508
        %4510 = vrot.lane.b32.xlu0 %v4509, 80
        %v4511 = vpop.permute.xlu0 %4510
        %v4513 = vunpack.c.l.b16 %v4417
        %v4514 = vpack.c.b16 %v4513, %v4513
        %4515 = vrot.lane.b32.xlu0 %v4514, 96
        %v4516 = vpop.permute.xlu0 %4515
        %v4518 = vunpack.c.l.b16 %v4451
        %v4519 = vpack.c.b16 %v4518, %v4518
        %4520 = vrot.lane.b32.xlu0 %v4519, 112
        %v4521 = vpop.permute.xlu0 %4520
        %v4524 = vsel %vm433, %v4340, %v4456
        %v4526 = vsel %vm437, %v4524, %v4461
        %v4528 = vsel %vm440, %v4526, %v4466
        %v4530 = vsel %vm443, %v4528, %v4471
        %v4532 = vsel %vm446, %v4530, %v4476
        %v4534 = vsel %vm449, %v4532, %v4481
        %v4536 = vsel %vm452, %v4534, %v4486
        %v4539 = vsel %vm433, %v4408, %v4491
        %v4541 = vsel %vm437, %v4539, %v4496
        %v4543 = vsel %vm440, %v4541, %v4501
        %v4545 = vsel %vm443, %v4543, %v4506
        %v4547 = vsel %vm446, %v4545, %v4511
        %v4549 = vsel %vm449, %v4547, %v4516
        %v4551 = vsel %vm452, %v4549, %v4521
        %v4554 = vunpack.c.l.b16 %v4536
        %v4555 = vunpack.c.l.b16 %v4551
        %v4556 = vpack.c.b16 %v4555, %v4554
        %4558 = vst [vmem:[#allocation2 + $0x10] sm:$0x33] %v4556
        %v4559 = vld [vmem:[#allocation3] sm:$0xf]
        %v4560 = vld [vmem:[#allocation3 + $0x4] sm:$0xf]
        %v4561 = vld [vmem:[#allocation3 + $0x8] sm:$0x1]
        %v4562 = vld [vmem:[#allocation3 + $0xc] sm:$0xf]
        %v4563 = vld [vmem:[#allocation3 + $0x10] sm:$0xf]
        %v4564 = vld [vmem:[#allocation3 + $0x14] sm:$0x1]
        %v4565 = vld [vmem:[#allocation3 + $0x18] sm:$0xf]
        %v4566 = vld [vmem:[#allocation3 + $0x1c] sm:$0xf]
        %v4567 = vld [vmem:[#allocation3 + $0x20] sm:$0x1]
        %v4568 = vld [vmem:[#allocation3 + $0x24] sm:$0xf]
        %v4569 = vld [vmem:[#allocation3 + $0x28] sm:$0xf]
        %v4570 = vld [vmem:[#allocation3 + $0x2c] sm:$0x1]
        %v4572 = vshrl.u32 %v4559, 16
        %v4574 = vrot.slane %v4572, 4
        %v4575 = vshll.u32 %v4559, 16
        %v4577 = vrot.slane %v4575, 5
        %v4578 = vor.u32 %v4574, %v4577
        %v4579 = vrot.slane %v4578, 4
        %v4581 = vshll.u32 %v4560, 16
        %v4583 = vrot.slane %v4581, 5
        %v4584 = vsel %vm3803, %v4579, %v4583
        %v4585 = vshrl.u32 %v4560, 16
        %v4587 = vrot.slane %v4585, 4
        %v4588 = vor.u32 %v4587, %v4583
        %v4589 = vrot.slane %v4588, 4
        %v4591 = vshll.u32 %v4561, 16
        %v4593 = vrot.slane %v4591, 5
        %v4594 = vsel %vm3803, %v4589, %v4593
        %v4596 = vshrl.u32 %v4562, 16
        %v4598 = vrot.slane %v4596, 4
        %v4599 = vshll.u32 %v4562, 16
        %v4601 = vrot.slane %v4599, 5
        %v4602 = vor.u32 %v4598, %v4601
        %v4603 = vrot.slane %v4602, 4
        %v4605 = vshll.u32 %v4563, 16
        %v4607 = vrot.slane %v4605, 5
        %v4608 = vsel %vm3803, %v4603, %v4607
        %v4609 = vshrl.u32 %v4563, 16
        %v4611 = vrot.slane %v4609, 4
        %v4612 = vor.u32 %v4611, %v4607
        %v4613 = vrot.slane %v4612, 4
        %v4615 = vshll.u32 %v4564, 16
        %v4617 = vrot.slane %v4615, 5
        %v4618 = vsel %vm3803, %v4613, %v4617
        %v4620 = vshrl.u32 %v4565, 16
        %v4622 = vrot.slane %v4620, 4
        %v4623 = vshll.u32 %v4565, 16
        %v4625 = vrot.slane %v4623, 5
        %v4626 = vor.u32 %v4622, %v4625
        %v4627 = vrot.slane %v4626, 4
        %v4629 = vshll.u32 %v4566, 16
        %v4631 = vrot.slane %v4629, 5
        %v4632 = vsel %vm3803, %v4627, %v4631
        %v4633 = vshrl.u32 %v4566, 16
        %v4635 = vrot.slane %v4633, 4
        %v4636 = vor.u32 %v4635, %v4631
        %v4637 = vrot.slane %v4636, 4
        %v4639 = vshll.u32 %v4567, 16
        %v4641 = vrot.slane %v4639, 5
        %v4642 = vsel %vm3803, %v4637, %v4641
        %v4644 = vshrl.u32 %v4568, 16
        %v4646 = vrot.slane %v4644, 4
        %v4647 = vshll.u32 %v4568, 16
        %v4649 = vrot.slane %v4647, 5
        %v4650 = vor.u32 %v4646, %v4649
        %v4651 = vrot.slane %v4650, 4
        %v4653 = vshll.u32 %v4569, 16
        %v4655 = vrot.slane %v4653, 5
        %v4656 = vsel %vm3803, %v4651, %v4655
        %v4657 = vshrl.u32 %v4569, 16
        %v4659 = vrot.slane %v4657, 4
        %v4660 = vor.u32 %v4659, %v4655
        %v4661 = vrot.slane %v4660, 4
        %v4663 = vshll.u32 %v4570, 16
        %v4665 = vrot.slane %v4663, 5
        %v4666 = vsel %vm3803, %v4661, %v4665
        %4667 = vrot.lane.b32.xlu0 %v4584, 126
        %v4668 = vpop.permute.xlu0 %4667
        %4669 = vrot.lane.b32.xlu0 %v4594, 126
        %v4670 = vpop.permute.xlu0 %4669
        %4671 = vrot.lane.b32.xlu0 %v4608, 126
        %v4672 = vpop.permute.xlu0 %4671
        %4673 = vrot.lane.b32.xlu0 %v4618, 126
        %v4674 = vpop.permute.xlu0 %4673
        %4675 = vrot.lane.b32.xlu0 %v4632, 126
        %v4676 = vpop.permute.xlu0 %4675
        %4677 = vrot.lane.b32.xlu0 %v4642, 126
        %v4678 = vpop.permute.xlu0 %4677
        %4679 = vrot.lane.b32.xlu0 %v4656, 126
        %v4680 = vpop.permute.xlu0 %4679
        %4681 = vrot.lane.b32.xlu0 %v4666, 126
        %v4682 = vpop.permute.xlu0 %4681
        %v4685 = vpack.i.b16 %v4672, %v4668
        %v4686 = vshrl.u32 %v4668, 16
        %v4687 = vshrl.u32 %v4672, 16
        %v4688 = vpack.i.b16 %v4687, %v4686
        %v4691 = vpack.i.b16 %v4680, %v4676
        %v4692 = vshrl.u32 %v4676, 16
        %v4693 = vshrl.u32 %v4680, 16
        %v4694 = vpack.i.b16 %v4693, %v4692
        %v4697 = vpack.i.b16 %v4674, %v4670
        %v4698 = vshrl.u32 %v4670, 16
        %v4699 = vshrl.u32 %v4674, 16
        %v4700 = vpack.i.b16 %v4699, %v4698
        %v4703 = vpack.i.b16 %v4682, %v4678
        %v4704 = vshrl.u32 %v4678, 16
        %v4705 = vshrl.u32 %v4682, 16
        %v4706 = vpack.i.b16 %v4705, %v4704
        %v4709 = vunpack.c.l.s4 1983009808
        %v4710 = vunpack.c.0.s8 %v4709
        %v4711 = vlaneseq
        %v4712 = vshrl.u32 %v4711, 7
        %v4713 = vsub.s32 %v4710, %v4712
        %v4714 = vrot.slane %v4685, %v4713
        %v4717 = vunpack.c.l.s4 1983009808
        %v4718 = vunpack.c.0.s8 %v4717
        %v4719 = vlaneseq
        %v4720 = vshrl.u32 %v4719, 7
        %v4721 = vsub.s32 %v4718, %v4720
        %v4722 = vrot.slane %v4691, %v4721
        %v4723 = vcombine.low %v4714, %v4722
        %v4724 = vcombine.high %v4714, %v4722
        %v4726 = vunpack.c.l.s4 1934713408
        %v4727 = vunpack.c.0.s8 %v4726
        %v4728 = vlaneseq
        %v4729 = vshrl.u32 %v4728, 7
        %v4730 = vsub.s32 %v4727, %v4729
        %v4731 = vrot.slane %v4723, %v4730
        %v4733 = vunpack.c.l.s4 1934713408
        %v4734 = vunpack.c.0.s8 %v4733
        %v4735 = vlaneseq
        %v4736 = vshrl.u32 %v4735, 7
        %v4737 = vsub.s32 %v4734, %v4736
        %v4738 = vrot.slane %v4724, %v4737
        %v4739 = vcombine.high %v4731, 0
        %v4740 = vcombine.high %v4738, 0
        %v4743 = vunpack.c.l.s4 1983009808
        %v4744 = vunpack.c.0.s8 %v4743
        %v4745 = vlaneseq
        %v4746 = vshrl.u32 %v4745, 7
        %v4747 = vsub.s32 %v4744, %v4746
        %v4748 = vrot.slane %v4688, %v4747
        %v4751 = vunpack.c.l.s4 1983009808
        %v4752 = vunpack.c.0.s8 %v4751
        %v4753 = vlaneseq
        %v4754 = vshrl.u32 %v4753, 7
        %v4755 = vsub.s32 %v4752, %v4754
        %v4756 = vrot.slane %v4694, %v4755
        %v4757 = vcombine.low %v4748, %v4756
        %v4758 = vcombine.high %v4748, %v4756
        %v4760 = vunpack.c.l.s4 1934713408
        %v4761 = vunpack.c.0.s8 %v4760
        %v4762 = vlaneseq
        %v4763 = vshrl.u32 %v4762, 7
        %v4764 = vsub.s32 %v4761, %v4763
        %v4765 = vrot.slane %v4757, %v4764
        %v4767 = vunpack.c.l.s4 1934713408
        %v4768 = vunpack.c.0.s8 %v4767
        %v4769 = vlaneseq
        %v4770 = vshrl.u32 %v4769, 7
        %v4771 = vsub.s32 %v4768, %v4770
        %v4772 = vrot.slane %v4758, %v4771
        %v4773 = vcombine.high %v4765, 0
        %v4774 = vcombine.high %v4772, 0
        %v4777 = vunpack.c.l.s4 1983009808
        %v4778 = vunpack.c.0.s8 %v4777
        %v4779 = vlaneseq
        %v4780 = vshrl.u32 %v4779, 7
        %v4781 = vsub.s32 %v4778, %v4780
        %v4782 = vrot.slane %v4697, %v4781
        %v4785 = vunpack.c.l.s4 1983009808
        %v4786 = vunpack.c.0.s8 %v4785
        %v4787 = vlaneseq
        %v4788 = vshrl.u32 %v4787, 7
        %v4789 = vsub.s32 %v4786, %v4788
        %v4790 = vrot.slane %v4703, %v4789
        %v4791 = vcombine.low %v4782, %v4790
        %v4792 = vcombine.high %v4782, %v4790
        %v4794 = vunpack.c.l.s4 1934713408
        %v4795 = vunpack.c.0.s8 %v4794
        %v4796 = vlaneseq
        %v4797 = vshrl.u32 %v4796, 7
        %v4798 = vsub.s32 %v4795, %v4797
        %v4799 = vrot.slane %v4791, %v4798
        %v4801 = vunpack.c.l.s4 1934713408
        %v4802 = vunpack.c.0.s8 %v4801
        %v4803 = vlaneseq
        %v4804 = vshrl.u32 %v4803, 7
        %v4805 = vsub.s32 %v4802, %v4804
        %v4806 = vrot.slane %v4792, %v4805
        %v4807 = vcombine.high %v4799, 0
        %v4808 = vcombine.high %v4806, 0
        %v4811 = vunpack.c.l.s4 1983009808
        %v4812 = vunpack.c.0.s8 %v4811
        %v4813 = vlaneseq
        %v4814 = vshrl.u32 %v4813, 7
        %v4815 = vsub.s32 %v4812, %v4814
        %v4816 = vrot.slane %v4700, %v4815
        %v4819 = vunpack.c.l.s4 1983009808
        %v4820 = vunpack.c.0.s8 %v4819
        %v4821 = vlaneseq
        %v4822 = vshrl.u32 %v4821, 7
        %v4823 = vsub.s32 %v4820, %v4822
        %v4824 = vrot.slane %v4706, %v4823
        %v4825 = vcombine.low %v4816, %v4824
        %v4826 = vcombine.high %v4816, %v4824
        %v4828 = vunpack.c.l.s4 1934713408
        %v4829 = vunpack.c.0.s8 %v4828
        %v4830 = vlaneseq
        %v4831 = vshrl.u32 %v4830, 7
        %v4832 = vsub.s32 %v4829, %v4831
        %v4833 = vrot.slane %v4825, %v4832
        %v4835 = vunpack.c.l.s4 1934713408
        %v4836 = vunpack.c.0.s8 %v4835
        %v4837 = vlaneseq
        %v4838 = vshrl.u32 %v4837, 7
        %v4839 = vsub.s32 %v4836, %v4838
        %v4840 = vrot.slane %v4826, %v4839
        %v4841 = vcombine.high %v4833, 0
        %v4842 = vcombine.high %v4840, 0
        %v4844 = vunpack.c.l.b16 %v4765
        %v4845 = vpack.c.b16 %v4844, %v4844
        %4846 = vrot.lane.b32.xlu0 %v4845, 16
        %v4847 = vpop.permute.xlu0 %4846
        %v4849 = vunpack.c.l.b16 %v4739
        %v4850 = vpack.c.b16 %v4849, %v4849
        %4851 = vrot.lane.b32.xlu0 %v4850, 32
        %v4852 = vpop.permute.xlu0 %4851
        %v4854 = vunpack.c.l.b16 %v4773
        %v4855 = vpack.c.b16 %v4854, %v4854
        %4856 = vrot.lane.b32.xlu0 %v4855, 48
        %v4857 = vpop.permute.xlu0 %4856
        %v4859 = vunpack.c.l.b16 %v4738
        %v4860 = vpack.c.b16 %v4859, %v4859
        %4861 = vrot.lane.b32.xlu0 %v4860, 64
        %v4862 = vpop.permute.xlu0 %4861
        %v4864 = vunpack.c.l.b16 %v4772
        %v4865 = vpack.c.b16 %v4864, %v4864
        %4866 = vrot.lane.b32.xlu0 %v4865, 80
        %v4867 = vpop.permute.xlu0 %4866
        %v4869 = vunpack.c.l.b16 %v4740
        %v4870 = vpack.c.b16 %v4869, %v4869
        %4871 = vrot.lane.b32.xlu0 %v4870, 96
        %v4872 = vpop.permute.xlu0 %4871
        %v4874 = vunpack.c.l.b16 %v4774
        %v4875 = vpack.c.b16 %v4874, %v4874
        %4876 = vrot.lane.b32.xlu0 %v4875, 112
        %v4877 = vpop.permute.xlu0 %4876
        %v4879 = vunpack.c.l.b16 %v4833
        %v4880 = vpack.c.b16 %v4879, %v4879
        %4881 = vrot.lane.b32.xlu0 %v4880, 16
        %v4882 = vpop.permute.xlu0 %4881
        %v4884 = vunpack.c.l.b16 %v4807
        %v4885 = vpack.c.b16 %v4884, %v4884
        %4886 = vrot.lane.b32.xlu0 %v4885, 32
        %v4887 = vpop.permute.xlu0 %4886
        %v4889 = vunpack.c.l.b16 %v4841
        %v4890 = vpack.c.b16 %v4889, %v4889
        %4891 = vrot.lane.b32.xlu0 %v4890, 48
        %v4892 = vpop.permute.xlu0 %4891
        %v4894 = vunpack.c.l.b16 %v4806
        %v4895 = vpack.c.b16 %v4894, %v4894
        %4896 = vrot.lane.b32.xlu0 %v4895, 64
        %v4897 = vpop.permute.xlu0 %4896
        %v4899 = vunpack.c.l.b16 %v4840
        %v4900 = vpack.c.b16 %v4899, %v4899
        %4901 = vrot.lane.b32.xlu0 %v4900, 80
        %v4902 = vpop.permute.xlu0 %4901
        %v4904 = vunpack.c.l.b16 %v4808
        %v4905 = vpack.c.b16 %v4904, %v4904
        %4906 = vrot.lane.b32.xlu0 %v4905, 96
        %v4907 = vpop.permute.xlu0 %4906
        %v4909 = vunpack.c.l.b16 %v4842
        %v4910 = vpack.c.b16 %v4909, %v4909
        %4911 = vrot.lane.b32.xlu0 %v4910, 112
        %v4912 = vpop.permute.xlu0 %4911
        %v4915 = vsel %vm433, %v4731, %v4847
        %v4917 = vsel %vm437, %v4915, %v4852
        %v4919 = vsel %vm440, %v4917, %v4857
        %v4921 = vsel %vm443, %v4919, %v4862
        %v4923 = vsel %vm446, %v4921, %v4867
        %v4925 = vsel %vm449, %v4923, %v4872
        %v4927 = vsel %vm452, %v4925, %v4877
        %v4930 = vsel %vm433, %v4799, %v4882
        %v4932 = vsel %vm437, %v4930, %v4887
        %v4934 = vsel %vm440, %v4932, %v4892
        %v4936 = vsel %vm443, %v4934, %v4897
        %v4938 = vsel %vm446, %v4936, %v4902
        %v4940 = vsel %vm449, %v4938, %v4907
        %v4942 = vsel %vm452, %v4940, %v4912
        %v4945 = vunpack.c.l.b16 %v4927
        %v4946 = vunpack.c.l.b16 %v4942
        %v4947 = vpack.c.b16 %v4946, %v4945
        %v4948 = vrot.slane %v4947, 6
        %4950 = vst [vmem:[#allocation2 + $0x10] sm:$0xcc] %v4948
        %v4951 = vld [vmem:[#allocation3] sm:$0xe]
        %v4952 = vld [vmem:[#allocation3 + $0x4] sm:$0xf]
        %v4953 = vld [vmem:[#allocation3 + $0x8] sm:$0x1]
        %v4954 = vld [vmem:[#allocation3 + $0xc] sm:$0xe]
        %v4955 = vld [vmem:[#allocation3 + $0x10] sm:$0xf]
        %v4956 = vld [vmem:[#allocation3 + $0x14] sm:$0x1]
        %v4957 = vld [vmem:[#allocation3 + $0x18] sm:$0xe]
        %v4958 = vld [vmem:[#allocation3 + $0x1c] sm:$0xf]
        %v4959 = vld [vmem:[#allocation3 + $0x20] sm:$0x1]
        %v4960 = vld [vmem:[#allocation3 + $0x24] sm:$0xe]
        %v4961 = vld [vmem:[#allocation3 + $0x28] sm:$0xf]
        %v4962 = vld [vmem:[#allocation3 + $0x2c] sm:$0x1]
        %vm4975 = vcmask 1042432
        %vm4976 = vcmask 1046532
        %vm4977 = vmor %vm4975, %vm4976
        %v4978 = vrot.slane %v4951, 5
        %v4979 = vrot.slane %v4978, 4
        %v4980 = vrot.slane %v4952, 5
        %v4981 = vsel %vm4977, %v4979, %v4980
        %v4982 = vrot.slane %v4980, 4
        %v4983 = vrot.slane %v4953, 5
        %v4984 = vsel %vm4977, %v4982, %v4983
        %v4985 = vrot.slane %v4954, 5
        %v4986 = vrot.slane %v4985, 4
        %v4987 = vrot.slane %v4955, 5
        %v4988 = vsel %vm4977, %v4986, %v4987
        %v4989 = vrot.slane %v4987, 4
        %v4990 = vrot.slane %v4956, 5
        %v4991 = vsel %vm4977, %v4989, %v4990
        %v4992 = vrot.slane %v4957, 5
        %v4993 = vrot.slane %v4992, 4
        %v4994 = vrot.slane %v4958, 5
        %v4995 = vsel %vm4977, %v4993, %v4994
        %v4996 = vrot.slane %v4994, 4
        %v4997 = vrot.slane %v4959, 5
        %v4998 = vsel %vm4977, %v4996, %v4997
        %v4999 = vrot.slane %v4960, 5
        %v5000 = vrot.slane %v4999, 4
        %v5001 = vrot.slane %v4961, 5
        %v5002 = vsel %vm4977, %v5000, %v5001
        %v5003 = vrot.slane %v5001, 4
        %v5004 = vrot.slane %v4962, 5
        %v5005 = vsel %vm4977, %v5003, %v5004
        %v5008 = vpack.i.b16 %v4988, %v4981
        %v5009 = vshrl.u32 %v4981, 16
        %v5010 = vshrl.u32 %v4988, 16
        %v5011 = vpack.i.b16 %v5010, %v5009
        %v5014 = vpack.i.b16 %v5002, %v4995
        %v5015 = vshrl.u32 %v4995, 16
        %v5016 = vshrl.u32 %v5002, 16
        %v5017 = vpack.i.b16 %v5016, %v5015
        %v5020 = vpack.i.b16 %v4991, %v4984
        %v5021 = vshrl.u32 %v4984, 16
        %v5022 = vshrl.u32 %v4991, 16
        %v5023 = vpack.i.b16 %v5022, %v5021
        %v5026 = vpack.i.b16 %v5005, %v4998
        %v5027 = vshrl.u32 %v4998, 16
        %v5028 = vshrl.u32 %v5005, 16
        %v5029 = vpack.i.b16 %v5028, %v5027
        %v5032 = vunpack.c.l.s4 1983009808
        %v5033 = vunpack.c.0.s8 %v5032
        %v5034 = vlaneseq
        %v5035 = vshrl.u32 %v5034, 7
        %v5036 = vsub.s32 %v5033, %v5035
        %v5037 = vrot.slane %v5008, %v5036
        %v5040 = vunpack.c.l.s4 1983009808
        %v5041 = vunpack.c.0.s8 %v5040
        %v5042 = vlaneseq
        %v5043 = vshrl.u32 %v5042, 7
        %v5044 = vsub.s32 %v5041, %v5043
        %v5045 = vrot.slane %v5014, %v5044
        %v5046 = vcombine.low %v5037, %v5045
        %v5047 = vcombine.high %v5037, %v5045
        %v5049 = vunpack.c.l.s4 1934713408
        %v5050 = vunpack.c.0.s8 %v5049
        %v5051 = vlaneseq
        %v5052 = vshrl.u32 %v5051, 7
        %v5053 = vsub.s32 %v5050, %v5052
        %v5054 = vrot.slane %v5046, %v5053
        %v5056 = vunpack.c.l.s4 1934713408
        %v5057 = vunpack.c.0.s8 %v5056
        %v5058 = vlaneseq
        %v5059 = vshrl.u32 %v5058, 7
        %v5060 = vsub.s32 %v5057, %v5059
        %v5061 = vrot.slane %v5047, %v5060
        %v5062 = vcombine.high %v5054, 0
        %v5063 = vcombine.high %v5061, 0
        %v5066 = vunpack.c.l.s4 1983009808
        %v5067 = vunpack.c.0.s8 %v5066
        %v5068 = vlaneseq
        %v5069 = vshrl.u32 %v5068, 7
        %v5070 = vsub.s32 %v5067, %v5069
        %v5071 = vrot.slane %v5011, %v5070
        %v5074 = vunpack.c.l.s4 1983009808
        %v5075 = vunpack.c.0.s8 %v5074
        %v5076 = vlaneseq
        %v5077 = vshrl.u32 %v5076, 7
        %v5078 = vsub.s32 %v5075, %v5077
        %v5079 = vrot.slane %v5017, %v5078
        %v5080 = vcombine.low %v5071, %v5079
        %v5081 = vcombine.high %v5071, %v5079
        %v5083 = vunpack.c.l.s4 1934713408
        %v5084 = vunpack.c.0.s8 %v5083
        %v5085 = vlaneseq
        %v5086 = vshrl.u32 %v5085, 7
        %v5087 = vsub.s32 %v5084, %v5086
        %v5088 = vrot.slane %v5080, %v5087
        %v5090 = vunpack.c.l.s4 1934713408
        %v5091 = vunpack.c.0.s8 %v5090
        %v5092 = vlaneseq
        %v5093 = vshrl.u32 %v5092, 7
        %v5094 = vsub.s32 %v5091, %v5093
        %v5095 = vrot.slane %v5081, %v5094
        %v5096 = vcombine.high %v5088, 0
        %v5097 = vcombine.high %v5095, 0
        %v5100 = vunpack.c.l.s4 1983009808
        %v5101 = vunpack.c.0.s8 %v5100
        %v5102 = vlaneseq
        %v5103 = vshrl.u32 %v5102, 7
        %v5104 = vsub.s32 %v5101, %v5103
        %v5105 = vrot.slane %v5020, %v5104
        %v5108 = vunpack.c.l.s4 1983009808
        %v5109 = vunpack.c.0.s8 %v5108
        %v5110 = vlaneseq
        %v5111 = vshrl.u32 %v5110, 7
        %v5112 = vsub.s32 %v5109, %v5111
        %v5113 = vrot.slane %v5026, %v5112
        %v5114 = vcombine.low %v5105, %v5113
        %v5115 = vcombine.high %v5105, %v5113
        %v5117 = vunpack.c.l.s4 1934713408
        %v5118 = vunpack.c.0.s8 %v5117
        %v5119 = vlaneseq
        %v5120 = vshrl.u32 %v5119, 7
        %v5121 = vsub.s32 %v5118, %v5120
        %v5122 = vrot.slane %v5114, %v5121
        %v5124 = vunpack.c.l.s4 1934713408
        %v5125 = vunpack.c.0.s8 %v5124
        %v5126 = vlaneseq
        %v5127 = vshrl.u32 %v5126, 7
        %v5128 = vsub.s32 %v5125, %v5127
        %v5129 = vrot.slane %v5115, %v5128
        %v5130 = vcombine.high %v5122, 0
        %v5131 = vcombine.high %v5129, 0
        %v5134 = vunpack.c.l.s4 1983009808
        %v5135 = vunpack.c.0.s8 %v5134
        %v5136 = vlaneseq
        %v5137 = vshrl.u32 %v5136, 7
        %v5138 = vsub.s32 %v5135, %v5137
        %v5139 = vrot.slane %v5023, %v5138
        %v5142 = vunpack.c.l.s4 1983009808
        %v5143 = vunpack.c.0.s8 %v5142
        %v5144 = vlaneseq
        %v5145 = vshrl.u32 %v5144, 7
        %v5146 = vsub.s32 %v5143, %v5145
        %v5147 = vrot.slane %v5029, %v5146
        %v5148 = vcombine.low %v5139, %v5147
        %v5149 = vcombine.high %v5139, %v5147
        %v5151 = vunpack.c.l.s4 1934713408
        %v5152 = vunpack.c.0.s8 %v5151
        %v5153 = vlaneseq
        %v5154 = vshrl.u32 %v5153, 7
        %v5155 = vsub.s32 %v5152, %v5154
        %v5156 = vrot.slane %v5148, %v5155
        %v5158 = vunpack.c.l.s4 1934713408
        %v5159 = vunpack.c.0.s8 %v5158
        %v5160 = vlaneseq
        %v5161 = vshrl.u32 %v5160, 7
        %v5162 = vsub.s32 %v5159, %v5161
        %v5163 = vrot.slane %v5149, %v5162
        %v5164 = vcombine.high %v5156, 0
        %v5165 = vcombine.high %v5163, 0
        %v5167 = vunpack.c.l.b16 %v5088
        %v5168 = vpack.c.b16 %v5167, %v5167
        %5169 = vrot.lane.b32.xlu0 %v5168, 16
        %v5170 = vpop.permute.xlu0 %5169
        %v5172 = vunpack.c.l.b16 %v5062
        %v5173 = vpack.c.b16 %v5172, %v5172
        %5174 = vrot.lane.b32.xlu0 %v5173, 32
        %v5175 = vpop.permute.xlu0 %5174
        %v5177 = vunpack.c.l.b16 %v5096
        %v5178 = vpack.c.b16 %v5177, %v5177
        %5179 = vrot.lane.b32.xlu0 %v5178, 48
        %v5180 = vpop.permute.xlu0 %5179
        %v5182 = vunpack.c.l.b16 %v5061
        %v5183 = vpack.c.b16 %v5182, %v5182
        %5184 = vrot.lane.b32.xlu0 %v5183, 64
        %v5185 = vpop.permute.xlu0 %5184
        %v5187 = vunpack.c.l.b16 %v5095
        %v5188 = vpack.c.b16 %v5187, %v5187
        %5189 = vrot.lane.b32.xlu0 %v5188, 80
        %v5190 = vpop.permute.xlu0 %5189
        %v5192 = vunpack.c.l.b16 %v5063
        %v5193 = vpack.c.b16 %v5192, %v5192
        %5194 = vrot.lane.b32.xlu0 %v5193, 96
        %v5195 = vpop.permute.xlu0 %5194
        %v5197 = vunpack.c.l.b16 %v5097
        %v5198 = vpack.c.b16 %v5197, %v5197
        %5199 = vrot.lane.b32.xlu0 %v5198, 112
        %v5200 = vpop.permute.xlu0 %5199
        %v5202 = vunpack.c.l.b16 %v5156
        %v5203 = vpack.c.b16 %v5202, %v5202
        %5204 = vrot.lane.b32.xlu0 %v5203, 16
        %v5205 = vpop.permute.xlu0 %5204
        %v5207 = vunpack.c.l.b16 %v5130
        %v5208 = vpack.c.b16 %v5207, %v5207
        %5209 = vrot.lane.b32.xlu0 %v5208, 32
        %v5210 = vpop.permute.xlu0 %5209
        %v5212 = vunpack.c.l.b16 %v5164
        %v5213 = vpack.c.b16 %v5212, %v5212
        %5214 = vrot.lane.b32.xlu0 %v5213, 48
        %v5215 = vpop.permute.xlu0 %5214
        %v5217 = vunpack.c.l.b16 %v5129
        %v5218 = vpack.c.b16 %v5217, %v5217
        %5219 = vrot.lane.b32.xlu0 %v5218, 64
        %v5220 = vpop.permute.xlu0 %5219
        %v5222 = vunpack.c.l.b16 %v5163
        %v5223 = vpack.c.b16 %v5222, %v5222
        %5224 = vrot.lane.b32.xlu0 %v5223, 80
        %v5225 = vpop.permute.xlu0 %5224
        %v5227 = vunpack.c.l.b16 %v5131
        %v5228 = vpack.c.b16 %v5227, %v5227
        %5229 = vrot.lane.b32.xlu0 %v5228, 96
        %v5230 = vpop.permute.xlu0 %5229
        %v5232 = vunpack.c.l.b16 %v5165
        %v5233 = vpack.c.b16 %v5232, %v5232
        %5234 = vrot.lane.b32.xlu0 %v5233, 112
        %v5235 = vpop.permute.xlu0 %5234
        %v5238 = vsel %vm433, %v5054, %v5170
        %v5240 = vsel %vm437, %v5238, %v5175
        %v5242 = vsel %vm440, %v5240, %v5180
        %v5244 = vsel %vm443, %v5242, %v5185
        %v5246 = vsel %vm446, %v5244, %v5190
        %v5248 = vsel %vm449, %v5246, %v5195
        %v5250 = vsel %vm452, %v5248, %v5200
        %v5253 = vsel %vm433, %v5122, %v5205
        %v5255 = vsel %vm437, %v5253, %v5210
        %v5257 = vsel %vm440, %v5255, %v5215
        %v5259 = vsel %vm443, %v5257, %v5220
        %v5261 = vsel %vm446, %v5259, %v5225
        %v5263 = vsel %vm449, %v5261, %v5230
        %v5265 = vsel %vm452, %v5263, %v5235
        %v5268 = vunpack.c.l.b16 %v5250
        %v5269 = vunpack.c.l.b16 %v5265
        %v5270 = vpack.c.b16 %v5269, %v5268
        %5272 = vst [vmem:[#allocation2 + $0x18] sm:$0x33] %v5270
        %v5273 = vld [vmem:[#allocation3] sm:$0xe]
        %v5274 = vld [vmem:[#allocation3 + $0x4] sm:$0xf]
        %v5275 = vld [vmem:[#allocation3 + $0x8] sm:$0x1]
        %v5276 = vld [vmem:[#allocation3 + $0xc] sm:$0xe]
        %v5277 = vld [vmem:[#allocation3 + $0x10] sm:$0xf]
        %v5278 = vld [vmem:[#allocation3 + $0x14] sm:$0x1]
        %v5279 = vld [vmem:[#allocation3 + $0x18] sm:$0xe]
        %v5280 = vld [vmem:[#allocation3 + $0x1c] sm:$0xf]
        %v5281 = vld [vmem:[#allocation3 + $0x20] sm:$0x1]
        %v5282 = vld [vmem:[#allocation3 + $0x24] sm:$0xe]
        %v5283 = vld [vmem:[#allocation3 + $0x28] sm:$0xf]
        %v5284 = vld [vmem:[#allocation3 + $0x2c] sm:$0x1]
        %v5297 = vrot.slane %v5273, 5
        %v5298 = vrot.slane %v5297, 4
        %v5299 = vrot.slane %v5274, 5
        %v5300 = vsel %vm4977, %v5298, %v5299
        %v5301 = vrot.slane %v5299, 4
        %v5302 = vrot.slane %v5275, 5
        %v5303 = vsel %vm4977, %v5301, %v5302
        %v5304 = vrot.slane %v5276, 5
        %v5305 = vrot.slane %v5304, 4
        %v5306 = vrot.slane %v5277, 5
        %v5307 = vsel %vm4977, %v5305, %v5306
        %v5308 = vrot.slane %v5306, 4
        %v5309 = vrot.slane %v5278, 5
        %v5310 = vsel %vm4977, %v5308, %v5309
        %v5311 = vrot.slane %v5279, 5
        %v5312 = vrot.slane %v5311, 4
        %v5313 = vrot.slane %v5280, 5
        %v5314 = vsel %vm4977, %v5312, %v5313
        %v5315 = vrot.slane %v5313, 4
        %v5316 = vrot.slane %v5281, 5
        %v5317 = vsel %vm4977, %v5315, %v5316
        %v5318 = vrot.slane %v5282, 5
        %v5319 = vrot.slane %v5318, 4
        %v5320 = vrot.slane %v5283, 5
        %v5321 = vsel %vm4977, %v5319, %v5320
        %v5322 = vrot.slane %v5320, 4
        %v5323 = vrot.slane %v5284, 5
        %v5324 = vsel %vm4977, %v5322, %v5323
        %5325 = vrot.lane.b32.xlu0 %v5300, 127
        %v5326 = vpop.permute.xlu0 %5325
        %5327 = vrot.lane.b32.xlu0 %v5303, 127
        %v5328 = vpop.permute.xlu0 %5327
        %5329 = vrot.lane.b32.xlu0 %v5307, 127
        %v5330 = vpop.permute.xlu0 %5329
        %5331 = vrot.lane.b32.xlu0 %v5310, 127
        %v5332 = vpop.permute.xlu0 %5331
        %5333 = vrot.lane.b32.xlu0 %v5314, 127
        %v5334 = vpop.permute.xlu0 %5333
        %5335 = vrot.lane.b32.xlu0 %v5317, 127
        %v5336 = vpop.permute.xlu0 %5335
        %5337 = vrot.lane.b32.xlu0 %v5321, 127
        %v5338 = vpop.permute.xlu0 %5337
        %5339 = vrot.lane.b32.xlu0 %v5324, 127
        %v5340 = vpop.permute.xlu0 %5339
        %v5343 = vpack.i.b16 %v5330, %v5326
        %v5344 = vshrl.u32 %v5326, 16
        %v5345 = vshrl.u32 %v5330, 16
        %v5346 = vpack.i.b16 %v5345, %v5344
        %v5349 = vpack.i.b16 %v5338, %v5334
        %v5350 = vshrl.u32 %v5334, 16
        %v5351 = vshrl.u32 %v5338, 16
        %v5352 = vpack.i.b16 %v5351, %v5350
        %v5355 = vpack.i.b16 %v5332, %v5328
        %v5356 = vshrl.u32 %v5328, 16
        %v5357 = vshrl.u32 %v5332, 16
        %v5358 = vpack.i.b16 %v5357, %v5356
        %v5361 = vpack.i.b16 %v5340, %v5336
        %v5362 = vshrl.u32 %v5336, 16
        %v5363 = vshrl.u32 %v5340, 16
        %v5364 = vpack.i.b16 %v5363, %v5362
        %v5367 = vunpack.c.l.s4 1983009808
        %v5368 = vunpack.c.0.s8 %v5367
        %v5369 = vlaneseq
        %v5370 = vshrl.u32 %v5369, 7
        %v5371 = vsub.s32 %v5368, %v5370
        %v5372 = vrot.slane %v5343, %v5371
        %v5375 = vunpack.c.l.s4 1983009808
        %v5376 = vunpack.c.0.s8 %v5375
        %v5377 = vlaneseq
        %v5378 = vshrl.u32 %v5377, 7
        %v5379 = vsub.s32 %v5376, %v5378
        %v5380 = vrot.slane %v5349, %v5379
        %v5381 = vcombine.low %v5372, %v5380
        %v5382 = vcombine.high %v5372, %v5380
        %v5384 = vunpack.c.l.s4 1934713408
        %v5385 = vunpack.c.0.s8 %v5384
        %v5386 = vlaneseq
        %v5387 = vshrl.u32 %v5386, 7
        %v5388 = vsub.s32 %v5385, %v5387
        %v5389 = vrot.slane %v5381, %v5388
        %v5391 = vunpack.c.l.s4 1934713408
        %v5392 = vunpack.c.0.s8 %v5391
        %v5393 = vlaneseq
        %v5394 = vshrl.u32 %v5393, 7
        %v5395 = vsub.s32 %v5392, %v5394
        %v5396 = vrot.slane %v5382, %v5395
        %v5397 = vcombine.high %v5389, 0
        %v5398 = vcombine.high %v5396, 0
        %v5401 = vunpack.c.l.s4 1983009808
        %v5402 = vunpack.c.0.s8 %v5401
        %v5403 = vlaneseq
        %v5404 = vshrl.u32 %v5403, 7
        %v5405 = vsub.s32 %v5402, %v5404
        %v5406 = vrot.slane %v5346, %v5405
        %v5409 = vunpack.c.l.s4 1983009808
        %v5410 = vunpack.c.0.s8 %v5409
        %v5411 = vlaneseq
        %v5412 = vshrl.u32 %v5411, 7
        %v5413 = vsub.s32 %v5410, %v5412
        %v5414 = vrot.slane %v5352, %v5413
        %v5415 = vcombine.low %v5406, %v5414
        %v5416 = vcombine.high %v5406, %v5414
        %v5418 = vunpack.c.l.s4 1934713408
        %v5419 = vunpack.c.0.s8 %v5418
        %v5420 = vlaneseq
        %v5421 = vshrl.u32 %v5420, 7
        %v5422 = vsub.s32 %v5419, %v5421
        %v5423 = vrot.slane %v5415, %v5422
        %v5425 = vunpack.c.l.s4 1934713408
        %v5426 = vunpack.c.0.s8 %v5425
        %v5427 = vlaneseq
        %v5428 = vshrl.u32 %v5427, 7
        %v5429 = vsub.s32 %v5426, %v5428
        %v5430 = vrot.slane %v5416, %v5429
        %v5431 = vcombine.high %v5423, 0
        %v5432 = vcombine.high %v5430, 0
        %v5435 = vunpack.c.l.s4 1983009808
        %v5436 = vunpack.c.0.s8 %v5435
        %v5437 = vlaneseq
        %v5438 = vshrl.u32 %v5437, 7
        %v5439 = vsub.s32 %v5436, %v5438
        %v5440 = vrot.slane %v5355, %v5439
        %v5443 = vunpack.c.l.s4 1983009808
        %v5444 = vunpack.c.0.s8 %v5443
        %v5445 = vlaneseq
        %v5446 = vshrl.u32 %v5445, 7
        %v5447 = vsub.s32 %v5444, %v5446
        %v5448 = vrot.slane %v5361, %v5447
        %v5449 = vcombine.low %v5440, %v5448
        %v5450 = vcombine.high %v5440, %v5448
        %v5452 = vunpack.c.l.s4 1934713408
        %v5453 = vunpack.c.0.s8 %v5452
        %v5454 = vlaneseq
        %v5455 = vshrl.u32 %v5454, 7
        %v5456 = vsub.s32 %v5453, %v5455
        %v5457 = vrot.slane %v5449, %v5456
        %v5459 = vunpack.c.l.s4 1934713408
        %v5460 = vunpack.c.0.s8 %v5459
        %v5461 = vlaneseq
        %v5462 = vshrl.u32 %v5461, 7
        %v5463 = vsub.s32 %v5460, %v5462
        %v5464 = vrot.slane %v5450, %v5463
        %v5465 = vcombine.high %v5457, 0
        %v5466 = vcombine.high %v5464, 0
        %v5469 = vunpack.c.l.s4 1983009808
        %v5470 = vunpack.c.0.s8 %v5469
        %v5471 = vlaneseq
        %v5472 = vshrl.u32 %v5471, 7
        %v5473 = vsub.s32 %v5470, %v5472
        %v5474 = vrot.slane %v5358, %v5473
        %v5477 = vunpack.c.l.s4 1983009808
        %v5478 = vunpack.c.0.s8 %v5477
        %v5479 = vlaneseq
        %v5480 = vshrl.u32 %v5479, 7
        %v5481 = vsub.s32 %v5478, %v5480
        %v5482 = vrot.slane %v5364, %v5481
        %v5483 = vcombine.low %v5474, %v5482
        %v5484 = vcombine.high %v5474, %v5482
        %v5486 = vunpack.c.l.s4 1934713408
        %v5487 = vunpack.c.0.s8 %v5486
        %v5488 = vlaneseq
        %v5489 = vshrl.u32 %v5488, 7
        %v5490 = vsub.s32 %v5487, %v5489
        %v5491 = vrot.slane %v5483, %v5490
        %v5493 = vunpack.c.l.s4 1934713408
        %v5494 = vunpack.c.0.s8 %v5493
        %v5495 = vlaneseq
        %v5496 = vshrl.u32 %v5495, 7
        %v5497 = vsub.s32 %v5494, %v5496
        %v5498 = vrot.slane %v5484, %v5497
        %v5499 = vcombine.high %v5491, 0
        %v5500 = vcombine.high %v5498, 0
        %v5502 = vunpack.c.l.b16 %v5423
        %v5503 = vpack.c.b16 %v5502, %v5502
        %5504 = vrot.lane.b32.xlu0 %v5503, 16
        %v5505 = vpop.permute.xlu0 %5504
        %v5507 = vunpack.c.l.b16 %v5397
        %v5508 = vpack.c.b16 %v5507, %v5507
        %5509 = vrot.lane.b32.xlu0 %v5508, 32
        %v5510 = vpop.permute.xlu0 %5509
        %v5512 = vunpack.c.l.b16 %v5431
        %v5513 = vpack.c.b16 %v5512, %v5512
        %5514 = vrot.lane.b32.xlu0 %v5513, 48
        %v5515 = vpop.permute.xlu0 %5514
        %v5517 = vunpack.c.l.b16 %v5396
        %v5518 = vpack.c.b16 %v5517, %v5517
        %5519 = vrot.lane.b32.xlu0 %v5518, 64
        %v5520 = vpop.permute.xlu0 %5519
        %v5522 = vunpack.c.l.b16 %v5430
        %v5523 = vpack.c.b16 %v5522, %v5522
        %5524 = vrot.lane.b32.xlu0 %v5523, 80
        %v5525 = vpop.permute.xlu0 %5524
        %v5527 = vunpack.c.l.b16 %v5398
        %v5528 = vpack.c.b16 %v5527, %v5527
        %5529 = vrot.lane.b32.xlu0 %v5528, 96
        %v5530 = vpop.permute.xlu0 %5529
        %v5532 = vunpack.c.l.b16 %v5432
        %v5533 = vpack.c.b16 %v5532, %v5532
        %5534 = vrot.lane.b32.xlu0 %v5533, 112
        %v5535 = vpop.permute.xlu0 %5534
        %v5537 = vunpack.c.l.b16 %v5491
        %v5538 = vpack.c.b16 %v5537, %v5537
        %5539 = vrot.lane.b32.xlu0 %v5538, 16
        %v5540 = vpop.permute.xlu0 %5539
        %v5542 = vunpack.c.l.b16 %v5465
        %v5543 = vpack.c.b16 %v5542, %v5542
        %5544 = vrot.lane.b32.xlu0 %v5543, 32
        %v5545 = vpop.permute.xlu0 %5544
        %v5547 = vunpack.c.l.b16 %v5499
        %v5548 = vpack.c.b16 %v5547, %v5547
        %5549 = vrot.lane.b32.xlu0 %v5548, 48
        %v5550 = vpop.permute.xlu0 %5549
        %v5552 = vunpack.c.l.b16 %v5464
        %v5553 = vpack.c.b16 %v5552, %v5552
        %5554 = vrot.lane.b32.xlu0 %v5553, 64
        %v5555 = vpop.permute.xlu0 %5554
        %v5557 = vunpack.c.l.b16 %v5498
        %v5558 = vpack.c.b16 %v5557, %v5557
        %5559 = vrot.lane.b32.xlu0 %v5558, 80
        %v5560 = vpop.permute.xlu0 %5559
        %v5562 = vunpack.c.l.b16 %v5466
        %v5563 = vpack.c.b16 %v5562, %v5562
        %5564 = vrot.lane.b32.xlu0 %v5563, 96
        %v5565 = vpop.permute.xlu0 %5564
        %v5567 = vunpack.c.l.b16 %v5500
        %v5568 = vpack.c.b16 %v5567, %v5567
        %5569 = vrot.lane.b32.xlu0 %v5568, 112
        %v5570 = vpop.permute.xlu0 %5569
        %v5573 = vsel %vm433, %v5389, %v5505
        %v5575 = vsel %vm437, %v5573, %v5510
        %v5577 = vsel %vm440, %v5575, %v5515
        %v5579 = vsel %vm443, %v5577, %v5520
        %v5581 = vsel %vm446, %v5579, %v5525
        %v5583 = vsel %vm449, %v5581, %v5530
        %v5585 = vsel %vm452, %v5583, %v5535
        %v5588 = vsel %vm433, %v5457, %v5540
        %v5590 = vsel %vm437, %v5588, %v5545
        %v5592 = vsel %vm440, %v5590, %v5550
        %v5594 = vsel %vm443, %v5592, %v5555
        %v5596 = vsel %vm446, %v5594, %v5560
        %v5598 = vsel %vm449, %v5596, %v5565
        %v5600 = vsel %vm452, %v5598, %v5570
        %v5603 = vunpack.c.l.b16 %v5585
        %v5604 = vunpack.c.l.b16 %v5600
        %v5605 = vpack.c.b16 %v5604, %v5603
        %v5606 = vrot.slane %v5605, 6
        %5608 = vst [vmem:[#allocation2 + $0x18] sm:$0xcc] %v5606
        %v5609 = vld [vmem:[#allocation3] sm:$0xe]
        %v5610 = vld [vmem:[#allocation3 + $0x4] sm:$0xf]
        %v5611 = vld [vmem:[#allocation3 + $0x8] sm:$0x1]
        %v5612 = vld [vmem:[#allocation3 + $0xc] sm:$0xe]
        %v5613 = vld [vmem:[#allocation3 + $0x10] sm:$0xf]
        %v5614 = vld [vmem:[#allocation3 + $0x14] sm:$0x1]
        %v5615 = vld [vmem:[#allocation3 + $0x18] sm:$0xe]
        %v5616 = vld [vmem:[#allocation3 + $0x1c] sm:$0xf]
        %v5617 = vld [vmem:[#allocation3 + $0x20] sm:$0x1]
        %v5618 = vld [vmem:[#allocation3 + $0x24] sm:$0xe]
        %v5619 = vld [vmem:[#allocation3 + $0x28] sm:$0xf]
        %v5620 = vld [vmem:[#allocation3 + $0x2c] sm:$0x1]
        %v5633 = vrot.slane %v5609, 5
        %v5634 = vrot.slane %v5633, 4
        %v5635 = vrot.slane %v5610, 5
        %v5636 = vsel %vm4977, %v5634, %v5635
        %v5637 = vrot.slane %v5635, 4
        %v5638 = vrot.slane %v5611, 5
        %v5639 = vsel %vm4977, %v5637, %v5638
        %v5640 = vrot.slane %v5612, 5
        %v5641 = vrot.slane %v5640, 4
        %v5642 = vrot.slane %v5613, 5
        %v5643 = vsel %vm4977, %v5641, %v5642
        %v5644 = vrot.slane %v5642, 4
        %v5645 = vrot.slane %v5614, 5
        %v5646 = vsel %vm4977, %v5644, %v5645
        %v5647 = vrot.slane %v5615, 5
        %v5648 = vrot.slane %v5647, 4
        %v5649 = vrot.slane %v5616, 5
        %v5650 = vsel %vm4977, %v5648, %v5649
        %v5651 = vrot.slane %v5649, 4
        %v5652 = vrot.slane %v5617, 5
        %v5653 = vsel %vm4977, %v5651, %v5652
        %v5654 = vrot.slane %v5618, 5
        %v5655 = vrot.slane %v5654, 4
        %v5656 = vrot.slane %v5619, 5
        %v5657 = vsel %vm4977, %v5655, %v5656
        %v5658 = vrot.slane %v5656, 4
        %v5659 = vrot.slane %v5620, 5
        %v5660 = vsel %vm4977, %v5658, %v5659
        %5661 = vrot.lane.b32.xlu0 %v5636, 126
        %v5662 = vpop.permute.xlu0 %5661
        %5663 = vrot.lane.b32.xlu0 %v5639, 126
        %v5664 = vpop.permute.xlu0 %5663
        %5665 = vrot.lane.b32.xlu0 %v5643, 126
        %v5666 = vpop.permute.xlu0 %5665
        %5667 = vrot.lane.b32.xlu0 %v5646, 126
        %v5668 = vpop.permute.xlu0 %5667
        %5669 = vrot.lane.b32.xlu0 %v5650, 126
        %v5670 = vpop.permute.xlu0 %5669
        %5671 = vrot.lane.b32.xlu0 %v5653, 126
        %v5672 = vpop.permute.xlu0 %5671
        %5673 = vrot.lane.b32.xlu0 %v5657, 126
        %v5674 = vpop.permute.xlu0 %5673
        %5675 = vrot.lane.b32.xlu0 %v5660, 126
        %v5676 = vpop.permute.xlu0 %5675
        %v5679 = vpack.i.b16 %v5666, %v5662
        %v5680 = vshrl.u32 %v5662, 16
        %v5681 = vshrl.u32 %v5666, 16
        %v5682 = vpack.i.b16 %v5681, %v5680
        %v5685 = vpack.i.b16 %v5674, %v5670
        %v5686 = vshrl.u32 %v5670, 16
        %v5687 = vshrl.u32 %v5674, 16
        %v5688 = vpack.i.b16 %v5687, %v5686
        %v5691 = vpack.i.b16 %v5668, %v5664
        %v5692 = vshrl.u32 %v5664, 16
        %v5693 = vshrl.u32 %v5668, 16
        %v5694 = vpack.i.b16 %v5693, %v5692
        %v5697 = vpack.i.b16 %v5676, %v5672
        %v5698 = vshrl.u32 %v5672, 16
        %v5699 = vshrl.u32 %v5676, 16
        %v5700 = vpack.i.b16 %v5699, %v5698
        %v5703 = vunpack.c.l.s4 1983009808
        %v5704 = vunpack.c.0.s8 %v5703
        %v5705 = vlaneseq
        %v5706 = vshrl.u32 %v5705, 7
        %v5707 = vsub.s32 %v5704, %v5706
        %v5708 = vrot.slane %v5679, %v5707
        %v5711 = vunpack.c.l.s4 1983009808
        %v5712 = vunpack.c.0.s8 %v5711
        %v5713 = vlaneseq
        %v5714 = vshrl.u32 %v5713, 7
        %v5715 = vsub.s32 %v5712, %v5714
        %v5716 = vrot.slane %v5685, %v5715
        %v5717 = vcombine.low %v5708, %v5716
        %v5718 = vcombine.high %v5708, %v5716
        %v5720 = vunpack.c.l.s4 1934713408
        %v5721 = vunpack.c.0.s8 %v5720
        %v5722 = vlaneseq
        %v5723 = vshrl.u32 %v5722, 7
        %v5724 = vsub.s32 %v5721, %v5723
        %v5725 = vrot.slane %v5717, %v5724
        %v5727 = vunpack.c.l.s4 1934713408
        %v5728 = vunpack.c.0.s8 %v5727
        %v5729 = vlaneseq
        %v5730 = vshrl.u32 %v5729, 7
        %v5731 = vsub.s32 %v5728, %v5730
        %v5732 = vrot.slane %v5718, %v5731
        %v5733 = vcombine.high %v5725, 0
        %v5734 = vcombine.high %v5732, 0
        %v5737 = vunpack.c.l.s4 1983009808
        %v5738 = vunpack.c.0.s8 %v5737
        %v5739 = vlaneseq
        %v5740 = vshrl.u32 %v5739, 7
        %v5741 = vsub.s32 %v5738, %v5740
        %v5742 = vrot.slane %v5682, %v5741
        %v5745 = vunpack.c.l.s4 1983009808
        %v5746 = vunpack.c.0.s8 %v5745
        %v5747 = vlaneseq
        %v5748 = vshrl.u32 %v5747, 7
        %v5749 = vsub.s32 %v5746, %v5748
        %v5750 = vrot.slane %v5688, %v5749
        %v5751 = vcombine.low %v5742, %v5750
        %v5752 = vcombine.high %v5742, %v5750
        %v5754 = vunpack.c.l.s4 1934713408
        %v5755 = vunpack.c.0.s8 %v5754
        %v5756 = vlaneseq
        %v5757 = vshrl.u32 %v5756, 7
        %v5758 = vsub.s32 %v5755, %v5757
        %v5759 = vrot.slane %v5751, %v5758
        %v5761 = vunpack.c.l.s4 1934713408
        %v5762 = vunpack.c.0.s8 %v5761
        %v5763 = vlaneseq
        %v5764 = vshrl.u32 %v5763, 7
        %v5765 = vsub.s32 %v5762, %v5764
        %v5766 = vrot.slane %v5752, %v5765
        %v5767 = vcombine.high %v5759, 0
        %v5768 = vcombine.high %v5766, 0
        %v5771 = vunpack.c.l.s4 1983009808
        %v5772 = vunpack.c.0.s8 %v5771
        %v5773 = vlaneseq
        %v5774 = vshrl.u32 %v5773, 7
        %v5775 = vsub.s32 %v5772, %v5774
        %v5776 = vrot.slane %v5691, %v5775
        %v5779 = vunpack.c.l.s4 1983009808
        %v5780 = vunpack.c.0.s8 %v5779
        %v5781 = vlaneseq
        %v5782 = vshrl.u32 %v5781, 7
        %v5783 = vsub.s32 %v5780, %v5782
        %v5784 = vrot.slane %v5697, %v5783
        %v5785 = vcombine.low %v5776, %v5784
        %v5786 = vcombine.high %v5776, %v5784
        %v5788 = vunpack.c.l.s4 1934713408
        %v5789 = vunpack.c.0.s8 %v5788
        %v5790 = vlaneseq
        %v5791 = vshrl.u32 %v5790, 7
        %v5792 = vsub.s32 %v5789, %v5791
        %v5793 = vrot.slane %v5785, %v5792
        %v5795 = vunpack.c.l.s4 1934713408
        %v5796 = vunpack.c.0.s8 %v5795
        %v5797 = vlaneseq
        %v5798 = vshrl.u32 %v5797, 7
        %v5799 = vsub.s32 %v5796, %v5798
        %v5800 = vrot.slane %v5786, %v5799
        %v5801 = vcombine.high %v5793, 0
        %v5802 = vcombine.high %v5800, 0
        %v5805 = vunpack.c.l.s4 1983009808
        %v5806 = vunpack.c.0.s8 %v5805
        %v5807 = vlaneseq
        %v5808 = vshrl.u32 %v5807, 7
        %v5809 = vsub.s32 %v5806, %v5808
        %v5810 = vrot.slane %v5694, %v5809
        %v5813 = vunpack.c.l.s4 1983009808
        %v5814 = vunpack.c.0.s8 %v5813
        %v5815 = vlaneseq
        %v5816 = vshrl.u32 %v5815, 7
        %v5817 = vsub.s32 %v5814, %v5816
        %v5818 = vrot.slane %v5700, %v5817
        %v5819 = vcombine.low %v5810, %v5818
        %v5820 = vcombine.high %v5810, %v5818
        %v5822 = vunpack.c.l.s4 1934713408
        %v5823 = vunpack.c.0.s8 %v5822
        %v5824 = vlaneseq
        %v5825 = vshrl.u32 %v5824, 7
        %v5826 = vsub.s32 %v5823, %v5825
        %v5827 = vrot.slane %v5819, %v5826
        %v5829 = vunpack.c.l.s4 1934713408
        %v5830 = vunpack.c.0.s8 %v5829
        %v5831 = vlaneseq
        %v5832 = vshrl.u32 %v5831, 7
        %v5833 = vsub.s32 %v5830, %v5832
        %v5834 = vrot.slane %v5820, %v5833
        %v5835 = vcombine.high %v5827, 0
        %v5836 = vcombine.high %v5834, 0
        %v5838 = vunpack.c.l.b16 %v5759
        %v5839 = vpack.c.b16 %v5838, %v5838
        %5840 = vrot.lane.b32.xlu0 %v5839, 16
        %v5841 = vpop.permute.xlu0 %5840
        %v5843 = vunpack.c.l.b16 %v5733
        %v5844 = vpack.c.b16 %v5843, %v5843
        %5845 = vrot.lane.b32.xlu0 %v5844, 32
        %v5846 = vpop.permute.xlu0 %5845
        %v5848 = vunpack.c.l.b16 %v5767
        %v5849 = vpack.c.b16 %v5848, %v5848
        %5850 = vrot.lane.b32.xlu0 %v5849, 48
        %v5851 = vpop.permute.xlu0 %5850
        %v5853 = vunpack.c.l.b16 %v5732
        %v5854 = vpack.c.b16 %v5853, %v5853
        %5855 = vrot.lane.b32.xlu0 %v5854, 64
        %v5856 = vpop.permute.xlu0 %5855
        %v5858 = vunpack.c.l.b16 %v5766
        %v5859 = vpack.c.b16 %v5858, %v5858
        %5860 = vrot.lane.b32.xlu0 %v5859, 80
        %v5861 = vpop.permute.xlu0 %5860
        %v5863 = vunpack.c.l.b16 %v5734
        %v5864 = vpack.c.b16 %v5863, %v5863
        %5865 = vrot.lane.b32.xlu0 %v5864, 96
        %v5866 = vpop.permute.xlu0 %5865
        %v5868 = vunpack.c.l.b16 %v5768
        %v5869 = vpack.c.b16 %v5868, %v5868
        %5870 = vrot.lane.b32.xlu0 %v5869, 112
        %v5871 = vpop.permute.xlu0 %5870
        %v5873 = vunpack.c.l.b16 %v5827
        %v5874 = vpack.c.b16 %v5873, %v5873
        %5875 = vrot.lane.b32.xlu0 %v5874, 16
        %v5876 = vpop.permute.xlu0 %5875
        %v5878 = vunpack.c.l.b16 %v5801
        %v5879 = vpack.c.b16 %v5878, %v5878
        %5880 = vrot.lane.b32.xlu0 %v5879, 32
        %v5881 = vpop.permute.xlu0 %5880
        %v5883 = vunpack.c.l.b16 %v5835
        %v5884 = vpack.c.b16 %v5883, %v5883
        %5885 = vrot.lane.b32.xlu0 %v5884, 48
        %v5886 = vpop.permute.xlu0 %5885
        %v5888 = vunpack.c.l.b16 %v5800
        %v5889 = vpack.c.b16 %v5888, %v5888
        %5890 = vrot.lane.b32.xlu0 %v5889, 64
        %v5891 = vpop.permute.xlu0 %5890
        %v5893 = vunpack.c.l.b16 %v5834
        %v5894 = vpack.c.b16 %v5893, %v5893
        %5895 = vrot.lane.b32.xlu0 %v5894, 80
        %v5896 = vpop.permute.xlu0 %5895
        %v5898 = vunpack.c.l.b16 %v5802
        %v5899 = vpack.c.b16 %v5898, %v5898
        %5900 = vrot.lane.b32.xlu0 %v5899, 96
        %v5901 = vpop.permute.xlu0 %5900
        %v5903 = vunpack.c.l.b16 %v5836
        %v5904 = vpack.c.b16 %v5903, %v5903
        %5905 = vrot.lane.b32.xlu0 %v5904, 112
        %v5906 = vpop.permute.xlu0 %5905
        %v5909 = vsel %vm433, %v5725, %v5841
        %v5911 = vsel %vm437, %v5909, %v5846
        %v5913 = vsel %vm440, %v5911, %v5851
        %v5915 = vsel %vm443, %v5913, %v5856
        %v5917 = vsel %vm446, %v5915, %v5861
        %v5919 = vsel %vm449, %v5917, %v5866
        %v5921 = vsel %vm452, %v5919, %v5871
        %v5924 = vsel %vm433, %v5793, %v5876
        %v5926 = vsel %vm437, %v5924, %v5881
        %v5928 = vsel %vm440, %v5926, %v5886
        %v5930 = vsel %vm443, %v5928, %v5891
        %v5932 = vsel %vm446, %v5930, %v5896
        %v5934 = vsel %vm449, %v5932, %v5901
        %v5936 = vsel %vm452, %v5934, %v5906
        %v5939 = vunpack.c.l.b16 %v5921
        %v5940 = vunpack.c.l.b16 %v5936
        %v5941 = vpack.c.b16 %v5940, %v5939
        %5943 = vst [vmem:[#allocation2 + $0x20] sm:$0x33] %v5941
        %v5944 = vld [vmem:[%s3] sm:$0x3]
        %v5945 = vld [vmem:[#allocation2] sm:$0xff]
        %v5946 = vld [vmem:[#allocation2 + $0x8] sm:$0xff]
        %v5947 = vld [vmem:[#allocation2 + $0x10] sm:$0xff]
        %v5948 = vld [vmem:[#allocation2 + $0x18] sm:$0xff]
        %v5949 = vld [vmem:[#allocation2 + $0x20] sm:$0x33]
        %v5955 = vunpack.c.l.b16 %v5945
        %v5956 = vunpack.c.h.b16 %v5945
        %v5957 = vunpack.c.l.b16 %v5946
        %v5958 = vunpack.c.h.b16 %v5946
        %v5959 = vunpack.c.l.b16 %v5947
        %v5960 = vunpack.c.h.b16 %v5947
        %v5961 = vunpack.c.l.b16 %v5948
        %v5962 = vunpack.c.h.b16 %v5948
        %v5963 = vunpack.c.l.b16 %v5949
        %v5964 = vunpack.c.h.b16 %v5949
        %v5965 = vpack.c.b16 %v5957, %v5955
        %v5966 = vpack.c.b16 %v5958, %v5956
        %v5967 = vpack.c.b16 %v5961, %v5959
        %v5968 = vpack.c.b16 %v5962, %v5960
        %v5969 = vpack.c.b16 %v5963, %v5963
        %v5970 = vpack.c.b16 %v5964, %v5964
        %v5976 = vsel %vm2438, %v5944, 0
        %v5979 = vsel %vm2442, %v5969, 0
        %v5982 = vsel %vm2442, %v5970, 0
        %5984 = vmatprep.subr.bf16.mxu0 %v5966
        %5985 = vmatpush1.bf16.msra.mxu0 %v5965
        %5986 = vmatprep.subr.bf16.mxu0 %v5968
        %5987 = vmatpush1.bf16.msra.mxu0 %v5967
        %5988 = vmatprep.subr.bf16.mxu0 %v5982
        %5989 = vmatpush1.bf16.msra.mxu0 %v5979
        %5990 = vmatprep.subr.bf16.mxu0 0
        %5991 = vmatpush1.bf16.msra.mxu0 0
        %5992 = vmatprep.subr.bf16.mxu0 0
        %5993 = vmatpush1.bf16.msra.mxu0 0
        %5994 = vmatprep.subr.bf16.mxu0 0
        %5995 = vmatpush1.bf16.msra.mxu0 0
        %5996 = vmatprep.subr.bf16.mxu0 0
        %5997 = vmatpush1.bf16.msra.mxu0 0
        %5998 = vmatprep.subr.bf16.mxu0 0
        %5999 = vmatpush1.bf16.msra.mxu0 0
        %6000 = vmatprep.subr.bf16.mxu0 0
        %6001 = vmatpush1.bf16.msra.mxu0 0
        %6002 = vmatprep.subr.bf16.mxu0 0
        %6003 = vmatpush1.bf16.msra.mxu0 0
        %6004 = vmatprep.subr.bf16.mxu0 0
        %6005 = vmatpush1.bf16.msra.mxu0 0
        %6006 = vmatprep.subr.bf16.mxu0 0
        %6007 = vmatpush1.bf16.msra.mxu0 0
        %6008 = vmatprep.subr.bf16.mxu0 0
        %6009 = vmatpush1.bf16.msra.mxu0 0
        %6010 = vmatprep.subr.bf16.mxu0 0
        %6011 = vmatpush1.bf16.msra.mxu0 0
        %6012 = vmatprep.subr.bf16.mxu0 0
        %6013 = vmatpush1.bf16.msra.mxu0 0
        %6014 = vmatprep.subr.bf16.mxu0 0
        %6015 = vmatpush1.bf16.msra.mxu0 0
        %6016 = vmatprep.mubr.bf16.mxu0 0
        %6017 = vmatmul.mubr.bf16.gmra.mrb[0].mxu0 %v5976
        %v6018 = vpop.f32.mrb[0].mxu0
        %v6019 = vadd.f32 0.0, %v6018
        %v6020 = vpop.f32.mrb[0].mxu0
        %v6021 = vadd.f32 0.0, %v6020
        %v6022 = vpop.f32.mrb[0].mxu0
        %v6023 = vpop.f32.mrb[0].mxu0
        %6024 = vdwg.mxu0
        %v6025 = vsel %vm2490, %v6019, 0.0
        %v6026 = vsel %vm2490, %v6021, 0.0
        %v6027 = vadd.f32 %v6025, %v6026
        %6028 = vadd.xlane.f32.xlu0 %v6027
        %v6029 = vpop.xlane.xlu0 %6028
        %v6030 = vmul.f32 %v6019, %v6019
        %v6031 = vmul.f32 %v6021, %v6021
        %v6032 = vsel %vm2490, %v6030, 0.0
        %v6033 = vsel %vm2490, %v6031, 0.0
        %v6034 = vadd.f32 %v6032, %v6033
        %6035 = vadd.xlane.f32.xlu0 %v6034
        %v6036 = vpop.xlane.xlu0 %6035
        %v6037 = vmul.f32 %v6029, 0.00390625
        %v6038 = vmul.f32 %v6036, 0.00390625
        %v6039 = vmul.f32 %v6037, %v6037
        %v6040 = vsub.f32 %v6038, %v6039
        %v6041 = vmax.f32 %v6040, 0.0
        %v6042 = vsub.f32 %v6019, %v6037
        %v6043 = vsub.f32 %v6021, %v6037
        %v6044 = vadd.f32 %v6041, 1e-05
        %v6045 = vrsqrt.pop %v6044
        %v6046 = vmul.f32 %v6042, %v6045
        %v6047 = vmul.f32 %v6043, %v6045
        %v6048 = vld [vmem:[%s215] sm:$0xff]
        %v6051 = vcombine.low %v6046, %v6047
        %v6053 = vadd.f32 %v6048, %v6051
        %6054 = vst [vmem:[%s205] sm:$0xff] %v6053
        %s6055 = sand.u32 %s120, 1
        %s6056 = scalar_lea.sflag [#allocation5], %s6055
        %s6057 = sand.u32 %s120, 1
        %s6058 = smul.addr %s6057, 8
        %s6059 = scalar_lea.vmem [#allocation4], %s6058
        // Predicated region
        $region37: #{tpu_custom_call.1} parent=35 // pred_check
          %p6060 = pneg %p130
        $region38: #{tpu_custom_call.1} parent=35 // pred_check_branch
          %6062 = sbr.rel (%p6060) target = $region40
        $region39: #{tpu_custom_call.1} parent=35 // pred_region
          %s6064 = ssub.s32 128, 128
          %6065 = vsyncadd %s6056, %s6064
          %s6066 = smul.addr %s18, 2
          %s6067 = smul.addr %s6066, 64
          %s6068 = scalar_lea.hbm %s4, %s6067
          %s6070 = sshll.u32 %s6059, 4
          %s6071 = int_to_ptr.vmem [resolvable:$true] %s6070
          %6073 = dma.vmem_to_hbm [thread:$0]  %s6071, 128, %s6068, %s6056
        $region40: #{tpu_custom_call.1} parent=35 // pred_fallthru
          _
      $region36: #{tpu_custom_call.1} parent=5 // pred_fallthru
        _
      %p6074 = scmp.le.s32.totalorder 2, %s13
      // Predicated region
      $region41: #{tpu_custom_call.1} parent=5 // pred_check
        %p6075 = pneg %p6074
      $region42: #{tpu_custom_call.1} parent=5 // pred_check_branch
        %6077 = sbr.rel (%p6075) target = $region44
      $region43: #{tpu_custom_call.1} parent=5 // pred_region
        %s6078 = ssub.s32 %s13, 2
        // Predicated region
        $region45: #{tpu_custom_call.1} parent=43 // pred_check
          %p6079 = pneg %p136
        $region46: #{tpu_custom_call.1} parent=43 // pred_check_branch
          %6081 = sbr.rel (%p6079) target = $region48
        $region47: #{tpu_custom_call.1} parent=43 // pred_region
          %s6082 = sand.u32 %s121, 1
          %s6083 = scalar_lea.sflag [#allocation5], %s6082
          %s6084 = sand.u32 %s121, 1
          %s6085 = smul.addr %s6084, 8
          %s6086 = scalar_lea.vmem [#allocation4], %s6085
          %6087 = dma.done %s6083, 128
        $region48: #{tpu_custom_call.1} parent=43 // pred_fallthru
          _
      $region44: #{tpu_custom_call.1} parent=5 // pred_fallthru
        _
    $region6: #{tpu_custom_call.1} parent=1 // loop_footer
      %s17 = sadd.s32 1, %s13
    $region7: #{tpu_custom_call.1} parent=1 // loop_footer_branch
      %12 = sbr.rel target = $region3
    $region8: #{tpu_custom_call.1} parent=1 // loop_exit
      _
    %6088 = vsyncpa [#allocation5], 1
    %s6089 = scalar_lea.sflag [#allocation5], 1
    %6090 = vsyncpa %s6089, 1

</llo_original>
